<compile_context>
chip_gen: v5e
topology: v5e:2x2
jax: 0.10.0
libtpu: 0.0.40
codegen_flags: <defaults>
</compile_context>

<pallas_src>
import jax
import jax.numpy as jnp
from jax import lax
from jax.experimental import pallas as pl
from jax.experimental.pallas import tpu as pltpu


# Parity order: p = 2*py + px.
_PARITY_ORDER = ((0, 0), (0, 1), (1, 0), (1, 1))

# Taps per output-pixel parity (py, px): (dy, dx, ky, kx) means the shifted
# window xp[h + dy, w + dx, :] multiplies ConvTranspose2d weight w[:, :, ky, kx].
_PARITY_TAPS = {
    (0, 0): ((1, 1, 1, 1), (0, 1, 3, 1), (1, 0, 1, 3), (0, 0, 3, 3)),
    (0, 1): ((1, 2, 1, 0), (1, 1, 1, 2), (0, 2, 3, 0), (0, 1, 3, 2)),
    (1, 0): ((2, 1, 0, 1), (1, 1, 2, 1), (2, 0, 0, 3), (1, 0, 2, 3)),
    (1, 1): ((2, 2, 0, 0), (2, 1, 0, 2), (1, 2, 2, 0), (1, 1, 2, 2)),
}


def _round_up(a, b):
    return (a + b - 1) // b * b


def _pick_row_tile(h, w, target_rows):
    """Largest divisor th of h with th*w <= target_rows (at least 1 row)."""
    best = 1
    for th in range(1, h + 1):
        if h % th == 0 and th * w <= max(target_rows, w):
            best = th
    return best


def _vmem_limit(est_bytes):
    return int(min(100 * 1024 * 1024, max(32 * 1024 * 1024, int(est_bytes * 1.5))))


def _make_convt_stats_kernel(W, Cin, th, taps_by_parity):
    """ConvTranspose2d(k=4,s=2,p=1) per-parity GEMMs + f32 channel sum/sumsq."""
    rows = th * W

    def kernel(x_ref, w_ref, y_ref, sum_ref, sq_ref):
        # x_ref:   (H+2, W+2, Cin)   bf16 padded image, VMEM-resident across i
        # w_ref:   (4, 4, Cin, Cp)   bf16 per-(parity, tap) weights, resident
        # y_ref:   (4, rows, Cp)     conv output tile (th full rows of H)
        # sum_ref: (1, Cp) f32       per-(n, i) partial channel sum
        # sq_ref:  (1, Cp) f32       per-(n, i) partial channel sum of squares
        r0 = pl.multiple_of(pl.program_id(1) * th, th)
        cp = y_ref.shape[-1]
        s = jnp.zeros((1, cp), jnp.float32)
        sq = jnp.zeros((1, cp), jnp.float32)
        for p, taps in enumerate(taps_by_parity):
            acc = None
            for t, (dy, dx, _, _) in enumerate(taps):
                lhs = x_ref[pl.ds(r0 + dy, th), dx:dx + W, :].reshape(rows, Cin)
                c = jnp.dot(lhs, w_ref[p, t], preferred_element_type=jnp.float32)
                acc = c if acc is None else acc + c
            y_ref[p] = acc.astype(y_ref.dtype)
            s = s + jnp.sum(acc, axis=0, keepdims=True)
            sq = sq + jnp.sum(acc * acc, axis=0, keepdims=True)
        sum_ref[...] = s
        sq_ref[...] = sq

    return kernel


def _bn_relu_kernel(y_ref, scale_ref, shift_ref, o_ref):
    """Fused batch-norm affine (precomputed f32 scale/shift) + ReLU, lane-dense."""
    y = y_ref[...].astype(jnp.float32)
    o_ref[...] = jnp.maximum(y * scale_ref[...] + shift_ref[...], 0.0).astype(o_ref.dtype)


def up_forward(x_nchw, w_t, gamma, beta, *, eps=1e-5, target_rows=2048,
               conv_dtype=jnp.bfloat16):
    """Pallas implementation of Up.forward with drop=False (Dropout -> Identity).

    conv_dtype: storage dtype for the conv intermediate (bf16 default per perf
    review: halves the dominant post-GEMM HBM traffic; stats stay f32).
    """
    N, Cin, H, W = x_nchw.shape
    Cin_w, Cout, KH, KW = w_t.shape
    assert Cin == Cin_w and KH == 4 and KW == 4
    assert W % 8 == 0, "TODO(synk): per-row matmul fallback for W % 8 != 0"

    compute_dtype = jnp.bfloat16
    Cout_pad = _round_up(Cout, 128)
    th = _pick_row_tile(H, W, target_rows)        # rows of H per grid step
    n_i = H // th
    rows = th * W
    M_count = 4 * N * H * W                       # true element count per channel
    conv_itemsize = jnp.dtype(conv_dtype).itemsize

    # ---- padded NHWC input (the only image-sized array XLA materializes) ----
    x_nhwc = jnp.transpose(x_nchw, (0, 2, 3, 1)).astype(compute_dtype)
    xp = jnp.pad(x_nhwc, ((0, 0), (1, 1), (1, 1), (0, 0)))      # (N, H+2, W+2, Cin)

    # ---- per-(parity, tap) weight matrices, Cout lane-padded, bf16 ----------
    taps_by_parity = tuple(_PARITY_TAPS[pp] for pp in _PARITY_ORDER)
    w_all = jnp.stack([
        jnp.stack([w_t[:, :, ky, kx] for (_, _, ky, kx) in taps], axis=0)
        for taps in taps_by_parity], axis=0)                    # (4, 4, Cin, Cout)
    w_all = jnp.pad(w_all, ((0, 0), (0, 0), (0, 0), (0, Cout_pad - Cout)))
    w_all = w_all.astype(compute_dtype)

    conv_kernel = _make_convt_stats_kernel(W, Cin, th, taps_by_parity)

    flops = 2 * M_count * Cout_pad * 4 * Cin
    bytes_accessed = (xp.size * 2 + w_all.size * 2
                      + 4 * N * H * W * Cout_pad * conv_itemsize
                      + 2 * N * n_i * Cout_pad * 4)
    cost = pl.CostEstimate(flops=int(flops), transcendentals=0,
                           bytes_accessed=int(bytes_accessed))

    est1 = (2 * (H + 2) * _round_up(W + 2, 8) * _round_up(Cin, 128) * 2   # image x2
            + 2 * 16 * _round_up(Cin, 8) * Cout_pad * 2                    # weights
            + 2 * 4 * rows * Cout_pad * conv_itemsize                      # conv blocks
            + 3 * rows * Cout_pad * 4                                      # f32 acc/temps
            + 4 * 8 * Cout_pad * 4)                                        # stats blocks

    conv_out, col_sum, col_sq = pl.pallas_call(
        conv_kernel,
        out_shape=(
            jax.ShapeDtypeStruct((4, N, H * W, Cout_pad), conv_dtype),
            jax.ShapeDtypeStruct((N, n_i, 1, Cout_pad), jnp.float32),
            jax.ShapeDtypeStruct((N, n_i, 1, Cout_pad), jnp.float32),
        ),
        grid_spec=pltpu.PrefetchScalarGridSpec(
            num_scalar_prefetch=0,
            grid=(N, n_i),
            in_specs=[
                # Full padded image, index ignores i -> DMA'd once per image.
                pl.BlockSpec((None, H + 2, W + 2, Cin), lambda n, i: (n, 0, 0, 0)),
                # Full weight tensor, constant index -> resident for the whole call.
                pl.BlockSpec((4, 4, Cin, Cout_pad), lambda n, i: (0, 0, 0, 0)),
            ],
            out_specs=(
                pl.BlockSpec((4, None, rows, Cout_pad), lambda n, i: (0, n, i, 0)),
                pl.BlockSpec((None, None, 1, Cout_pad), lambda n, i: (n, i, 0, 0)),
                pl.BlockSpec((None, None, 1, Cout_pad), lambda n, i: (n, i, 0, 0)),
            ),
        ),
        compiler_params=pltpu.CompilerParams(
            dimension_semantics=("parallel", "parallel"),
            vmem_limit_bytes=_vmem_limit(est1),
        ),
        cost_estimate=cost,
    )(xp, w_all)

    # ---- BatchNorm2d (training mode: batch statistics, biased variance) ----
    # TODO(synk): single-pass E[x^2]-E[x]^2 can cancel when |mean| >> std; the
    # clamp keeps it non-negative but a shifted/two-pass variance would be safer.
    total_sum = jnp.sum(col_sum, axis=(0, 1))[0]                 # (Cout_pad,)
    total_sq = jnp.sum(col_sq, axis=(0, 1))[0]
    mean = total_sum / M_count
    var = jnp.maximum(total_sq / M_count - mean * mean, 0.0)
    inv_std = lax.rsqrt(var + eps)
    gamma_p = jnp.pad(gamma.astype(jnp.float32), (0, Cout_pad - Cout))
    beta_p = jnp.pad(beta.astype(jnp.float32), (0, Cout_pad - Cout))
    scale = (gamma_p * inv_std)[None, :]                          # (1, Cout_pad)
    shift = (beta_p - mean * gamma_p * inv_std)[None, :]

    out_dtype = jnp.float32
    aliases = {0: 0} if jnp.dtype(conv_dtype) == jnp.dtype(out_dtype) else {}
    est2 = (2 * rows * Cout_pad * (conv_itemsize + 4)
            + rows * Cout_pad * 4 + 4 * Cout_pad * 4 * 4)

    bn_out = pl.pallas_call(
        _bn_relu_kernel,
        out_shape=jax.ShapeDtypeStruct((4, N, H * W, Cout_pad), out_dtype),
        grid_spec=pltpu.PrefetchScalarGridSpec(
            num_scalar_prefetch=0,
            grid=(4, N, n_i),
            in_specs=[
                pl.BlockSpec((None, None, rows, Cout_pad),
                             lambda p, n, i: (p, n, i, 0)),
                pl.BlockSpec((1, Cout_pad), lambda p, n, i: (0, 0)),
                pl.BlockSpec((1, Cout_pad), lambda p, n, i: (0, 0)),
            ],
            out_specs=pl.BlockSpec((None, None, rows, Cout_pad),
                                   lambda p, n, i: (p, n, i, 0)),
        ),
        compiler_params=pltpu.CompilerParams(
            dimension_semantics=("parallel", "parallel", "parallel"),
            vmem_limit_bytes=_vmem_limit(est2),
        ),
        input_output_aliases=aliases,
    )(conv_out, scale, shift)

    # ---- parity interleave + channel un-pad back to NCHW (one XLA pass) ----
    y = bn_out.reshape(2, 2, N, H, W, Cout_pad)[..., :Cout]
    y = jnp.transpose(y, (2, 5, 3, 0, 4, 1))                     # (N, C, H, 2, W, 2)
    return y.reshape(N, Cout, 2 * H, 2 * W)


# --------------------------- pure-JAX references -----------------------------

def _convt_ref(x, w_t):
    w_conv = jnp.transpose(w_t[:, :, ::-1, ::-1], (1, 0, 2, 3))  # (Cout, Cin, 4, 4)
    return lax.conv_general_dilated(
        x, w_conv, window_strides=(1, 1), padding=((2, 2), (2, 2)),
        lhs_dilation=(2, 2), rhs_dilation=(1, 1),
        dimension_numbers=("NCHW", "OIHW", "NCHW"))


def _bn_relu_ref(conv, gamma, beta, eps):
    mean = conv.mean(axis=(0, 2, 3), keepdims=True)
    var = conv.var(axis=(0, 2, 3), keepdims=True)
    norm = (conv - mean) / jnp.sqrt(var + eps)
    out = norm * gamma[None, :, None, None] + beta[None, :, None, None]
    return jnp.maximum(out, 0.0)


def reference_f32(x, w_t, gamma, beta, eps=1e-5):
    """Pure-JAX f32 reference for PyTorch Up.forward (training-mode BatchNorm)."""
    return _bn_relu_ref(_convt_ref(x, w_t), gamma, beta, eps)


def reference_matched(x, w_t, gamma, beta, eps=1e-5):
    """Same math with bf16-quantized conv inputs (mirrors the kernel's bf16 GEMM
    operands); the remaining gap to the kernel is the bf16 conv-intermediate
    storage and accumulation order."""
    xq = x.astype(jnp.bfloat16).astype(jnp.float32)
    wq = w_t.astype(jnp.bfloat16).astype(jnp.float32)
    return reference_f32(xq, wq, gamma, beta, eps)


if __name__ == "__main__":
    key = jax.random.PRNGKey(0)
    k1, k2, k3, k4 = jax.random.split(key, 4)

    N, Cin, H, W = 2, 4, 16, 16
    Cout = 8

    x = jax.random.normal(k1, (N, Cin, H, W), jnp.float32)
    # PyTorch ConvTranspose2d weight layout: (in_channel, up_channel, 4, 4)
    w_t = 0.1 * jax.random.normal(k2, (Cin, Cout, 4, 4), jnp.float32)
    gamma = 1.0 + 0.1 * jax.random.normal(k3, (Cout,), jnp.float32)
    beta = 0.1 * jax.random.normal(k4, (Cout,), jnp.float32)

    out = jax.block_until_ready(up_forward(x, w_t, gamma, beta))
    assert out.shape == (N, Cout, 2 * H, 2 * W), out.shape

    # Check vs a reference with the kernel's GEMM precision (bf16 operands,
    # f32 accumulation + stats); tolerance covers the bf16 conv-intermediate.
    err_m = float(jnp.max(jnp.abs(out - reference_matched(x, w_t, gamma, beta))))
    if err_m > 2.5e-2:
        raise AssertionError(f"mismatch vs matched-precision reference: {err_m}")

    # Loose check vs the full-f32 reference (adds bf16 input quantization).
    err_f = float(jnp.max(jnp.abs(out - reference_f32(x, w_t, gamma, beta))))
    if err_f > 6e-2:
        raise AssertionError(f"mismatch vs f32 reference: {err_f}")

    print("KERNEL_OK")
</pallas_src>

<mosaic_0001>
module attributes {stable_mosaic.version = 11 : i64} {
  func.func @kernel(%arg0: i32, %arg1: i32, %arg2: memref<1x18x18x4xbf16, #tpu.memory_space<vmem>>, %arg3: memref<4x4x4x128xbf16, #tpu.memory_space<vmem>>, %arg4: memref<4x1x256x128xbf16, #tpu.memory_space<vmem>>, %arg5: memref<1x1x1x128xf32, #tpu.memory_space<vmem>>, %arg6: memref<1x1x1x128xf32, #tpu.memory_space<vmem>>) attributes {dimension_semantics = [#tpu.dimension_semantics<parallel>, #tpu.dimension_semantics<parallel>], iteration_bounds = array<i64: 2, 1>, scalar_prefetch = 0 : i64, scratch_operands = 0 : i64, tpu.core_type = #tpu.core_type<tc>, window_params = [{transform_indices = @transform_0, window_bounds = array<i64: 1, 18, 18, 4>}, {pipeline_mode = #tpu.pipeline_mode<synchronous>, transform_indices = @transform_1, window_bounds = array<i64: 4, 4, 4, 128>}, {transform_indices = @transform_2, window_bounds = array<i64: 4, 1, 256, 128>}, {transform_indices = @transform_3, window_bounds = array<i64: 1, 1, 1, 128>}, {transform_indices = @transform_4, window_bounds = array<i64: 1, 1, 1, 128>}]} {
    %c16_i32 = arith.constant 16 : i32
    %0 = arith.muli %arg1, %c16_i32 : i32
    %1 = tpu.assume_multiple %0, 16 : i32
    %cst = arith.constant 0.000000e+00 : f32
    %2 = vector.broadcast %cst : f32 to vector<1x128xf32>
    %cst_0 = arith.constant 0.000000e+00 : f32
    %3 = vector.broadcast %cst_0 : f32 to vector<1x128xf32>
    %c1_i32 = arith.constant 1 : i32
    %4 = arith.addi %1, %c1_i32 : i32
    %c0 = arith.constant 0 : index
    %5 = arith.index_cast %4 : i32 to index
    %c1 = arith.constant 1 : index
    %c0_1 = arith.constant 0 : index
    %6 = vector.load %arg2[%c0, %5, %c1, %c0_1] : memref<1x18x18x4xbf16, #tpu.memory_space<vmem>>, vector<1x16x16x4xbf16>
    %7 = vector.shape_cast %6 : vector<1x16x16x4xbf16> to vector<16x16x4xbf16>
    %8 = vector.shape_cast %7 : vector<16x16x4xbf16> to vector<256x4xbf16>
    %c0_2 = arith.constant 0 : index
    %c0_3 = arith.constant 0 : index
    %c0_4 = arith.constant 0 : index
    %c0_5 = arith.constant 0 : index
    %9 = vector.load %arg3[%c0_2, %c0_3, %c0_4, %c0_5] : memref<4x4x4x128xbf16, #tpu.memory_space<vmem>>, vector<1x1x4x128xbf16>
    %10 = vector.shape_cast %9 : vector<1x1x4x128xbf16> to vector<4x128xbf16>
    %cst_6 = arith.constant dense<0.000000e+00> : vector<256x128xf32>
    %11 = tpu.matmul %8, %10, %cst_6 {dimension_numbers = #tpu.dot_dimension_numbers<[1], [0], [0], [1], [0, 0, 1, 1], [], []>} : vector<256x4xbf16>, vector<4x128xbf16>, vector<256x128xf32> -> vector<256x128xf32>
    %c0_i32 = arith.constant 0 : i32
    %12 = arith.addi %1, %c0_i32 : i32
    %c0_7 = arith.constant 0 : index
    %13 = arith.index_cast %12 : i32 to index
    %c1_8 = arith.constant 1 : index
    %c0_9 = arith.constant 0 : index
    %14 = vector.load %arg2[%c0_7, %13, %c1_8, %c0_9] : memref<1x18x18x4xbf16, #tpu.memory_space<vmem>>, vector<1x16x16x4xbf16>
    %15 = vector.shape_cast %14 : vector<1x16x16x4xbf16> to vector<16x16x4xbf16>
    %16 = vector.shape_cast %15 : vector<16x16x4xbf16> to vector<256x4xbf16>
    %c0_10 = arith.constant 0 : index
    %c1_11 = arith.constant 1 : index
    %c0_12 = arith.constant 0 : index
    %c0_13 = arith.constant 0 : index
    %17 = vector.load %arg3[%c0_10, %c1_11, %c0_12, %c0_13] : memref<4x4x4x128xbf16, #tpu.memory_space<vmem>>, vector<1x1x4x128xbf16>
    %18 = vector.shape_cast %17 : vector<1x1x4x128xbf16> to vector<4x128xbf16>
    %cst_14 = arith.constant dense<0.000000e+00> : vector<256x128xf32>
    %19 = tpu.matmul %16, %18, %cst_14 {dimension_numbers = #tpu.dot_dimension_numbers<[1], [0], [0], [1], [0, 0, 1, 1], [], []>} : vector<256x4xbf16>, vector<4x128xbf16>, vector<256x128xf32> -> vector<256x128xf32>
    %20 = arith.addf %11, %19 : vector<256x128xf32>
    %c1_i32_15 = arith.constant 1 : i32
    %21 = arith.addi %1, %c1_i32_15 : i32
    %c0_16 = arith.constant 0 : index
    %22 = arith.index_cast %21 : i32 to index
    %c0_17 = arith.constant 0 : index
    %c0_18 = arith.constant 0 : index
    %23 = vector.load %arg2[%c0_16, %22, %c0_17, %c0_18] : memref<1x18x18x4xbf16, #tpu.memory_space<vmem>>, vector<1x16x16x4xbf16>
    %24 = vector.shape_cast %23 : vector<1x16x16x4xbf16> to vector<16x16x4xbf16>
    %25 = vector.shape_cast %24 : vector<16x16x4xbf16> to vector<256x4xbf16>
    %c0_19 = arith.constant 0 : index
    %c2 = arith.constant 2 : index
    %c0_20 = arith.constant 0 : index
    %c0_21 = arith.constant 0 : index
    %26 = vector.load %arg3[%c0_19, %c2, %c0_20, %c0_21] : memref<4x4x4x128xbf16, #tpu.memory_space<vmem>>, vector<1x1x4x128xbf16>
    %27 = vector.shape_cast %26 : vector<1x1x4x128xbf16> to vector<4x128xbf16>
    %cst_22 = arith.constant dense<0.000000e+00> : vector<256x128xf32>
    %28 = tpu.matmul %25, %27, %cst_22 {dimension_numbers = #tpu.dot_dimension_numbers<[1], [0], [0], [1], [0, 0, 1, 1], [], []>} : vector<256x4xbf16>, vector<4x128xbf16>, vector<256x128xf32> -> vector<256x128xf32>
    %29 = arith.addf %20, %28 : vector<256x128xf32>
    %c0_i32_23 = arith.constant 0 : i32
    %30 = arith.addi %1, %c0_i32_23 : i32
    %c0_24 = arith.constant 0 : index
    %31 = arith.index_cast %30 : i32 to index
    %c0_25 = arith.constant 0 : index
    %c0_26 = arith.constant 0 : index
    %32 = vector.load %arg2[%c0_24, %31, %c0_25, %c0_26] : memref<1x18x18x4xbf16, #tpu.memory_space<vmem>>, vector<1x16x16x4xbf16>
    %33 = vector.shape_cast %32 : vector<1x16x16x4xbf16> to vector<16x16x4xbf16>
    %34 = vector.shape_cast %33 : vector<16x16x4xbf16> to vector<256x4xbf16>
    %c0_27 = arith.constant 0 : index
    %c3 = arith.constant 3 : index
    %c0_28 = arith.constant 0 : index
    %c0_29 = arith.constant 0 : index
    %35 = vector.load %arg3[%c0_27, %c3, %c0_28, %c0_29] : memref<4x4x4x128xbf16, #tpu.memory_space<vmem>>, vector<1x1x4x128xbf16>
    %36 = vector.shape_cast %35 : vector<1x1x4x128xbf16> to vector<4x128xbf16>
    %cst_30 = arith.constant dense<0.000000e+00> : vector<256x128xf32>
    %37 = tpu.matmul %34, %36, %cst_30 {dimension_numbers = #tpu.dot_dimension_numbers<[1], [0], [0], [1], [0, 0, 1, 1], [], []>} : vector<256x4xbf16>, vector<4x128xbf16>, vector<256x128xf32> -> vector<256x128xf32>
    %38 = arith.addf %29, %37 : vector<256x128xf32>
    %39 = arith.truncf %38 : vector<256x128xf32> to vector<256x128xbf16>
    %c0_31 = arith.constant 0 : index
    %c0_32 = arith.constant 0 : index
    %c0_33 = arith.constant 0 : index
    %c0_34 = arith.constant 0 : index
    %40 = vector.load %arg4[%c0_31, %c0_32, %c0_33, %c0_34] : memref<4x1x256x128xbf16, #tpu.memory_space<vmem>>, vector<1x1x256x128xbf16>
    %41 = vector.shape_cast %40 : vector<1x1x256x128xbf16> to vector<256x128xbf16>
    %42 = vector.shape_cast %39 : vector<256x128xbf16> to vector<1x1x256x128xbf16>
    tpu.vector_store %arg4[%c0_31, %c0_32, %c0_33, %c0_34], %42 {strides = array<i32>} : memref<4x1x256x128xbf16, #tpu.memory_space<vmem>>, vector<1x1x256x128xbf16>,
    %cst_35 = arith.constant dense<0.000000e+00> : vector<128xf32>
    %43 = vector.multi_reduction <add>, %38, %cst_35 [0] : vector<256x128xf32> to vector<128xf32>
    %44 = vector.shape_cast %43 : vector<128xf32> to vector<1x128xf32>
    %45 = arith.addf %2, %44 : vector<1x128xf32>
    %46 = arith.mulf %38, %38 : vector<256x128xf32>
    %cst_36 = arith.constant dense<0.000000e+00> : vector<128xf32>
    %47 = vector.multi_reduction <add>, %46, %cst_36 [0] : vector<256x128xf32> to vector<128xf32>
    %48 = vector.shape_cast %47 : vector<128xf32> to vector<1x128xf32>
    %49 = arith.addf %3, %48 : vector<1x128xf32>
    %c1_i32_37 = arith.constant 1 : i32
    %50 = arith.addi %1, %c1_i32_37 : i32
    %c0_38 = arith.constant 0 : index
    %51 = arith.index_cast %50 : i32 to index
    %c2_39 = arith.constant 2 : index
    %c0_40 = arith.constant 0 : index
    %52 = vector.load %arg2[%c0_38, %51, %c2_39, %c0_40] : memref<1x18x18x4xbf16, #tpu.memory_space<vmem>>, vector<1x16x16x4xbf16>
    %53 = vector.shape_cast %52 : vector<1x16x16x4xbf16> to vector<16x16x4xbf16>
    %54 = vector.shape_cast %53 : vector<16x16x4xbf16> to vector<256x4xbf16>
    %c1_41 = arith.constant 1 : index
    %c0_42 = arith.constant 0 : index
    %c0_43 = arith.constant 0 : index
    %c0_44 = arith.constant 0 : index
    %55 = vector.load %arg3[%c1_41, %c0_42, %c0_43, %c0_44] : memref<4x4x4x128xbf16, #tpu.memory_space<vmem>>, vector<1x1x4x128xbf16>
    %56 = vector.shape_cast %55 : vector<1x1x4x128xbf16> to vector<4x128xbf16>
    %cst_45 = arith.constant dense<0.000000e+00> : vector<256x128xf32>
    %57 = tpu.matmul %54, %56, %cst_45 {dimension_numbers = #tpu.dot_dimension_numbers<[1], [0], [0], [1], [0, 0, 1, 1], [], []>} : vector<256x4xbf16>, vector<4x128xbf16>, vector<256x128xf32> -> vector<256x128xf32>
    %c1_i32_46 = arith.constant 1 : i32
    %58 = arith.addi %1, %c1_i32_46 : i32
    %c0_47 = arith.constant 0 : index
    %59 = arith.index_cast %58 : i32 to index
    %c1_48 = arith.constant 1 : index
    %c0_49 = arith.constant 0 : index
    %60 = vector.load %arg2[%c0_47, %59, %c1_48, %c0_49] : memref<1x18x18x4xbf16, #tpu.memory_space<vmem>>, vector<1x16x16x4xbf16>
    %61 = vector.shape_cast %60 : vector<1x16x16x4xbf16> to vector<16x16x4xbf16>
    %62 = vector.shape_cast %61 : vector<16x16x4xbf16> to vector<256x4xbf16>
    %c1_50 = arith.constant 1 : index
    %c1_51 = arith.constant 1 : index
    %c0_52 = arith.constant 0 : index
    %c0_53 = arith.constant 0 : index
    %63 = vector.load %arg3[%c1_50, %c1_51, %c0_52, %c0_53] : memref<4x4x4x128xbf16, #tpu.memory_space<vmem>>, vector<1x1x4x128xbf16>
    %64 = vector.shape_cast %63 : vector<1x1x4x128xbf16> to vector<4x128xbf16>
    %cst_54 = arith.constant dense<0.000000e+00> : vector<256x128xf32>
    %65 = tpu.matmul %62, %64, %cst_54 {dimension_numbers = #tpu.dot_dimension_numbers<[1], [0], [0], [1], [0, 0, 1, 1], [], []>} : vector<256x4xbf16>, vector<4x128xbf16>, vector<256x128xf32> -> vector<256x128xf32>
    %66 = arith.addf %57, %65 : vector<256x128xf32>
    %c0_i32_55 = arith.constant 0 : i32
    %67 = arith.addi %1, %c0_i32_55 : i32
    %c0_56 = arith.constant 0 : index
    %68 = arith.index_cast %67 : i32 to index
    %c2_57 = arith.constant 2 : index
    %c0_58 = arith.constant 0 : index
    %69 = vector.load %arg2[%c0_56, %68, %c2_57, %c0_58] : memref<1x18x18x4xbf16, #tpu.memory_space<vmem>>, vector<1x16x16x4xbf16>
    %70 = vector.shape_cast %69 : vector<1x16x16x4xbf16> to vector<16x16x4xbf16>
    %71 = vector.shape_cast %70 : vector<16x16x4xbf16> to vector<256x4xbf16>
    %c1_59 = arith.constant 1 : index
    %c2_60 = arith.constant 2 : index
    %c0_61 = arith.constant 0 : index
    %c0_62 = arith.constant 0 : index
    %72 = vector.load %arg3[%c1_59, %c2_60, %c0_61, %c0_62] : memref<4x4x4x128xbf16, #tpu.memory_space<vmem>>, vector<1x1x4x128xbf16>
    %73 = vector.shape_cast %72 : vector<1x1x4x128xbf16> to vector<4x128xbf16>
    %cst_63 = arith.constant dense<0.000000e+00> : vector<256x128xf32>
    %74 = tpu.matmul %71, %73, %cst_63 {dimension_numbers = #tpu.dot_dimension_numbers<[1], [0], [0], [1], [0, 0, 1, 1], [], []>} : vector<256x4xbf16>, vector<4x128xbf16>, vector<256x128xf32> -> vector<256x128xf32>
    %75 = arith.addf %66, %74 : vector<256x128xf32>
    %c0_i32_64 = arith.constant 0 : i32
    %76 = arith.addi %1, %c0_i32_64 : i32
    %c0_65 = arith.constant 0 : index
    %77 = arith.index_cast %76 : i32 to index
    %c1_66 = arith.constant 1 : index
    %c0_67 = arith.constant 0 : index
    %78 = vector.load %arg2[%c0_65, %77, %c1_66, %c0_67] : memref<1x18x18x4xbf16, #tpu.memory_space<vmem>>, vector<1x16x16x4xbf16>
    %79 = vector.shape_cast %78 : vector<1x16x16x4xbf16> to vector<16x16x4xbf16>
    %80 = vector.shape_cast %79 : vector<16x16x4xbf16> to vector<256x4xbf16>
    %c1_68 = arith.constant 1 : index
    %c3_69 = arith.constant 3 : index
    %c0_70 = arith.constant 0 : index
    %c0_71 = arith.constant 0 : index
    %81 = vector.load %arg3[%c1_68, %c3_69, %c0_70, %c0_71] : memref<4x4x4x128xbf16, #tpu.memory_space<vmem>>, vector<1x1x4x128xbf16>
    %82 = vector.shape_cast %81 : vector<1x1x4x128xbf16> to vector<4x128xbf16>
    %cst_72 = arith.constant dense<0.000000e+00> : vector<256x128xf32>
    %83 = tpu.matmul %80, %82, %cst_72 {dimension_numbers = #tpu.dot_dimension_numbers<[1], [0], [0], [1], [0, 0, 1, 1], [], []>} : vector<256x4xbf16>, vector<4x128xbf16>, vector<256x128xf32> -> vector<256x128xf32>
    %84 = arith.addf %75, %83 : vector<256x128xf32>
    %85 = arith.truncf %84 : vector<256x128xf32> to vector<256x128xbf16>
    %c1_73 = arith.constant 1 : index
    %c0_74 = arith.constant 0 : index
    %c0_75 = arith.constant 0 : index
    %c0_76 = arith.constant 0 : index
    %86 = vector.load %arg4[%c1_73, %c0_74, %c0_75, %c0_76] : memref<4x1x256x128xbf16, #tpu.memory_space<vmem>>, vector<1x1x256x128xbf16>
    %87 = vector.shape_cast %86 : vector<1x1x256x128xbf16> to vector<256x128xbf16>
    %88 = vector.shape_cast %85 : vector<256x128xbf16> to vector<1x1x256x128xbf16>
    tpu.vector_store %arg4[%c1_73, %c0_74, %c0_75, %c0_76], %88 {strides = array<i32>} : memref<4x1x256x128xbf16, #tpu.memory_space<vmem>>, vector<1x1x256x128xbf16>,
    %cst_77 = arith.constant dense<0.000000e+00> : vector<128xf32>
    %89 = vector.multi_reduction <add>, %84, %cst_77 [0] : vector<256x128xf32> to vector<128xf32>
    %90 = vector.shape_cast %89 : vector<128xf32> to vector<1x128xf32>
    %91 = arith.addf %45, %90 : vector<1x128xf32>
    %92 = arith.mulf %84, %84 : vector<256x128xf32>
    %cst_78 = arith.constant dense<0.000000e+00> : vector<128xf32>
    %93 = vector.multi_reduction <add>, %92, %cst_78 [0] : vector<256x128xf32> to vector<128xf32>
    %94 = vector.shape_cast %93 : vector<128xf32> to vector<1x128xf32>
    %95 = arith.addf %49, %94 : vector<1x128xf32>
    %c2_i32 = arith.constant 2 : i32
    %96 = arith.addi %1, %c2_i32 : i32
    %c0_79 = arith.constant 0 : index
    %97 = arith.index_cast %96 : i32 to index
    %c1_80 = arith.constant 1 : index
    %c0_81 = arith.constant 0 : index
    %98 = vector.load %arg2[%c0_79, %97, %c1_80, %c0_81] : memref<1x18x18x4xbf16, #tpu.memory_space<vmem>>, vector<1x16x16x4xbf16>
    %99 = vector.shape_cast %98 : vector<1x16x16x4xbf16> to vector<16x16x4xbf16>
    %100 = vector.shape_cast %99 : vector<16x16x4xbf16> to vector<256x4xbf16>
    %c2_82 = arith.constant 2 : index
    %c0_83 = arith.constant 0 : index
    %c0_84 = arith.constant 0 : index
    %c0_85 = arith.constant 0 : index
    %101 = vector.load %arg3[%c2_82, %c0_83, %c0_84, %c0_85] : memref<4x4x4x128xbf16, #tpu.memory_space<vmem>>, vector<1x1x4x128xbf16>
    %102 = vector.shape_cast %101 : vector<1x1x4x128xbf16> to vector<4x128xbf16>
    %cst_86 = arith.constant dense<0.000000e+00> : vector<256x128xf32>
    %103 = tpu.matmul %100, %102, %cst_86 {dimension_numbers = #tpu.dot_dimension_numbers<[1], [0], [0], [1], [0, 0, 1, 1], [], []>} : vector<256x4xbf16>, vector<4x128xbf16>, vector<256x128xf32> -> vector<256x128xf32>
    %c1_i32_87 = arith.constant 1 : i32
    %104 = arith.addi %1, %c1_i32_87 : i32
    %c0_88 = arith.constant 0 : index
    %105 = arith.index_cast %104 : i32 to index
    %c1_89 = arith.constant 1 : index
    %c0_90 = arith.constant 0 : index
    %106 = vector.load %arg2[%c0_88, %105, %c1_89, %c0_90] : memref<1x18x18x4xbf16, #tpu.memory_space<vmem>>, vector<1x16x16x4xbf16>
    %107 = vector.shape_cast %106 : vector<1x16x16x4xbf16> to vector<16x16x4xbf16>
    %108 = vector.shape_cast %107 : vector<16x16x4xbf16> to vector<256x4xbf16>
    %c2_91 = arith.constant 2 : index
    %c1_92 = arith.constant 1 : index
    %c0_93 = arith.constant 0 : index
    %c0_94 = arith.constant 0 : index
    %109 = vector.load %arg3[%c2_91, %c1_92, %c0_93, %c0_94] : memref<4x4x4x128xbf16, #tpu.memory_space<vmem>>, vector<1x1x4x128xbf16>
    %110 = vector.shape_cast %109 : vector<1x1x4x128xbf16> to vector<4x128xbf16>
    %cst_95 = arith.constant dense<0.000000e+00> : vector<256x128xf32>
    %111 = tpu.matmul %108, %110, %cst_95 {dimension_numbers = #tpu.dot_dimension_numbers<[1], [0], [0], [1], [0, 0, 1, 1], [], []>} : vector<256x4xbf16>, vector<4x128xbf16>, vector<256x128xf32> -> vector<256x128xf32>
    %112 = arith.addf %103, %111 : vector<256x128xf32>
    %c2_i32_96 = arith.constant 2 : i32
    %113 = arith.addi %1, %c2_i32_96 : i32
    %c0_97 = arith.constant 0 : index
    %114 = arith.index_cast %113 : i32 to index
    %c0_98 = arith.constant 0 : index
    %c0_99 = arith.constant 0 : index
    %115 = vector.load %arg2[%c0_97, %114, %c0_98, %c0_99] : memref<1x18x18x4xbf16, #tpu.memory_space<vmem>>, vector<1x16x16x4xbf16>
    %116 = vector.shape_cast %115 : vector<1x16x16x4xbf16> to vector<16x16x4xbf16>
    %117 = vector.shape_cast %116 : vector<16x16x4xbf16> to vector<256x4xbf16>
    %c2_100 = arith.constant 2 : index
    %c2_101 = arith.constant 2 : index
    %c0_102 = arith.constant 0 : index
    %c0_103 = arith.constant 0 : index
    %118 = vector.load %arg3[%c2_100, %c2_101, %c0_102, %c0_103] : memref<4x4x4x128xbf16, #tpu.memory_space<vmem>>, vector<1x1x4x128xbf16>
    %119 = vector.shape_cast %118 : vector<1x1x4x128xbf16> to vector<4x128xbf16>
    %cst_104 = arith.constant dense<0.000000e+00> : vector<256x128xf32>
    %120 = tpu.matmul %117, %119, %cst_104 {dimension_numbers = #tpu.dot_dimension_numbers<[1], [0], [0], [1], [0, 0, 1, 1], [], []>} : vector<256x4xbf16>, vector<4x128xbf16>, vector<256x128xf32> -> vector<256x128xf32>
    %121 = arith.addf %112, %120 : vector<256x128xf32>
    %c1_i32_105 = arith.constant 1 : i32
    %122 = arith.addi %1, %c1_i32_105 : i32
    %c0_106 = arith.constant 0 : index
    %123 = arith.index_cast %122 : i32 to index
    %c0_107 = arith.constant 0 : index
    %c0_108 = arith.constant 0 : index
    %124 = vector.load %arg2[%c0_106, %123, %c0_107, %c0_108] : memref<1x18x18x4xbf16, #tpu.memory_space<vmem>>, vector<1x16x16x4xbf16>
    %125 = vector.shape_cast %124 : vector<1x16x16x4xbf16> to vector<16x16x4xbf16>
    %126 = vector.shape_cast %125 : vector<16x16x4xbf16> to vector<256x4xbf16>
    %c2_109 = arith.constant 2 : index
    %c3_110 = arith.constant 3 : index
    %c0_111 = arith.constant 0 : index
    %c0_112 = arith.constant 0 : index
    %127 = vector.load %arg3[%c2_109, %c3_110, %c0_111, %c0_112] : memref<4x4x4x128xbf16, #tpu.memory_space<vmem>>, vector<1x1x4x128xbf16>
    %128 = vector.shape_cast %127 : vector<1x1x4x128xbf16> to vector<4x128xbf16>
    %cst_113 = arith.constant dense<0.000000e+00> : vector<256x128xf32>
    %129 = tpu.matmul %126, %128, %cst_113 {dimension_numbers = #tpu.dot_dimension_numbers<[1], [0], [0], [1], [0, 0, 1, 1], [], []>} : vector<256x4xbf16>, vector<4x128xbf16>, vector<256x128xf32> -> vector<256x128xf32>
    %130 = arith.addf %121, %129 : vector<256x128xf32>
    %131 = arith.truncf %130 : vector<256x128xf32> to vector<256x128xbf16>
    %c2_114 = arith.constant 2 : index
    %c0_115 = arith.constant 0 : index
    %c0_116 = arith.constant 0 : index
    %c0_117 = arith.constant 0 : index
    %132 = vector.load %arg4[%c2_114, %c0_115, %c0_116, %c0_117] : memref<4x1x256x128xbf16, #tpu.memory_space<vmem>>, vector<1x1x256x128xbf16>
    %133 = vector.shape_cast %132 : vector<1x1x256x128xbf16> to vector<256x128xbf16>
    %134 = vector.shape_cast %131 : vector<256x128xbf16> to vector<1x1x256x128xbf16>
    tpu.vector_store %arg4[%c2_114, %c0_115, %c0_116, %c0_117], %134 {strides = array<i32>} : memref<4x1x256x128xbf16, #tpu.memory_space<vmem>>, vector<1x1x256x128xbf16>,
    %cst_118 = arith.constant dense<0.000000e+00> : vector<128xf32>
    %135 = vector.multi_reduction <add>, %130, %cst_118 [0] : vector<256x128xf32> to vector<128xf32>
    %136 = vector.shape_cast %135 : vector<128xf32> to vector<1x128xf32>
    %137 = arith.addf %91, %136 : vector<1x128xf32>
    %138 = arith.mulf %130, %130 : vector<256x128xf32>
    %cst_119 = arith.constant dense<0.000000e+00> : vector<128xf32>
    %139 = vector.multi_reduction <add>, %138, %cst_119 [0] : vector<256x128xf32> to vector<128xf32>
    %140 = vector.shape_cast %139 : vector<128xf32> to vector<1x128xf32>
    %141 = arith.addf %95, %140 : vector<1x128xf32>
    %c2_i32_120 = arith.constant 2 : i32
    %142 = arith.addi %1, %c2_i32_120 : i32
    %c0_121 = arith.constant 0 : index
    %143 = arith.index_cast %142 : i32 to index
    %c2_122 = arith.constant 2 : index
    %c0_123 = arith.constant 0 : index
    %144 = vector.load %arg2[%c0_121, %143, %c2_122, %c0_123] : memref<1x18x18x4xbf16, #tpu.memory_space<vmem>>, vector<1x16x16x4xbf16>
    %145 = vector.shape_cast %144 : vector<1x16x16x4xbf16> to vector<16x16x4xbf16>
    %146 = vector.shape_cast %145 : vector<16x16x4xbf16> to vector<256x4xbf16>
    %c3_124 = arith.constant 3 : index
    %c0_125 = arith.constant 0 : index
    %c0_126 = arith.constant 0 : index
    %c0_127 = arith.constant 0 : index
    %147 = vector.load %arg3[%c3_124, %c0_125, %c0_126, %c0_127] : memref<4x4x4x128xbf16, #tpu.memory_space<vmem>>, vector<1x1x4x128xbf16>
    %148 = vector.shape_cast %147 : vector<1x1x4x128xbf16> to vector<4x128xbf16>
    %cst_128 = arith.constant dense<0.000000e+00> : vector<256x128xf32>
    %149 = tpu.matmul %146, %148, %cst_128 {dimension_numbers = #tpu.dot_dimension_numbers<[1], [0], [0], [1], [0, 0, 1, 1], [], []>} : vector<256x4xbf16>, vector<4x128xbf16>, vector<256x128xf32> -> vector<256x128xf32>
    %c2_i32_129 = arith.constant 2 : i32
    %150 = arith.addi %1, %c2_i32_129 : i32
    %c0_130 = arith.constant 0 : index
    %151 = arith.index_cast %150 : i32 to index
    %c1_131 = arith.constant 1 : index
    %c0_132 = arith.constant 0 : index
    %152 = vector.load %arg2[%c0_130, %151, %c1_131, %c0_132] : memref<1x18x18x4xbf16, #tpu.memory_space<vmem>>, vector<1x16x16x4xbf16>
    %153 = vector.shape_cast %152 : vector<1x16x16x4xbf16> to vector<16x16x4xbf16>
    %154 = vector.shape_cast %153 : vector<16x16x4xbf16> to vector<256x4xbf16>
    %c3_133 = arith.constant 3 : index
    %c1_134 = arith.constant 1 : index
    %c0_135 = arith.constant 0 : index
    %c0_136 = arith.constant 0 : index
    %155 = vector.load %arg3[%c3_133, %c1_134, %c0_135, %c0_136] : memref<4x4x4x128xbf16, #tpu.memory_space<vmem>>, vector<1x1x4x128xbf16>
    %156 = vector.shape_cast %155 : vector<1x1x4x128xbf16> to vector<4x128xbf16>
    %cst_137 = arith.constant dense<0.000000e+00> : vector<256x128xf32>
    %157 = tpu.matmul %154, %156, %cst_137 {dimension_numbers = #tpu.dot_dimension_numbers<[1], [0], [0], [1], [0, 0, 1, 1], [], []>} : vector<256x4xbf16>, vector<4x128xbf16>, vector<256x128xf32> -> vector<256x128xf32>
    %158 = arith.addf %149, %157 : vector<256x128xf32>
    %c1_i32_138 = arith.constant 1 : i32
    %159 = arith.addi %1, %c1_i32_138 : i32
    %c0_139 = arith.constant 0 : index
    %160 = arith.index_cast %159 : i32 to index
    %c2_140 = arith.constant 2 : index
    %c0_141 = arith.constant 0 : index
    %161 = vector.load %arg2[%c0_139, %160, %c2_140, %c0_141] : memref<1x18x18x4xbf16, #tpu.memory_space<vmem>>, vector<1x16x16x4xbf16>
    %162 = vector.shape_cast %161 : vector<1x16x16x4xbf16> to vector<16x16x4xbf16>
    %163 = vector.shape_cast %162 : vector<16x16x4xbf16> to vector<256x4xbf16>
    %c3_142 = arith.constant 3 : index
    %c2_143 = arith.constant 2 : index
    %c0_144 = arith.constant 0 : index
    %c0_145 = arith.constant 0 : index
    %164 = vector.load %arg3[%c3_142, %c2_143, %c0_144, %c0_145] : memref<4x4x4x128xbf16, #tpu.memory_space<vmem>>, vector<1x1x4x128xbf16>
    %165 = vector.shape_cast %164 : vector<1x1x4x128xbf16> to vector<4x128xbf16>
    %cst_146 = arith.constant dense<0.000000e+00> : vector<256x128xf32>
    %166 = tpu.matmul %163, %165, %cst_146 {dimension_numbers = #tpu.dot_dimension_numbers<[1], [0], [0], [1], [0, 0, 1, 1], [], []>} : vector<256x4xbf16>, vector<4x128xbf16>, vector<256x128xf32> -> vector<256x128xf32>
    %167 = arith.addf %158, %166 : vector<256x128xf32>
    %c1_i32_147 = arith.constant 1 : i32
    %168 = arith.addi %1, %c1_i32_147 : i32
    %c0_148 = arith.constant 0 : index
    %169 = arith.index_cast %168 : i32 to index
    %c1_149 = arith.constant 1 : index
    %c0_150 = arith.constant 0 : index
    %170 = vector.load %arg2[%c0_148, %169, %c1_149, %c0_150] : memref<1x18x18x4xbf16, #tpu.memory_space<vmem>>, vector<1x16x16x4xbf16>
    %171 = vector.shape_cast %170 : vector<1x16x16x4xbf16> to vector<16x16x4xbf16>
    %172 = vector.shape_cast %171 : vector<16x16x4xbf16> to vector<256x4xbf16>
    %c3_151 = arith.constant 3 : index
    %c3_152 = arith.constant 3 : index
    %c0_153 = arith.constant 0 : index
    %c0_154 = arith.constant 0 : index
    %173 = vector.load %arg3[%c3_151, %c3_152, %c0_153, %c0_154] : memref<4x4x4x128xbf16, #tpu.memory_space<vmem>>, vector<1x1x4x128xbf16>
    %174 = vector.shape_cast %173 : vector<1x1x4x128xbf16> to vector<4x128xbf16>
    %cst_155 = arith.constant dense<0.000000e+00> : vector<256x128xf32>
    %175 = tpu.matmul %172, %174, %cst_155 {dimension_numbers = #tpu.dot_dimension_numbers<[1], [0], [0], [1], [0, 0, 1, 1], [], []>} : vector<256x4xbf16>, vector<4x128xbf16>, vector<256x128xf32> -> vector<256x128xf32>
    %176 = arith.addf %167, %175 : vector<256x128xf32>
    %177 = arith.truncf %176 : vector<256x128xf32> to vector<256x128xbf16>
    %c3_156 = arith.constant 3 : index
    %c0_157 = arith.constant 0 : index
    %c0_158 = arith.constant 0 : index
    %c0_159 = arith.constant 0 : index
    %178 = vector.load %arg4[%c3_156, %c0_157, %c0_158, %c0_159] : memref<4x1x256x128xbf16, #tpu.memory_space<vmem>>, vector<1x1x256x128xbf16>
    %179 = vector.shape_cast %178 : vector<1x1x256x128xbf16> to vector<256x128xbf16>
    %180 = vector.shape_cast %177 : vector<256x128xbf16> to vector<1x1x256x128xbf16>
    tpu.vector_store %arg4[%c3_156, %c0_157, %c0_158, %c0_159], %180 {strides = array<i32>} : memref<4x1x256x128xbf16, #tpu.memory_space<vmem>>, vector<1x1x256x128xbf16>,
    %cst_160 = arith.constant dense<0.000000e+00> : vector<128xf32>
    %181 = vector.multi_reduction <add>, %176, %cst_160 [0] : vector<256x128xf32> to vector<128xf32>
    %182 = vector.shape_cast %181 : vector<128xf32> to vector<1x128xf32>
    %183 = arith.addf %137, %182 : vector<1x128xf32>
    %184 = arith.mulf %176, %176 : vector<256x128xf32>
    %cst_161 = arith.constant dense<0.000000e+00> : vector<128xf32>
    %185 = vector.multi_reduction <add>, %184, %cst_161 [0] : vector<256x128xf32> to vector<128xf32>
    %186 = vector.shape_cast %185 : vector<128xf32> to vector<1x128xf32>
    %187 = arith.addf %141, %186 : vector<1x128xf32>
    %c0_162 = arith.constant 0 : index
    %c0_163 = arith.constant 0 : index
    %c0_164 = arith.constant 0 : index
    %c0_165 = arith.constant 0 : index
    %188 = vector.load %arg5[%c0_162, %c0_163, %c0_164, %c0_165] : memref<1x1x1x128xf32, #tpu.memory_space<vmem>>, vector<1x1x1x128xf32>
    %189 = vector.shape_cast %188 : vector<1x1x1x128xf32> to vector<1x128xf32>
    %190 = vector.shape_cast %183 : vector<1x128xf32> to vector<1x1x1x128xf32>
    tpu.vector_store %arg5[%c0_162, %c0_163, %c0_164, %c0_165], %190 {strides = array<i32>} : memref<1x1x1x128xf32, #tpu.memory_space<vmem>>, vector<1x1x1x128xf32>,
    %c0_166 = arith.constant 0 : index
    %c0_167 = arith.constant 0 : index
    %c0_168 = arith.constant 0 : index
    %c0_169 = arith.constant 0 : index
    %191 = vector.load %arg6[%c0_166, %c0_167, %c0_168, %c0_169] : memref<1x1x1x128xf32, #tpu.memory_space<vmem>>, vector<1x1x1x128xf32>
    %192 = vector.shape_cast %191 : vector<1x1x1x128xf32> to vector<1x128xf32>
    %193 = vector.shape_cast %187 : vector<1x128xf32> to vector<1x1x1x128xf32>
    tpu.vector_store %arg6[%c0_166, %c0_167, %c0_168, %c0_169], %193 {strides = array<i32>} : memref<1x1x1x128xf32, #tpu.memory_space<vmem>>, vector<1x1x1x128xf32>,
    return
  }
  func.func @transform_0(%arg0: i32, %arg1: i32) -> (i32, i32, i32, i32) {
    %c0_i32 = arith.constant 0 : i32
    %c0_i32_0 = arith.constant 0 : i32
    %c0_i32_1 = arith.constant 0 : i32
    %c0_i32_2 = arith.constant 0 : i32
    return %arg0, %c0_i32, %c0_i32_0, %c0_i32_1 : i32, i32, i32, i32
  }
  func.func @transform_1(%arg0: i32, %arg1: i32) -> (i32, i32, i32, i32) {
    %c0_i32 = arith.constant 0 : i32
    %c0_i32_0 = arith.constant 0 : i32
    %c0_i32_1 = arith.constant 0 : i32
    %c0_i32_2 = arith.constant 0 : i32
    %c0_i32_3 = arith.constant 0 : i32
    return %c0_i32, %c0_i32_0, %c0_i32_1, %c0_i32_2 : i32, i32, i32, i32
  }
  func.func @transform_2(%arg0: i32, %arg1: i32) -> (i32, i32, i32, i32) {
    %c0_i32 = arith.constant 0 : i32
    %c0_i32_0 = arith.constant 0 : i32
    %c0_i32_1 = arith.constant 0 : i32
    return %c0_i32, %arg0, %arg1, %c0_i32_0 : i32, i32, i32, i32
  }
  func.func @transform_3(%arg0: i32, %arg1: i32) -> (i32, i32, i32, i32) {
    %c0_i32 = arith.constant 0 : i32
    %c0_i32_0 = arith.constant 0 : i32
    %c0_i32_1 = arith.constant 0 : i32
    return %arg0, %arg1, %c0_i32, %c0_i32_0 : i32, i32, i32, i32
  }
  func.func @transform_4(%arg0: i32, %arg1: i32) -> (i32, i32, i32, i32) {
    %c0_i32 = arith.constant 0 : i32
    %c0_i32_0 = arith.constant 0 : i32
    %c0_i32_1 = arith.constant 0 : i32
    return %arg0, %arg1, %c0_i32, %c0_i32_0 : i32, i32, i32, i32
  }
}

</mosaic_0001>

<llo_original>
// kernel: tpu_custom_call.1
$region0: #{tpu_custom_call.1}
  #allocation0 [shape = 'u32[]', space=smem, size = 0x4, offset = 0x4, fixed_abs, tag = 'smem constant byte address 0x4 - core index']
  #allocation1 [shape = 'u32[72,128]{1,0:T(1,128)}', space=vmem, size = 0x9000, scoped, tag = 'internal scratch']
  #allocation7 [shape = 's32[]', space=sflag, size = 0x4, offset = 0, fixed_abs, tag = 'sflag constant byte address 0x0 - dummy sync flag']
  %s0 = inlined_call_operand.vmem [shape: bf16[2,18,18,4], index: 0, kind: input, shape index: {}]
  %s1 = inlined_call_operand.vmem [shape: bf16[4,4,4,128], index: 1, kind: input, shape index: {}]
  %s2 = inlined_call_operand.hbm [shape: bf16[4,2,256,128], index: 2, kind: output, shape index: {0}]
  %s3 = inlined_call_operand.hbm [shape: f32[2,1,1,128], index: 3, kind: output, shape index: {1}]
  %s4 = inlined_call_operand.hbm [shape: f32[2,1,1,128], index: 4, kind: output, shape index: {2}]
  %5 = xla_tuple %s2, %s3, %s4
  %s6 = sld [smem:[#allocation0]]
  $region57: #{tpu_custom_call.1} parent=0
    _
  %s8 = ssub.s32 1, %s6
  %s9 = scalar_select 0, %s8, %s6
  $region1: #{tpu_custom_call.1} parent=0
    #allocation2 [shape = 'u8[524288]{0}', space=vmem, size = 0x80000, scoped, tag = 'output window, operand 0']
    #allocation3 [shape = 's32[2]{0}', space=sflag, size = 0x8, scoped, tag = 'scoped memory for tpu_custom_call.1']
    #allocation4 [shape = 'u8[1024]{0}', space=vmem, size = 0x400, scoped, tag = 'output window, operand 1']
    #allocation5 [shape = 's32[2]{0}', space=sflag, size = 0x8, scoped, tag = 'scoped memory for tpu_custom_call.1']
    #allocation6 [shape = 'u8[1024]{0}', space=vmem, size = 0x400, scoped, tag = 'output window, operand 2']
    %10 = vsyncpa [#allocation3], 0
    %s11 = scalar_lea.sflag [#allocation3], 1
    %12 = vsyncpa %s11, 0
    %13 = vsyncpa [#allocation5], 0
    %s14 = scalar_lea.sflag [#allocation5], 1
    %15 = vsyncpa %s14, 0
    loop: start=0, step=1, limit=4
    $region2: #{tpu_custom_call.1} parent=1 // loop_pre_header
      _
    $region3: #{tpu_custom_call.1} parent=1 // loop_header
      %s17 = sphi 0, %s21
      %p18 = scmp.ge.s32.totalorder %s17, 4
      %s24 = sphi 0, %s36
      %s25 = sphi 0, %s32
      %s26 = sphi 0, %s24
      %s27 = sphi 0, %s25
      %s28 = sphi 0, %s26
      %s29 = sphi 0, %s27
      %s39 = sphi 0, %s41
      %s42 = sphi 0, %s39
      %s43 = sphi 0, %s42
      %s59 = sphi 0, %s43
      %s63 = sphi 0, %s63
      %s65 = sphi 0, %s63
      %s66 = sphi 0, %s65
      %s80 = sphi 0, %s66
      %s88 = sphi 0, %s90
      %s91 = sphi 0, %s88
      %s92 = sphi 0, %s91
      %s108 = sphi 0, %s92
      %s116 = sphi 0, %s118
      %s119 = sphi 0, %s116
      %s120 = sphi 0, %s119
      %s136 = sphi 0, %s120
      %s144 = sphi 0, %s146
      %s147 = sphi 0, %s144
      %s148 = sphi 0, %s147
      %s164 = sphi 0, %s148
    $region4: #{tpu_custom_call.1} parent=1 // loop_header_branch
      %20 = sbr.rel (%p18) target = $region8
    $region5: #{tpu_custom_call.1} parent=1 // loop_body
      %s22 = ssub.s32 %s17, 1
      %s23 = ssub.s32 %s17, 2
      %s30 = sadd.s32 1, %s25
      %p31 = scmp.ge.s32.totalorder %s30, 1
      %s32 = scalar_select %p31, 0, %s30
      %s33 = sadd.s32 1, %s24
      %s34 = scalar_select %p31, %s33, %s24
      %p35 = scmp.ge.s32.totalorder %s34, 2
      %s36 = scalar_select %p35, 0, %s34
      %s37 = ssub.s32 %s24, %s36
      %p38 = scmp.eq.s32.totalorder %s37, 0
      %s40 = sadd.s32 %s39, 1
      %s41 = scalar_select %p38, %s39, %s40
      %p44 = pneg %p38
      %p45 = scmp.eq.s32.totalorder %s17, 1
      %p46 = por %p44, %p45
      %p47 = scmp.ne.s32.totalorder %s39, %s42
      %p48 = scmp.eq.s32.totalorder %s17, 0
      %p49 = por %p47, %p48
      %p50 = scmp.ne.s32.totalorder %s39, %s42
      %p51 = scmp.eq.s32.totalorder %s22, 1
      %p52 = por %p50, %p51
      %p53 = scmp.ne.s32.totalorder %s42, %s43
      %p54 = scmp.eq.s32.totalorder %s22, 0
      %p55 = por %p53, %p54
      %p56 = scmp.ne.s32.totalorder %s42, %s43
      %p57 = scmp.eq.s32.totalorder %s23, 1
      %p58 = por %p56, %p57
      %p60 = scmp.ne.s32.totalorder %s43, %s59
      %p61 = scmp.eq.s32.totalorder %s23, 0
      %p62 = por %p60, %p61
      %s64 = sadd.s32 %s63, 1
      %p67 = scmp.eq.s32.totalorder %s17, 1
      %p68 = scmp.ne.s32.totalorder %s63, %s65
      %p69 = scmp.eq.s32.totalorder %s17, 0
      %p70 = por %p68, %p69
      %p71 = scmp.ne.s32.totalorder %s63, %s65
      %p72 = scmp.eq.s32.totalorder %s22, 1
      %p73 = por %p71, %p72
      %p74 = scmp.ne.s32.totalorder %s65, %s66
      %p75 = scmp.eq.s32.totalorder %s22, 0
      %p76 = por %p74, %p75
      %p77 = scmp.ne.s32.totalorder %s65, %s66
      %p78 = scmp.eq.s32.totalorder %s23, 1
      %p79 = por %p77, %p78
      %p81 = scmp.ne.s32.totalorder %s66, %s80
      %p82 = scmp.eq.s32.totalorder %s23, 0
      %p83 = por %p81, %p82
      %s84 = ssub.s32 %s24, %s36
      %s85 = ssub.s32 %s25, %s32
      %s86 = sor.u32 %s84, %s85
      %p87 = scmp.eq.s32.totalorder %s86, 0
      %s89 = sadd.s32 %s88, 1
      %s90 = scalar_select %p87, %s88, %s89
      %p93 = pneg %p87
      %p94 = scmp.eq.s32.totalorder %s17, 1
      %p95 = por %p93, %p94
      %p96 = scmp.ne.s32.totalorder %s88, %s91
      %p97 = scmp.eq.s32.totalorder %s17, 0
      %p98 = por %p96, %p97
      %p99 = scmp.ne.s32.totalorder %s88, %s91
      %p100 = scmp.eq.s32.totalorder %s22, 1
      %p101 = por %p99, %p100
      %p102 = scmp.ne.s32.totalorder %s91, %s92
      %p103 = scmp.eq.s32.totalorder %s22, 0
      %p104 = por %p102, %p103
      %p105 = scmp.ne.s32.totalorder %s91, %s92
      %p106 = scmp.eq.s32.totalorder %s23, 1
      %p107 = por %p105, %p106
      %p109 = scmp.ne.s32.totalorder %s92, %s108
      %p110 = scmp.eq.s32.totalorder %s23, 0
      %p111 = por %p109, %p110
      %s112 = ssub.s32 %s24, %s36
      %s113 = ssub.s32 %s25, %s32
      %s114 = sor.u32 %s112, %s113
      %p115 = scmp.eq.s32.totalorder %s114, 0
      %s117 = sadd.s32 %s116, 1
      %s118 = scalar_select %p115, %s116, %s117
      %p121 = pneg %p115
      %p122 = scmp.eq.s32.totalorder %s17, 1
      %p123 = por %p121, %p122
      %p124 = scmp.ne.s32.totalorder %s116, %s119
      %p125 = scmp.eq.s32.totalorder %s17, 0
      %p126 = por %p124, %p125
      %p127 = scmp.ne.s32.totalorder %s116, %s119
      %p128 = scmp.eq.s32.totalorder %s22, 1
      %p129 = por %p127, %p128
      %p130 = scmp.ne.s32.totalorder %s119, %s120
      %p131 = scmp.eq.s32.totalorder %s22, 0
      %p132 = por %p130, %p131
      %p133 = scmp.ne.s32.totalorder %s119, %s120
      %p134 = scmp.eq.s32.totalorder %s23, 1
      %p135 = por %p133, %p134
      %p137 = scmp.ne.s32.totalorder %s120, %s136
      %p138 = scmp.eq.s32.totalorder %s23, 0
      %p139 = por %p137, %p138
      %s140 = ssub.s32 %s24, %s36
      %s141 = ssub.s32 %s25, %s32
      %s142 = sor.u32 %s140, %s141
      %p143 = scmp.eq.s32.totalorder %s142, 0
      %s145 = sadd.s32 %s144, 1
      %s146 = scalar_select %p143, %s144, %s145
      %p149 = pneg %p143
      %p150 = scmp.eq.s32.totalorder %s17, 1
      %p151 = por %p149, %p150
      %p152 = scmp.ne.s32.totalorder %s144, %s147
      %p153 = scmp.eq.s32.totalorder %s17, 0
      %p154 = por %p152, %p153
      %p155 = scmp.ne.s32.totalorder %s144, %s147
      %p156 = scmp.eq.s32.totalorder %s22, 1
      %p157 = por %p155, %p156
      %p158 = scmp.ne.s32.totalorder %s147, %s148
      %p159 = scmp.eq.s32.totalorder %s22, 0
      %p160 = por %p158, %p159
      %p161 = scmp.ne.s32.totalorder %s147, %s148
      %p162 = scmp.eq.s32.totalorder %s23, 1
      %p163 = por %p161, %p162
      %p165 = scmp.ne.s32.totalorder %s148, %s164
      %p166 = scmp.eq.s32.totalorder %s23, 0
      %p167 = por %p165, %p166
      %p168 = scmp.le.s32.totalorder 1, %s17
      %p169 = scmp.lt.s32.totalorder %s17, 3
      %p170 = pnand %p168, %p169
      %p171 = pneg %p170
      // Predicated region
      $region9: #{tpu_custom_call.1} parent=5 // pred_check
        _
      $region10: #{tpu_custom_call.1} parent=5 // pred_check_branch
        %173 = sbr.rel (%p170) target = $region12
      $region11: #{tpu_custom_call.1} parent=5 // pred_region
        %s174 = ssub.s32 %s17, 1
        // Predicated region
        $region13: #{tpu_custom_call.1} parent=11 // pred_check
          %p175 = pneg %p76
        $region14: #{tpu_custom_call.1} parent=11 // pred_check_branch
          %177 = sbr.rel (%p175) target = $region16
        $region15: #{tpu_custom_call.1} parent=11 // pred_region
          _
        $region16: #{tpu_custom_call.1} parent=11 // pred_fallthru
          _
      $region12: #{tpu_custom_call.1} parent=5 // pred_fallthru
        _
      %p178 = scmp.lt.s32.totalorder %s17, 2
      // Predicated region
      $region17: #{tpu_custom_call.1} parent=5 // pred_check
        %p179 = pneg %p178
      $region18: #{tpu_custom_call.1} parent=5 // pred_check_branch
        %181 = sbr.rel (%p179) target = $region20
      $region19: #{tpu_custom_call.1} parent=5 // pred_region
        // Predicated region
        $region21: #{tpu_custom_call.1} parent=19 // pred_check
          %p182 = pneg %p49
        $region22: #{tpu_custom_call.1} parent=19 // pred_check_branch
          %184 = sbr.rel (%p182) target = $region24
        $region23: #{tpu_custom_call.1} parent=19 // pred_region
          %p185 = scmp.lt.s32.totalorder %s24, 1
          %s186 = scalar_select %p185, %s24, 1
          %s187 = smul.addr %s186, 54
          %s188 = smul.addr %s187, 4
          %s189 = scalar_lea.vmem %s0, %s188
        $region24: #{tpu_custom_call.1} parent=19 // pred_fallthru
          _
      $region20: #{tpu_custom_call.1} parent=5 // pred_fallthru
        _
      %p190 = scmp.le.s32.totalorder 1, %s17
      %p191 = scmp.lt.s32.totalorder %s17, 3
      %p192 = pnand %p190, %p191
      %p193 = pneg %p192
      // Predicated region
      $region25: #{tpu_custom_call.1} parent=5 // pred_check
        _
      $region26: #{tpu_custom_call.1} parent=5 // pred_check_branch
        %195 = sbr.rel (%p192) target = $region28
      $region27: #{tpu_custom_call.1} parent=5 // pred_region
        %s196 = ssub.s32 %s17, 1
        %p197 = scmp.lt.s32.totalorder %s26, 1
        %s198 = scalar_select %p197, %s26, 1
        %s199 = smul.addr %s198, 54
        %s200 = smul.addr %s199, 4
        %s201 = scalar_lea.vmem %s0, %s200
        %p202 = pneg %p55
        %p203 = pneg %p52
        %p204 = pneg %p76
        %p205 = pneg %p73
        %p206 = pneg %p104
        %p207 = pneg %p101
        %s208 = sand.u32 %s91, 1
        %s209 = scalar_lea.sflag [#allocation3], %s208
        %s210 = sand.u32 %s91, 1
        %s211 = smul.addr %s210, 512
        %s212 = scalar_lea.vmem [#allocation2], %s211
        %p213 = pneg %p132
        %p214 = pneg %p129
        %s215 = sand.u32 %s22, 1
        %s216 = scalar_lea.sflag [#allocation5], %s215
        %s217 = sand.u32 %s119, 1
        %s218 = scalar_lea.vmem [#allocation4], %s217
        %p219 = pneg %p160
        %p220 = pneg %p157
        %s221 = sand.u32 %s22, 1
        %s222 = scalar_lea.sflag [#allocation5], %s221
        %s223 = sand.u32 %s147, 1
        %s224 = scalar_lea.vmem [#allocation6], %s223
        %p225 = scmp.lt.s32.totalorder %s26, 1
        %s226 = scalar_select %p225, %s26, 1
        %s227 = smul.addr %s226, 54
        %s228 = smul.addr %s227, 4
        %s229 = scalar_lea.vmem %s0, %s228
        %s230 = smul.u32 32, %s27
        %s232 = smul.u32 %s27, 16
        %s233 = sadd.s32 %s232, 1
        %s234 = smul.u32 %s233, 3
        %s235 = smul.addr %s234, 4
        %s236 = scalar_lea.vmem %s229, %s235
        %v237 = vld [vmem:[%s236] sm:$0xf]
        %v238 = vld [vmem:[%s236 + $0x4] sm:$0xf]
        %v239 = vld [vmem:[%s236 + $0x8] sm:$0x1]
        %v240 = vld [vmem:[%s236 + $0xc] sm:$0xf]
        %v241 = vld [vmem:[%s236 + $0x10] sm:$0xf]
        %v242 = vld [vmem:[%s236 + $0x14] sm:$0x1]
        %v243 = vld [vmem:[%s236 + $0x18] sm:$0xf]
        %v244 = vld [vmem:[%s236 + $0x1c] sm:$0xf]
        %v245 = vld [vmem:[%s236 + $0x20] sm:$0x1]
        %v246 = vld [vmem:[%s236 + $0x24] sm:$0xf]
        %v247 = vld [vmem:[%s236 + $0x28] sm:$0xf]
        %v248 = vld [vmem:[%s236 + $0x2c] sm:$0x1]
        %v249 = vld [vmem:[%s236 + $0x30] sm:$0xf]
        %v250 = vld [vmem:[%s236 + $0x34] sm:$0xf]
        %v251 = vld [vmem:[%s236 + $0x38] sm:$0x1]
        %v252 = vld [vmem:[%s236 + $0x3c] sm:$0xf]
        %v253 = vld [vmem:[%s236 + $0x40] sm:$0xf]
        %v254 = vld [vmem:[%s236 + $0x44] sm:$0x1]
        %v255 = vld [vmem:[%s236 + $0x48] sm:$0xf]
        %v256 = vld [vmem:[%s236 + $0x4c] sm:$0xf]
        %v257 = vld [vmem:[%s236 + $0x50] sm:$0x1]
        %v258 = vld [vmem:[%s236 + $0x54] sm:$0xf]
        %v259 = vld [vmem:[%s236 + $0x58] sm:$0xf]
        %v260 = vld [vmem:[%s236 + $0x5c] sm:$0x1]
        %v261 = vld [vmem:[%s236 + $0x60] sm:$0xf]
        %v262 = vld [vmem:[%s236 + $0x64] sm:$0xf]
        %v263 = vld [vmem:[%s236 + $0x68] sm:$0x1]
        %v264 = vld [vmem:[%s236 + $0x6c] sm:$0xf]
        %v265 = vld [vmem:[%s236 + $0x70] sm:$0xf]
        %v266 = vld [vmem:[%s236 + $0x74] sm:$0x1]
        %v267 = vld [vmem:[%s236 + $0x78] sm:$0xf]
        %v268 = vld [vmem:[%s236 + $0x7c] sm:$0xf]
        %v269 = vld [vmem:[%s236 + $0x80] sm:$0x1]
        %v270 = vld [vmem:[%s236 + $0x84] sm:$0xf]
        %v271 = vld [vmem:[%s236 + $0x88] sm:$0xf]
        %v272 = vld [vmem:[%s236 + $0x8c] sm:$0x1]
        %v273 = vld [vmem:[%s236 + $0x90] sm:$0xf]
        %v274 = vld [vmem:[%s236 + $0x94] sm:$0xf]
        %v275 = vld [vmem:[%s236 + $0x98] sm:$0x1]
        %v276 = vld [vmem:[%s236 + $0x9c] sm:$0xf]
        %v277 = vld [vmem:[%s236 + $0xa0] sm:$0xf]
        %v278 = vld [vmem:[%s236 + $0xa4] sm:$0x1]
        %v279 = vld [vmem:[%s236 + $0xa8] sm:$0xf]
        %v280 = vld [vmem:[%s236 + $0xac] sm:$0xf]
        %v281 = vld [vmem:[%s236 + $0xb0] sm:$0x1]
        %v282 = vld [vmem:[%s236 + $0xb4] sm:$0xf]
        %v283 = vld [vmem:[%s236 + $0xb8] sm:$0xf]
        %v284 = vld [vmem:[%s236 + $0xbc] sm:$0x1]
        %vm285 = vsmask.f32 3328
        %vm286 = vsmask.f32 7440
        %vm287 = vmor %vm285, %vm286
        %v289 = vshrl.u32 %v237, 16
        %v291 = vrot.slane %v289, 4
        %v292 = vshll.u32 %v237, 16
        %v294 = vrot.slane %v292, 5
        %v295 = vor.u32 %v291, %v294
        %v296 = vrot.slane %v295, 4
        %v298 = vshll.u32 %v238, 16
        %v300 = vrot.slane %v298, 5
        %v301 = vsel %vm287, %v296, %v300
        %v302 = vshrl.u32 %v238, 16
        %v304 = vrot.slane %v302, 4
        %v305 = vor.u32 %v304, %v300
        %v306 = vrot.slane %v305, 4
        %v308 = vshll.u32 %v239, 16
        %v310 = vrot.slane %v308, 5
        %v311 = vsel %vm287, %v306, %v310
        %v313 = vshrl.u32 %v240, 16
        %v315 = vrot.slane %v313, 4
        %v316 = vshll.u32 %v240, 16
        %v318 = vrot.slane %v316, 5
        %v319 = vor.u32 %v315, %v318
        %v320 = vrot.slane %v319, 4
        %v322 = vshll.u32 %v241, 16
        %v324 = vrot.slane %v322, 5
        %v325 = vsel %vm287, %v320, %v324
        %v326 = vshrl.u32 %v241, 16
        %v328 = vrot.slane %v326, 4
        %v329 = vor.u32 %v328, %v324
        %v330 = vrot.slane %v329, 4
        %v332 = vshll.u32 %v242, 16
        %v334 = vrot.slane %v332, 5
        %v335 = vsel %vm287, %v330, %v334
        %v337 = vshrl.u32 %v243, 16
        %v339 = vrot.slane %v337, 4
        %v340 = vshll.u32 %v243, 16
        %v342 = vrot.slane %v340, 5
        %v343 = vor.u32 %v339, %v342
        %v344 = vrot.slane %v343, 4
        %v346 = vshll.u32 %v244, 16
        %v348 = vrot.slane %v346, 5
        %v349 = vsel %vm287, %v344, %v348
        %v350 = vshrl.u32 %v244, 16
        %v352 = vrot.slane %v350, 4
        %v353 = vor.u32 %v352, %v348
        %v354 = vrot.slane %v353, 4
        %v356 = vshll.u32 %v245, 16
        %v358 = vrot.slane %v356, 5
        %v359 = vsel %vm287, %v354, %v358
        %v361 = vshrl.u32 %v246, 16
        %v363 = vrot.slane %v361, 4
        %v364 = vshll.u32 %v246, 16
        %v366 = vrot.slane %v364, 5
        %v367 = vor.u32 %v363, %v366
        %v368 = vrot.slane %v367, 4
        %v370 = vshll.u32 %v247, 16
        %v372 = vrot.slane %v370, 5
        %v373 = vsel %vm287, %v368, %v372
        %v374 = vshrl.u32 %v247, 16
        %v376 = vrot.slane %v374, 4
        %v377 = vor.u32 %v376, %v372
        %v378 = vrot.slane %v377, 4
        %v380 = vshll.u32 %v248, 16
        %v382 = vrot.slane %v380, 5
        %v383 = vsel %vm287, %v378, %v382
        %v385 = vshrl.u32 %v249, 16
        %v387 = vrot.slane %v385, 4
        %v388 = vshll.u32 %v249, 16
        %v390 = vrot.slane %v388, 5
        %v391 = vor.u32 %v387, %v390
        %v392 = vrot.slane %v391, 4
        %v394 = vshll.u32 %v250, 16
        %v396 = vrot.slane %v394, 5
        %v397 = vsel %vm287, %v392, %v396
        %v398 = vshrl.u32 %v250, 16
        %v400 = vrot.slane %v398, 4
        %v401 = vor.u32 %v400, %v396
        %v402 = vrot.slane %v401, 4
        %v404 = vshll.u32 %v251, 16
        %v406 = vrot.slane %v404, 5
        %v407 = vsel %vm287, %v402, %v406
        %v409 = vshrl.u32 %v252, 16
        %v411 = vrot.slane %v409, 4
        %v412 = vshll.u32 %v252, 16
        %v414 = vrot.slane %v412, 5
        %v415 = vor.u32 %v411, %v414
        %v416 = vrot.slane %v415, 4
        %v418 = vshll.u32 %v253, 16
        %v420 = vrot.slane %v418, 5
        %v421 = vsel %vm287, %v416, %v420
        %v422 = vshrl.u32 %v253, 16
        %v424 = vrot.slane %v422, 4
        %v425 = vor.u32 %v424, %v420
        %v426 = vrot.slane %v425, 4
        %v428 = vshll.u32 %v254, 16
        %v430 = vrot.slane %v428, 5
        %v431 = vsel %vm287, %v426, %v430
        %v433 = vshrl.u32 %v255, 16
        %v435 = vrot.slane %v433, 4
        %v436 = vshll.u32 %v255, 16
        %v438 = vrot.slane %v436, 5
        %v439 = vor.u32 %v435, %v438
        %v440 = vrot.slane %v439, 4
        %v442 = vshll.u32 %v256, 16
        %v444 = vrot.slane %v442, 5
        %v445 = vsel %vm287, %v440, %v444
        %v446 = vshrl.u32 %v256, 16
        %v448 = vrot.slane %v446, 4
        %v449 = vor.u32 %v448, %v444
        %v450 = vrot.slane %v449, 4
        %v452 = vshll.u32 %v257, 16
        %v454 = vrot.slane %v452, 5
        %v455 = vsel %vm287, %v450, %v454
        %v457 = vshrl.u32 %v258, 16
        %v459 = vrot.slane %v457, 4
        %v460 = vshll.u32 %v258, 16
        %v462 = vrot.slane %v460, 5
        %v463 = vor.u32 %v459, %v462
        %v464 = vrot.slane %v463, 4
        %v466 = vshll.u32 %v259, 16
        %v468 = vrot.slane %v466, 5
        %v469 = vsel %vm287, %v464, %v468
        %v470 = vshrl.u32 %v259, 16
        %v472 = vrot.slane %v470, 4
        %v473 = vor.u32 %v472, %v468
        %v474 = vrot.slane %v473, 4
        %v476 = vshll.u32 %v260, 16
        %v478 = vrot.slane %v476, 5
        %v479 = vsel %vm287, %v474, %v478
        %v481 = vshrl.u32 %v261, 16
        %v483 = vrot.slane %v481, 4
        %v484 = vshll.u32 %v261, 16
        %v486 = vrot.slane %v484, 5
        %v487 = vor.u32 %v483, %v486
        %v488 = vrot.slane %v487, 4
        %v490 = vshll.u32 %v262, 16
        %v492 = vrot.slane %v490, 5
        %v493 = vsel %vm287, %v488, %v492
        %v494 = vshrl.u32 %v262, 16
        %v496 = vrot.slane %v494, 4
        %v497 = vor.u32 %v496, %v492
        %v498 = vrot.slane %v497, 4
        %v500 = vshll.u32 %v263, 16
        %v502 = vrot.slane %v500, 5
        %v503 = vsel %vm287, %v498, %v502
        %v505 = vshrl.u32 %v264, 16
        %v507 = vrot.slane %v505, 4
        %v508 = vshll.u32 %v264, 16
        %v510 = vrot.slane %v508, 5
        %v511 = vor.u32 %v507, %v510
        %v512 = vrot.slane %v511, 4
        %v514 = vshll.u32 %v265, 16
        %v516 = vrot.slane %v514, 5
        %v517 = vsel %vm287, %v512, %v516
        %v518 = vshrl.u32 %v265, 16
        %v520 = vrot.slane %v518, 4
        %v521 = vor.u32 %v520, %v516
        %v522 = vrot.slane %v521, 4
        %v524 = vshll.u32 %v266, 16
        %v526 = vrot.slane %v524, 5
        %v527 = vsel %vm287, %v522, %v526
        %v529 = vshrl.u32 %v267, 16
        %v531 = vrot.slane %v529, 4
        %v532 = vshll.u32 %v267, 16
        %v534 = vrot.slane %v532, 5
        %v535 = vor.u32 %v531, %v534
        %v536 = vrot.slane %v535, 4
        %v538 = vshll.u32 %v268, 16
        %v540 = vrot.slane %v538, 5
        %v541 = vsel %vm287, %v536, %v540
        %v542 = vshrl.u32 %v268, 16
        %v544 = vrot.slane %v542, 4
        %v545 = vor.u32 %v544, %v540
        %v546 = vrot.slane %v545, 4
        %v548 = vshll.u32 %v269, 16
        %v550 = vrot.slane %v548, 5
        %v551 = vsel %vm287, %v546, %v550
        %v553 = vshrl.u32 %v270, 16
        %v555 = vrot.slane %v553, 4
        %v556 = vshll.u32 %v270, 16
        %v558 = vrot.slane %v556, 5
        %v559 = vor.u32 %v555, %v558
        %v560 = vrot.slane %v559, 4
        %v562 = vshll.u32 %v271, 16
        %v564 = vrot.slane %v562, 5
        %v565 = vsel %vm287, %v560, %v564
        %v566 = vshrl.u32 %v271, 16
        %v568 = vrot.slane %v566, 4
        %v569 = vor.u32 %v568, %v564
        %v570 = vrot.slane %v569, 4
        %v572 = vshll.u32 %v272, 16
        %v574 = vrot.slane %v572, 5
        %v575 = vsel %vm287, %v570, %v574
        %v577 = vshrl.u32 %v273, 16
        %v579 = vrot.slane %v577, 4
        %v580 = vshll.u32 %v273, 16
        %v582 = vrot.slane %v580, 5
        %v583 = vor.u32 %v579, %v582
        %v584 = vrot.slane %v583, 4
        %v586 = vshll.u32 %v274, 16
        %v588 = vrot.slane %v586, 5
        %v589 = vsel %vm287, %v584, %v588
        %v590 = vshrl.u32 %v274, 16
        %v592 = vrot.slane %v590, 4
        %v593 = vor.u32 %v592, %v588
        %v594 = vrot.slane %v593, 4
        %v596 = vshll.u32 %v275, 16
        %v598 = vrot.slane %v596, 5
        %v599 = vsel %vm287, %v594, %v598
        %v601 = vshrl.u32 %v276, 16
        %v603 = vrot.slane %v601, 4
        %v604 = vshll.u32 %v276, 16
        %v606 = vrot.slane %v604, 5
        %v607 = vor.u32 %v603, %v606
        %v608 = vrot.slane %v607, 4
        %v610 = vshll.u32 %v277, 16
        %v612 = vrot.slane %v610, 5
        %v613 = vsel %vm287, %v608, %v612
        %v614 = vshrl.u32 %v277, 16
        %v616 = vrot.slane %v614, 4
        %v617 = vor.u32 %v616, %v612
        %v618 = vrot.slane %v617, 4
        %v620 = vshll.u32 %v278, 16
        %v622 = vrot.slane %v620, 5
        %v623 = vsel %vm287, %v618, %v622
        %v625 = vshrl.u32 %v279, 16
        %v627 = vrot.slane %v625, 4
        %v628 = vshll.u32 %v279, 16
        %v630 = vrot.slane %v628, 5
        %v631 = vor.u32 %v627, %v630
        %v632 = vrot.slane %v631, 4
        %v634 = vshll.u32 %v280, 16
        %v636 = vrot.slane %v634, 5
        %v637 = vsel %vm287, %v632, %v636
        %v638 = vshrl.u32 %v280, 16
        %v640 = vrot.slane %v638, 4
        %v641 = vor.u32 %v640, %v636
        %v642 = vrot.slane %v641, 4
        %v644 = vshll.u32 %v281, 16
        %v646 = vrot.slane %v644, 5
        %v647 = vsel %vm287, %v642, %v646
        %v649 = vshrl.u32 %v282, 16
        %v651 = vrot.slane %v649, 4
        %v652 = vshll.u32 %v282, 16
        %v654 = vrot.slane %v652, 5
        %v655 = vor.u32 %v651, %v654
        %v656 = vrot.slane %v655, 4
        %v658 = vshll.u32 %v283, 16
        %v660 = vrot.slane %v658, 5
        %v661 = vsel %vm287, %v656, %v660
        %v662 = vshrl.u32 %v283, 16
        %v664 = vrot.slane %v662, 4
        %v665 = vor.u32 %v664, %v660
        %v666 = vrot.slane %v665, 4
        %v668 = vshll.u32 %v284, 16
        %v670 = vrot.slane %v668, 5
        %v671 = vsel %vm287, %v666, %v670
        %v672 = vld [vmem:[%s1] sm:$0x3]
        %s673 = smul.u32 %s232, 3
        %s674 = smul.addr %s673, 4
        %s675 = scalar_lea.vmem %s229, %s674
        %v676 = vld [vmem:[%s675] sm:$0xf]
        %v677 = vld [vmem:[%s675 + $0x4] sm:$0xf]
        %v678 = vld [vmem:[%s675 + $0x8] sm:$0x1]
        %v679 = vld [vmem:[%s675 + $0xc] sm:$0xf]
        %v680 = vld [vmem:[%s675 + $0x10] sm:$0xf]
        %v681 = vld [vmem:[%s675 + $0x14] sm:$0x1]
        %v682 = vld [vmem:[%s675 + $0x18] sm:$0xf]
        %v683 = vld [vmem:[%s675 + $0x1c] sm:$0xf]
        %v684 = vld [vmem:[%s675 + $0x20] sm:$0x1]
        %v685 = vld [vmem:[%s675 + $0x24] sm:$0xf]
        %v686 = vld [vmem:[%s675 + $0x28] sm:$0xf]
        %v687 = vld [vmem:[%s675 + $0x2c] sm:$0x1]
        %v688 = vld [vmem:[%s675 + $0x30] sm:$0xf]
        %v689 = vld [vmem:[%s675 + $0x34] sm:$0xf]
        %v690 = vld [vmem:[%s675 + $0x38] sm:$0x1]
        %v691 = vld [vmem:[%s675 + $0x3c] sm:$0xf]
        %v692 = vld [vmem:[%s675 + $0x40] sm:$0xf]
        %v693 = vld [vmem:[%s675 + $0x44] sm:$0x1]
        %v694 = vld [vmem:[%s675 + $0x48] sm:$0xf]
        %v695 = vld [vmem:[%s675 + $0x4c] sm:$0xf]
        %v696 = vld [vmem:[%s675 + $0x50] sm:$0x1]
        %v697 = vld [vmem:[%s675 + $0x54] sm:$0xf]
        %v698 = vld [vmem:[%s675 + $0x58] sm:$0xf]
        %v699 = vld [vmem:[%s675 + $0x5c] sm:$0x1]
        %v700 = vld [vmem:[%s675 + $0x60] sm:$0xf]
        %v701 = vld [vmem:[%s675 + $0x64] sm:$0xf]
        %v702 = vld [vmem:[%s675 + $0x68] sm:$0x1]
        %v703 = vld [vmem:[%s675 + $0x6c] sm:$0xf]
        %v704 = vld [vmem:[%s675 + $0x70] sm:$0xf]
        %v705 = vld [vmem:[%s675 + $0x74] sm:$0x1]
        %v706 = vld [vmem:[%s675 + $0x78] sm:$0xf]
        %v707 = vld [vmem:[%s675 + $0x7c] sm:$0xf]
        %v708 = vld [vmem:[%s675 + $0x80] sm:$0x1]
        %v709 = vld [vmem:[%s675 + $0x84] sm:$0xf]
        %v710 = vld [vmem:[%s675 + $0x88] sm:$0xf]
        %v711 = vld [vmem:[%s675 + $0x8c] sm:$0x1]
        %v712 = vld [vmem:[%s675 + $0x90] sm:$0xf]
        %v713 = vld [vmem:[%s675 + $0x94] sm:$0xf]
        %v714 = vld [vmem:[%s675 + $0x98] sm:$0x1]
        %v715 = vld [vmem:[%s675 + $0x9c] sm:$0xf]
        %v716 = vld [vmem:[%s675 + $0xa0] sm:$0xf]
        %v717 = vld [vmem:[%s675 + $0xa4] sm:$0x1]
        %v718 = vld [vmem:[%s675 + $0xa8] sm:$0xf]
        %v719 = vld [vmem:[%s675 + $0xac] sm:$0xf]
        %v720 = vld [vmem:[%s675 + $0xb0] sm:$0x1]
        %v721 = vld [vmem:[%s675 + $0xb4] sm:$0xf]
        %v722 = vld [vmem:[%s675 + $0xb8] sm:$0xf]
        %v723 = vld [vmem:[%s675 + $0xbc] sm:$0x1]
        %v725 = vshrl.u32 %v676, 16
        %v727 = vrot.slane %v725, 4
        %v728 = vshll.u32 %v676, 16
        %v730 = vrot.slane %v728, 5
        %v731 = vor.u32 %v727, %v730
        %v732 = vrot.slane %v731, 4
        %v734 = vshll.u32 %v677, 16
        %v736 = vrot.slane %v734, 5
        %v737 = vsel %vm287, %v732, %v736
        %v738 = vshrl.u32 %v677, 16
        %v740 = vrot.slane %v738, 4
        %v741 = vor.u32 %v740, %v736
        %v742 = vrot.slane %v741, 4
        %v744 = vshll.u32 %v678, 16
        %v746 = vrot.slane %v744, 5
        %v747 = vsel %vm287, %v742, %v746
        %v749 = vshrl.u32 %v679, 16
        %v751 = vrot.slane %v749, 4
        %v752 = vshll.u32 %v679, 16
        %v754 = vrot.slane %v752, 5
        %v755 = vor.u32 %v751, %v754
        %v756 = vrot.slane %v755, 4
        %v758 = vshll.u32 %v680, 16
        %v760 = vrot.slane %v758, 5
        %v761 = vsel %vm287, %v756, %v760
        %v762 = vshrl.u32 %v680, 16
        %v764 = vrot.slane %v762, 4
        %v765 = vor.u32 %v764, %v760
        %v766 = vrot.slane %v765, 4
        %v768 = vshll.u32 %v681, 16
        %v770 = vrot.slane %v768, 5
        %v771 = vsel %vm287, %v766, %v770
        %v773 = vshrl.u32 %v682, 16
        %v775 = vrot.slane %v773, 4
        %v776 = vshll.u32 %v682, 16
        %v778 = vrot.slane %v776, 5
        %v779 = vor.u32 %v775, %v778
        %v780 = vrot.slane %v779, 4
        %v782 = vshll.u32 %v683, 16
        %v784 = vrot.slane %v782, 5
        %v785 = vsel %vm287, %v780, %v784
        %v786 = vshrl.u32 %v683, 16
        %v788 = vrot.slane %v786, 4
        %v789 = vor.u32 %v788, %v784
        %v790 = vrot.slane %v789, 4
        %v792 = vshll.u32 %v684, 16
        %v794 = vrot.slane %v792, 5
        %v795 = vsel %vm287, %v790, %v794
        %v797 = vshrl.u32 %v685, 16
        %v799 = vrot.slane %v797, 4
        %v800 = vshll.u32 %v685, 16
        %v802 = vrot.slane %v800, 5
        %v803 = vor.u32 %v799, %v802
        %v804 = vrot.slane %v803, 4
        %v806 = vshll.u32 %v686, 16
        %v808 = vrot.slane %v806, 5
        %v809 = vsel %vm287, %v804, %v808
        %v810 = vshrl.u32 %v686, 16
        %v812 = vrot.slane %v810, 4
        %v813 = vor.u32 %v812, %v808
        %v814 = vrot.slane %v813, 4
        %v816 = vshll.u32 %v687, 16
        %v818 = vrot.slane %v816, 5
        %v819 = vsel %vm287, %v814, %v818
        %v821 = vshrl.u32 %v688, 16
        %v823 = vrot.slane %v821, 4
        %v824 = vshll.u32 %v688, 16
        %v826 = vrot.slane %v824, 5
        %v827 = vor.u32 %v823, %v826
        %v828 = vrot.slane %v827, 4
        %v830 = vshll.u32 %v689, 16
        %v832 = vrot.slane %v830, 5
        %v833 = vsel %vm287, %v828, %v832
        %v834 = vshrl.u32 %v689, 16
        %v836 = vrot.slane %v834, 4
        %v837 = vor.u32 %v836, %v832
        %v838 = vrot.slane %v837, 4
        %v840 = vshll.u32 %v690, 16
        %v842 = vrot.slane %v840, 5
        %v843 = vsel %vm287, %v838, %v842
        %v845 = vshrl.u32 %v691, 16
        %v847 = vrot.slane %v845, 4
        %v848 = vshll.u32 %v691, 16
        %v850 = vrot.slane %v848, 5
        %v851 = vor.u32 %v847, %v850
        %v852 = vrot.slane %v851, 4
        %v854 = vshll.u32 %v692, 16
        %v856 = vrot.slane %v854, 5
        %v857 = vsel %vm287, %v852, %v856
        %v858 = vshrl.u32 %v692, 16
        %v860 = vrot.slane %v858, 4
        %v861 = vor.u32 %v860, %v856
        %v862 = vrot.slane %v861, 4
        %v864 = vshll.u32 %v693, 16
        %v866 = vrot.slane %v864, 5
        %v867 = vsel %vm287, %v862, %v866
        %v869 = vshrl.u32 %v694, 16
        %v871 = vrot.slane %v869, 4
        %v872 = vshll.u32 %v694, 16
        %v874 = vrot.slane %v872, 5
        %v875 = vor.u32 %v871, %v874
        %v876 = vrot.slane %v875, 4
        %v878 = vshll.u32 %v695, 16
        %v880 = vrot.slane %v878, 5
        %v881 = vsel %vm287, %v876, %v880
        %v882 = vshrl.u32 %v695, 16
        %v884 = vrot.slane %v882, 4
        %v885 = vor.u32 %v884, %v880
        %v886 = vrot.slane %v885, 4
        %v888 = vshll.u32 %v696, 16
        %v890 = vrot.slane %v888, 5
        %v891 = vsel %vm287, %v886, %v890
        %v893 = vshrl.u32 %v697, 16
        %v895 = vrot.slane %v893, 4
        %v896 = vshll.u32 %v697, 16
        %v898 = vrot.slane %v896, 5
        %v899 = vor.u32 %v895, %v898
        %v900 = vrot.slane %v899, 4
        %v902 = vshll.u32 %v698, 16
        %v904 = vrot.slane %v902, 5
        %v905 = vsel %vm287, %v900, %v904
        %v906 = vshrl.u32 %v698, 16
        %v908 = vrot.slane %v906, 4
        %v909 = vor.u32 %v908, %v904
        %v910 = vrot.slane %v909, 4
        %v912 = vshll.u32 %v699, 16
        %v914 = vrot.slane %v912, 5
        %v915 = vsel %vm287, %v910, %v914
        %v917 = vshrl.u32 %v700, 16
        %v919 = vrot.slane %v917, 4
        %v920 = vshll.u32 %v700, 16
        %v922 = vrot.slane %v920, 5
        %v923 = vor.u32 %v919, %v922
        %v924 = vrot.slane %v923, 4
        %v926 = vshll.u32 %v701, 16
        %v928 = vrot.slane %v926, 5
        %v929 = vsel %vm287, %v924, %v928
        %v930 = vshrl.u32 %v701, 16
        %v932 = vrot.slane %v930, 4
        %v933 = vor.u32 %v932, %v928
        %v934 = vrot.slane %v933, 4
        %v936 = vshll.u32 %v702, 16
        %v938 = vrot.slane %v936, 5
        %v939 = vsel %vm287, %v934, %v938
        %v941 = vshrl.u32 %v703, 16
        %v943 = vrot.slane %v941, 4
        %v944 = vshll.u32 %v703, 16
        %v946 = vrot.slane %v944, 5
        %v947 = vor.u32 %v943, %v946
        %v948 = vrot.slane %v947, 4
        %v950 = vshll.u32 %v704, 16
        %v952 = vrot.slane %v950, 5
        %v953 = vsel %vm287, %v948, %v952
        %v954 = vshrl.u32 %v704, 16
        %v956 = vrot.slane %v954, 4
        %v957 = vor.u32 %v956, %v952
        %v958 = vrot.slane %v957, 4
        %v960 = vshll.u32 %v705, 16
        %v962 = vrot.slane %v960, 5
        %v963 = vsel %vm287, %v958, %v962
        %v965 = vshrl.u32 %v706, 16
        %v967 = vrot.slane %v965, 4
        %v968 = vshll.u32 %v706, 16
        %v970 = vrot.slane %v968, 5
        %v971 = vor.u32 %v967, %v970
        %v972 = vrot.slane %v971, 4
        %v974 = vshll.u32 %v707, 16
        %v976 = vrot.slane %v974, 5
        %v977 = vsel %vm287, %v972, %v976
        %v978 = vshrl.u32 %v707, 16
        %v980 = vrot.slane %v978, 4
        %v981 = vor.u32 %v980, %v976
        %v982 = vrot.slane %v981, 4
        %v984 = vshll.u32 %v708, 16
        %v986 = vrot.slane %v984, 5
        %v987 = vsel %vm287, %v982, %v986
        %v989 = vshrl.u32 %v709, 16
        %v991 = vrot.slane %v989, 4
        %v992 = vshll.u32 %v709, 16
        %v994 = vrot.slane %v992, 5
        %v995 = vor.u32 %v991, %v994
        %v996 = vrot.slane %v995, 4
        %v998 = vshll.u32 %v710, 16
        %v1000 = vrot.slane %v998, 5
        %v1001 = vsel %vm287, %v996, %v1000
        %v1002 = vshrl.u32 %v710, 16
        %v1004 = vrot.slane %v1002, 4
        %v1005 = vor.u32 %v1004, %v1000
        %v1006 = vrot.slane %v1005, 4
        %v1008 = vshll.u32 %v711, 16
        %v1010 = vrot.slane %v1008, 5
        %v1011 = vsel %vm287, %v1006, %v1010
        %v1013 = vshrl.u32 %v712, 16
        %v1015 = vrot.slane %v1013, 4
        %v1016 = vshll.u32 %v712, 16
        %v1018 = vrot.slane %v1016, 5
        %v1019 = vor.u32 %v1015, %v1018
        %v1020 = vrot.slane %v1019, 4
        %v1022 = vshll.u32 %v713, 16
        %v1024 = vrot.slane %v1022, 5
        %v1025 = vsel %vm287, %v1020, %v1024
        %v1026 = vshrl.u32 %v713, 16
        %v1028 = vrot.slane %v1026, 4
        %v1029 = vor.u32 %v1028, %v1024
        %v1030 = vrot.slane %v1029, 4
        %v1032 = vshll.u32 %v714, 16
        %v1034 = vrot.slane %v1032, 5
        %v1035 = vsel %vm287, %v1030, %v1034
        %v1037 = vshrl.u32 %v715, 16
        %v1039 = vrot.slane %v1037, 4
        %v1040 = vshll.u32 %v715, 16
        %v1042 = vrot.slane %v1040, 5
        %v1043 = vor.u32 %v1039, %v1042
        %v1044 = vrot.slane %v1043, 4
        %v1046 = vshll.u32 %v716, 16
        %v1048 = vrot.slane %v1046, 5
        %v1049 = vsel %vm287, %v1044, %v1048
        %v1050 = vshrl.u32 %v716, 16
        %v1052 = vrot.slane %v1050, 4
        %v1053 = vor.u32 %v1052, %v1048
        %v1054 = vrot.slane %v1053, 4
        %v1056 = vshll.u32 %v717, 16
        %v1058 = vrot.slane %v1056, 5
        %v1059 = vsel %vm287, %v1054, %v1058
        %v1061 = vshrl.u32 %v718, 16
        %v1063 = vrot.slane %v1061, 4
        %v1064 = vshll.u32 %v718, 16
        %v1066 = vrot.slane %v1064, 5
        %v1067 = vor.u32 %v1063, %v1066
        %v1068 = vrot.slane %v1067, 4
        %v1070 = vshll.u32 %v719, 16
        %v1072 = vrot.slane %v1070, 5
        %v1073 = vsel %vm287, %v1068, %v1072
        %v1074 = vshrl.u32 %v719, 16
        %v1076 = vrot.slane %v1074, 4
        %v1077 = vor.u32 %v1076, %v1072
        %v1078 = vrot.slane %v1077, 4
        %v1080 = vshll.u32 %v720, 16
        %v1082 = vrot.slane %v1080, 5
        %v1083 = vsel %vm287, %v1078, %v1082
        %v1085 = vshrl.u32 %v721, 16
        %v1087 = vrot.slane %v1085, 4
        %v1088 = vshll.u32 %v721, 16
        %v1090 = vrot.slane %v1088, 5
        %v1091 = vor.u32 %v1087, %v1090
        %v1092 = vrot.slane %v1091, 4
        %v1094 = vshll.u32 %v722, 16
        %v1096 = vrot.slane %v1094, 5
        %v1097 = vsel %vm287, %v1092, %v1096
        %v1098 = vshrl.u32 %v722, 16
        %v1100 = vrot.slane %v1098, 4
        %v1101 = vor.u32 %v1100, %v1096
        %v1102 = vrot.slane %v1101, 4
        %v1104 = vshll.u32 %v723, 16
        %v1106 = vrot.slane %v1104, 5
        %v1107 = vsel %vm287, %v1102, %v1106
        %s1108 = scalar_lea.vmem %s1, 2
        %v1109 = vld [vmem:[%s1108] sm:$0x3]
        %v1110 = vunpack.c.l.b16 %v737
        %v1111 = vunpack.c.l.b16 %v747
        %v1112 = vunpack.c.l.b16 %v761
        %v1113 = vunpack.c.l.b16 %v771
        %v1114 = vunpack.c.l.b16 %v785
        %v1115 = vunpack.c.l.b16 %v795
        %v1116 = vunpack.c.l.b16 %v809
        %v1117 = vunpack.c.l.b16 %v819
        %v1118 = vunpack.c.l.b16 %v833
        %v1119 = vunpack.c.l.b16 %v843
        %v1120 = vunpack.c.l.b16 %v857
        %v1121 = vunpack.c.l.b16 %v867
        %v1122 = vunpack.c.l.b16 %v881
        %v1123 = vunpack.c.l.b16 %v891
        %v1124 = vunpack.c.l.b16 %v905
        %v1125 = vunpack.c.l.b16 %v915
        %v1126 = vunpack.c.l.b16 %v929
        %v1127 = vunpack.c.l.b16 %v939
        %v1128 = vunpack.c.l.b16 %v953
        %v1129 = vunpack.c.l.b16 %v963
        %v1130 = vunpack.c.l.b16 %v977
        %v1131 = vunpack.c.l.b16 %v987
        %v1132 = vunpack.c.l.b16 %v1001
        %v1133 = vunpack.c.l.b16 %v1011
        %v1134 = vunpack.c.l.b16 %v1025
        %v1135 = vunpack.c.l.b16 %v1035
        %v1136 = vunpack.c.l.b16 %v1049
        %v1137 = vunpack.c.l.b16 %v1059
        %v1138 = vunpack.c.l.b16 %v1073
        %v1139 = vunpack.c.l.b16 %v1083
        %v1140 = vunpack.c.l.b16 %v1097
        %v1141 = vunpack.c.l.b16 %v1107
        %v1142 = vpack.c.b16 %v1111, %v1110
        %v1143 = vpack.c.b16 %v1113, %v1112
        %v1144 = vpack.c.b16 %v1115, %v1114
        %v1145 = vpack.c.b16 %v1117, %v1116
        %v1146 = vpack.c.b16 %v1119, %v1118
        %v1147 = vpack.c.b16 %v1121, %v1120
        %v1148 = vpack.c.b16 %v1123, %v1122
        %v1149 = vpack.c.b16 %v1125, %v1124
        %v1150 = vpack.c.b16 %v1127, %v1126
        %v1151 = vpack.c.b16 %v1129, %v1128
        %v1152 = vpack.c.b16 %v1131, %v1130
        %v1153 = vpack.c.b16 %v1133, %v1132
        %v1154 = vpack.c.b16 %v1135, %v1134
        %v1155 = vpack.c.b16 %v1137, %v1136
        %v1156 = vpack.c.b16 %v1139, %v1138
        %v1157 = vpack.c.b16 %v1141, %v1140
        %vm1158 = vcmask 31744
        %v1160 = vsel %vm1158, %v1142, 0
        %v1163 = vsel %vm1158, %v1143, 0
        %v1166 = vsel %vm1158, %v1144, 0
        %v1169 = vsel %vm1158, %v1145, 0
        %v1172 = vsel %vm1158, %v1146, 0
        %v1175 = vsel %vm1158, %v1147, 0
        %v1178 = vsel %vm1158, %v1148, 0
        %v1181 = vsel %vm1158, %v1149, 0
        %v1184 = vsel %vm1158, %v1150, 0
        %v1187 = vsel %vm1158, %v1151, 0
        %v1190 = vsel %vm1158, %v1152, 0
        %v1193 = vsel %vm1158, %v1153, 0
        %v1196 = vsel %vm1158, %v1154, 0
        %v1199 = vsel %vm1158, %v1155, 0
        %v1202 = vsel %vm1158, %v1156, 0
        %v1205 = vsel %vm1158, %v1157, 0
        %vm1207 = vcmask 1041408
        %v1209 = vsel %vm1207, %v1109, 0
        %1211 = vmatpush.bf16.msra.mxu0 0
        %1212 = vmatpush.bf16.msra.mxu0 0
        %1213 = vmatpush.bf16.msra.mxu0 0
        %1214 = vmatpush.bf16.msra.mxu0 0
        %1215 = vmatpush.bf16.msra.mxu0 0
        %1216 = vmatpush.bf16.msra.mxu0 0
        %1217 = vmatpush.bf16.msra.mxu0 0
        %1218 = vmatpush.bf16.msra.mxu0 %v1209
        %1219 = vmatmul.bf16.gmra.mxu0 %v1160
        %v1220 = vpop.f32.mrf.mxu0
        %v1221 = vadd.f32 0.0, %v1220
        %v1222 = vpop.f32.mrf.mxu0
        %v1223 = vadd.f32 0.0, %v1222
        %1224 = vmatmul.bf16.gmra.mxu0 %v1163
        %v1225 = vpop.f32.mrf.mxu0
        %v1226 = vadd.f32 0.0, %v1225
        %v1227 = vpop.f32.mrf.mxu0
        %v1228 = vadd.f32 0.0, %v1227
        %1229 = vmatmul.bf16.gmra.mxu0 %v1166
        %v1230 = vpop.f32.mrf.mxu0
        %v1231 = vadd.f32 0.0, %v1230
        %v1232 = vpop.f32.mrf.mxu0
        %v1233 = vadd.f32 0.0, %v1232
        %1234 = vmatmul.bf16.gmra.mxu0 %v1169
        %v1235 = vpop.f32.mrf.mxu0
        %v1236 = vadd.f32 0.0, %v1235
        %v1237 = vpop.f32.mrf.mxu0
        %v1238 = vadd.f32 0.0, %v1237
        %1239 = vmatmul.bf16.gmra.mxu0 %v1172
        %v1240 = vpop.f32.mrf.mxu0
        %v1241 = vadd.f32 0.0, %v1240
        %v1242 = vpop.f32.mrf.mxu0
        %v1243 = vadd.f32 0.0, %v1242
        %1244 = vmatmul.bf16.gmra.mxu0 %v1175
        %v1245 = vpop.f32.mrf.mxu0
        %v1246 = vadd.f32 0.0, %v1245
        %v1247 = vpop.f32.mrf.mxu0
        %v1248 = vadd.f32 0.0, %v1247
        %1249 = vmatmul.bf16.gmra.mxu0 %v1178
        %v1250 = vpop.f32.mrf.mxu0
        %v1251 = vadd.f32 0.0, %v1250
        %v1252 = vpop.f32.mrf.mxu0
        %v1253 = vadd.f32 0.0, %v1252
        %1254 = vmatmul.bf16.gmra.mxu0 %v1181
        %v1255 = vpop.f32.mrf.mxu0
        %v1256 = vadd.f32 0.0, %v1255
        %v1257 = vpop.f32.mrf.mxu0
        %v1258 = vadd.f32 0.0, %v1257
        %1259 = vmatmul.bf16.gmra.mxu0 %v1184
        %v1260 = vpop.f32.mrf.mxu0
        %v1261 = vadd.f32 0.0, %v1260
        %v1262 = vpop.f32.mrf.mxu0
        %v1263 = vadd.f32 0.0, %v1262
        %1264 = vmatmul.bf16.gmra.mxu0 %v1187
        %v1265 = vpop.f32.mrf.mxu0
        %v1266 = vadd.f32 0.0, %v1265
        %v1267 = vpop.f32.mrf.mxu0
        %v1268 = vadd.f32 0.0, %v1267
        %1269 = vmatmul.bf16.gmra.mxu0 %v1190
        %v1270 = vpop.f32.mrf.mxu0
        %v1271 = vadd.f32 0.0, %v1270
        %v1272 = vpop.f32.mrf.mxu0
        %v1273 = vadd.f32 0.0, %v1272
        %1274 = vmatmul.bf16.gmra.mxu0 %v1193
        %v1275 = vpop.f32.mrf.mxu0
        %v1276 = vadd.f32 0.0, %v1275
        %v1277 = vpop.f32.mrf.mxu0
        %v1278 = vadd.f32 0.0, %v1277
        %1279 = vmatmul.bf16.gmra.mxu0 %v1196
        %v1280 = vpop.f32.mrf.mxu0
        %v1281 = vadd.f32 0.0, %v1280
        %v1282 = vpop.f32.mrf.mxu0
        %v1283 = vadd.f32 0.0, %v1282
        %1284 = vmatmul.bf16.gmra.mxu0 %v1199
        %v1285 = vpop.f32.mrf.mxu0
        %v1286 = vadd.f32 0.0, %v1285
        %v1287 = vpop.f32.mrf.mxu0
        %v1288 = vadd.f32 0.0, %v1287
        %1289 = vmatmul.bf16.gmra.mxu0 %v1202
        %v1290 = vpop.f32.mrf.mxu0
        %v1291 = vadd.f32 0.0, %v1290
        %v1292 = vpop.f32.mrf.mxu0
        %v1293 = vadd.f32 0.0, %v1292
        %1294 = vmatmul.bf16.gmra.mxu0 %v1205
        %v1295 = vpop.f32.mrf.mxu0
        %v1296 = vadd.f32 0.0, %v1295
        %v1297 = vpop.f32.mrf.mxu0
        %v1298 = vadd.f32 0.0, %v1297
        %1299 = vdwg.mxu0
        %v1300 = vunpack.c.l.b16 %v301
        %v1301 = vunpack.c.l.b16 %v311
        %v1302 = vunpack.c.l.b16 %v325
        %v1303 = vunpack.c.l.b16 %v335
        %v1304 = vunpack.c.l.b16 %v349
        %v1305 = vunpack.c.l.b16 %v359
        %v1306 = vunpack.c.l.b16 %v373
        %v1307 = vunpack.c.l.b16 %v383
        %v1308 = vunpack.c.l.b16 %v397
        %v1309 = vunpack.c.l.b16 %v407
        %v1310 = vunpack.c.l.b16 %v421
        %v1311 = vunpack.c.l.b16 %v431
        %v1312 = vunpack.c.l.b16 %v445
        %v1313 = vunpack.c.l.b16 %v455
        %v1314 = vunpack.c.l.b16 %v469
        %v1315 = vunpack.c.l.b16 %v479
        %v1316 = vunpack.c.l.b16 %v493
        %v1317 = vunpack.c.l.b16 %v503
        %v1318 = vunpack.c.l.b16 %v517
        %v1319 = vunpack.c.l.b16 %v527
        %v1320 = vunpack.c.l.b16 %v541
        %v1321 = vunpack.c.l.b16 %v551
        %v1322 = vunpack.c.l.b16 %v565
        %v1323 = vunpack.c.l.b16 %v575
        %v1324 = vunpack.c.l.b16 %v589
        %v1325 = vunpack.c.l.b16 %v599
        %v1326 = vunpack.c.l.b16 %v613
        %v1327 = vunpack.c.l.b16 %v623
        %v1328 = vunpack.c.l.b16 %v637
        %v1329 = vunpack.c.l.b16 %v647
        %v1330 = vunpack.c.l.b16 %v661
        %v1331 = vunpack.c.l.b16 %v671
        %v1332 = vpack.c.b16 %v1301, %v1300
        %v1333 = vpack.c.b16 %v1303, %v1302
        %v1334 = vpack.c.b16 %v1305, %v1304
        %v1335 = vpack.c.b16 %v1307, %v1306
        %v1336 = vpack.c.b16 %v1309, %v1308
        %v1337 = vpack.c.b16 %v1311, %v1310
        %v1338 = vpack.c.b16 %v1313, %v1312
        %v1339 = vpack.c.b16 %v1315, %v1314
        %v1340 = vpack.c.b16 %v1317, %v1316
        %v1341 = vpack.c.b16 %v1319, %v1318
        %v1342 = vpack.c.b16 %v1321, %v1320
        %v1343 = vpack.c.b16 %v1323, %v1322
        %v1344 = vpack.c.b16 %v1325, %v1324
        %v1345 = vpack.c.b16 %v1327, %v1326
        %v1346 = vpack.c.b16 %v1329, %v1328
        %v1347 = vpack.c.b16 %v1331, %v1330
        %v1349 = vsel %vm1158, %v1332, 0
        %v1352 = vsel %vm1158, %v1333, 0
        %v1355 = vsel %vm1158, %v1334, 0
        %v1358 = vsel %vm1158, %v1335, 0
        %v1361 = vsel %vm1158, %v1336, 0
        %v1364 = vsel %vm1158, %v1337, 0
        %v1367 = vsel %vm1158, %v1338, 0
        %v1370 = vsel %vm1158, %v1339, 0
        %v1373 = vsel %vm1158, %v1340, 0
        %v1376 = vsel %vm1158, %v1341, 0
        %v1379 = vsel %vm1158, %v1342, 0
        %v1382 = vsel %vm1158, %v1343, 0
        %v1385 = vsel %vm1158, %v1344, 0
        %v1388 = vsel %vm1158, %v1345, 0
        %v1391 = vsel %vm1158, %v1346, 0
        %v1394 = vsel %vm1158, %v1347, 0
        %v1397 = vsel %vm1207, %v672, 0
        %1399 = vmatpush.bf16.msra.mxu0 0
        %1400 = vmatpush.bf16.msra.mxu0 0
        %1401 = vmatpush.bf16.msra.mxu0 0
        %1402 = vmatpush.bf16.msra.mxu0 0
        %1403 = vmatpush.bf16.msra.mxu0 0
        %1404 = vmatpush.bf16.msra.mxu0 0
        %1405 = vmatpush.bf16.msra.mxu0 0
        %1406 = vmatpush.bf16.msra.mxu0 %v1397
        %1407 = vmatmul.bf16.gmra.mxu0 %v1349
        %v1408 = vpop.f32.mrf.mxu0
        %v1409 = vadd.f32 %v1221, %v1408
        %v1410 = vpop.f32.mrf.mxu0
        %v1411 = vadd.f32 %v1223, %v1410
        %1412 = vmatmul.bf16.gmra.mxu0 %v1352
        %v1413 = vpop.f32.mrf.mxu0
        %v1414 = vadd.f32 %v1226, %v1413
        %v1415 = vpop.f32.mrf.mxu0
        %v1416 = vadd.f32 %v1228, %v1415
        %1417 = vmatmul.bf16.gmra.mxu0 %v1355
        %v1418 = vpop.f32.mrf.mxu0
        %v1419 = vadd.f32 %v1231, %v1418
        %v1420 = vpop.f32.mrf.mxu0
        %v1421 = vadd.f32 %v1233, %v1420
        %1422 = vmatmul.bf16.gmra.mxu0 %v1358
        %v1423 = vpop.f32.mrf.mxu0
        %v1424 = vadd.f32 %v1236, %v1423
        %v1425 = vpop.f32.mrf.mxu0
        %v1426 = vadd.f32 %v1238, %v1425
        %1427 = vmatmul.bf16.gmra.mxu0 %v1361
        %v1428 = vpop.f32.mrf.mxu0
        %v1429 = vadd.f32 %v1241, %v1428
        %v1430 = vpop.f32.mrf.mxu0
        %v1431 = vadd.f32 %v1243, %v1430
        %1432 = vmatmul.bf16.gmra.mxu0 %v1364
        %v1433 = vpop.f32.mrf.mxu0
        %v1434 = vadd.f32 %v1246, %v1433
        %v1435 = vpop.f32.mrf.mxu0
        %v1436 = vadd.f32 %v1248, %v1435
        %1437 = vmatmul.bf16.gmra.mxu0 %v1367
        %v1438 = vpop.f32.mrf.mxu0
        %v1439 = vadd.f32 %v1251, %v1438
        %v1440 = vpop.f32.mrf.mxu0
        %v1441 = vadd.f32 %v1253, %v1440
        %1442 = vmatmul.bf16.gmra.mxu0 %v1370
        %v1443 = vpop.f32.mrf.mxu0
        %v1444 = vadd.f32 %v1256, %v1443
        %v1445 = vpop.f32.mrf.mxu0
        %v1446 = vadd.f32 %v1258, %v1445
        %1447 = vmatmul.bf16.gmra.mxu0 %v1373
        %v1448 = vpop.f32.mrf.mxu0
        %v1449 = vadd.f32 %v1261, %v1448
        %v1450 = vpop.f32.mrf.mxu0
        %v1451 = vadd.f32 %v1263, %v1450
        %1452 = vmatmul.bf16.gmra.mxu0 %v1376
        %v1453 = vpop.f32.mrf.mxu0
        %v1454 = vadd.f32 %v1266, %v1453
        %v1455 = vpop.f32.mrf.mxu0
        %v1456 = vadd.f32 %v1268, %v1455
        %1457 = vmatmul.bf16.gmra.mxu0 %v1379
        %v1458 = vpop.f32.mrf.mxu0
        %v1459 = vadd.f32 %v1271, %v1458
        %v1460 = vpop.f32.mrf.mxu0
        %v1461 = vadd.f32 %v1273, %v1460
        %1462 = vmatmul.bf16.gmra.mxu0 %v1382
        %v1463 = vpop.f32.mrf.mxu0
        %v1464 = vadd.f32 %v1276, %v1463
        %v1465 = vpop.f32.mrf.mxu0
        %v1466 = vadd.f32 %v1278, %v1465
        %1467 = vmatmul.bf16.gmra.mxu0 %v1385
        %v1468 = vpop.f32.mrf.mxu0
        %v1469 = vadd.f32 %v1281, %v1468
        %v1470 = vpop.f32.mrf.mxu0
        %v1471 = vadd.f32 %v1283, %v1470
        %1472 = vmatmul.bf16.gmra.mxu0 %v1388
        %v1473 = vpop.f32.mrf.mxu0
        %v1474 = vadd.f32 %v1286, %v1473
        %v1475 = vpop.f32.mrf.mxu0
        %v1476 = vadd.f32 %v1288, %v1475
        %1477 = vmatmul.bf16.gmra.mxu0 %v1391
        %v1478 = vpop.f32.mrf.mxu0
        %v1479 = vadd.f32 %v1291, %v1478
        %v1480 = vpop.f32.mrf.mxu0
        %v1481 = vadd.f32 %v1293, %v1480
        %1482 = vmatmul.bf16.gmra.mxu0 %v1394
        %v1483 = vpop.f32.mrf.mxu0
        %v1484 = vadd.f32 %v1296, %v1483
        %v1485 = vpop.f32.mrf.mxu0
        %v1486 = vadd.f32 %v1298, %v1485
        %1487 = vdwg.mxu0
        %v1488 = vld [vmem:[%s236] sm:$0xf]
        %v1489 = vld [vmem:[%s236 + $0x4] sm:$0xf]
        %v1490 = vld [vmem:[%s236 + $0xc] sm:$0xf]
        %v1491 = vld [vmem:[%s236 + $0x10] sm:$0xf]
        %v1492 = vld [vmem:[%s236 + $0x18] sm:$0xf]
        %v1493 = vld [vmem:[%s236 + $0x1c] sm:$0xf]
        %v1494 = vld [vmem:[%s236 + $0x24] sm:$0xf]
        %v1495 = vld [vmem:[%s236 + $0x28] sm:$0xf]
        %v1496 = vld [vmem:[%s236 + $0x30] sm:$0xf]
        %v1497 = vld [vmem:[%s236 + $0x34] sm:$0xf]
        %v1498 = vld [vmem:[%s236 + $0x3c] sm:$0xf]
        %v1499 = vld [vmem:[%s236 + $0x40] sm:$0xf]
        %v1500 = vld [vmem:[%s236 + $0x48] sm:$0xf]
        %v1501 = vld [vmem:[%s236 + $0x4c] sm:$0xf]
        %v1502 = vld [vmem:[%s236 + $0x54] sm:$0xf]
        %v1503 = vld [vmem:[%s236 + $0x58] sm:$0xf]
        %v1504 = vld [vmem:[%s236 + $0x60] sm:$0xf]
        %v1505 = vld [vmem:[%s236 + $0x64] sm:$0xf]
        %v1506 = vld [vmem:[%s236 + $0x6c] sm:$0xf]
        %v1507 = vld [vmem:[%s236 + $0x70] sm:$0xf]
        %v1508 = vld [vmem:[%s236 + $0x78] sm:$0xf]
        %v1509 = vld [vmem:[%s236 + $0x7c] sm:$0xf]
        %v1510 = vld [vmem:[%s236 + $0x84] sm:$0xf]
        %v1511 = vld [vmem:[%s236 + $0x88] sm:$0xf]
        %v1512 = vld [vmem:[%s236 + $0x90] sm:$0xf]
        %v1513 = vld [vmem:[%s236 + $0x94] sm:$0xf]
        %v1514 = vld [vmem:[%s236 + $0x9c] sm:$0xf]
        %v1515 = vld [vmem:[%s236 + $0xa0] sm:$0xf]
        %v1516 = vld [vmem:[%s236 + $0xa8] sm:$0xf]
        %v1517 = vld [vmem:[%s236 + $0xac] sm:$0xf]
        %v1518 = vld [vmem:[%s236 + $0xb4] sm:$0xf]
        %v1519 = vld [vmem:[%s236 + $0xb8] sm:$0xf]
        %s1520 = scalar_lea.vmem %s1, 4
        %v1521 = vld [vmem:[%s1520] sm:$0x3]
        %v1554 = vunpack.c.l.b16 %v1488
        %v1555 = vunpack.c.l.b16 %v1489
        %v1556 = vunpack.c.l.b16 %v1490
        %v1557 = vunpack.c.l.b16 %v1491
        %v1558 = vunpack.c.l.b16 %v1492
        %v1559 = vunpack.c.l.b16 %v1493
        %v1560 = vunpack.c.l.b16 %v1494
        %v1561 = vunpack.c.l.b16 %v1495
        %v1562 = vunpack.c.l.b16 %v1496
        %v1563 = vunpack.c.l.b16 %v1497
        %v1564 = vunpack.c.l.b16 %v1498
        %v1565 = vunpack.c.l.b16 %v1499
        %v1566 = vunpack.c.l.b16 %v1500
        %v1567 = vunpack.c.l.b16 %v1501
        %v1568 = vunpack.c.l.b16 %v1502
        %v1569 = vunpack.c.l.b16 %v1503
        %v1570 = vunpack.c.l.b16 %v1504
        %v1571 = vunpack.c.l.b16 %v1505
        %v1572 = vunpack.c.l.b16 %v1506
        %v1573 = vunpack.c.l.b16 %v1507
        %v1574 = vunpack.c.l.b16 %v1508
        %v1575 = vunpack.c.l.b16 %v1509
        %v1576 = vunpack.c.l.b16 %v1510
        %v1577 = vunpack.c.l.b16 %v1511
        %v1578 = vunpack.c.l.b16 %v1512
        %v1579 = vunpack.c.l.b16 %v1513
        %v1580 = vunpack.c.l.b16 %v1514
        %v1581 = vunpack.c.l.b16 %v1515
        %v1582 = vunpack.c.l.b16 %v1516
        %v1583 = vunpack.c.l.b16 %v1517
        %v1584 = vunpack.c.l.b16 %v1518
        %v1585 = vunpack.c.l.b16 %v1519
        %v1586 = vpack.c.b16 %v1555, %v1554
        %v1587 = vpack.c.b16 %v1557, %v1556
        %v1588 = vpack.c.b16 %v1559, %v1558
        %v1589 = vpack.c.b16 %v1561, %v1560
        %v1590 = vpack.c.b16 %v1563, %v1562
        %v1591 = vpack.c.b16 %v1565, %v1564
        %v1592 = vpack.c.b16 %v1567, %v1566
        %v1593 = vpack.c.b16 %v1569, %v1568
        %v1594 = vpack.c.b16 %v1571, %v1570
        %v1595 = vpack.c.b16 %v1573, %v1572
        %v1596 = vpack.c.b16 %v1575, %v1574
        %v1597 = vpack.c.b16 %v1577, %v1576
        %v1598 = vpack.c.b16 %v1579, %v1578
        %v1599 = vpack.c.b16 %v1581, %v1580
        %v1600 = vpack.c.b16 %v1583, %v1582
        %v1601 = vpack.c.b16 %v1585, %v1584
        %v1603 = vsel %vm1158, %v1586, 0
        %v1606 = vsel %vm1158, %v1587, 0
        %v1609 = vsel %vm1158, %v1588, 0
        %v1612 = vsel %vm1158, %v1589, 0
        %v1615 = vsel %vm1158, %v1590, 0
        %v1618 = vsel %vm1158, %v1591, 0
        %v1621 = vsel %vm1158, %v1592, 0
        %v1624 = vsel %vm1158, %v1593, 0
        %v1627 = vsel %vm1158, %v1594, 0
        %v1630 = vsel %vm1158, %v1595, 0
        %v1633 = vsel %vm1158, %v1596, 0
        %v1636 = vsel %vm1158, %v1597, 0
        %v1639 = vsel %vm1158, %v1598, 0
        %v1642 = vsel %vm1158, %v1599, 0
        %v1645 = vsel %vm1158, %v1600, 0
        %v1648 = vsel %vm1158, %v1601, 0
        %v1651 = vsel %vm1207, %v1521, 0
        %1653 = vmatpush.bf16.msra.mxu0 0
        %1654 = vmatpush.bf16.msra.mxu0 0
        %1655 = vmatpush.bf16.msra.mxu0 0
        %1656 = vmatpush.bf16.msra.mxu0 0
        %1657 = vmatpush.bf16.msra.mxu0 0
        %1658 = vmatpush.bf16.msra.mxu0 0
        %1659 = vmatpush.bf16.msra.mxu0 0
        %1660 = vmatpush.bf16.msra.mxu0 %v1651
        %1661 = vmatmul.bf16.gmra.mxu0 %v1603
        %v1662 = vpop.f32.mrf.mxu0
        %v1663 = vadd.f32 0.0, %v1662
        %v1664 = vpop.f32.mrf.mxu0
        %v1665 = vadd.f32 0.0, %v1664
        %1666 = vmatmul.bf16.gmra.mxu0 %v1606
        %v1667 = vpop.f32.mrf.mxu0
        %v1668 = vadd.f32 0.0, %v1667
        %v1669 = vpop.f32.mrf.mxu0
        %v1670 = vadd.f32 0.0, %v1669
        %1671 = vmatmul.bf16.gmra.mxu0 %v1609
        %v1672 = vpop.f32.mrf.mxu0
        %v1673 = vadd.f32 0.0, %v1672
        %v1674 = vpop.f32.mrf.mxu0
        %v1675 = vadd.f32 0.0, %v1674
        %1676 = vmatmul.bf16.gmra.mxu0 %v1612
        %v1677 = vpop.f32.mrf.mxu0
        %v1678 = vadd.f32 0.0, %v1677
        %v1679 = vpop.f32.mrf.mxu0
        %v1680 = vadd.f32 0.0, %v1679
        %1681 = vmatmul.bf16.gmra.mxu0 %v1615
        %v1682 = vpop.f32.mrf.mxu0
        %v1683 = vadd.f32 0.0, %v1682
        %v1684 = vpop.f32.mrf.mxu0
        %v1685 = vadd.f32 0.0, %v1684
        %1686 = vmatmul.bf16.gmra.mxu0 %v1618
        %v1687 = vpop.f32.mrf.mxu0
        %v1688 = vadd.f32 0.0, %v1687
        %v1689 = vpop.f32.mrf.mxu0
        %v1690 = vadd.f32 0.0, %v1689
        %1691 = vmatmul.bf16.gmra.mxu0 %v1621
        %v1692 = vpop.f32.mrf.mxu0
        %v1693 = vadd.f32 0.0, %v1692
        %v1694 = vpop.f32.mrf.mxu0
        %v1695 = vadd.f32 0.0, %v1694
        %1696 = vmatmul.bf16.gmra.mxu0 %v1624
        %v1697 = vpop.f32.mrf.mxu0
        %v1698 = vadd.f32 0.0, %v1697
        %v1699 = vpop.f32.mrf.mxu0
        %v1700 = vadd.f32 0.0, %v1699
        %1701 = vmatmul.bf16.gmra.mxu0 %v1627
        %v1702 = vpop.f32.mrf.mxu0
        %v1703 = vadd.f32 0.0, %v1702
        %v1704 = vpop.f32.mrf.mxu0
        %v1705 = vadd.f32 0.0, %v1704
        %1706 = vmatmul.bf16.gmra.mxu0 %v1630
        %v1707 = vpop.f32.mrf.mxu0
        %v1708 = vadd.f32 0.0, %v1707
        %v1709 = vpop.f32.mrf.mxu0
        %v1710 = vadd.f32 0.0, %v1709
        %1711 = vmatmul.bf16.gmra.mxu0 %v1633
        %v1712 = vpop.f32.mrf.mxu0
        %v1713 = vadd.f32 0.0, %v1712
        %v1714 = vpop.f32.mrf.mxu0
        %v1715 = vadd.f32 0.0, %v1714
        %1716 = vmatmul.bf16.gmra.mxu0 %v1636
        %v1717 = vpop.f32.mrf.mxu0
        %v1718 = vadd.f32 0.0, %v1717
        %v1719 = vpop.f32.mrf.mxu0
        %v1720 = vadd.f32 0.0, %v1719
        %1721 = vmatmul.bf16.gmra.mxu0 %v1639
        %v1722 = vpop.f32.mrf.mxu0
        %v1723 = vadd.f32 0.0, %v1722
        %v1724 = vpop.f32.mrf.mxu0
        %v1725 = vadd.f32 0.0, %v1724
        %1726 = vmatmul.bf16.gmra.mxu0 %v1642
        %v1727 = vpop.f32.mrf.mxu0
        %v1728 = vadd.f32 0.0, %v1727
        %v1729 = vpop.f32.mrf.mxu0
        %v1730 = vadd.f32 0.0, %v1729
        %1731 = vmatmul.bf16.gmra.mxu0 %v1645
        %v1732 = vpop.f32.mrf.mxu0
        %v1733 = vadd.f32 0.0, %v1732
        %v1734 = vpop.f32.mrf.mxu0
        %v1735 = vadd.f32 0.0, %v1734
        %1736 = vmatmul.bf16.gmra.mxu0 %v1648
        %v1737 = vpop.f32.mrf.mxu0
        %v1738 = vadd.f32 0.0, %v1737
        %v1739 = vpop.f32.mrf.mxu0
        %v1740 = vadd.f32 0.0, %v1739
        %1741 = vdwg.mxu0
        %v1742 = vadd.f32 %v1409, %v1663
        %v1743 = vadd.f32 %v1411, %v1665
        %v1744 = vadd.f32 %v1414, %v1668
        %v1745 = vadd.f32 %v1416, %v1670
        %v1746 = vadd.f32 %v1419, %v1673
        %v1747 = vadd.f32 %v1421, %v1675
        %v1748 = vadd.f32 %v1424, %v1678
        %v1749 = vadd.f32 %v1426, %v1680
        %v1750 = vadd.f32 %v1429, %v1683
        %v1751 = vadd.f32 %v1431, %v1685
        %v1752 = vadd.f32 %v1434, %v1688
        %v1753 = vadd.f32 %v1436, %v1690
        %v1754 = vadd.f32 %v1439, %v1693
        %v1755 = vadd.f32 %v1441, %v1695
        %v1756 = vadd.f32 %v1444, %v1698
        %v1757 = vadd.f32 %v1446, %v1700
        %v1758 = vadd.f32 %v1449, %v1703
        %v1759 = vadd.f32 %v1451, %v1705
        %v1760 = vadd.f32 %v1454, %v1708
        %v1761 = vadd.f32 %v1456, %v1710
        %v1762 = vadd.f32 %v1459, %v1713
        %v1763 = vadd.f32 %v1461, %v1715
        %v1764 = vadd.f32 %v1464, %v1718
        %v1765 = vadd.f32 %v1466, %v1720
        %v1766 = vadd.f32 %v1469, %v1723
        %v1767 = vadd.f32 %v1471, %v1725
        %v1768 = vadd.f32 %v1474, %v1728
        %v1769 = vadd.f32 %v1476, %v1730
        %v1770 = vadd.f32 %v1479, %v1733
        %v1771 = vadd.f32 %v1481, %v1735
        %v1772 = vadd.f32 %v1484, %v1738
        %v1773 = vadd.f32 %v1486, %v1740
        %v1774 = vld [vmem:[%s675] sm:$0xf]
        %v1775 = vld [vmem:[%s675 + $0x4] sm:$0xf]
        %v1776 = vld [vmem:[%s675 + $0xc] sm:$0xf]
        %v1777 = vld [vmem:[%s675 + $0x10] sm:$0xf]
        %v1778 = vld [vmem:[%s675 + $0x18] sm:$0xf]
        %v1779 = vld [vmem:[%s675 + $0x1c] sm:$0xf]
        %v1780 = vld [vmem:[%s675 + $0x24] sm:$0xf]
        %v1781 = vld [vmem:[%s675 + $0x28] sm:$0xf]
        %v1782 = vld [vmem:[%s675 + $0x30] sm:$0xf]
        %v1783 = vld [vmem:[%s675 + $0x34] sm:$0xf]
        %v1784 = vld [vmem:[%s675 + $0x3c] sm:$0xf]
        %v1785 = vld [vmem:[%s675 + $0x40] sm:$0xf]
        %v1786 = vld [vmem:[%s675 + $0x48] sm:$0xf]
        %v1787 = vld [vmem:[%s675 + $0x4c] sm:$0xf]
        %v1788 = vld [vmem:[%s675 + $0x54] sm:$0xf]
        %v1789 = vld [vmem:[%s675 + $0x58] sm:$0xf]
        %v1790 = vld [vmem:[%s675 + $0x60] sm:$0xf]
        %v1791 = vld [vmem:[%s675 + $0x64] sm:$0xf]
        %v1792 = vld [vmem:[%s675 + $0x6c] sm:$0xf]
        %v1793 = vld [vmem:[%s675 + $0x70] sm:$0xf]
        %v1794 = vld [vmem:[%s675 + $0x78] sm:$0xf]
        %v1795 = vld [vmem:[%s675 + $0x7c] sm:$0xf]
        %v1796 = vld [vmem:[%s675 + $0x84] sm:$0xf]
        %v1797 = vld [vmem:[%s675 + $0x88] sm:$0xf]
        %v1798 = vld [vmem:[%s675 + $0x90] sm:$0xf]
        %v1799 = vld [vmem:[%s675 + $0x94] sm:$0xf]
        %v1800 = vld [vmem:[%s675 + $0x9c] sm:$0xf]
        %v1801 = vld [vmem:[%s675 + $0xa0] sm:$0xf]
        %v1802 = vld [vmem:[%s675 + $0xa8] sm:$0xf]
        %v1803 = vld [vmem:[%s675 + $0xac] sm:$0xf]
        %v1804 = vld [vmem:[%s675 + $0xb4] sm:$0xf]
        %v1805 = vld [vmem:[%s675 + $0xb8] sm:$0xf]
        %s1806 = scalar_lea.vmem %s1, 6
        %v1807 = vld [vmem:[%s1806] sm:$0x3]
        %v1840 = vunpack.c.l.b16 %v1774
        %v1841 = vunpack.c.l.b16 %v1775
        %v1842 = vunpack.c.l.b16 %v1776
        %v1843 = vunpack.c.l.b16 %v1777
        %v1844 = vunpack.c.l.b16 %v1778
        %v1845 = vunpack.c.l.b16 %v1779
        %v1846 = vunpack.c.l.b16 %v1780
        %v1847 = vunpack.c.l.b16 %v1781
        %v1848 = vunpack.c.l.b16 %v1782
        %v1849 = vunpack.c.l.b16 %v1783
        %v1850 = vunpack.c.l.b16 %v1784
        %v1851 = vunpack.c.l.b16 %v1785
        %v1852 = vunpack.c.l.b16 %v1786
        %v1853 = vunpack.c.l.b16 %v1787
        %v1854 = vunpack.c.l.b16 %v1788
        %v1855 = vunpack.c.l.b16 %v1789
        %v1856 = vunpack.c.l.b16 %v1790
        %v1857 = vunpack.c.l.b16 %v1791
        %v1858 = vunpack.c.l.b16 %v1792
        %v1859 = vunpack.c.l.b16 %v1793
        %v1860 = vunpack.c.l.b16 %v1794
        %v1861 = vunpack.c.l.b16 %v1795
        %v1862 = vunpack.c.l.b16 %v1796
        %v1863 = vunpack.c.l.b16 %v1797
        %v1864 = vunpack.c.l.b16 %v1798
        %v1865 = vunpack.c.l.b16 %v1799
        %v1866 = vunpack.c.l.b16 %v1800
        %v1867 = vunpack.c.l.b16 %v1801
        %v1868 = vunpack.c.l.b16 %v1802
        %v1869 = vunpack.c.l.b16 %v1803
        %v1870 = vunpack.c.l.b16 %v1804
        %v1871 = vunpack.c.l.b16 %v1805
        %v1872 = vpack.c.b16 %v1841, %v1840
        %v1873 = vpack.c.b16 %v1843, %v1842
        %v1874 = vpack.c.b16 %v1845, %v1844
        %v1875 = vpack.c.b16 %v1847, %v1846
        %v1876 = vpack.c.b16 %v1849, %v1848
        %v1877 = vpack.c.b16 %v1851, %v1850
        %v1878 = vpack.c.b16 %v1853, %v1852
        %v1879 = vpack.c.b16 %v1855, %v1854
        %v1880 = vpack.c.b16 %v1857, %v1856
        %v1881 = vpack.c.b16 %v1859, %v1858
        %v1882 = vpack.c.b16 %v1861, %v1860
        %v1883 = vpack.c.b16 %v1863, %v1862
        %v1884 = vpack.c.b16 %v1865, %v1864
        %v1885 = vpack.c.b16 %v1867, %v1866
        %v1886 = vpack.c.b16 %v1869, %v1868
        %v1887 = vpack.c.b16 %v1871, %v1870
        %v1889 = vsel %vm1158, %v1872, 0
        %v1892 = vsel %vm1158, %v1873, 0
        %v1895 = vsel %vm1158, %v1874, 0
        %v1898 = vsel %vm1158, %v1875, 0
        %v1901 = vsel %vm1158, %v1876, 0
        %v1904 = vsel %vm1158, %v1877, 0
        %v1907 = vsel %vm1158, %v1878, 0
        %v1910 = vsel %vm1158, %v1879, 0
        %v1913 = vsel %vm1158, %v1880, 0
        %v1916 = vsel %vm1158, %v1881, 0
        %v1919 = vsel %vm1158, %v1882, 0
        %v1922 = vsel %vm1158, %v1883, 0
        %v1925 = vsel %vm1158, %v1884, 0
        %v1928 = vsel %vm1158, %v1885, 0
        %v1931 = vsel %vm1158, %v1886, 0
        %v1934 = vsel %vm1158, %v1887, 0
        %v1937 = vsel %vm1207, %v1807, 0
        %1939 = vmatpush.bf16.msra.mxu0 0
        %1940 = vmatpush.bf16.msra.mxu0 0
        %1941 = vmatpush.bf16.msra.mxu0 0
        %1942 = vmatpush.bf16.msra.mxu0 0
        %1943 = vmatpush.bf16.msra.mxu0 0
        %1944 = vmatpush.bf16.msra.mxu0 0
        %1945 = vmatpush.bf16.msra.mxu0 0
        %1946 = vmatpush.bf16.msra.mxu0 %v1937
        %1947 = vmatmul.bf16.gmra.mxu0 %v1889
        %v1948 = vpop.f32.mrf.mxu0
        %v1949 = vadd.f32 0.0, %v1948
        %v1950 = vpop.f32.mrf.mxu0
        %v1951 = vadd.f32 0.0, %v1950
        %1952 = vmatmul.bf16.gmra.mxu0 %v1892
        %v1953 = vpop.f32.mrf.mxu0
        %v1954 = vadd.f32 0.0, %v1953
        %v1955 = vpop.f32.mrf.mxu0
        %v1956 = vadd.f32 0.0, %v1955
        %1957 = vmatmul.bf16.gmra.mxu0 %v1895
        %v1958 = vpop.f32.mrf.mxu0
        %v1959 = vadd.f32 0.0, %v1958
        %v1960 = vpop.f32.mrf.mxu0
        %v1961 = vadd.f32 0.0, %v1960
        %1962 = vmatmul.bf16.gmra.mxu0 %v1898
        %v1963 = vpop.f32.mrf.mxu0
        %v1964 = vadd.f32 0.0, %v1963
        %v1965 = vpop.f32.mrf.mxu0
        %v1966 = vadd.f32 0.0, %v1965
        %1967 = vmatmul.bf16.gmra.mxu0 %v1901
        %v1968 = vpop.f32.mrf.mxu0
        %v1969 = vadd.f32 0.0, %v1968
        %v1970 = vpop.f32.mrf.mxu0
        %v1971 = vadd.f32 0.0, %v1970
        %1972 = vmatmul.bf16.gmra.mxu0 %v1904
        %v1973 = vpop.f32.mrf.mxu0
        %v1974 = vadd.f32 0.0, %v1973
        %v1975 = vpop.f32.mrf.mxu0
        %v1976 = vadd.f32 0.0, %v1975
        %1977 = vmatmul.bf16.gmra.mxu0 %v1907
        %v1978 = vpop.f32.mrf.mxu0
        %v1979 = vadd.f32 0.0, %v1978
        %v1980 = vpop.f32.mrf.mxu0
        %v1981 = vadd.f32 0.0, %v1980
        %1982 = vmatmul.bf16.gmra.mxu0 %v1910
        %v1983 = vpop.f32.mrf.mxu0
        %v1984 = vadd.f32 0.0, %v1983
        %v1985 = vpop.f32.mrf.mxu0
        %v1986 = vadd.f32 0.0, %v1985
        %1987 = vmatmul.bf16.gmra.mxu0 %v1913
        %v1988 = vpop.f32.mrf.mxu0
        %v1989 = vadd.f32 0.0, %v1988
        %v1990 = vpop.f32.mrf.mxu0
        %v1991 = vadd.f32 0.0, %v1990
        %1992 = vmatmul.bf16.gmra.mxu0 %v1916
        %v1993 = vpop.f32.mrf.mxu0
        %v1994 = vadd.f32 0.0, %v1993
        %v1995 = vpop.f32.mrf.mxu0
        %v1996 = vadd.f32 0.0, %v1995
        %1997 = vmatmul.bf16.gmra.mxu0 %v1919
        %v1998 = vpop.f32.mrf.mxu0
        %v1999 = vadd.f32 0.0, %v1998
        %v2000 = vpop.f32.mrf.mxu0
        %v2001 = vadd.f32 0.0, %v2000
        %2002 = vmatmul.bf16.gmra.mxu0 %v1922
        %v2003 = vpop.f32.mrf.mxu0
        %v2004 = vadd.f32 0.0, %v2003
        %v2005 = vpop.f32.mrf.mxu0
        %v2006 = vadd.f32 0.0, %v2005
        %2007 = vmatmul.bf16.gmra.mxu0 %v1925
        %v2008 = vpop.f32.mrf.mxu0
        %v2009 = vadd.f32 0.0, %v2008
        %v2010 = vpop.f32.mrf.mxu0
        %v2011 = vadd.f32 0.0, %v2010
        %2012 = vmatmul.bf16.gmra.mxu0 %v1928
        %v2013 = vpop.f32.mrf.mxu0
        %v2014 = vadd.f32 0.0, %v2013
        %v2015 = vpop.f32.mrf.mxu0
        %v2016 = vadd.f32 0.0, %v2015
        %2017 = vmatmul.bf16.gmra.mxu0 %v1931
        %v2018 = vpop.f32.mrf.mxu0
        %v2019 = vadd.f32 0.0, %v2018
        %v2020 = vpop.f32.mrf.mxu0
        %v2021 = vadd.f32 0.0, %v2020
        %2022 = vmatmul.bf16.gmra.mxu0 %v1934
        %v2023 = vpop.f32.mrf.mxu0
        %v2024 = vadd.f32 0.0, %v2023
        %v2025 = vpop.f32.mrf.mxu0
        %v2026 = vadd.f32 0.0, %v2025
        %2027 = vdwg.mxu0
        %v2028 = vadd.f32 %v1742, %v1949
        %v2029 = vadd.f32 %v1743, %v1951
        %v2030 = vadd.f32 %v1744, %v1954
        %v2031 = vadd.f32 %v1745, %v1956
        %v2032 = vadd.f32 %v1746, %v1959
        %v2033 = vadd.f32 %v1747, %v1961
        %v2034 = vadd.f32 %v1748, %v1964
        %v2035 = vadd.f32 %v1749, %v1966
        %v2036 = vadd.f32 %v1750, %v1969
        %v2037 = vadd.f32 %v1751, %v1971
        %v2038 = vadd.f32 %v1752, %v1974
        %v2039 = vadd.f32 %v1753, %v1976
        %v2040 = vadd.f32 %v1754, %v1979
        %v2041 = vadd.f32 %v1755, %v1981
        %v2042 = vadd.f32 %v1756, %v1984
        %v2043 = vadd.f32 %v1757, %v1986
        %v2044 = vadd.f32 %v1758, %v1989
        %v2045 = vadd.f32 %v1759, %v1991
        %v2046 = vadd.f32 %v1760, %v1994
        %v2047 = vadd.f32 %v1761, %v1996
        %v2048 = vadd.f32 %v1762, %v1999
        %v2049 = vadd.f32 %v1763, %v2001
        %v2050 = vadd.f32 %v1764, %v2004
        %v2051 = vadd.f32 %v1765, %v2006
        %v2052 = vadd.f32 %v1766, %v2009
        %v2053 = vadd.f32 %v1767, %v2011
        %v2054 = vadd.f32 %v1768, %v2014
        %v2055 = vadd.f32 %v1769, %v2016
        %v2056 = vadd.f32 %v1770, %v2019
        %v2057 = vadd.f32 %v1771, %v2021
        %v2058 = vadd.f32 %v1772, %v2024
        %v2059 = vadd.f32 %v1773, %v2026
        %v2060 = vpack.c.bf16 %v2028, %v2028
        %v2061 = vpack.c.bf16 %v2029, %v2029
        %v2062 = vpack.c.bf16 %v2030, %v2030
        %v2063 = vpack.c.bf16 %v2031, %v2031
        %v2064 = vpack.c.bf16 %v2032, %v2032
        %v2065 = vpack.c.bf16 %v2033, %v2033
        %v2066 = vpack.c.bf16 %v2034, %v2034
        %v2067 = vpack.c.bf16 %v2035, %v2035
        %v2068 = vpack.c.bf16 %v2036, %v2036
        %v2069 = vpack.c.bf16 %v2037, %v2037
        %v2070 = vpack.c.bf16 %v2038, %v2038
        %v2071 = vpack.c.bf16 %v2039, %v2039
        %v2072 = vpack.c.bf16 %v2040, %v2040
        %v2073 = vpack.c.bf16 %v2041, %v2041
        %v2074 = vpack.c.bf16 %v2042, %v2042
        %v2075 = vpack.c.bf16 %v2043, %v2043
        %v2076 = vpack.c.bf16 %v2044, %v2044
        %v2077 = vpack.c.bf16 %v2045, %v2045
        %v2078 = vpack.c.bf16 %v2046, %v2046
        %v2079 = vpack.c.bf16 %v2047, %v2047
        %v2080 = vpack.c.bf16 %v2048, %v2048
        %v2081 = vpack.c.bf16 %v2049, %v2049
        %v2082 = vpack.c.bf16 %v2050, %v2050
        %v2083 = vpack.c.bf16 %v2051, %v2051
        %v2084 = vpack.c.bf16 %v2052, %v2052
        %v2085 = vpack.c.bf16 %v2053, %v2053
        %v2086 = vpack.c.bf16 %v2054, %v2054
        %v2087 = vpack.c.bf16 %v2055, %v2055
        %v2088 = vpack.c.bf16 %v2056, %v2056
        %v2089 = vpack.c.bf16 %v2057, %v2057
        %v2090 = vpack.c.bf16 %v2058, %v2058
        %v2091 = vpack.c.bf16 %v2059, %v2059
        %2092 = vst [vmem:[%s212] sm:$0xf] %v2060
        %2093 = vst [vmem:[%s212 + $0x4] sm:$0xf] %v2061
        %2094 = vst [vmem:[%s212 + $0x8] sm:$0xf] %v2062
        %2095 = vst [vmem:[%s212 + $0xc] sm:$0xf] %v2063
        %2096 = vst [vmem:[%s212 + $0x10] sm:$0xf] %v2064
        %2097 = vst [vmem:[%s212 + $0x14] sm:$0xf] %v2065
        %2098 = vst [vmem:[%s212 + $0x18] sm:$0xf] %v2066
        %2099 = vst [vmem:[%s212 + $0x1c] sm:$0xf] %v2067
        %2100 = vst [vmem:[%s212 + $0x20] sm:$0xf] %v2068
        %2101 = vst [vmem:[%s212 + $0x24] sm:$0xf] %v2069
        %2102 = vst [vmem:[%s212 + $0x28] sm:$0xf] %v2070
        %2103 = vst [vmem:[%s212 + $0x2c] sm:$0xf] %v2071
        %2104 = vst [vmem:[%s212 + $0x30] sm:$0xf] %v2072
        %2105 = vst [vmem:[%s212 + $0x34] sm:$0xf] %v2073
        %2106 = vst [vmem:[%s212 + $0x38] sm:$0xf] %v2074
        %2107 = vst [vmem:[%s212 + $0x3c] sm:$0xf] %v2075
        %2108 = vst [vmem:[%s212 + $0x40] sm:$0xf] %v2076
        %2109 = vst [vmem:[%s212 + $0x44] sm:$0xf] %v2077
        %2110 = vst [vmem:[%s212 + $0x48] sm:$0xf] %v2078
        %2111 = vst [vmem:[%s212 + $0x4c] sm:$0xf] %v2079
        %2112 = vst [vmem:[%s212 + $0x50] sm:$0xf] %v2080
        %2113 = vst [vmem:[%s212 + $0x54] sm:$0xf] %v2081
        %2114 = vst [vmem:[%s212 + $0x58] sm:$0xf] %v2082
        %2115 = vst [vmem:[%s212 + $0x5c] sm:$0xf] %v2083
        %2116 = vst [vmem:[%s212 + $0x60] sm:$0xf] %v2084
        %2117 = vst [vmem:[%s212 + $0x64] sm:$0xf] %v2085
        %2118 = vst [vmem:[%s212 + $0x68] sm:$0xf] %v2086
        %2119 = vst [vmem:[%s212 + $0x6c] sm:$0xf] %v2087
        %2120 = vst [vmem:[%s212 + $0x70] sm:$0xf] %v2088
        %2121 = vst [vmem:[%s212 + $0x74] sm:$0xf] %v2089
        %2122 = vst [vmem:[%s212 + $0x78] sm:$0xf] %v2090
        %2123 = vst [vmem:[%s212 + $0x7c] sm:$0xf] %v2091
        %v2124 = vadd.f32 %v2028, %v2029
        %v2125 = vadd.f32 %v2124, %v2030
        %v2126 = vadd.f32 %v2125, %v2031
        %v2127 = vadd.f32 %v2126, %v2032
        %v2128 = vadd.f32 %v2127, %v2033
        %v2129 = vadd.f32 %v2128, %v2034
        %v2130 = vadd.f32 %v2129, %v2035
        %v2131 = vadd.f32 %v2130, %v2036
        %v2132 = vadd.f32 %v2131, %v2037
        %v2133 = vadd.f32 %v2132, %v2038
        %v2134 = vadd.f32 %v2133, %v2039
        %v2135 = vadd.f32 %v2134, %v2040
        %v2136 = vadd.f32 %v2135, %v2041
        %v2137 = vadd.f32 %v2136, %v2042
        %v2138 = vadd.f32 %v2137, %v2043
        %v2139 = vadd.f32 %v2138, %v2044
        %v2140 = vadd.f32 %v2139, %v2045
        %v2141 = vadd.f32 %v2140, %v2046
        %v2142 = vadd.f32 %v2141, %v2047
        %v2143 = vadd.f32 %v2142, %v2048
        %v2144 = vadd.f32 %v2143, %v2049
        %v2145 = vadd.f32 %v2144, %v2050
        %v2146 = vadd.f32 %v2145, %v2051
        %v2147 = vadd.f32 %v2146, %v2052
        %v2148 = vadd.f32 %v2147, %v2053
        %v2149 = vadd.f32 %v2148, %v2054
        %v2150 = vadd.f32 %v2149, %v2055
        %v2151 = vadd.f32 %v2150, %v2056
        %v2152 = vadd.f32 %v2151, %v2057
        %v2153 = vadd.f32 %v2152, %v2058
        %v2154 = vadd.f32 %v2153, %v2059
        %v2155 = vrot.slane %v2154, 4
        %v2156 = vadd.f32 %v2154, %v2155
        %v2157 = vrot.slane %v2156, 2
        %v2158 = vadd.f32 %v2156, %v2157
        %v2159 = vrot.slane %v2158, 1
        %v2160 = vadd.f32 %v2158, %v2159
        %v2161 = vadd.f32 %v2160, 0.0
        %v2162 = vmul.f32 %v2028, %v2028
        %v2163 = vmul.f32 %v2029, %v2029
        %v2164 = vmul.f32 %v2030, %v2030
        %v2165 = vmul.f32 %v2031, %v2031
        %v2166 = vmul.f32 %v2032, %v2032
        %v2167 = vmul.f32 %v2033, %v2033
        %v2168 = vmul.f32 %v2034, %v2034
        %v2169 = vmul.f32 %v2035, %v2035
        %v2170 = vmul.f32 %v2036, %v2036
        %v2171 = vmul.f32 %v2037, %v2037
        %v2172 = vmul.f32 %v2038, %v2038
        %v2173 = vmul.f32 %v2039, %v2039
        %v2174 = vmul.f32 %v2040, %v2040
        %v2175 = vmul.f32 %v2041, %v2041
        %v2176 = vmul.f32 %v2042, %v2042
        %v2177 = vmul.f32 %v2043, %v2043
        %v2178 = vmul.f32 %v2044, %v2044
        %v2179 = vmul.f32 %v2045, %v2045
        %v2180 = vmul.f32 %v2046, %v2046
        %v2181 = vmul.f32 %v2047, %v2047
        %v2182 = vmul.f32 %v2048, %v2048
        %v2183 = vmul.f32 %v2049, %v2049
        %v2184 = vmul.f32 %v2050, %v2050
        %v2185 = vmul.f32 %v2051, %v2051
        %v2186 = vmul.f32 %v2052, %v2052
        %v2187 = vmul.f32 %v2053, %v2053
        %v2188 = vmul.f32 %v2054, %v2054
        %v2189 = vmul.f32 %v2055, %v2055
        %v2190 = vmul.f32 %v2056, %v2056
        %v2191 = vmul.f32 %v2057, %v2057
        %v2192 = vmul.f32 %v2058, %v2058
        %v2193 = vmul.f32 %v2059, %v2059
        %v2194 = vadd.f32 %v2162, %v2163
        %v2195 = vadd.f32 %v2194, %v2164
        %v2196 = vadd.f32 %v2195, %v2165
        %v2197 = vadd.f32 %v2196, %v2166
        %v2198 = vadd.f32 %v2197, %v2167
        %v2199 = vadd.f32 %v2198, %v2168
        %v2200 = vadd.f32 %v2199, %v2169
        %v2201 = vadd.f32 %v2200, %v2170
        %v2202 = vadd.f32 %v2201, %v2171
        %v2203 = vadd.f32 %v2202, %v2172
        %v2204 = vadd.f32 %v2203, %v2173
        %v2205 = vadd.f32 %v2204, %v2174
        %v2206 = vadd.f32 %v2205, %v2175
        %v2207 = vadd.f32 %v2206, %v2176
        %v2208 = vadd.f32 %v2207, %v2177
        %v2209 = vadd.f32 %v2208, %v2178
        %v2210 = vadd.f32 %v2209, %v2179
        %v2211 = vadd.f32 %v2210, %v2180
        %v2212 = vadd.f32 %v2211, %v2181
        %v2213 = vadd.f32 %v2212, %v2182
        %v2214 = vadd.f32 %v2213, %v2183
        %v2215 = vadd.f32 %v2214, %v2184
        %v2216 = vadd.f32 %v2215, %v2185
        %v2217 = vadd.f32 %v2216, %v2186
        %v2218 = vadd.f32 %v2217, %v2187
        %v2219 = vadd.f32 %v2218, %v2188
        %v2220 = vadd.f32 %v2219, %v2189
        %v2221 = vadd.f32 %v2220, %v2190
        %v2222 = vadd.f32 %v2221, %v2191
        %v2223 = vadd.f32 %v2222, %v2192
        %v2224 = vadd.f32 %v2223, %v2193
        %v2225 = vrot.slane %v2224, 4
        %v2226 = vadd.f32 %v2224, %v2225
        %v2227 = vrot.slane %v2226, 2
        %v2228 = vadd.f32 %v2226, %v2227
        %v2229 = vrot.slane %v2228, 1
        %v2230 = vadd.f32 %v2228, %v2229
        %v2231 = vadd.f32 %v2230, 0.0
        %v2232 = vld [vmem:[%s236] sm:$0xe]
        %v2233 = vld [vmem:[%s236 + $0x4] sm:$0xf]
        %v2234 = vld [vmem:[%s236 + $0x8] sm:$0x1]
        %v2235 = vld [vmem:[%s236 + $0xc] sm:$0xe]
        %v2236 = vld [vmem:[%s236 + $0x10] sm:$0xf]
        %v2237 = vld [vmem:[%s236 + $0x14] sm:$0x1]
        %v2238 = vld [vmem:[%s236 + $0x18] sm:$0xe]
        %v2239 = vld [vmem:[%s236 + $0x1c] sm:$0xf]
        %v2240 = vld [vmem:[%s236 + $0x20] sm:$0x1]
        %v2241 = vld [vmem:[%s236 + $0x24] sm:$0xe]
        %v2242 = vld [vmem:[%s236 + $0x28] sm:$0xf]
        %v2243 = vld [vmem:[%s236 + $0x2c] sm:$0x1]
        %v2244 = vld [vmem:[%s236 + $0x30] sm:$0xe]
        %v2245 = vld [vmem:[%s236 + $0x34] sm:$0xf]
        %v2246 = vld [vmem:[%s236 + $0x38] sm:$0x1]
        %v2247 = vld [vmem:[%s236 + $0x3c] sm:$0xe]
        %v2248 = vld [vmem:[%s236 + $0x40] sm:$0xf]
        %v2249 = vld [vmem:[%s236 + $0x44] sm:$0x1]
        %v2250 = vld [vmem:[%s236 + $0x48] sm:$0xe]
        %v2251 = vld [vmem:[%s236 + $0x4c] sm:$0xf]
        %v2252 = vld [vmem:[%s236 + $0x50] sm:$0x1]
        %v2253 = vld [vmem:[%s236 + $0x54] sm:$0xe]
        %v2254 = vld [vmem:[%s236 + $0x58] sm:$0xf]
        %v2255 = vld [vmem:[%s236 + $0x5c] sm:$0x1]
        %v2256 = vld [vmem:[%s236 + $0x60] sm:$0xe]
        %v2257 = vld [vmem:[%s236 + $0x64] sm:$0xf]
        %v2258 = vld [vmem:[%s236 + $0x68] sm:$0x1]
        %v2259 = vld [vmem:[%s236 + $0x6c] sm:$0xe]
        %v2260 = vld [vmem:[%s236 + $0x70] sm:$0xf]
        %v2261 = vld [vmem:[%s236 + $0x74] sm:$0x1]
        %v2262 = vld [vmem:[%s236 + $0x78] sm:$0xe]
        %v2263 = vld [vmem:[%s236 + $0x7c] sm:$0xf]
        %v2264 = vld [vmem:[%s236 + $0x80] sm:$0x1]
        %v2265 = vld [vmem:[%s236 + $0x84] sm:$0xe]
        %v2266 = vld [vmem:[%s236 + $0x88] sm:$0xf]
        %v2267 = vld [vmem:[%s236 + $0x8c] sm:$0x1]
        %v2268 = vld [vmem:[%s236 + $0x90] sm:$0xe]
        %v2269 = vld [vmem:[%s236 + $0x94] sm:$0xf]
        %v2270 = vld [vmem:[%s236 + $0x98] sm:$0x1]
        %v2271 = vld [vmem:[%s236 + $0x9c] sm:$0xe]
        %v2272 = vld [vmem:[%s236 + $0xa0] sm:$0xf]
        %v2273 = vld [vmem:[%s236 + $0xa4] sm:$0x1]
        %v2274 = vld [vmem:[%s236 + $0xa8] sm:$0xe]
        %v2275 = vld [vmem:[%s236 + $0xac] sm:$0xf]
        %v2276 = vld [vmem:[%s236 + $0xb0] sm:$0x1]
        %v2277 = vld [vmem:[%s236 + $0xb4] sm:$0xe]
        %v2278 = vld [vmem:[%s236 + $0xb8] sm:$0xf]
        %v2279 = vld [vmem:[%s236 + $0xbc] sm:$0x1]
        %vm2328 = vcmask 1042432
        %vm2329 = vcmask 1046532
        %vm2330 = vmor %vm2328, %vm2329
        %v2331 = vrot.slane %v2232, 5
        %v2332 = vrot.slane %v2331, 4
        %v2333 = vrot.slane %v2233, 5
        %v2334 = vsel %vm2330, %v2332, %v2333
        %v2335 = vrot.slane %v2333, 4
        %v2336 = vrot.slane %v2234, 5
        %v2337 = vsel %vm2330, %v2335, %v2336
        %v2338 = vrot.slane %v2235, 5
        %v2339 = vrot.slane %v2338, 4
        %v2340 = vrot.slane %v2236, 5
        %v2341 = vsel %vm2330, %v2339, %v2340
        %v2342 = vrot.slane %v2340, 4
        %v2343 = vrot.slane %v2237, 5
        %v2344 = vsel %vm2330, %v2342, %v2343
        %v2345 = vrot.slane %v2238, 5
        %v2346 = vrot.slane %v2345, 4
        %v2347 = vrot.slane %v2239, 5
        %v2348 = vsel %vm2330, %v2346, %v2347
        %v2349 = vrot.slane %v2347, 4
        %v2350 = vrot.slane %v2240, 5
        %v2351 = vsel %vm2330, %v2349, %v2350
        %v2352 = vrot.slane %v2241, 5
        %v2353 = vrot.slane %v2352, 4
        %v2354 = vrot.slane %v2242, 5
        %v2355 = vsel %vm2330, %v2353, %v2354
        %v2356 = vrot.slane %v2354, 4
        %v2357 = vrot.slane %v2243, 5
        %v2358 = vsel %vm2330, %v2356, %v2357
        %v2359 = vrot.slane %v2244, 5
        %v2360 = vrot.slane %v2359, 4
        %v2361 = vrot.slane %v2245, 5
        %v2362 = vsel %vm2330, %v2360, %v2361
        %v2363 = vrot.slane %v2361, 4
        %v2364 = vrot.slane %v2246, 5
        %v2365 = vsel %vm2330, %v2363, %v2364
        %v2366 = vrot.slane %v2247, 5
        %v2367 = vrot.slane %v2366, 4
        %v2368 = vrot.slane %v2248, 5
        %v2369 = vsel %vm2330, %v2367, %v2368
        %v2370 = vrot.slane %v2368, 4
        %v2371 = vrot.slane %v2249, 5
        %v2372 = vsel %vm2330, %v2370, %v2371
        %v2373 = vrot.slane %v2250, 5
        %v2374 = vrot.slane %v2373, 4
        %v2375 = vrot.slane %v2251, 5
        %v2376 = vsel %vm2330, %v2374, %v2375
        %v2377 = vrot.slane %v2375, 4
        %v2378 = vrot.slane %v2252, 5
        %v2379 = vsel %vm2330, %v2377, %v2378
        %v2380 = vrot.slane %v2253, 5
        %v2381 = vrot.slane %v2380, 4
        %v2382 = vrot.slane %v2254, 5
        %v2383 = vsel %vm2330, %v2381, %v2382
        %v2384 = vrot.slane %v2382, 4
        %v2385 = vrot.slane %v2255, 5
        %v2386 = vsel %vm2330, %v2384, %v2385
        %v2387 = vrot.slane %v2256, 5
        %v2388 = vrot.slane %v2387, 4
        %v2389 = vrot.slane %v2257, 5
        %v2390 = vsel %vm2330, %v2388, %v2389
        %v2391 = vrot.slane %v2389, 4
        %v2392 = vrot.slane %v2258, 5
        %v2393 = vsel %vm2330, %v2391, %v2392
        %v2394 = vrot.slane %v2259, 5
        %v2395 = vrot.slane %v2394, 4
        %v2396 = vrot.slane %v2260, 5
        %v2397 = vsel %vm2330, %v2395, %v2396
        %v2398 = vrot.slane %v2396, 4
        %v2399 = vrot.slane %v2261, 5
        %v2400 = vsel %vm2330, %v2398, %v2399
        %v2401 = vrot.slane %v2262, 5
        %v2402 = vrot.slane %v2401, 4
        %v2403 = vrot.slane %v2263, 5
        %v2404 = vsel %vm2330, %v2402, %v2403
        %v2405 = vrot.slane %v2403, 4
        %v2406 = vrot.slane %v2264, 5
        %v2407 = vsel %vm2330, %v2405, %v2406
        %v2408 = vrot.slane %v2265, 5
        %v2409 = vrot.slane %v2408, 4
        %v2410 = vrot.slane %v2266, 5
        %v2411 = vsel %vm2330, %v2409, %v2410
        %v2412 = vrot.slane %v2410, 4
        %v2413 = vrot.slane %v2267, 5
        %v2414 = vsel %vm2330, %v2412, %v2413
        %v2415 = vrot.slane %v2268, 5
        %v2416 = vrot.slane %v2415, 4
        %v2417 = vrot.slane %v2269, 5
        %v2418 = vsel %vm2330, %v2416, %v2417
        %v2419 = vrot.slane %v2417, 4
        %v2420 = vrot.slane %v2270, 5
        %v2421 = vsel %vm2330, %v2419, %v2420
        %v2422 = vrot.slane %v2271, 5
        %v2423 = vrot.slane %v2422, 4
        %v2424 = vrot.slane %v2272, 5
        %v2425 = vsel %vm2330, %v2423, %v2424
        %v2426 = vrot.slane %v2424, 4
        %v2427 = vrot.slane %v2273, 5
        %v2428 = vsel %vm2330, %v2426, %v2427
        %v2429 = vrot.slane %v2274, 5
        %v2430 = vrot.slane %v2429, 4
        %v2431 = vrot.slane %v2275, 5
        %v2432 = vsel %vm2330, %v2430, %v2431
        %v2433 = vrot.slane %v2431, 4
        %v2434 = vrot.slane %v2276, 5
        %v2435 = vsel %vm2330, %v2433, %v2434
        %v2436 = vrot.slane %v2277, 5
        %v2437 = vrot.slane %v2436, 4
        %v2438 = vrot.slane %v2278, 5
        %v2439 = vsel %vm2330, %v2437, %v2438
        %v2440 = vrot.slane %v2438, 4
        %v2441 = vrot.slane %v2279, 5
        %v2442 = vsel %vm2330, %v2440, %v2441
        %s2443 = scalar_lea.vmem %s1, 8
        %v2444 = vld [vmem:[%s2443] sm:$0x3]
        %v2445 = vld [vmem:[%s236] sm:$0xf]
        %v2446 = vld [vmem:[%s236 + $0xc] sm:$0xf]
        %v2447 = vld [vmem:[%s236 + $0x18] sm:$0xf]
        %v2448 = vld [vmem:[%s236 + $0x24] sm:$0xf]
        %v2449 = vld [vmem:[%s236 + $0x30] sm:$0xf]
        %v2450 = vld [vmem:[%s236 + $0x3c] sm:$0xf]
        %v2451 = vld [vmem:[%s236 + $0x48] sm:$0xf]
        %v2452 = vld [vmem:[%s236 + $0x54] sm:$0xf]
        %v2453 = vld [vmem:[%s236 + $0x60] sm:$0xf]
        %v2454 = vld [vmem:[%s236 + $0x6c] sm:$0xf]
        %v2455 = vld [vmem:[%s236 + $0x78] sm:$0xf]
        %v2456 = vld [vmem:[%s236 + $0x84] sm:$0xf]
        %v2457 = vld [vmem:[%s236 + $0x90] sm:$0xf]
        %v2458 = vld [vmem:[%s236 + $0x9c] sm:$0xf]
        %v2459 = vld [vmem:[%s236 + $0xa8] sm:$0xf]
        %v2460 = vld [vmem:[%s236 + $0xb4] sm:$0xf]
        %v2462 = vshrl.u32 %v2445, 16
        %v2464 = vrot.slane %v2462, 4
        %v2465 = vshll.u32 %v2445, 16
        %v2467 = vrot.slane %v2465, 5
        %v2468 = vor.u32 %v2464, %v2467
        %v2469 = vrot.slane %v2468, 4
        %v2471 = vshll.u32 %v2233, 16
        %v2473 = vrot.slane %v2471, 5
        %v2474 = vsel %vm287, %v2469, %v2473
        %v2475 = vshrl.u32 %v2233, 16
        %v2477 = vrot.slane %v2475, 4
        %v2478 = vor.u32 %v2477, %v2473
        %v2479 = vrot.slane %v2478, 4
        %v2481 = vshll.u32 %v2234, 16
        %v2483 = vrot.slane %v2481, 5
        %v2484 = vsel %vm287, %v2479, %v2483
        %v2486 = vshrl.u32 %v2446, 16
        %v2488 = vrot.slane %v2486, 4
        %v2489 = vshll.u32 %v2446, 16
        %v2491 = vrot.slane %v2489, 5
        %v2492 = vor.u32 %v2488, %v2491
        %v2493 = vrot.slane %v2492, 4
        %v2495 = vshll.u32 %v2236, 16
        %v2497 = vrot.slane %v2495, 5
        %v2498 = vsel %vm287, %v2493, %v2497
        %v2499 = vshrl.u32 %v2236, 16
        %v2501 = vrot.slane %v2499, 4
        %v2502 = vor.u32 %v2501, %v2497
        %v2503 = vrot.slane %v2502, 4
        %v2505 = vshll.u32 %v2237, 16
        %v2507 = vrot.slane %v2505, 5
        %v2508 = vsel %vm287, %v2503, %v2507
        %v2510 = vshrl.u32 %v2447, 16
        %v2512 = vrot.slane %v2510, 4
        %v2513 = vshll.u32 %v2447, 16
        %v2515 = vrot.slane %v2513, 5
        %v2516 = vor.u32 %v2512, %v2515
        %v2517 = vrot.slane %v2516, 4
        %v2519 = vshll.u32 %v2239, 16
        %v2521 = vrot.slane %v2519, 5
        %v2522 = vsel %vm287, %v2517, %v2521
        %v2523 = vshrl.u32 %v2239, 16
        %v2525 = vrot.slane %v2523, 4
        %v2526 = vor.u32 %v2525, %v2521
        %v2527 = vrot.slane %v2526, 4
        %v2529 = vshll.u32 %v2240, 16
        %v2531 = vrot.slane %v2529, 5
        %v2532 = vsel %vm287, %v2527, %v2531
        %v2534 = vshrl.u32 %v2448, 16
        %v2536 = vrot.slane %v2534, 4
        %v2537 = vshll.u32 %v2448, 16
        %v2539 = vrot.slane %v2537, 5
        %v2540 = vor.u32 %v2536, %v2539
        %v2541 = vrot.slane %v2540, 4
        %v2543 = vshll.u32 %v2242, 16
        %v2545 = vrot.slane %v2543, 5
        %v2546 = vsel %vm287, %v2541, %v2545
        %v2547 = vshrl.u32 %v2242, 16
        %v2549 = vrot.slane %v2547, 4
        %v2550 = vor.u32 %v2549, %v2545
        %v2551 = vrot.slane %v2550, 4
        %v2553 = vshll.u32 %v2243, 16
        %v2555 = vrot.slane %v2553, 5
        %v2556 = vsel %vm287, %v2551, %v2555
        %v2558 = vshrl.u32 %v2449, 16
        %v2560 = vrot.slane %v2558, 4
        %v2561 = vshll.u32 %v2449, 16
        %v2563 = vrot.slane %v2561, 5
        %v2564 = vor.u32 %v2560, %v2563
        %v2565 = vrot.slane %v2564, 4
        %v2567 = vshll.u32 %v2245, 16
        %v2569 = vrot.slane %v2567, 5
        %v2570 = vsel %vm287, %v2565, %v2569
        %v2571 = vshrl.u32 %v2245, 16
        %v2573 = vrot.slane %v2571, 4
        %v2574 = vor.u32 %v2573, %v2569
        %v2575 = vrot.slane %v2574, 4
        %v2577 = vshll.u32 %v2246, 16
        %v2579 = vrot.slane %v2577, 5
        %v2580 = vsel %vm287, %v2575, %v2579
        %v2582 = vshrl.u32 %v2450, 16
        %v2584 = vrot.slane %v2582, 4
        %v2585 = vshll.u32 %v2450, 16
        %v2587 = vrot.slane %v2585, 5
        %v2588 = vor.u32 %v2584, %v2587
        %v2589 = vrot.slane %v2588, 4
        %v2591 = vshll.u32 %v2248, 16
        %v2593 = vrot.slane %v2591, 5
        %v2594 = vsel %vm287, %v2589, %v2593
        %v2595 = vshrl.u32 %v2248, 16
        %v2597 = vrot.slane %v2595, 4
        %v2598 = vor.u32 %v2597, %v2593
        %v2599 = vrot.slane %v2598, 4
        %v2601 = vshll.u32 %v2249, 16
        %v2603 = vrot.slane %v2601, 5
        %v2604 = vsel %vm287, %v2599, %v2603
        %v2606 = vshrl.u32 %v2451, 16
        %v2608 = vrot.slane %v2606, 4
        %v2609 = vshll.u32 %v2451, 16
        %v2611 = vrot.slane %v2609, 5
        %v2612 = vor.u32 %v2608, %v2611
        %v2613 = vrot.slane %v2612, 4
        %v2615 = vshll.u32 %v2251, 16
        %v2617 = vrot.slane %v2615, 5
        %v2618 = vsel %vm287, %v2613, %v2617
        %v2619 = vshrl.u32 %v2251, 16
        %v2621 = vrot.slane %v2619, 4
        %v2622 = vor.u32 %v2621, %v2617
        %v2623 = vrot.slane %v2622, 4
        %v2625 = vshll.u32 %v2252, 16
        %v2627 = vrot.slane %v2625, 5
        %v2628 = vsel %vm287, %v2623, %v2627
        %v2630 = vshrl.u32 %v2452, 16
        %v2632 = vrot.slane %v2630, 4
        %v2633 = vshll.u32 %v2452, 16
        %v2635 = vrot.slane %v2633, 5
        %v2636 = vor.u32 %v2632, %v2635
        %v2637 = vrot.slane %v2636, 4
        %v2639 = vshll.u32 %v2254, 16
        %v2641 = vrot.slane %v2639, 5
        %v2642 = vsel %vm287, %v2637, %v2641
        %v2643 = vshrl.u32 %v2254, 16
        %v2645 = vrot.slane %v2643, 4
        %v2646 = vor.u32 %v2645, %v2641
        %v2647 = vrot.slane %v2646, 4
        %v2649 = vshll.u32 %v2255, 16
        %v2651 = vrot.slane %v2649, 5
        %v2652 = vsel %vm287, %v2647, %v2651
        %v2654 = vshrl.u32 %v2453, 16
        %v2656 = vrot.slane %v2654, 4
        %v2657 = vshll.u32 %v2453, 16
        %v2659 = vrot.slane %v2657, 5
        %v2660 = vor.u32 %v2656, %v2659
        %v2661 = vrot.slane %v2660, 4
        %v2663 = vshll.u32 %v2257, 16
        %v2665 = vrot.slane %v2663, 5
        %v2666 = vsel %vm287, %v2661, %v2665
        %v2667 = vshrl.u32 %v2257, 16
        %v2669 = vrot.slane %v2667, 4
        %v2670 = vor.u32 %v2669, %v2665
        %v2671 = vrot.slane %v2670, 4
        %v2673 = vshll.u32 %v2258, 16
        %v2675 = vrot.slane %v2673, 5
        %v2676 = vsel %vm287, %v2671, %v2675
        %v2678 = vshrl.u32 %v2454, 16
        %v2680 = vrot.slane %v2678, 4
        %v2681 = vshll.u32 %v2454, 16
        %v2683 = vrot.slane %v2681, 5
        %v2684 = vor.u32 %v2680, %v2683
        %v2685 = vrot.slane %v2684, 4
        %v2687 = vshll.u32 %v2260, 16
        %v2689 = vrot.slane %v2687, 5
        %v2690 = vsel %vm287, %v2685, %v2689
        %v2691 = vshrl.u32 %v2260, 16
        %v2693 = vrot.slane %v2691, 4
        %v2694 = vor.u32 %v2693, %v2689
        %v2695 = vrot.slane %v2694, 4
        %v2697 = vshll.u32 %v2261, 16
        %v2699 = vrot.slane %v2697, 5
        %v2700 = vsel %vm287, %v2695, %v2699
        %v2702 = vshrl.u32 %v2455, 16
        %v2704 = vrot.slane %v2702, 4
        %v2705 = vshll.u32 %v2455, 16
        %v2707 = vrot.slane %v2705, 5
        %v2708 = vor.u32 %v2704, %v2707
        %v2709 = vrot.slane %v2708, 4
        %v2711 = vshll.u32 %v2263, 16
        %v2713 = vrot.slane %v2711, 5
        %v2714 = vsel %vm287, %v2709, %v2713
        %v2715 = vshrl.u32 %v2263, 16
        %v2717 = vrot.slane %v2715, 4
        %v2718 = vor.u32 %v2717, %v2713
        %v2719 = vrot.slane %v2718, 4
        %v2721 = vshll.u32 %v2264, 16
        %v2723 = vrot.slane %v2721, 5
        %v2724 = vsel %vm287, %v2719, %v2723
        %v2726 = vshrl.u32 %v2456, 16
        %v2728 = vrot.slane %v2726, 4
        %v2729 = vshll.u32 %v2456, 16
        %v2731 = vrot.slane %v2729, 5
        %v2732 = vor.u32 %v2728, %v2731
        %v2733 = vrot.slane %v2732, 4
        %v2735 = vshll.u32 %v2266, 16
        %v2737 = vrot.slane %v2735, 5
        %v2738 = vsel %vm287, %v2733, %v2737
        %v2739 = vshrl.u32 %v2266, 16
        %v2741 = vrot.slane %v2739, 4
        %v2742 = vor.u32 %v2741, %v2737
        %v2743 = vrot.slane %v2742, 4
        %v2745 = vshll.u32 %v2267, 16
        %v2747 = vrot.slane %v2745, 5
        %v2748 = vsel %vm287, %v2743, %v2747
        %v2750 = vshrl.u32 %v2457, 16
        %v2752 = vrot.slane %v2750, 4
        %v2753 = vshll.u32 %v2457, 16
        %v2755 = vrot.slane %v2753, 5
        %v2756 = vor.u32 %v2752, %v2755
        %v2757 = vrot.slane %v2756, 4
        %v2759 = vshll.u32 %v2269, 16
        %v2761 = vrot.slane %v2759, 5
        %v2762 = vsel %vm287, %v2757, %v2761
        %v2763 = vshrl.u32 %v2269, 16
        %v2765 = vrot.slane %v2763, 4
        %v2766 = vor.u32 %v2765, %v2761
        %v2767 = vrot.slane %v2766, 4
        %v2769 = vshll.u32 %v2270, 16
        %v2771 = vrot.slane %v2769, 5
        %v2772 = vsel %vm287, %v2767, %v2771
        %v2774 = vshrl.u32 %v2458, 16
        %v2776 = vrot.slane %v2774, 4
        %v2777 = vshll.u32 %v2458, 16
        %v2779 = vrot.slane %v2777, 5
        %v2780 = vor.u32 %v2776, %v2779
        %v2781 = vrot.slane %v2780, 4
        %v2783 = vshll.u32 %v2272, 16
        %v2785 = vrot.slane %v2783, 5
        %v2786 = vsel %vm287, %v2781, %v2785
        %v2787 = vshrl.u32 %v2272, 16
        %v2789 = vrot.slane %v2787, 4
        %v2790 = vor.u32 %v2789, %v2785
        %v2791 = vrot.slane %v2790, 4
        %v2793 = vshll.u32 %v2273, 16
        %v2795 = vrot.slane %v2793, 5
        %v2796 = vsel %vm287, %v2791, %v2795
        %v2798 = vshrl.u32 %v2459, 16
        %v2800 = vrot.slane %v2798, 4
        %v2801 = vshll.u32 %v2459, 16
        %v2803 = vrot.slane %v2801, 5
        %v2804 = vor.u32 %v2800, %v2803
        %v2805 = vrot.slane %v2804, 4
        %v2807 = vshll.u32 %v2275, 16
        %v2809 = vrot.slane %v2807, 5
        %v2810 = vsel %vm287, %v2805, %v2809
        %v2811 = vshrl.u32 %v2275, 16
        %v2813 = vrot.slane %v2811, 4
        %v2814 = vor.u32 %v2813, %v2809
        %v2815 = vrot.slane %v2814, 4
        %v2817 = vshll.u32 %v2276, 16
        %v2819 = vrot.slane %v2817, 5
        %v2820 = vsel %vm287, %v2815, %v2819
        %v2822 = vshrl.u32 %v2460, 16
        %v2824 = vrot.slane %v2822, 4
        %v2825 = vshll.u32 %v2460, 16
        %v2827 = vrot.slane %v2825, 5
        %v2828 = vor.u32 %v2824, %v2827
        %v2829 = vrot.slane %v2828, 4
        %v2831 = vshll.u32 %v2278, 16
        %v2833 = vrot.slane %v2831, 5
        %v2834 = vsel %vm287, %v2829, %v2833
        %v2835 = vshrl.u32 %v2278, 16
        %v2837 = vrot.slane %v2835, 4
        %v2838 = vor.u32 %v2837, %v2833
        %v2839 = vrot.slane %v2838, 4
        %v2841 = vshll.u32 %v2279, 16
        %v2843 = vrot.slane %v2841, 5
        %v2844 = vsel %vm287, %v2839, %v2843
        %s2845 = scalar_lea.vmem %s1, 10
        %v2846 = vld [vmem:[%s2845] sm:$0x3]
        %v2847 = vunpack.c.l.b16 %v2474
        %v2848 = vunpack.c.l.b16 %v2484
        %v2849 = vunpack.c.l.b16 %v2498
        %v2850 = vunpack.c.l.b16 %v2508
        %v2851 = vunpack.c.l.b16 %v2522
        %v2852 = vunpack.c.l.b16 %v2532
        %v2853 = vunpack.c.l.b16 %v2546
        %v2854 = vunpack.c.l.b16 %v2556
        %v2855 = vunpack.c.l.b16 %v2570
        %v2856 = vunpack.c.l.b16 %v2580
        %v2857 = vunpack.c.l.b16 %v2594
        %v2858 = vunpack.c.l.b16 %v2604
        %v2859 = vunpack.c.l.b16 %v2618
        %v2860 = vunpack.c.l.b16 %v2628
        %v2861 = vunpack.c.l.b16 %v2642
        %v2862 = vunpack.c.l.b16 %v2652
        %v2863 = vunpack.c.l.b16 %v2666
        %v2864 = vunpack.c.l.b16 %v2676
        %v2865 = vunpack.c.l.b16 %v2690
        %v2866 = vunpack.c.l.b16 %v2700
        %v2867 = vunpack.c.l.b16 %v2714
        %v2868 = vunpack.c.l.b16 %v2724
        %v2869 = vunpack.c.l.b16 %v2738
        %v2870 = vunpack.c.l.b16 %v2748
        %v2871 = vunpack.c.l.b16 %v2762
        %v2872 = vunpack.c.l.b16 %v2772
        %v2873 = vunpack.c.l.b16 %v2786
        %v2874 = vunpack.c.l.b16 %v2796
        %v2875 = vunpack.c.l.b16 %v2810
        %v2876 = vunpack.c.l.b16 %v2820
        %v2877 = vunpack.c.l.b16 %v2834
        %v2878 = vunpack.c.l.b16 %v2844
        %v2879 = vpack.c.b16 %v2848, %v2847
        %v2880 = vpack.c.b16 %v2850, %v2849
        %v2881 = vpack.c.b16 %v2852, %v2851
        %v2882 = vpack.c.b16 %v2854, %v2853
        %v2883 = vpack.c.b16 %v2856, %v2855
        %v2884 = vpack.c.b16 %v2858, %v2857
        %v2885 = vpack.c.b16 %v2860, %v2859
        %v2886 = vpack.c.b16 %v2862, %v2861
        %v2887 = vpack.c.b16 %v2864, %v2863
        %v2888 = vpack.c.b16 %v2866, %v2865
        %v2889 = vpack.c.b16 %v2868, %v2867
        %v2890 = vpack.c.b16 %v2870, %v2869
        %v2891 = vpack.c.b16 %v2872, %v2871
        %v2892 = vpack.c.b16 %v2874, %v2873
        %v2893 = vpack.c.b16 %v2876, %v2875
        %v2894 = vpack.c.b16 %v2878, %v2877
        %v2896 = vsel %vm1158, %v2879, 0
        %v2899 = vsel %vm1158, %v2880, 0
        %v2902 = vsel %vm1158, %v2881, 0
        %v2905 = vsel %vm1158, %v2882, 0
        %v2908 = vsel %vm1158, %v2883, 0
        %v2911 = vsel %vm1158, %v2884, 0
        %v2914 = vsel %vm1158, %v2885, 0
        %v2917 = vsel %vm1158, %v2886, 0
        %v2920 = vsel %vm1158, %v2887, 0
        %v2923 = vsel %vm1158, %v2888, 0
        %v2926 = vsel %vm1158, %v2889, 0
        %v2929 = vsel %vm1158, %v2890, 0
        %v2932 = vsel %vm1158, %v2891, 0
        %v2935 = vsel %vm1158, %v2892, 0
        %v2938 = vsel %vm1158, %v2893, 0
        %v2941 = vsel %vm1158, %v2894, 0
        %v2944 = vsel %vm1207, %v2846, 0
        %2946 = vmatpush.bf16.msra.mxu0 0
        %2947 = vmatpush.bf16.msra.mxu0 0
        %2948 = vmatpush.bf16.msra.mxu0 0
        %2949 = vmatpush.bf16.msra.mxu0 0
        %2950 = vmatpush.bf16.msra.mxu0 0
        %2951 = vmatpush.bf16.msra.mxu0 0
        %2952 = vmatpush.bf16.msra.mxu0 0
        %2953 = vmatpush.bf16.msra.mxu0 %v2944
        %2954 = vmatmul.bf16.gmra.mxu0 %v2896
        %v2955 = vpop.f32.mrf.mxu0
        %v2956 = vadd.f32 0.0, %v2955
        %v2957 = vpop.f32.mrf.mxu0
        %v2958 = vadd.f32 0.0, %v2957
        %2959 = vmatmul.bf16.gmra.mxu0 %v2899
        %v2960 = vpop.f32.mrf.mxu0
        %v2961 = vadd.f32 0.0, %v2960
        %v2962 = vpop.f32.mrf.mxu0
        %v2963 = vadd.f32 0.0, %v2962
        %2964 = vmatmul.bf16.gmra.mxu0 %v2902
        %v2965 = vpop.f32.mrf.mxu0
        %v2966 = vadd.f32 0.0, %v2965
        %v2967 = vpop.f32.mrf.mxu0
        %v2968 = vadd.f32 0.0, %v2967
        %2969 = vmatmul.bf16.gmra.mxu0 %v2905
        %v2970 = vpop.f32.mrf.mxu0
        %v2971 = vadd.f32 0.0, %v2970
        %v2972 = vpop.f32.mrf.mxu0
        %v2973 = vadd.f32 0.0, %v2972
        %2974 = vmatmul.bf16.gmra.mxu0 %v2908
        %v2975 = vpop.f32.mrf.mxu0
        %v2976 = vadd.f32 0.0, %v2975
        %v2977 = vpop.f32.mrf.mxu0
        %v2978 = vadd.f32 0.0, %v2977
        %2979 = vmatmul.bf16.gmra.mxu0 %v2911
        %v2980 = vpop.f32.mrf.mxu0
        %v2981 = vadd.f32 0.0, %v2980
        %v2982 = vpop.f32.mrf.mxu0
        %v2983 = vadd.f32 0.0, %v2982
        %2984 = vmatmul.bf16.gmra.mxu0 %v2914
        %v2985 = vpop.f32.mrf.mxu0
        %v2986 = vadd.f32 0.0, %v2985
        %v2987 = vpop.f32.mrf.mxu0
        %v2988 = vadd.f32 0.0, %v2987
        %2989 = vmatmul.bf16.gmra.mxu0 %v2917
        %v2990 = vpop.f32.mrf.mxu0
        %v2991 = vadd.f32 0.0, %v2990
        %v2992 = vpop.f32.mrf.mxu0
        %v2993 = vadd.f32 0.0, %v2992
        %2994 = vmatmul.bf16.gmra.mxu0 %v2920
        %v2995 = vpop.f32.mrf.mxu0
        %v2996 = vadd.f32 0.0, %v2995
        %v2997 = vpop.f32.mrf.mxu0
        %v2998 = vadd.f32 0.0, %v2997
        %2999 = vmatmul.bf16.gmra.mxu0 %v2923
        %v3000 = vpop.f32.mrf.mxu0
        %v3001 = vadd.f32 0.0, %v3000
        %v3002 = vpop.f32.mrf.mxu0
        %v3003 = vadd.f32 0.0, %v3002
        %3004 = vmatmul.bf16.gmra.mxu0 %v2926
        %v3005 = vpop.f32.mrf.mxu0
        %v3006 = vadd.f32 0.0, %v3005
        %v3007 = vpop.f32.mrf.mxu0
        %v3008 = vadd.f32 0.0, %v3007
        %3009 = vmatmul.bf16.gmra.mxu0 %v2929
        %v3010 = vpop.f32.mrf.mxu0
        %v3011 = vadd.f32 0.0, %v3010
        %v3012 = vpop.f32.mrf.mxu0
        %v3013 = vadd.f32 0.0, %v3012
        %3014 = vmatmul.bf16.gmra.mxu0 %v2932
        %v3015 = vpop.f32.mrf.mxu0
        %v3016 = vadd.f32 0.0, %v3015
        %v3017 = vpop.f32.mrf.mxu0
        %v3018 = vadd.f32 0.0, %v3017
        %3019 = vmatmul.bf16.gmra.mxu0 %v2935
        %v3020 = vpop.f32.mrf.mxu0
        %v3021 = vadd.f32 0.0, %v3020
        %v3022 = vpop.f32.mrf.mxu0
        %v3023 = vadd.f32 0.0, %v3022
        %3024 = vmatmul.bf16.gmra.mxu0 %v2938
        %v3025 = vpop.f32.mrf.mxu0
        %v3026 = vadd.f32 0.0, %v3025
        %v3027 = vpop.f32.mrf.mxu0
        %v3028 = vadd.f32 0.0, %v3027
        %3029 = vmatmul.bf16.gmra.mxu0 %v2941
        %v3030 = vpop.f32.mrf.mxu0
        %v3031 = vadd.f32 0.0, %v3030
        %v3032 = vpop.f32.mrf.mxu0
        %v3033 = vadd.f32 0.0, %v3032
        %3034 = vdwg.mxu0
        %v3035 = vunpack.c.l.b16 %v2334
        %v3036 = vunpack.c.l.b16 %v2337
        %v3037 = vunpack.c.l.b16 %v2341
        %v3038 = vunpack.c.l.b16 %v2344
        %v3039 = vunpack.c.l.b16 %v2348
        %v3040 = vunpack.c.l.b16 %v2351
        %v3041 = vunpack.c.l.b16 %v2355
        %v3042 = vunpack.c.l.b16 %v2358
        %v3043 = vunpack.c.l.b16 %v2362
        %v3044 = vunpack.c.l.b16 %v2365
        %v3045 = vunpack.c.l.b16 %v2369
        %v3046 = vunpack.c.l.b16 %v2372
        %v3047 = vunpack.c.l.b16 %v2376
        %v3048 = vunpack.c.l.b16 %v2379
        %v3049 = vunpack.c.l.b16 %v2383
        %v3050 = vunpack.c.l.b16 %v2386
        %v3051 = vunpack.c.l.b16 %v2390
        %v3052 = vunpack.c.l.b16 %v2393
        %v3053 = vunpack.c.l.b16 %v2397
        %v3054 = vunpack.c.l.b16 %v2400
        %v3055 = vunpack.c.l.b16 %v2404
        %v3056 = vunpack.c.l.b16 %v2407
        %v3057 = vunpack.c.l.b16 %v2411
        %v3058 = vunpack.c.l.b16 %v2414
        %v3059 = vunpack.c.l.b16 %v2418
        %v3060 = vunpack.c.l.b16 %v2421
        %v3061 = vunpack.c.l.b16 %v2425
        %v3062 = vunpack.c.l.b16 %v2428
        %v3063 = vunpack.c.l.b16 %v2432
        %v3064 = vunpack.c.l.b16 %v2435
        %v3065 = vunpack.c.l.b16 %v2439
        %v3066 = vunpack.c.l.b16 %v2442
        %v3067 = vpack.c.b16 %v3036, %v3035
        %v3068 = vpack.c.b16 %v3038, %v3037
        %v3069 = vpack.c.b16 %v3040, %v3039
        %v3070 = vpack.c.b16 %v3042, %v3041
        %v3071 = vpack.c.b16 %v3044, %v3043
        %v3072 = vpack.c.b16 %v3046, %v3045
        %v3073 = vpack.c.b16 %v3048, %v3047
        %v3074 = vpack.c.b16 %v3050, %v3049
        %v3075 = vpack.c.b16 %v3052, %v3051
        %v3076 = vpack.c.b16 %v3054, %v3053
        %v3077 = vpack.c.b16 %v3056, %v3055
        %v3078 = vpack.c.b16 %v3058, %v3057
        %v3079 = vpack.c.b16 %v3060, %v3059
        %v3080 = vpack.c.b16 %v3062, %v3061
        %v3081 = vpack.c.b16 %v3064, %v3063
        %v3082 = vpack.c.b16 %v3066, %v3065
        %v3084 = vsel %vm1158, %v3067, 0
        %v3087 = vsel %vm1158, %v3068, 0
        %v3090 = vsel %vm1158, %v3069, 0
        %v3093 = vsel %vm1158, %v3070, 0
        %v3096 = vsel %vm1158, %v3071, 0
        %v3099 = vsel %vm1158, %v3072, 0
        %v3102 = vsel %vm1158, %v3073, 0
        %v3105 = vsel %vm1158, %v3074, 0
        %v3108 = vsel %vm1158, %v3075, 0
        %v3111 = vsel %vm1158, %v3076, 0
        %v3114 = vsel %vm1158, %v3077, 0
        %v3117 = vsel %vm1158, %v3078, 0
        %v3120 = vsel %vm1158, %v3079, 0
        %v3123 = vsel %vm1158, %v3080, 0
        %v3126 = vsel %vm1158, %v3081, 0
        %v3129 = vsel %vm1158, %v3082, 0
        %v3132 = vsel %vm1207, %v2444, 0
        %3134 = vmatpush.bf16.msra.mxu0 0
        %3135 = vmatpush.bf16.msra.mxu0 0
        %3136 = vmatpush.bf16.msra.mxu0 0
        %3137 = vmatpush.bf16.msra.mxu0 0
        %3138 = vmatpush.bf16.msra.mxu0 0
        %3139 = vmatpush.bf16.msra.mxu0 0
        %3140 = vmatpush.bf16.msra.mxu0 0
        %3141 = vmatpush.bf16.msra.mxu0 %v3132
        %3142 = vmatmul.bf16.gmra.mxu0 %v3084
        %v3143 = vpop.f32.mrf.mxu0
        %v3144 = vadd.f32 %v2956, %v3143
        %v3145 = vpop.f32.mrf.mxu0
        %v3146 = vadd.f32 %v2958, %v3145
        %3147 = vmatmul.bf16.gmra.mxu0 %v3087
        %v3148 = vpop.f32.mrf.mxu0
        %v3149 = vadd.f32 %v2961, %v3148
        %v3150 = vpop.f32.mrf.mxu0
        %v3151 = vadd.f32 %v2963, %v3150
        %3152 = vmatmul.bf16.gmra.mxu0 %v3090
        %v3153 = vpop.f32.mrf.mxu0
        %v3154 = vadd.f32 %v2966, %v3153
        %v3155 = vpop.f32.mrf.mxu0
        %v3156 = vadd.f32 %v2968, %v3155
        %3157 = vmatmul.bf16.gmra.mxu0 %v3093
        %v3158 = vpop.f32.mrf.mxu0
        %v3159 = vadd.f32 %v2971, %v3158
        %v3160 = vpop.f32.mrf.mxu0
        %v3161 = vadd.f32 %v2973, %v3160
        %3162 = vmatmul.bf16.gmra.mxu0 %v3096
        %v3163 = vpop.f32.mrf.mxu0
        %v3164 = vadd.f32 %v2976, %v3163
        %v3165 = vpop.f32.mrf.mxu0
        %v3166 = vadd.f32 %v2978, %v3165
        %3167 = vmatmul.bf16.gmra.mxu0 %v3099
        %v3168 = vpop.f32.mrf.mxu0
        %v3169 = vadd.f32 %v2981, %v3168
        %v3170 = vpop.f32.mrf.mxu0
        %v3171 = vadd.f32 %v2983, %v3170
        %3172 = vmatmul.bf16.gmra.mxu0 %v3102
        %v3173 = vpop.f32.mrf.mxu0
        %v3174 = vadd.f32 %v2986, %v3173
        %v3175 = vpop.f32.mrf.mxu0
        %v3176 = vadd.f32 %v2988, %v3175
        %3177 = vmatmul.bf16.gmra.mxu0 %v3105
        %v3178 = vpop.f32.mrf.mxu0
        %v3179 = vadd.f32 %v2991, %v3178
        %v3180 = vpop.f32.mrf.mxu0
        %v3181 = vadd.f32 %v2993, %v3180
        %3182 = vmatmul.bf16.gmra.mxu0 %v3108
        %v3183 = vpop.f32.mrf.mxu0
        %v3184 = vadd.f32 %v2996, %v3183
        %v3185 = vpop.f32.mrf.mxu0
        %v3186 = vadd.f32 %v2998, %v3185
        %3187 = vmatmul.bf16.gmra.mxu0 %v3111
        %v3188 = vpop.f32.mrf.mxu0
        %v3189 = vadd.f32 %v3001, %v3188
        %v3190 = vpop.f32.mrf.mxu0
        %v3191 = vadd.f32 %v3003, %v3190
        %3192 = vmatmul.bf16.gmra.mxu0 %v3114
        %v3193 = vpop.f32.mrf.mxu0
        %v3194 = vadd.f32 %v3006, %v3193
        %v3195 = vpop.f32.mrf.mxu0
        %v3196 = vadd.f32 %v3008, %v3195
        %3197 = vmatmul.bf16.gmra.mxu0 %v3117
        %v3198 = vpop.f32.mrf.mxu0
        %v3199 = vadd.f32 %v3011, %v3198
        %v3200 = vpop.f32.mrf.mxu0
        %v3201 = vadd.f32 %v3013, %v3200
        %3202 = vmatmul.bf16.gmra.mxu0 %v3120
        %v3203 = vpop.f32.mrf.mxu0
        %v3204 = vadd.f32 %v3016, %v3203
        %v3205 = vpop.f32.mrf.mxu0
        %v3206 = vadd.f32 %v3018, %v3205
        %3207 = vmatmul.bf16.gmra.mxu0 %v3123
        %v3208 = vpop.f32.mrf.mxu0
        %v3209 = vadd.f32 %v3021, %v3208
        %v3210 = vpop.f32.mrf.mxu0
        %v3211 = vadd.f32 %v3023, %v3210
        %3212 = vmatmul.bf16.gmra.mxu0 %v3126
        %v3213 = vpop.f32.mrf.mxu0
        %v3214 = vadd.f32 %v3026, %v3213
        %v3215 = vpop.f32.mrf.mxu0
        %v3216 = vadd.f32 %v3028, %v3215
        %3217 = vmatmul.bf16.gmra.mxu0 %v3129
        %v3218 = vpop.f32.mrf.mxu0
        %v3219 = vadd.f32 %v3031, %v3218
        %v3220 = vpop.f32.mrf.mxu0
        %v3221 = vadd.f32 %v3033, %v3220
        %3222 = vdwg.mxu0
        %v3223 = vld [vmem:[%s675] sm:$0xe]
        %v3224 = vld [vmem:[%s675 + $0x4] sm:$0xf]
        %v3225 = vld [vmem:[%s675 + $0x8] sm:$0x1]
        %v3226 = vld [vmem:[%s675 + $0xc] sm:$0xe]
        %v3227 = vld [vmem:[%s675 + $0x10] sm:$0xf]
        %v3228 = vld [vmem:[%s675 + $0x14] sm:$0x1]
        %v3229 = vld [vmem:[%s675 + $0x18] sm:$0xe]
        %v3230 = vld [vmem:[%s675 + $0x1c] sm:$0xf]
        %v3231 = vld [vmem:[%s675 + $0x20] sm:$0x1]
        %v3232 = vld [vmem:[%s675 + $0x24] sm:$0xe]
        %v3233 = vld [vmem:[%s675 + $0x28] sm:$0xf]
        %v3234 = vld [vmem:[%s675 + $0x2c] sm:$0x1]
        %v3235 = vld [vmem:[%s675 + $0x30] sm:$0xe]
        %v3236 = vld [vmem:[%s675 + $0x34] sm:$0xf]
        %v3237 = vld [vmem:[%s675 + $0x38] sm:$0x1]
        %v3238 = vld [vmem:[%s675 + $0x3c] sm:$0xe]
        %v3239 = vld [vmem:[%s675 + $0x40] sm:$0xf]
        %v3240 = vld [vmem:[%s675 + $0x44] sm:$0x1]
        %v3241 = vld [vmem:[%s675 + $0x48] sm:$0xe]
        %v3242 = vld [vmem:[%s675 + $0x4c] sm:$0xf]
        %v3243 = vld [vmem:[%s675 + $0x50] sm:$0x1]
        %v3244 = vld [vmem:[%s675 + $0x54] sm:$0xe]
        %v3245 = vld [vmem:[%s675 + $0x58] sm:$0xf]
        %v3246 = vld [vmem:[%s675 + $0x5c] sm:$0x1]
        %v3247 = vld [vmem:[%s675 + $0x60] sm:$0xe]
        %v3248 = vld [vmem:[%s675 + $0x64] sm:$0xf]
        %v3249 = vld [vmem:[%s675 + $0x68] sm:$0x1]
        %v3250 = vld [vmem:[%s675 + $0x6c] sm:$0xe]
        %v3251 = vld [vmem:[%s675 + $0x70] sm:$0xf]
        %v3252 = vld [vmem:[%s675 + $0x74] sm:$0x1]
        %v3253 = vld [vmem:[%s675 + $0x78] sm:$0xe]
        %v3254 = vld [vmem:[%s675 + $0x7c] sm:$0xf]
        %v3255 = vld [vmem:[%s675 + $0x80] sm:$0x1]
        %v3256 = vld [vmem:[%s675 + $0x84] sm:$0xe]
        %v3257 = vld [vmem:[%s675 + $0x88] sm:$0xf]
        %v3258 = vld [vmem:[%s675 + $0x8c] sm:$0x1]
        %v3259 = vld [vmem:[%s675 + $0x90] sm:$0xe]
        %v3260 = vld [vmem:[%s675 + $0x94] sm:$0xf]
        %v3261 = vld [vmem:[%s675 + $0x98] sm:$0x1]
        %v3262 = vld [vmem:[%s675 + $0x9c] sm:$0xe]
        %v3263 = vld [vmem:[%s675 + $0xa0] sm:$0xf]
        %v3264 = vld [vmem:[%s675 + $0xa4] sm:$0x1]
        %v3265 = vld [vmem:[%s675 + $0xa8] sm:$0xe]
        %v3266 = vld [vmem:[%s675 + $0xac] sm:$0xf]
        %v3267 = vld [vmem:[%s675 + $0xb0] sm:$0x1]
        %v3268 = vld [vmem:[%s675 + $0xb4] sm:$0xe]
        %v3269 = vld [vmem:[%s675 + $0xb8] sm:$0xf]
        %v3270 = vld [vmem:[%s675 + $0xbc] sm:$0x1]
        %v3319 = vrot.slane %v3223, 5
        %v3320 = vrot.slane %v3319, 4
        %v3321 = vrot.slane %v3224, 5
        %v3322 = vsel %vm2330, %v3320, %v3321
        %v3323 = vrot.slane %v3321, 4
        %v3324 = vrot.slane %v3225, 5
        %v3325 = vsel %vm2330, %v3323, %v3324
        %v3326 = vrot.slane %v3226, 5
        %v3327 = vrot.slane %v3326, 4
        %v3328 = vrot.slane %v3227, 5
        %v3329 = vsel %vm2330, %v3327, %v3328
        %v3330 = vrot.slane %v3328, 4
        %v3331 = vrot.slane %v3228, 5
        %v3332 = vsel %vm2330, %v3330, %v3331
        %v3333 = vrot.slane %v3229, 5
        %v3334 = vrot.slane %v3333, 4
        %v3335 = vrot.slane %v3230, 5
        %v3336 = vsel %vm2330, %v3334, %v3335
        %v3337 = vrot.slane %v3335, 4
        %v3338 = vrot.slane %v3231, 5
        %v3339 = vsel %vm2330, %v3337, %v3338
        %v3340 = vrot.slane %v3232, 5
        %v3341 = vrot.slane %v3340, 4
        %v3342 = vrot.slane %v3233, 5
        %v3343 = vsel %vm2330, %v3341, %v3342
        %v3344 = vrot.slane %v3342, 4
        %v3345 = vrot.slane %v3234, 5
        %v3346 = vsel %vm2330, %v3344, %v3345
        %v3347 = vrot.slane %v3235, 5
        %v3348 = vrot.slane %v3347, 4
        %v3349 = vrot.slane %v3236, 5
        %v3350 = vsel %vm2330, %v3348, %v3349
        %v3351 = vrot.slane %v3349, 4
        %v3352 = vrot.slane %v3237, 5
        %v3353 = vsel %vm2330, %v3351, %v3352
        %v3354 = vrot.slane %v3238, 5
        %v3355 = vrot.slane %v3354, 4
        %v3356 = vrot.slane %v3239, 5
        %v3357 = vsel %vm2330, %v3355, %v3356
        %v3358 = vrot.slane %v3356, 4
        %v3359 = vrot.slane %v3240, 5
        %v3360 = vsel %vm2330, %v3358, %v3359
        %v3361 = vrot.slane %v3241, 5
        %v3362 = vrot.slane %v3361, 4
        %v3363 = vrot.slane %v3242, 5
        %v3364 = vsel %vm2330, %v3362, %v3363
        %v3365 = vrot.slane %v3363, 4
        %v3366 = vrot.slane %v3243, 5
        %v3367 = vsel %vm2330, %v3365, %v3366
        %v3368 = vrot.slane %v3244, 5
        %v3369 = vrot.slane %v3368, 4
        %v3370 = vrot.slane %v3245, 5
        %v3371 = vsel %vm2330, %v3369, %v3370
        %v3372 = vrot.slane %v3370, 4
        %v3373 = vrot.slane %v3246, 5
        %v3374 = vsel %vm2330, %v3372, %v3373
        %v3375 = vrot.slane %v3247, 5
        %v3376 = vrot.slane %v3375, 4
        %v3377 = vrot.slane %v3248, 5
        %v3378 = vsel %vm2330, %v3376, %v3377
        %v3379 = vrot.slane %v3377, 4
        %v3380 = vrot.slane %v3249, 5
        %v3381 = vsel %vm2330, %v3379, %v3380
        %v3382 = vrot.slane %v3250, 5
        %v3383 = vrot.slane %v3382, 4
        %v3384 = vrot.slane %v3251, 5
        %v3385 = vsel %vm2330, %v3383, %v3384
        %v3386 = vrot.slane %v3384, 4
        %v3387 = vrot.slane %v3252, 5
        %v3388 = vsel %vm2330, %v3386, %v3387
        %v3389 = vrot.slane %v3253, 5
        %v3390 = vrot.slane %v3389, 4
        %v3391 = vrot.slane %v3254, 5
        %v3392 = vsel %vm2330, %v3390, %v3391
        %v3393 = vrot.slane %v3391, 4
        %v3394 = vrot.slane %v3255, 5
        %v3395 = vsel %vm2330, %v3393, %v3394
        %v3396 = vrot.slane %v3256, 5
        %v3397 = vrot.slane %v3396, 4
        %v3398 = vrot.slane %v3257, 5
        %v3399 = vsel %vm2330, %v3397, %v3398
        %v3400 = vrot.slane %v3398, 4
        %v3401 = vrot.slane %v3258, 5
        %v3402 = vsel %vm2330, %v3400, %v3401
        %v3403 = vrot.slane %v3259, 5
        %v3404 = vrot.slane %v3403, 4
        %v3405 = vrot.slane %v3260, 5
        %v3406 = vsel %vm2330, %v3404, %v3405
        %v3407 = vrot.slane %v3405, 4
        %v3408 = vrot.slane %v3261, 5
        %v3409 = vsel %vm2330, %v3407, %v3408
        %v3410 = vrot.slane %v3262, 5
        %v3411 = vrot.slane %v3410, 4
        %v3412 = vrot.slane %v3263, 5
        %v3413 = vsel %vm2330, %v3411, %v3412
        %v3414 = vrot.slane %v3412, 4
        %v3415 = vrot.slane %v3264, 5
        %v3416 = vsel %vm2330, %v3414, %v3415
        %v3417 = vrot.slane %v3265, 5
        %v3418 = vrot.slane %v3417, 4
        %v3419 = vrot.slane %v3266, 5
        %v3420 = vsel %vm2330, %v3418, %v3419
        %v3421 = vrot.slane %v3419, 4
        %v3422 = vrot.slane %v3267, 5
        %v3423 = vsel %vm2330, %v3421, %v3422
        %v3424 = vrot.slane %v3268, 5
        %v3425 = vrot.slane %v3424, 4
        %v3426 = vrot.slane %v3269, 5
        %v3427 = vsel %vm2330, %v3425, %v3426
        %v3428 = vrot.slane %v3426, 4
        %v3429 = vrot.slane %v3270, 5
        %v3430 = vsel %vm2330, %v3428, %v3429
        %s3431 = scalar_lea.vmem %s1, 12
        %v3432 = vld [vmem:[%s3431] sm:$0x3]
        %v3433 = vunpack.c.l.b16 %v3322
        %v3434 = vunpack.c.l.b16 %v3325
        %v3435 = vunpack.c.l.b16 %v3329
        %v3436 = vunpack.c.l.b16 %v3332
        %v3437 = vunpack.c.l.b16 %v3336
        %v3438 = vunpack.c.l.b16 %v3339
        %v3439 = vunpack.c.l.b16 %v3343
        %v3440 = vunpack.c.l.b16 %v3346
        %v3441 = vunpack.c.l.b16 %v3350
        %v3442 = vunpack.c.l.b16 %v3353
        %v3443 = vunpack.c.l.b16 %v3357
        %v3444 = vunpack.c.l.b16 %v3360
        %v3445 = vunpack.c.l.b16 %v3364
        %v3446 = vunpack.c.l.b16 %v3367
        %v3447 = vunpack.c.l.b16 %v3371
        %v3448 = vunpack.c.l.b16 %v3374
        %v3449 = vunpack.c.l.b16 %v3378
        %v3450 = vunpack.c.l.b16 %v3381
        %v3451 = vunpack.c.l.b16 %v3385
        %v3452 = vunpack.c.l.b16 %v3388
        %v3453 = vunpack.c.l.b16 %v3392
        %v3454 = vunpack.c.l.b16 %v3395
        %v3455 = vunpack.c.l.b16 %v3399
        %v3456 = vunpack.c.l.b16 %v3402
        %v3457 = vunpack.c.l.b16 %v3406
        %v3458 = vunpack.c.l.b16 %v3409
        %v3459 = vunpack.c.l.b16 %v3413
        %v3460 = vunpack.c.l.b16 %v3416
        %v3461 = vunpack.c.l.b16 %v3420
        %v3462 = vunpack.c.l.b16 %v3423
        %v3463 = vunpack.c.l.b16 %v3427
        %v3464 = vunpack.c.l.b16 %v3430
        %v3465 = vpack.c.b16 %v3434, %v3433
        %v3466 = vpack.c.b16 %v3436, %v3435
        %v3467 = vpack.c.b16 %v3438, %v3437
        %v3468 = vpack.c.b16 %v3440, %v3439
        %v3469 = vpack.c.b16 %v3442, %v3441
        %v3470 = vpack.c.b16 %v3444, %v3443
        %v3471 = vpack.c.b16 %v3446, %v3445
        %v3472 = vpack.c.b16 %v3448, %v3447
        %v3473 = vpack.c.b16 %v3450, %v3449
        %v3474 = vpack.c.b16 %v3452, %v3451
        %v3475 = vpack.c.b16 %v3454, %v3453
        %v3476 = vpack.c.b16 %v3456, %v3455
        %v3477 = vpack.c.b16 %v3458, %v3457
        %v3478 = vpack.c.b16 %v3460, %v3459
        %v3479 = vpack.c.b16 %v3462, %v3461
        %v3480 = vpack.c.b16 %v3464, %v3463
        %v3482 = vsel %vm1158, %v3465, 0
        %v3485 = vsel %vm1158, %v3466, 0
        %v3488 = vsel %vm1158, %v3467, 0
        %v3491 = vsel %vm1158, %v3468, 0
        %v3494 = vsel %vm1158, %v3469, 0
        %v3497 = vsel %vm1158, %v3470, 0
        %v3500 = vsel %vm1158, %v3471, 0
        %v3503 = vsel %vm1158, %v3472, 0
        %v3506 = vsel %vm1158, %v3473, 0
        %v3509 = vsel %vm1158, %v3474, 0
        %v3512 = vsel %vm1158, %v3475, 0
        %v3515 = vsel %vm1158, %v3476, 0
        %v3518 = vsel %vm1158, %v3477, 0
        %v3521 = vsel %vm1158, %v3478, 0
        %v3524 = vsel %vm1158, %v3479, 0
        %v3527 = vsel %vm1158, %v3480, 0
        %v3530 = vsel %vm1207, %v3432, 0
        %3532 = vmatpush.bf16.msra.mxu0 0
        %3533 = vmatpush.bf16.msra.mxu0 0
        %3534 = vmatpush.bf16.msra.mxu0 0
        %3535 = vmatpush.bf16.msra.mxu0 0
        %3536 = vmatpush.bf16.msra.mxu0 0
        %3537 = vmatpush.bf16.msra.mxu0 0
        %3538 = vmatpush.bf16.msra.mxu0 0
        %3539 = vmatpush.bf16.msra.mxu0 %v3530
        %3540 = vmatmul.bf16.gmra.mxu0 %v3482
        %v3541 = vpop.f32.mrf.mxu0
        %v3542 = vadd.f32 0.0, %v3541
        %v3543 = vpop.f32.mrf.mxu0
        %v3544 = vadd.f32 0.0, %v3543
        %3545 = vmatmul.bf16.gmra.mxu0 %v3485
        %v3546 = vpop.f32.mrf.mxu0
        %v3547 = vadd.f32 0.0, %v3546
        %v3548 = vpop.f32.mrf.mxu0
        %v3549 = vadd.f32 0.0, %v3548
        %3550 = vmatmul.bf16.gmra.mxu0 %v3488
        %v3551 = vpop.f32.mrf.mxu0
        %v3552 = vadd.f32 0.0, %v3551
        %v3553 = vpop.f32.mrf.mxu0
        %v3554 = vadd.f32 0.0, %v3553
        %3555 = vmatmul.bf16.gmra.mxu0 %v3491
        %v3556 = vpop.f32.mrf.mxu0
        %v3557 = vadd.f32 0.0, %v3556
        %v3558 = vpop.f32.mrf.mxu0
        %v3559 = vadd.f32 0.0, %v3558
        %3560 = vmatmul.bf16.gmra.mxu0 %v3494
        %v3561 = vpop.f32.mrf.mxu0
        %v3562 = vadd.f32 0.0, %v3561
        %v3563 = vpop.f32.mrf.mxu0
        %v3564 = vadd.f32 0.0, %v3563
        %3565 = vmatmul.bf16.gmra.mxu0 %v3497
        %v3566 = vpop.f32.mrf.mxu0
        %v3567 = vadd.f32 0.0, %v3566
        %v3568 = vpop.f32.mrf.mxu0
        %v3569 = vadd.f32 0.0, %v3568
        %3570 = vmatmul.bf16.gmra.mxu0 %v3500
        %v3571 = vpop.f32.mrf.mxu0
        %v3572 = vadd.f32 0.0, %v3571
        %v3573 = vpop.f32.mrf.mxu0
        %v3574 = vadd.f32 0.0, %v3573
        %3575 = vmatmul.bf16.gmra.mxu0 %v3503
        %v3576 = vpop.f32.mrf.mxu0
        %v3577 = vadd.f32 0.0, %v3576
        %v3578 = vpop.f32.mrf.mxu0
        %v3579 = vadd.f32 0.0, %v3578
        %3580 = vmatmul.bf16.gmra.mxu0 %v3506
        %v3581 = vpop.f32.mrf.mxu0
        %v3582 = vadd.f32 0.0, %v3581
        %v3583 = vpop.f32.mrf.mxu0
        %v3584 = vadd.f32 0.0, %v3583
        %3585 = vmatmul.bf16.gmra.mxu0 %v3509
        %v3586 = vpop.f32.mrf.mxu0
        %v3587 = vadd.f32 0.0, %v3586
        %v3588 = vpop.f32.mrf.mxu0
        %v3589 = vadd.f32 0.0, %v3588
        %3590 = vmatmul.bf16.gmra.mxu0 %v3512
        %v3591 = vpop.f32.mrf.mxu0
        %v3592 = vadd.f32 0.0, %v3591
        %v3593 = vpop.f32.mrf.mxu0
        %v3594 = vadd.f32 0.0, %v3593
        %3595 = vmatmul.bf16.gmra.mxu0 %v3515
        %v3596 = vpop.f32.mrf.mxu0
        %v3597 = vadd.f32 0.0, %v3596
        %v3598 = vpop.f32.mrf.mxu0
        %v3599 = vadd.f32 0.0, %v3598
        %3600 = vmatmul.bf16.gmra.mxu0 %v3518
        %v3601 = vpop.f32.mrf.mxu0
        %v3602 = vadd.f32 0.0, %v3601
        %v3603 = vpop.f32.mrf.mxu0
        %v3604 = vadd.f32 0.0, %v3603
        %3605 = vmatmul.bf16.gmra.mxu0 %v3521
        %v3606 = vpop.f32.mrf.mxu0
        %v3607 = vadd.f32 0.0, %v3606
        %v3608 = vpop.f32.mrf.mxu0
        %v3609 = vadd.f32 0.0, %v3608
        %3610 = vmatmul.bf16.gmra.mxu0 %v3524
        %v3611 = vpop.f32.mrf.mxu0
        %v3612 = vadd.f32 0.0, %v3611
        %v3613 = vpop.f32.mrf.mxu0
        %v3614 = vadd.f32 0.0, %v3613
        %3615 = vmatmul.bf16.gmra.mxu0 %v3527
        %v3616 = vpop.f32.mrf.mxu0
        %v3617 = vadd.f32 0.0, %v3616
        %v3618 = vpop.f32.mrf.mxu0
        %v3619 = vadd.f32 0.0, %v3618
        %3620 = vdwg.mxu0
        %v3621 = vadd.f32 %v3144, %v3542
        %v3622 = vadd.f32 %v3146, %v3544
        %v3623 = vadd.f32 %v3149, %v3547
        %v3624 = vadd.f32 %v3151, %v3549
        %v3625 = vadd.f32 %v3154, %v3552
        %v3626 = vadd.f32 %v3156, %v3554
        %v3627 = vadd.f32 %v3159, %v3557
        %v3628 = vadd.f32 %v3161, %v3559
        %v3629 = vadd.f32 %v3164, %v3562
        %v3630 = vadd.f32 %v3166, %v3564
        %v3631 = vadd.f32 %v3169, %v3567
        %v3632 = vadd.f32 %v3171, %v3569
        %v3633 = vadd.f32 %v3174, %v3572
        %v3634 = vadd.f32 %v3176, %v3574
        %v3635 = vadd.f32 %v3179, %v3577
        %v3636 = vadd.f32 %v3181, %v3579
        %v3637 = vadd.f32 %v3184, %v3582
        %v3638 = vadd.f32 %v3186, %v3584
        %v3639 = vadd.f32 %v3189, %v3587
        %v3640 = vadd.f32 %v3191, %v3589
        %v3641 = vadd.f32 %v3194, %v3592
        %v3642 = vadd.f32 %v3196, %v3594
        %v3643 = vadd.f32 %v3199, %v3597
        %v3644 = vadd.f32 %v3201, %v3599
        %v3645 = vadd.f32 %v3204, %v3602
        %v3646 = vadd.f32 %v3206, %v3604
        %v3647 = vadd.f32 %v3209, %v3607
        %v3648 = vadd.f32 %v3211, %v3609
        %v3649 = vadd.f32 %v3214, %v3612
        %v3650 = vadd.f32 %v3216, %v3614
        %v3651 = vadd.f32 %v3219, %v3617
        %v3652 = vadd.f32 %v3221, %v3619
        %v3653 = vld [vmem:[%s675] sm:$0xf]
        %v3654 = vld [vmem:[%s675 + $0xc] sm:$0xf]
        %v3655 = vld [vmem:[%s675 + $0x18] sm:$0xf]
        %v3656 = vld [vmem:[%s675 + $0x24] sm:$0xf]
        %v3657 = vld [vmem:[%s675 + $0x30] sm:$0xf]
        %v3658 = vld [vmem:[%s675 + $0x3c] sm:$0xf]
        %v3659 = vld [vmem:[%s675 + $0x48] sm:$0xf]
        %v3660 = vld [vmem:[%s675 + $0x54] sm:$0xf]
        %v3661 = vld [vmem:[%s675 + $0x60] sm:$0xf]
        %v3662 = vld [vmem:[%s675 + $0x6c] sm:$0xf]
        %v3663 = vld [vmem:[%s675 + $0x78] sm:$0xf]
        %v3664 = vld [vmem:[%s675 + $0x84] sm:$0xf]
        %v3665 = vld [vmem:[%s675 + $0x90] sm:$0xf]
        %v3666 = vld [vmem:[%s675 + $0x9c] sm:$0xf]
        %v3667 = vld [vmem:[%s675 + $0xa8] sm:$0xf]
        %v3668 = vld [vmem:[%s675 + $0xb4] sm:$0xf]
        %v3670 = vshrl.u32 %v3653, 16
        %v3672 = vrot.slane %v3670, 4
        %v3673 = vshll.u32 %v3653, 16
        %v3675 = vrot.slane %v3673, 5
        %v3676 = vor.u32 %v3672, %v3675
        %v3677 = vrot.slane %v3676, 4
        %v3679 = vshll.u32 %v3224, 16
        %v3681 = vrot.slane %v3679, 5
        %v3682 = vsel %vm287, %v3677, %v3681
        %v3683 = vshrl.u32 %v3224, 16
        %v3685 = vrot.slane %v3683, 4
        %v3686 = vor.u32 %v3685, %v3681
        %v3687 = vrot.slane %v3686, 4
        %v3689 = vshll.u32 %v3225, 16
        %v3691 = vrot.slane %v3689, 5
        %v3692 = vsel %vm287, %v3687, %v3691
        %v3694 = vshrl.u32 %v3654, 16
        %v3696 = vrot.slane %v3694, 4
        %v3697 = vshll.u32 %v3654, 16
        %v3699 = vrot.slane %v3697, 5
        %v3700 = vor.u32 %v3696, %v3699
        %v3701 = vrot.slane %v3700, 4
        %v3703 = vshll.u32 %v3227, 16
        %v3705 = vrot.slane %v3703, 5
        %v3706 = vsel %vm287, %v3701, %v3705
        %v3707 = vshrl.u32 %v3227, 16
        %v3709 = vrot.slane %v3707, 4
        %v3710 = vor.u32 %v3709, %v3705
        %v3711 = vrot.slane %v3710, 4
        %v3713 = vshll.u32 %v3228, 16
        %v3715 = vrot.slane %v3713, 5
        %v3716 = vsel %vm287, %v3711, %v3715
        %v3718 = vshrl.u32 %v3655, 16
        %v3720 = vrot.slane %v3718, 4
        %v3721 = vshll.u32 %v3655, 16
        %v3723 = vrot.slane %v3721, 5
        %v3724 = vor.u32 %v3720, %v3723
        %v3725 = vrot.slane %v3724, 4
        %v3727 = vshll.u32 %v3230, 16
        %v3729 = vrot.slane %v3727, 5
        %v3730 = vsel %vm287, %v3725, %v3729
        %v3731 = vshrl.u32 %v3230, 16
        %v3733 = vrot.slane %v3731, 4
        %v3734 = vor.u32 %v3733, %v3729
        %v3735 = vrot.slane %v3734, 4
        %v3737 = vshll.u32 %v3231, 16
        %v3739 = vrot.slane %v3737, 5
        %v3740 = vsel %vm287, %v3735, %v3739
        %v3742 = vshrl.u32 %v3656, 16
        %v3744 = vrot.slane %v3742, 4
        %v3745 = vshll.u32 %v3656, 16
        %v3747 = vrot.slane %v3745, 5
        %v3748 = vor.u32 %v3744, %v3747
        %v3749 = vrot.slane %v3748, 4
        %v3751 = vshll.u32 %v3233, 16
        %v3753 = vrot.slane %v3751, 5
        %v3754 = vsel %vm287, %v3749, %v3753
        %v3755 = vshrl.u32 %v3233, 16
        %v3757 = vrot.slane %v3755, 4
        %v3758 = vor.u32 %v3757, %v3753
        %v3759 = vrot.slane %v3758, 4
        %v3761 = vshll.u32 %v3234, 16
        %v3763 = vrot.slane %v3761, 5
        %v3764 = vsel %vm287, %v3759, %v3763
        %v3766 = vshrl.u32 %v3657, 16
        %v3768 = vrot.slane %v3766, 4
        %v3769 = vshll.u32 %v3657, 16
        %v3771 = vrot.slane %v3769, 5
        %v3772 = vor.u32 %v3768, %v3771
        %v3773 = vrot.slane %v3772, 4
        %v3775 = vshll.u32 %v3236, 16
        %v3777 = vrot.slane %v3775, 5
        %v3778 = vsel %vm287, %v3773, %v3777
        %v3779 = vshrl.u32 %v3236, 16
        %v3781 = vrot.slane %v3779, 4
        %v3782 = vor.u32 %v3781, %v3777
        %v3783 = vrot.slane %v3782, 4
        %v3785 = vshll.u32 %v3237, 16
        %v3787 = vrot.slane %v3785, 5
        %v3788 = vsel %vm287, %v3783, %v3787
        %v3790 = vshrl.u32 %v3658, 16
        %v3792 = vrot.slane %v3790, 4
        %v3793 = vshll.u32 %v3658, 16
        %v3795 = vrot.slane %v3793, 5
        %v3796 = vor.u32 %v3792, %v3795
        %v3797 = vrot.slane %v3796, 4
        %v3799 = vshll.u32 %v3239, 16
        %v3801 = vrot.slane %v3799, 5
        %v3802 = vsel %vm287, %v3797, %v3801
        %v3803 = vshrl.u32 %v3239, 16
        %v3805 = vrot.slane %v3803, 4
        %v3806 = vor.u32 %v3805, %v3801
        %v3807 = vrot.slane %v3806, 4
        %v3809 = vshll.u32 %v3240, 16
        %v3811 = vrot.slane %v3809, 5
        %v3812 = vsel %vm287, %v3807, %v3811
        %v3814 = vshrl.u32 %v3659, 16
        %v3816 = vrot.slane %v3814, 4
        %v3817 = vshll.u32 %v3659, 16
        %v3819 = vrot.slane %v3817, 5
        %v3820 = vor.u32 %v3816, %v3819
        %v3821 = vrot.slane %v3820, 4
        %v3823 = vshll.u32 %v3242, 16
        %v3825 = vrot.slane %v3823, 5
        %v3826 = vsel %vm287, %v3821, %v3825
        %v3827 = vshrl.u32 %v3242, 16
        %v3829 = vrot.slane %v3827, 4
        %v3830 = vor.u32 %v3829, %v3825
        %v3831 = vrot.slane %v3830, 4
        %v3833 = vshll.u32 %v3243, 16
        %v3835 = vrot.slane %v3833, 5
        %v3836 = vsel %vm287, %v3831, %v3835
        %v3838 = vshrl.u32 %v3660, 16
        %v3840 = vrot.slane %v3838, 4
        %v3841 = vshll.u32 %v3660, 16
        %v3843 = vrot.slane %v3841, 5
        %v3844 = vor.u32 %v3840, %v3843
        %v3845 = vrot.slane %v3844, 4
        %v3847 = vshll.u32 %v3245, 16
        %v3849 = vrot.slane %v3847, 5
        %v3850 = vsel %vm287, %v3845, %v3849
        %v3851 = vshrl.u32 %v3245, 16
        %v3853 = vrot.slane %v3851, 4
        %v3854 = vor.u32 %v3853, %v3849
        %v3855 = vrot.slane %v3854, 4
        %v3857 = vshll.u32 %v3246, 16
        %v3859 = vrot.slane %v3857, 5
        %v3860 = vsel %vm287, %v3855, %v3859
        %v3862 = vshrl.u32 %v3661, 16
        %v3864 = vrot.slane %v3862, 4
        %v3865 = vshll.u32 %v3661, 16
        %v3867 = vrot.slane %v3865, 5
        %v3868 = vor.u32 %v3864, %v3867
        %v3869 = vrot.slane %v3868, 4
        %v3871 = vshll.u32 %v3248, 16
        %v3873 = vrot.slane %v3871, 5
        %v3874 = vsel %vm287, %v3869, %v3873
        %v3875 = vshrl.u32 %v3248, 16
        %v3877 = vrot.slane %v3875, 4
        %v3878 = vor.u32 %v3877, %v3873
        %v3879 = vrot.slane %v3878, 4
        %v3881 = vshll.u32 %v3249, 16
        %v3883 = vrot.slane %v3881, 5
        %v3884 = vsel %vm287, %v3879, %v3883
        %v3886 = vshrl.u32 %v3662, 16
        %v3888 = vrot.slane %v3886, 4
        %v3889 = vshll.u32 %v3662, 16
        %v3891 = vrot.slane %v3889, 5
        %v3892 = vor.u32 %v3888, %v3891
        %v3893 = vrot.slane %v3892, 4
        %v3895 = vshll.u32 %v3251, 16
        %v3897 = vrot.slane %v3895, 5
        %v3898 = vsel %vm287, %v3893, %v3897
        %v3899 = vshrl.u32 %v3251, 16
        %v3901 = vrot.slane %v3899, 4
        %v3902 = vor.u32 %v3901, %v3897
        %v3903 = vrot.slane %v3902, 4
        %v3905 = vshll.u32 %v3252, 16
        %v3907 = vrot.slane %v3905, 5
        %v3908 = vsel %vm287, %v3903, %v3907
        %v3910 = vshrl.u32 %v3663, 16
        %v3912 = vrot.slane %v3910, 4
        %v3913 = vshll.u32 %v3663, 16
        %v3915 = vrot.slane %v3913, 5
        %v3916 = vor.u32 %v3912, %v3915
        %v3917 = vrot.slane %v3916, 4
        %v3919 = vshll.u32 %v3254, 16
        %v3921 = vrot.slane %v3919, 5
        %v3922 = vsel %vm287, %v3917, %v3921
        %v3923 = vshrl.u32 %v3254, 16
        %v3925 = vrot.slane %v3923, 4
        %v3926 = vor.u32 %v3925, %v3921
        %v3927 = vrot.slane %v3926, 4
        %v3929 = vshll.u32 %v3255, 16
        %v3931 = vrot.slane %v3929, 5
        %v3932 = vsel %vm287, %v3927, %v3931
        %v3934 = vshrl.u32 %v3664, 16
        %v3936 = vrot.slane %v3934, 4
        %v3937 = vshll.u32 %v3664, 16
        %v3939 = vrot.slane %v3937, 5
        %v3940 = vor.u32 %v3936, %v3939
        %v3941 = vrot.slane %v3940, 4
        %v3943 = vshll.u32 %v3257, 16
        %v3945 = vrot.slane %v3943, 5
        %v3946 = vsel %vm287, %v3941, %v3945
        %v3947 = vshrl.u32 %v3257, 16
        %v3949 = vrot.slane %v3947, 4
        %v3950 = vor.u32 %v3949, %v3945
        %v3951 = vrot.slane %v3950, 4
        %v3953 = vshll.u32 %v3258, 16
        %v3955 = vrot.slane %v3953, 5
        %v3956 = vsel %vm287, %v3951, %v3955
        %v3958 = vshrl.u32 %v3665, 16
        %v3960 = vrot.slane %v3958, 4
        %v3961 = vshll.u32 %v3665, 16
        %v3963 = vrot.slane %v3961, 5
        %v3964 = vor.u32 %v3960, %v3963
        %v3965 = vrot.slane %v3964, 4
        %v3967 = vshll.u32 %v3260, 16
        %v3969 = vrot.slane %v3967, 5
        %v3970 = vsel %vm287, %v3965, %v3969
        %v3971 = vshrl.u32 %v3260, 16
        %v3973 = vrot.slane %v3971, 4
        %v3974 = vor.u32 %v3973, %v3969
        %v3975 = vrot.slane %v3974, 4
        %v3977 = vshll.u32 %v3261, 16
        %v3979 = vrot.slane %v3977, 5
        %v3980 = vsel %vm287, %v3975, %v3979
        %v3982 = vshrl.u32 %v3666, 16
        %v3984 = vrot.slane %v3982, 4
        %v3985 = vshll.u32 %v3666, 16
        %v3987 = vrot.slane %v3985, 5
        %v3988 = vor.u32 %v3984, %v3987
        %v3989 = vrot.slane %v3988, 4
        %v3991 = vshll.u32 %v3263, 16
        %v3993 = vrot.slane %v3991, 5
        %v3994 = vsel %vm287, %v3989, %v3993
        %v3995 = vshrl.u32 %v3263, 16
        %v3997 = vrot.slane %v3995, 4
        %v3998 = vor.u32 %v3997, %v3993
        %v3999 = vrot.slane %v3998, 4
        %v4001 = vshll.u32 %v3264, 16
        %v4003 = vrot.slane %v4001, 5
        %v4004 = vsel %vm287, %v3999, %v4003
        %v4006 = vshrl.u32 %v3667, 16
        %v4008 = vrot.slane %v4006, 4
        %v4009 = vshll.u32 %v3667, 16
        %v4011 = vrot.slane %v4009, 5
        %v4012 = vor.u32 %v4008, %v4011
        %v4013 = vrot.slane %v4012, 4
        %v4015 = vshll.u32 %v3266, 16
        %v4017 = vrot.slane %v4015, 5
        %v4018 = vsel %vm287, %v4013, %v4017
        %v4019 = vshrl.u32 %v3266, 16
        %v4021 = vrot.slane %v4019, 4
        %v4022 = vor.u32 %v4021, %v4017
        %v4023 = vrot.slane %v4022, 4
        %v4025 = vshll.u32 %v3267, 16
        %v4027 = vrot.slane %v4025, 5
        %v4028 = vsel %vm287, %v4023, %v4027
        %v4030 = vshrl.u32 %v3668, 16
        %v4032 = vrot.slane %v4030, 4
        %v4033 = vshll.u32 %v3668, 16
        %v4035 = vrot.slane %v4033, 5
        %v4036 = vor.u32 %v4032, %v4035
        %v4037 = vrot.slane %v4036, 4
        %v4039 = vshll.u32 %v3269, 16
        %v4041 = vrot.slane %v4039, 5
        %v4042 = vsel %vm287, %v4037, %v4041
        %v4043 = vshrl.u32 %v3269, 16
        %v4045 = vrot.slane %v4043, 4
        %v4046 = vor.u32 %v4045, %v4041
        %v4047 = vrot.slane %v4046, 4
        %v4049 = vshll.u32 %v3270, 16
        %v4051 = vrot.slane %v4049, 5
        %v4052 = vsel %vm287, %v4047, %v4051
        %s4053 = scalar_lea.vmem %s1, 14
        %v4054 = vld [vmem:[%s4053] sm:$0x3]
        %v4055 = vunpack.c.l.b16 %v3682
        %v4056 = vunpack.c.l.b16 %v3692
        %v4057 = vunpack.c.l.b16 %v3706
        %v4058 = vunpack.c.l.b16 %v3716
        %v4059 = vunpack.c.l.b16 %v3730
        %v4060 = vunpack.c.l.b16 %v3740
        %v4061 = vunpack.c.l.b16 %v3754
        %v4062 = vunpack.c.l.b16 %v3764
        %v4063 = vunpack.c.l.b16 %v3778
        %v4064 = vunpack.c.l.b16 %v3788
        %v4065 = vunpack.c.l.b16 %v3802
        %v4066 = vunpack.c.l.b16 %v3812
        %v4067 = vunpack.c.l.b16 %v3826
        %v4068 = vunpack.c.l.b16 %v3836
        %v4069 = vunpack.c.l.b16 %v3850
        %v4070 = vunpack.c.l.b16 %v3860
        %v4071 = vunpack.c.l.b16 %v3874
        %v4072 = vunpack.c.l.b16 %v3884
        %v4073 = vunpack.c.l.b16 %v3898
        %v4074 = vunpack.c.l.b16 %v3908
        %v4075 = vunpack.c.l.b16 %v3922
        %v4076 = vunpack.c.l.b16 %v3932
        %v4077 = vunpack.c.l.b16 %v3946
        %v4078 = vunpack.c.l.b16 %v3956
        %v4079 = vunpack.c.l.b16 %v3970
        %v4080 = vunpack.c.l.b16 %v3980
        %v4081 = vunpack.c.l.b16 %v3994
        %v4082 = vunpack.c.l.b16 %v4004
        %v4083 = vunpack.c.l.b16 %v4018
        %v4084 = vunpack.c.l.b16 %v4028
        %v4085 = vunpack.c.l.b16 %v4042
        %v4086 = vunpack.c.l.b16 %v4052
        %v4087 = vpack.c.b16 %v4056, %v4055
        %v4088 = vpack.c.b16 %v4058, %v4057
        %v4089 = vpack.c.b16 %v4060, %v4059
        %v4090 = vpack.c.b16 %v4062, %v4061
        %v4091 = vpack.c.b16 %v4064, %v4063
        %v4092 = vpack.c.b16 %v4066, %v4065
        %v4093 = vpack.c.b16 %v4068, %v4067
        %v4094 = vpack.c.b16 %v4070, %v4069
        %v4095 = vpack.c.b16 %v4072, %v4071
        %v4096 = vpack.c.b16 %v4074, %v4073
        %v4097 = vpack.c.b16 %v4076, %v4075
        %v4098 = vpack.c.b16 %v4078, %v4077
        %v4099 = vpack.c.b16 %v4080, %v4079
        %v4100 = vpack.c.b16 %v4082, %v4081
        %v4101 = vpack.c.b16 %v4084, %v4083
        %v4102 = vpack.c.b16 %v4086, %v4085
        %v4104 = vsel %vm1158, %v4087, 0
        %v4107 = vsel %vm1158, %v4088, 0
        %v4110 = vsel %vm1158, %v4089, 0
        %v4113 = vsel %vm1158, %v4090, 0
        %v4116 = vsel %vm1158, %v4091, 0
        %v4119 = vsel %vm1158, %v4092, 0
        %v4122 = vsel %vm1158, %v4093, 0
        %v4125 = vsel %vm1158, %v4094, 0
        %v4128 = vsel %vm1158, %v4095, 0
        %v4131 = vsel %vm1158, %v4096, 0
        %v4134 = vsel %vm1158, %v4097, 0
        %v4137 = vsel %vm1158, %v4098, 0
        %v4140 = vsel %vm1158, %v4099, 0
        %v4143 = vsel %vm1158, %v4100, 0
        %v4146 = vsel %vm1158, %v4101, 0
        %v4149 = vsel %vm1158, %v4102, 0
        %v4152 = vsel %vm1207, %v4054, 0
        %4154 = vmatpush.bf16.msra.mxu0 0
        %4155 = vmatpush.bf16.msra.mxu0 0
        %4156 = vmatpush.bf16.msra.mxu0 0
        %4157 = vmatpush.bf16.msra.mxu0 0
        %4158 = vmatpush.bf16.msra.mxu0 0
        %4159 = vmatpush.bf16.msra.mxu0 0
        %4160 = vmatpush.bf16.msra.mxu0 0
        %4161 = vmatpush.bf16.msra.mxu0 %v4152
        %4162 = vmatmul.bf16.gmra.mxu0 %v4104
        %v4163 = vpop.f32.mrf.mxu0
        %v4164 = vadd.f32 0.0, %v4163
        %v4165 = vpop.f32.mrf.mxu0
        %v4166 = vadd.f32 0.0, %v4165
        %4167 = vmatmul.bf16.gmra.mxu0 %v4107
        %v4168 = vpop.f32.mrf.mxu0
        %v4169 = vadd.f32 0.0, %v4168
        %v4170 = vpop.f32.mrf.mxu0
        %v4171 = vadd.f32 0.0, %v4170
        %4172 = vmatmul.bf16.gmra.mxu0 %v4110
        %v4173 = vpop.f32.mrf.mxu0
        %v4174 = vadd.f32 0.0, %v4173
        %v4175 = vpop.f32.mrf.mxu0
        %v4176 = vadd.f32 0.0, %v4175
        %4177 = vmatmul.bf16.gmra.mxu0 %v4113
        %v4178 = vpop.f32.mrf.mxu0
        %v4179 = vadd.f32 0.0, %v4178
        %v4180 = vpop.f32.mrf.mxu0
        %v4181 = vadd.f32 0.0, %v4180
        %4182 = vmatmul.bf16.gmra.mxu0 %v4116
        %v4183 = vpop.f32.mrf.mxu0
        %v4184 = vadd.f32 0.0, %v4183
        %v4185 = vpop.f32.mrf.mxu0
        %v4186 = vadd.f32 0.0, %v4185
        %4187 = vmatmul.bf16.gmra.mxu0 %v4119
        %v4188 = vpop.f32.mrf.mxu0
        %v4189 = vadd.f32 0.0, %v4188
        %v4190 = vpop.f32.mrf.mxu0
        %v4191 = vadd.f32 0.0, %v4190
        %4192 = vmatmul.bf16.gmra.mxu0 %v4122
        %v4193 = vpop.f32.mrf.mxu0
        %v4194 = vadd.f32 0.0, %v4193
        %v4195 = vpop.f32.mrf.mxu0
        %v4196 = vadd.f32 0.0, %v4195
        %4197 = vmatmul.bf16.gmra.mxu0 %v4125
        %v4198 = vpop.f32.mrf.mxu0
        %v4199 = vadd.f32 0.0, %v4198
        %v4200 = vpop.f32.mrf.mxu0
        %v4201 = vadd.f32 0.0, %v4200
        %4202 = vmatmul.bf16.gmra.mxu0 %v4128
        %v4203 = vpop.f32.mrf.mxu0
        %v4204 = vadd.f32 0.0, %v4203
        %v4205 = vpop.f32.mrf.mxu0
        %v4206 = vadd.f32 0.0, %v4205
        %4207 = vmatmul.bf16.gmra.mxu0 %v4131
        %v4208 = vpop.f32.mrf.mxu0
        %v4209 = vadd.f32 0.0, %v4208
        %v4210 = vpop.f32.mrf.mxu0
        %v4211 = vadd.f32 0.0, %v4210
        %4212 = vmatmul.bf16.gmra.mxu0 %v4134
        %v4213 = vpop.f32.mrf.mxu0
        %v4214 = vadd.f32 0.0, %v4213
        %v4215 = vpop.f32.mrf.mxu0
        %v4216 = vadd.f32 0.0, %v4215
        %4217 = vmatmul.bf16.gmra.mxu0 %v4137
        %v4218 = vpop.f32.mrf.mxu0
        %v4219 = vadd.f32 0.0, %v4218
        %v4220 = vpop.f32.mrf.mxu0
        %v4221 = vadd.f32 0.0, %v4220
        %4222 = vmatmul.bf16.gmra.mxu0 %v4140
        %v4223 = vpop.f32.mrf.mxu0
        %v4224 = vadd.f32 0.0, %v4223
        %v4225 = vpop.f32.mrf.mxu0
        %v4226 = vadd.f32 0.0, %v4225
        %4227 = vmatmul.bf16.gmra.mxu0 %v4143
        %v4228 = vpop.f32.mrf.mxu0
        %v4229 = vadd.f32 0.0, %v4228
        %v4230 = vpop.f32.mrf.mxu0
        %v4231 = vadd.f32 0.0, %v4230
        %4232 = vmatmul.bf16.gmra.mxu0 %v4146
        %v4233 = vpop.f32.mrf.mxu0
        %v4234 = vadd.f32 0.0, %v4233
        %v4235 = vpop.f32.mrf.mxu0
        %v4236 = vadd.f32 0.0, %v4235
        %4237 = vmatmul.bf16.gmra.mxu0 %v4149
        %v4238 = vpop.f32.mrf.mxu0
        %v4239 = vadd.f32 0.0, %v4238
        %v4240 = vpop.f32.mrf.mxu0
        %v4241 = vadd.f32 0.0, %v4240
        %4242 = vdwg.mxu0
        %v4243 = vadd.f32 %v3621, %v4164
        %v4244 = vadd.f32 %v3622, %v4166
        %v4245 = vadd.f32 %v3623, %v4169
        %v4246 = vadd.f32 %v3624, %v4171
        %v4247 = vadd.f32 %v3625, %v4174
        %v4248 = vadd.f32 %v3626, %v4176
        %v4249 = vadd.f32 %v3627, %v4179
        %v4250 = vadd.f32 %v3628, %v4181
        %v4251 = vadd.f32 %v3629, %v4184
        %v4252 = vadd.f32 %v3630, %v4186
        %v4253 = vadd.f32 %v3631, %v4189
        %v4254 = vadd.f32 %v3632, %v4191
        %v4255 = vadd.f32 %v3633, %v4194
        %v4256 = vadd.f32 %v3634, %v4196
        %v4257 = vadd.f32 %v3635, %v4199
        %v4258 = vadd.f32 %v3636, %v4201
        %v4259 = vadd.f32 %v3637, %v4204
        %v4260 = vadd.f32 %v3638, %v4206
        %v4261 = vadd.f32 %v3639, %v4209
        %v4262 = vadd.f32 %v3640, %v4211
        %v4263 = vadd.f32 %v3641, %v4214
        %v4264 = vadd.f32 %v3642, %v4216
        %v4265 = vadd.f32 %v3643, %v4219
        %v4266 = vadd.f32 %v3644, %v4221
        %v4267 = vadd.f32 %v3645, %v4224
        %v4268 = vadd.f32 %v3646, %v4226
        %v4269 = vadd.f32 %v3647, %v4229
        %v4270 = vadd.f32 %v3648, %v4231
        %v4271 = vadd.f32 %v3649, %v4234
        %v4272 = vadd.f32 %v3650, %v4236
        %v4273 = vadd.f32 %v3651, %v4239
        %v4274 = vadd.f32 %v3652, %v4241
        %v4275 = vpack.c.bf16 %v4243, %v4243
        %v4276 = vpack.c.bf16 %v4244, %v4244
        %v4277 = vpack.c.bf16 %v4245, %v4245
        %v4278 = vpack.c.bf16 %v4246, %v4246
        %v4279 = vpack.c.bf16 %v4247, %v4247
        %v4280 = vpack.c.bf16 %v4248, %v4248
        %v4281 = vpack.c.bf16 %v4249, %v4249
        %v4282 = vpack.c.bf16 %v4250, %v4250
        %v4283 = vpack.c.bf16 %v4251, %v4251
        %v4284 = vpack.c.bf16 %v4252, %v4252
        %v4285 = vpack.c.bf16 %v4253, %v4253
        %v4286 = vpack.c.bf16 %v4254, %v4254
        %v4287 = vpack.c.bf16 %v4255, %v4255
        %v4288 = vpack.c.bf16 %v4256, %v4256
        %v4289 = vpack.c.bf16 %v4257, %v4257
        %v4290 = vpack.c.bf16 %v4258, %v4258
        %v4291 = vpack.c.bf16 %v4259, %v4259
        %v4292 = vpack.c.bf16 %v4260, %v4260
        %v4293 = vpack.c.bf16 %v4261, %v4261
        %v4294 = vpack.c.bf16 %v4262, %v4262
        %v4295 = vpack.c.bf16 %v4263, %v4263
        %v4296 = vpack.c.bf16 %v4264, %v4264
        %v4297 = vpack.c.bf16 %v4265, %v4265
        %v4298 = vpack.c.bf16 %v4266, %v4266
        %v4299 = vpack.c.bf16 %v4267, %v4267
        %v4300 = vpack.c.bf16 %v4268, %v4268
        %v4301 = vpack.c.bf16 %v4269, %v4269
        %v4302 = vpack.c.bf16 %v4270, %v4270
        %v4303 = vpack.c.bf16 %v4271, %v4271
        %v4304 = vpack.c.bf16 %v4272, %v4272
        %v4305 = vpack.c.bf16 %v4273, %v4273
        %v4306 = vpack.c.bf16 %v4274, %v4274
        %s4307 = scalar_lea.vmem %s212, 128 [#allocation2]
        %4308 = vst [vmem:[%s4307] sm:$0xf] %v4275
        %4309 = vst [vmem:[%s4307 + $0x4] sm:$0xf] %v4276
        %4310 = vst [vmem:[%s4307 + $0x8] sm:$0xf] %v4277
        %4311 = vst [vmem:[%s4307 + $0xc] sm:$0xf] %v4278
        %4312 = vst [vmem:[%s4307 + $0x10] sm:$0xf] %v4279
        %4313 = vst [vmem:[%s4307 + $0x14] sm:$0xf] %v4280
        %4314 = vst [vmem:[%s4307 + $0x18] sm:$0xf] %v4281
        %4315 = vst [vmem:[%s4307 + $0x1c] sm:$0xf] %v4282
        %4316 = vst [vmem:[%s4307 + $0x20] sm:$0xf] %v4283
        %4317 = vst [vmem:[%s4307 + $0x24] sm:$0xf] %v4284
        %4318 = vst [vmem:[%s4307 + $0x28] sm:$0xf] %v4285
        %4319 = vst [vmem:[%s4307 + $0x2c] sm:$0xf] %v4286
        %4320 = vst [vmem:[%s4307 + $0x30] sm:$0xf] %v4287
        %4321 = vst [vmem:[%s4307 + $0x34] sm:$0xf] %v4288
        %4322 = vst [vmem:[%s4307 + $0x38] sm:$0xf] %v4289
        %4323 = vst [vmem:[%s4307 + $0x3c] sm:$0xf] %v4290
        %4324 = vst [vmem:[%s4307 + $0x40] sm:$0xf] %v4291
        %4325 = vst [vmem:[%s4307 + $0x44] sm:$0xf] %v4292
        %4326 = vst [vmem:[%s4307 + $0x48] sm:$0xf] %v4293
        %4327 = vst [vmem:[%s4307 + $0x4c] sm:$0xf] %v4294
        %4328 = vst [vmem:[%s4307 + $0x50] sm:$0xf] %v4295
        %4329 = vst [vmem:[%s4307 + $0x54] sm:$0xf] %v4296
        %4330 = vst [vmem:[%s4307 + $0x58] sm:$0xf] %v4297
        %4331 = vst [vmem:[%s4307 + $0x5c] sm:$0xf] %v4298
        %4332 = vst [vmem:[%s4307 + $0x60] sm:$0xf] %v4299
        %4333 = vst [vmem:[%s4307 + $0x64] sm:$0xf] %v4300
        %4334 = vst [vmem:[%s4307 + $0x68] sm:$0xf] %v4301
        %4335 = vst [vmem:[%s4307 + $0x6c] sm:$0xf] %v4302
        %4336 = vst [vmem:[%s4307 + $0x70] sm:$0xf] %v4303
        %4337 = vst [vmem:[%s4307 + $0x74] sm:$0xf] %v4304
        %4338 = vst [vmem:[%s4307 + $0x78] sm:$0xf] %v4305
        %4339 = vst [vmem:[%s4307 + $0x7c] sm:$0xf] %v4306
        %v4340 = vadd.f32 %v4243, %v4244
        %v4341 = vadd.f32 %v4340, %v4245
        %v4342 = vadd.f32 %v4341, %v4246
        %v4343 = vadd.f32 %v4342, %v4247
        %v4344 = vadd.f32 %v4343, %v4248
        %v4345 = vadd.f32 %v4344, %v4249
        %v4346 = vadd.f32 %v4345, %v4250
        %v4347 = vadd.f32 %v4346, %v4251
        %v4348 = vadd.f32 %v4347, %v4252
        %v4349 = vadd.f32 %v4348, %v4253
        %v4350 = vadd.f32 %v4349, %v4254
        %v4351 = vadd.f32 %v4350, %v4255
        %v4352 = vadd.f32 %v4351, %v4256
        %v4353 = vadd.f32 %v4352, %v4257
        %v4354 = vadd.f32 %v4353, %v4258
        %v4355 = vadd.f32 %v4354, %v4259
        %v4356 = vadd.f32 %v4355, %v4260
        %v4357 = vadd.f32 %v4356, %v4261
        %v4358 = vadd.f32 %v4357, %v4262
        %v4359 = vadd.f32 %v4358, %v4263
        %v4360 = vadd.f32 %v4359, %v4264
        %v4361 = vadd.f32 %v4360, %v4265
        %v4362 = vadd.f32 %v4361, %v4266
        %v4363 = vadd.f32 %v4362, %v4267
        %v4364 = vadd.f32 %v4363, %v4268
        %v4365 = vadd.f32 %v4364, %v4269
        %v4366 = vadd.f32 %v4365, %v4270
        %v4367 = vadd.f32 %v4366, %v4271
        %v4368 = vadd.f32 %v4367, %v4272
        %v4369 = vadd.f32 %v4368, %v4273
        %v4370 = vadd.f32 %v4369, %v4274
        %v4371 = vrot.slane %v4370, 4
        %v4372 = vadd.f32 %v4370, %v4371
        %v4373 = vrot.slane %v4372, 2
        %v4374 = vadd.f32 %v4372, %v4373
        %v4375 = vrot.slane %v4374, 1
        %v4376 = vadd.f32 %v4374, %v4375
        %v4377 = vadd.f32 %v2161, %v4376
        %v4378 = vmul.f32 %v4243, %v4243
        %v4379 = vmul.f32 %v4244, %v4244
        %v4380 = vmul.f32 %v4245, %v4245
        %v4381 = vmul.f32 %v4246, %v4246
        %v4382 = vmul.f32 %v4247, %v4247
        %v4383 = vmul.f32 %v4248, %v4248
        %v4384 = vmul.f32 %v4249, %v4249
        %v4385 = vmul.f32 %v4250, %v4250
        %v4386 = vmul.f32 %v4251, %v4251
        %v4387 = vmul.f32 %v4252, %v4252
        %v4388 = vmul.f32 %v4253, %v4253
        %v4389 = vmul.f32 %v4254, %v4254
        %v4390 = vmul.f32 %v4255, %v4255
        %v4391 = vmul.f32 %v4256, %v4256
        %v4392 = vmul.f32 %v4257, %v4257
        %v4393 = vmul.f32 %v4258, %v4258
        %v4394 = vmul.f32 %v4259, %v4259
        %v4395 = vmul.f32 %v4260, %v4260
        %v4396 = vmul.f32 %v4261, %v4261
        %v4397 = vmul.f32 %v4262, %v4262
        %v4398 = vmul.f32 %v4263, %v4263
        %v4399 = vmul.f32 %v4264, %v4264
        %v4400 = vmul.f32 %v4265, %v4265
        %v4401 = vmul.f32 %v4266, %v4266
        %v4402 = vmul.f32 %v4267, %v4267
        %v4403 = vmul.f32 %v4268, %v4268
        %v4404 = vmul.f32 %v4269, %v4269
        %v4405 = vmul.f32 %v4270, %v4270
        %v4406 = vmul.f32 %v4271, %v4271
        %v4407 = vmul.f32 %v4272, %v4272
        %v4408 = vmul.f32 %v4273, %v4273
        %v4409 = vmul.f32 %v4274, %v4274
        %v4410 = vadd.f32 %v4378, %v4379
        %v4411 = vadd.f32 %v4410, %v4380
        %v4412 = vadd.f32 %v4411, %v4381
        %v4413 = vadd.f32 %v4412, %v4382
        %v4414 = vadd.f32 %v4413, %v4383
        %v4415 = vadd.f32 %v4414, %v4384
        %v4416 = vadd.f32 %v4415, %v4385
        %v4417 = vadd.f32 %v4416, %v4386
        %v4418 = vadd.f32 %v4417, %v4387
        %v4419 = vadd.f32 %v4418, %v4388
        %v4420 = vadd.f32 %v4419, %v4389
        %v4421 = vadd.f32 %v4420, %v4390
        %v4422 = vadd.f32 %v4421, %v4391
        %v4423 = vadd.f32 %v4422, %v4392
        %v4424 = vadd.f32 %v4423, %v4393
        %v4425 = vadd.f32 %v4424, %v4394
        %v4426 = vadd.f32 %v4425, %v4395
        %v4427 = vadd.f32 %v4426, %v4396
        %v4428 = vadd.f32 %v4427, %v4397
        %v4429 = vadd.f32 %v4428, %v4398
        %v4430 = vadd.f32 %v4429, %v4399
        %v4431 = vadd.f32 %v4430, %v4400
        %v4432 = vadd.f32 %v4431, %v4401
        %v4433 = vadd.f32 %v4432, %v4402
        %v4434 = vadd.f32 %v4433, %v4403
        %v4435 = vadd.f32 %v4434, %v4404
        %v4436 = vadd.f32 %v4435, %v4405
        %v4437 = vadd.f32 %v4436, %v4406
        %v4438 = vadd.f32 %v4437, %v4407
        %v4439 = vadd.f32 %v4438, %v4408
        %v4440 = vadd.f32 %v4439, %v4409
        %v4441 = vrot.slane %v4440, 4
        %v4442 = vadd.f32 %v4440, %v4441
        %v4443 = vrot.slane %v4442, 2
        %v4444 = vadd.f32 %v4442, %v4443
        %v4445 = vrot.slane %v4444, 1
        %v4446 = vadd.f32 %v4444, %v4445
        %v4447 = vadd.f32 %v2231, %v4446
        %s4448 = sadd.s32 %s232, 2
        %s4449 = smul.u32 %s4448, 3
        %s4450 = smul.addr %s4449, 4
        %s4451 = scalar_lea.vmem %s229, %s4450
        %v4452 = vld [vmem:[%s4451] sm:$0xf]
        %v4453 = vld [vmem:[%s4451 + $0x4] sm:$0xf]
        %v4454 = vld [vmem:[%s4451 + $0x8] sm:$0x1]
        %v4455 = vld [vmem:[%s4451 + $0xc] sm:$0xf]
        %v4456 = vld [vmem:[%s4451 + $0x10] sm:$0xf]
        %v4457 = vld [vmem:[%s4451 + $0x14] sm:$0x1]
        %v4458 = vld [vmem:[%s4451 + $0x18] sm:$0xf]
        %v4459 = vld [vmem:[%s4451 + $0x1c] sm:$0xf]
        %v4460 = vld [vmem:[%s4451 + $0x20] sm:$0x1]
        %v4461 = vld [vmem:[%s4451 + $0x24] sm:$0xf]
        %v4462 = vld [vmem:[%s4451 + $0x28] sm:$0xf]
        %v4463 = vld [vmem:[%s4451 + $0x2c] sm:$0x1]
        %v4464 = vld [vmem:[%s4451 + $0x30] sm:$0xf]
        %v4465 = vld [vmem:[%s4451 + $0x34] sm:$0xf]
        %v4466 = vld [vmem:[%s4451 + $0x38] sm:$0x1]
        %v4467 = vld [vmem:[%s4451 + $0x3c] sm:$0xf]
        %v4468 = vld [vmem:[%s4451 + $0x40] sm:$0xf]
        %v4469 = vld [vmem:[%s4451 + $0x44] sm:$0x1]
        %v4470 = vld [vmem:[%s4451 + $0x48] sm:$0xf]
        %v4471 = vld [vmem:[%s4451 + $0x4c] sm:$0xf]
        %v4472 = vld [vmem:[%s4451 + $0x50] sm:$0x1]
        %v4473 = vld [vmem:[%s4451 + $0x54] sm:$0xf]
        %v4474 = vld [vmem:[%s4451 + $0x58] sm:$0xf]
        %v4475 = vld [vmem:[%s4451 + $0x5c] sm:$0x1]
        %v4476 = vld [vmem:[%s4451 + $0x60] sm:$0xf]
        %v4477 = vld [vmem:[%s4451 + $0x64] sm:$0xf]
        %v4478 = vld [vmem:[%s4451 + $0x68] sm:$0x1]
        %v4479 = vld [vmem:[%s4451 + $0x6c] sm:$0xf]
        %v4480 = vld [vmem:[%s4451 + $0x70] sm:$0xf]
        %v4481 = vld [vmem:[%s4451 + $0x74] sm:$0x1]
        %v4482 = vld [vmem:[%s4451 + $0x78] sm:$0xf]
        %v4483 = vld [vmem:[%s4451 + $0x7c] sm:$0xf]
        %v4484 = vld [vmem:[%s4451 + $0x80] sm:$0x1]
        %v4485 = vld [vmem:[%s4451 + $0x84] sm:$0xf]
        %v4486 = vld [vmem:[%s4451 + $0x88] sm:$0xf]
        %v4487 = vld [vmem:[%s4451 + $0x8c] sm:$0x1]
        %v4488 = vld [vmem:[%s4451 + $0x90] sm:$0xf]
        %v4489 = vld [vmem:[%s4451 + $0x94] sm:$0xf]
        %v4490 = vld [vmem:[%s4451 + $0x98] sm:$0x1]
        %v4491 = vld [vmem:[%s4451 + $0x9c] sm:$0xf]
        %v4492 = vld [vmem:[%s4451 + $0xa0] sm:$0xf]
        %v4493 = vld [vmem:[%s4451 + $0xa4] sm:$0x1]
        %v4494 = vld [vmem:[%s4451 + $0xa8] sm:$0xf]
        %v4495 = vld [vmem:[%s4451 + $0xac] sm:$0xf]
        %v4496 = vld [vmem:[%s4451 + $0xb0] sm:$0x1]
        %v4497 = vld [vmem:[%s4451 + $0xb4] sm:$0xf]
        %v4498 = vld [vmem:[%s4451 + $0xb8] sm:$0xf]
        %v4499 = vld [vmem:[%s4451 + $0xbc] sm:$0x1]
        %v4501 = vshrl.u32 %v4452, 16
        %v4503 = vrot.slane %v4501, 4
        %v4504 = vshll.u32 %v4452, 16
        %v4506 = vrot.slane %v4504, 5
        %v4507 = vor.u32 %v4503, %v4506
        %v4508 = vrot.slane %v4507, 4
        %v4510 = vshll.u32 %v4453, 16
        %v4512 = vrot.slane %v4510, 5
        %v4513 = vsel %vm287, %v4508, %v4512
        %v4514 = vshrl.u32 %v4453, 16
        %v4516 = vrot.slane %v4514, 4
        %v4517 = vor.u32 %v4516, %v4512
        %v4518 = vrot.slane %v4517, 4
        %v4520 = vshll.u32 %v4454, 16
        %v4522 = vrot.slane %v4520, 5
        %v4523 = vsel %vm287, %v4518, %v4522
        %v4525 = vshrl.u32 %v4455, 16
        %v4527 = vrot.slane %v4525, 4
        %v4528 = vshll.u32 %v4455, 16
        %v4530 = vrot.slane %v4528, 5
        %v4531 = vor.u32 %v4527, %v4530
        %v4532 = vrot.slane %v4531, 4
        %v4534 = vshll.u32 %v4456, 16
        %v4536 = vrot.slane %v4534, 5
        %v4537 = vsel %vm287, %v4532, %v4536
        %v4538 = vshrl.u32 %v4456, 16
        %v4540 = vrot.slane %v4538, 4
        %v4541 = vor.u32 %v4540, %v4536
        %v4542 = vrot.slane %v4541, 4
        %v4544 = vshll.u32 %v4457, 16
        %v4546 = vrot.slane %v4544, 5
        %v4547 = vsel %vm287, %v4542, %v4546
        %v4549 = vshrl.u32 %v4458, 16
        %v4551 = vrot.slane %v4549, 4
        %v4552 = vshll.u32 %v4458, 16
        %v4554 = vrot.slane %v4552, 5
        %v4555 = vor.u32 %v4551, %v4554
        %v4556 = vrot.slane %v4555, 4
        %v4558 = vshll.u32 %v4459, 16
        %v4560 = vrot.slane %v4558, 5
        %v4561 = vsel %vm287, %v4556, %v4560
        %v4562 = vshrl.u32 %v4459, 16
        %v4564 = vrot.slane %v4562, 4
        %v4565 = vor.u32 %v4564, %v4560
        %v4566 = vrot.slane %v4565, 4
        %v4568 = vshll.u32 %v4460, 16
        %v4570 = vrot.slane %v4568, 5
        %v4571 = vsel %vm287, %v4566, %v4570
        %v4573 = vshrl.u32 %v4461, 16
        %v4575 = vrot.slane %v4573, 4
        %v4576 = vshll.u32 %v4461, 16
        %v4578 = vrot.slane %v4576, 5
        %v4579 = vor.u32 %v4575, %v4578
        %v4580 = vrot.slane %v4579, 4
        %v4582 = vshll.u32 %v4462, 16
        %v4584 = vrot.slane %v4582, 5
        %v4585 = vsel %vm287, %v4580, %v4584
        %v4586 = vshrl.u32 %v4462, 16
        %v4588 = vrot.slane %v4586, 4
        %v4589 = vor.u32 %v4588, %v4584
        %v4590 = vrot.slane %v4589, 4
        %v4592 = vshll.u32 %v4463, 16
        %v4594 = vrot.slane %v4592, 5
        %v4595 = vsel %vm287, %v4590, %v4594
        %v4597 = vshrl.u32 %v4464, 16
        %v4599 = vrot.slane %v4597, 4
        %v4600 = vshll.u32 %v4464, 16
        %v4602 = vrot.slane %v4600, 5
        %v4603 = vor.u32 %v4599, %v4602
        %v4604 = vrot.slane %v4603, 4
        %v4606 = vshll.u32 %v4465, 16
        %v4608 = vrot.slane %v4606, 5
        %v4609 = vsel %vm287, %v4604, %v4608
        %v4610 = vshrl.u32 %v4465, 16
        %v4612 = vrot.slane %v4610, 4
        %v4613 = vor.u32 %v4612, %v4608
        %v4614 = vrot.slane %v4613, 4
        %v4616 = vshll.u32 %v4466, 16
        %v4618 = vrot.slane %v4616, 5
        %v4619 = vsel %vm287, %v4614, %v4618
        %v4621 = vshrl.u32 %v4467, 16
        %v4623 = vrot.slane %v4621, 4
        %v4624 = vshll.u32 %v4467, 16
        %v4626 = vrot.slane %v4624, 5
        %v4627 = vor.u32 %v4623, %v4626
        %v4628 = vrot.slane %v4627, 4
        %v4630 = vshll.u32 %v4468, 16
        %v4632 = vrot.slane %v4630, 5
        %v4633 = vsel %vm287, %v4628, %v4632
        %v4634 = vshrl.u32 %v4468, 16
        %v4636 = vrot.slane %v4634, 4
        %v4637 = vor.u32 %v4636, %v4632
        %v4638 = vrot.slane %v4637, 4
        %v4640 = vshll.u32 %v4469, 16
        %v4642 = vrot.slane %v4640, 5
        %v4643 = vsel %vm287, %v4638, %v4642
        %v4645 = vshrl.u32 %v4470, 16
        %v4647 = vrot.slane %v4645, 4
        %v4648 = vshll.u32 %v4470, 16
        %v4650 = vrot.slane %v4648, 5
        %v4651 = vor.u32 %v4647, %v4650
        %v4652 = vrot.slane %v4651, 4
        %v4654 = vshll.u32 %v4471, 16
        %v4656 = vrot.slane %v4654, 5
        %v4657 = vsel %vm287, %v4652, %v4656
        %v4658 = vshrl.u32 %v4471, 16
        %v4660 = vrot.slane %v4658, 4
        %v4661 = vor.u32 %v4660, %v4656
        %v4662 = vrot.slane %v4661, 4
        %v4664 = vshll.u32 %v4472, 16
        %v4666 = vrot.slane %v4664, 5
        %v4667 = vsel %vm287, %v4662, %v4666
        %v4669 = vshrl.u32 %v4473, 16
        %v4671 = vrot.slane %v4669, 4
        %v4672 = vshll.u32 %v4473, 16
        %v4674 = vrot.slane %v4672, 5
        %v4675 = vor.u32 %v4671, %v4674
        %v4676 = vrot.slane %v4675, 4
        %v4678 = vshll.u32 %v4474, 16
        %v4680 = vrot.slane %v4678, 5
        %v4681 = vsel %vm287, %v4676, %v4680
        %v4682 = vshrl.u32 %v4474, 16
        %v4684 = vrot.slane %v4682, 4
        %v4685 = vor.u32 %v4684, %v4680
        %v4686 = vrot.slane %v4685, 4
        %v4688 = vshll.u32 %v4475, 16
        %v4690 = vrot.slane %v4688, 5
        %v4691 = vsel %vm287, %v4686, %v4690
        %v4693 = vshrl.u32 %v4476, 16
        %v4695 = vrot.slane %v4693, 4
        %v4696 = vshll.u32 %v4476, 16
        %v4698 = vrot.slane %v4696, 5
        %v4699 = vor.u32 %v4695, %v4698
        %v4700 = vrot.slane %v4699, 4
        %v4702 = vshll.u32 %v4477, 16
        %v4704 = vrot.slane %v4702, 5
        %v4705 = vsel %vm287, %v4700, %v4704
        %v4706 = vshrl.u32 %v4477, 16
        %v4708 = vrot.slane %v4706, 4
        %v4709 = vor.u32 %v4708, %v4704
        %v4710 = vrot.slane %v4709, 4
        %v4712 = vshll.u32 %v4478, 16
        %v4714 = vrot.slane %v4712, 5
        %v4715 = vsel %vm287, %v4710, %v4714
        %v4717 = vshrl.u32 %v4479, 16
        %v4719 = vrot.slane %v4717, 4
        %v4720 = vshll.u32 %v4479, 16
        %v4722 = vrot.slane %v4720, 5
        %v4723 = vor.u32 %v4719, %v4722
        %v4724 = vrot.slane %v4723, 4
        %v4726 = vshll.u32 %v4480, 16
        %v4728 = vrot.slane %v4726, 5
        %v4729 = vsel %vm287, %v4724, %v4728
        %v4730 = vshrl.u32 %v4480, 16
        %v4732 = vrot.slane %v4730, 4
        %v4733 = vor.u32 %v4732, %v4728
        %v4734 = vrot.slane %v4733, 4
        %v4736 = vshll.u32 %v4481, 16
        %v4738 = vrot.slane %v4736, 5
        %v4739 = vsel %vm287, %v4734, %v4738
        %v4741 = vshrl.u32 %v4482, 16
        %v4743 = vrot.slane %v4741, 4
        %v4744 = vshll.u32 %v4482, 16
        %v4746 = vrot.slane %v4744, 5
        %v4747 = vor.u32 %v4743, %v4746
        %v4748 = vrot.slane %v4747, 4
        %v4750 = vshll.u32 %v4483, 16
        %v4752 = vrot.slane %v4750, 5
        %v4753 = vsel %vm287, %v4748, %v4752
        %v4754 = vshrl.u32 %v4483, 16
        %v4756 = vrot.slane %v4754, 4
        %v4757 = vor.u32 %v4756, %v4752
        %v4758 = vrot.slane %v4757, 4
        %v4760 = vshll.u32 %v4484, 16
        %v4762 = vrot.slane %v4760, 5
        %v4763 = vsel %vm287, %v4758, %v4762
        %v4765 = vshrl.u32 %v4485, 16
        %v4767 = vrot.slane %v4765, 4
        %v4768 = vshll.u32 %v4485, 16
        %v4770 = vrot.slane %v4768, 5
        %v4771 = vor.u32 %v4767, %v4770
        %v4772 = vrot.slane %v4771, 4
        %v4774 = vshll.u32 %v4486, 16
        %v4776 = vrot.slane %v4774, 5
        %v4777 = vsel %vm287, %v4772, %v4776
        %v4778 = vshrl.u32 %v4486, 16
        %v4780 = vrot.slane %v4778, 4
        %v4781 = vor.u32 %v4780, %v4776
        %v4782 = vrot.slane %v4781, 4
        %v4784 = vshll.u32 %v4487, 16
        %v4786 = vrot.slane %v4784, 5
        %v4787 = vsel %vm287, %v4782, %v4786
        %v4789 = vshrl.u32 %v4488, 16
        %v4791 = vrot.slane %v4789, 4
        %v4792 = vshll.u32 %v4488, 16
        %v4794 = vrot.slane %v4792, 5
        %v4795 = vor.u32 %v4791, %v4794
        %v4796 = vrot.slane %v4795, 4
        %v4798 = vshll.u32 %v4489, 16
        %v4800 = vrot.slane %v4798, 5
        %v4801 = vsel %vm287, %v4796, %v4800
        %v4802 = vshrl.u32 %v4489, 16
        %v4804 = vrot.slane %v4802, 4
        %v4805 = vor.u32 %v4804, %v4800
        %v4806 = vrot.slane %v4805, 4
        %v4808 = vshll.u32 %v4490, 16
        %v4810 = vrot.slane %v4808, 5
        %v4811 = vsel %vm287, %v4806, %v4810
        %v4813 = vshrl.u32 %v4491, 16
        %v4815 = vrot.slane %v4813, 4
        %v4816 = vshll.u32 %v4491, 16
        %v4818 = vrot.slane %v4816, 5
        %v4819 = vor.u32 %v4815, %v4818
        %v4820 = vrot.slane %v4819, 4
        %v4822 = vshll.u32 %v4492, 16
        %v4824 = vrot.slane %v4822, 5
        %v4825 = vsel %vm287, %v4820, %v4824
        %v4826 = vshrl.u32 %v4492, 16
        %v4828 = vrot.slane %v4826, 4
        %v4829 = vor.u32 %v4828, %v4824
        %v4830 = vrot.slane %v4829, 4
        %v4832 = vshll.u32 %v4493, 16
        %v4834 = vrot.slane %v4832, 5
        %v4835 = vsel %vm287, %v4830, %v4834
        %v4837 = vshrl.u32 %v4494, 16
        %v4839 = vrot.slane %v4837, 4
        %v4840 = vshll.u32 %v4494, 16
        %v4842 = vrot.slane %v4840, 5
        %v4843 = vor.u32 %v4839, %v4842
        %v4844 = vrot.slane %v4843, 4
        %v4846 = vshll.u32 %v4495, 16
        %v4848 = vrot.slane %v4846, 5
        %v4849 = vsel %vm287, %v4844, %v4848
        %v4850 = vshrl.u32 %v4495, 16
        %v4852 = vrot.slane %v4850, 4
        %v4853 = vor.u32 %v4852, %v4848
        %v4854 = vrot.slane %v4853, 4
        %v4856 = vshll.u32 %v4496, 16
        %v4858 = vrot.slane %v4856, 5
        %v4859 = vsel %vm287, %v4854, %v4858
        %v4861 = vshrl.u32 %v4497, 16
        %v4863 = vrot.slane %v4861, 4
        %v4864 = vshll.u32 %v4497, 16
        %v4866 = vrot.slane %v4864, 5
        %v4867 = vor.u32 %v4863, %v4866
        %v4868 = vrot.slane %v4867, 4
        %v4870 = vshll.u32 %v4498, 16
        %v4872 = vrot.slane %v4870, 5
        %v4873 = vsel %vm287, %v4868, %v4872
        %v4874 = vshrl.u32 %v4498, 16
        %v4876 = vrot.slane %v4874, 4
        %v4877 = vor.u32 %v4876, %v4872
        %v4878 = vrot.slane %v4877, 4
        %v4880 = vshll.u32 %v4499, 16
        %v4882 = vrot.slane %v4880, 5
        %v4883 = vsel %vm287, %v4878, %v4882
        %s4884 = scalar_lea.vmem %s1, 16
        %v4885 = vld [vmem:[%s4884] sm:$0x3]
        %v4886 = vld [vmem:[%s236] sm:$0xf]
        %v4887 = vld [vmem:[%s236 + $0x4] sm:$0xf]
        %v4888 = vld [vmem:[%s236 + $0x8] sm:$0x1]
        %v4889 = vld [vmem:[%s236 + $0xc] sm:$0xf]
        %v4890 = vld [vmem:[%s236 + $0x10] sm:$0xf]
        %v4891 = vld [vmem:[%s236 + $0x14] sm:$0x1]
        %v4892 = vld [vmem:[%s236 + $0x18] sm:$0xf]
        %v4893 = vld [vmem:[%s236 + $0x1c] sm:$0xf]
        %v4894 = vld [vmem:[%s236 + $0x20] sm:$0x1]
        %v4895 = vld [vmem:[%s236 + $0x24] sm:$0xf]
        %v4896 = vld [vmem:[%s236 + $0x28] sm:$0xf]
        %v4897 = vld [vmem:[%s236 + $0x2c] sm:$0x1]
        %v4898 = vld [vmem:[%s236 + $0x30] sm:$0xf]
        %v4899 = vld [vmem:[%s236 + $0x34] sm:$0xf]
        %v4900 = vld [vmem:[%s236 + $0x38] sm:$0x1]
        %v4901 = vld [vmem:[%s236 + $0x3c] sm:$0xf]
        %v4902 = vld [vmem:[%s236 + $0x40] sm:$0xf]
        %v4903 = vld [vmem:[%s236 + $0x44] sm:$0x1]
        %v4904 = vld [vmem:[%s236 + $0x48] sm:$0xf]
        %v4905 = vld [vmem:[%s236 + $0x4c] sm:$0xf]
        %v4906 = vld [vmem:[%s236 + $0x50] sm:$0x1]
        %v4907 = vld [vmem:[%s236 + $0x54] sm:$0xf]
        %v4908 = vld [vmem:[%s236 + $0x58] sm:$0xf]
        %v4909 = vld [vmem:[%s236 + $0x5c] sm:$0x1]
        %v4910 = vld [vmem:[%s236 + $0x60] sm:$0xf]
        %v4911 = vld [vmem:[%s236 + $0x64] sm:$0xf]
        %v4912 = vld [vmem:[%s236 + $0x68] sm:$0x1]
        %v4913 = vld [vmem:[%s236 + $0x6c] sm:$0xf]
        %v4914 = vld [vmem:[%s236 + $0x70] sm:$0xf]
        %v4915 = vld [vmem:[%s236 + $0x74] sm:$0x1]
        %v4916 = vld [vmem:[%s236 + $0x78] sm:$0xf]
        %v4917 = vld [vmem:[%s236 + $0x7c] sm:$0xf]
        %v4918 = vld [vmem:[%s236 + $0x80] sm:$0x1]
        %v4919 = vld [vmem:[%s236 + $0x84] sm:$0xf]
        %v4920 = vld [vmem:[%s236 + $0x88] sm:$0xf]
        %v4921 = vld [vmem:[%s236 + $0x8c] sm:$0x1]
        %v4922 = vld [vmem:[%s236 + $0x90] sm:$0xf]
        %v4923 = vld [vmem:[%s236 + $0x94] sm:$0xf]
        %v4924 = vld [vmem:[%s236 + $0x98] sm:$0x1]
        %v4925 = vld [vmem:[%s236 + $0x9c] sm:$0xf]
        %v4926 = vld [vmem:[%s236 + $0xa0] sm:$0xf]
        %v4927 = vld [vmem:[%s236 + $0xa4] sm:$0x1]
        %v4928 = vld [vmem:[%s236 + $0xa8] sm:$0xf]
        %v4929 = vld [vmem:[%s236 + $0xac] sm:$0xf]
        %v4930 = vld [vmem:[%s236 + $0xb0] sm:$0x1]
        %v4931 = vld [vmem:[%s236 + $0xb4] sm:$0xf]
        %v4932 = vld [vmem:[%s236 + $0xb8] sm:$0xf]
        %v4933 = vld [vmem:[%s236 + $0xbc] sm:$0x1]
        %v4935 = vshrl.u32 %v4886, 16
        %v4937 = vrot.slane %v4935, 4
        %v4938 = vshll.u32 %v4886, 16
        %v4940 = vrot.slane %v4938, 5
        %v4941 = vor.u32 %v4937, %v4940
        %v4942 = vrot.slane %v4941, 4
        %v4944 = vshll.u32 %v4887, 16
        %v4946 = vrot.slane %v4944, 5
        %v4947 = vsel %vm287, %v4942, %v4946
        %v4948 = vshrl.u32 %v4887, 16
        %v4950 = vrot.slane %v4948, 4
        %v4951 = vor.u32 %v4950, %v4946
        %v4952 = vrot.slane %v4951, 4
        %v4954 = vshll.u32 %v4888, 16
        %v4956 = vrot.slane %v4954, 5
        %v4957 = vsel %vm287, %v4952, %v4956
        %v4959 = vshrl.u32 %v4889, 16
        %v4961 = vrot.slane %v4959, 4
        %v4962 = vshll.u32 %v4889, 16
        %v4964 = vrot.slane %v4962, 5
        %v4965 = vor.u32 %v4961, %v4964
        %v4966 = vrot.slane %v4965, 4
        %v4968 = vshll.u32 %v4890, 16
        %v4970 = vrot.slane %v4968, 5
        %v4971 = vsel %vm287, %v4966, %v4970
        %v4972 = vshrl.u32 %v4890, 16
        %v4974 = vrot.slane %v4972, 4
        %v4975 = vor.u32 %v4974, %v4970
        %v4976 = vrot.slane %v4975, 4
        %v4978 = vshll.u32 %v4891, 16
        %v4980 = vrot.slane %v4978, 5
        %v4981 = vsel %vm287, %v4976, %v4980
        %v4983 = vshrl.u32 %v4892, 16
        %v4985 = vrot.slane %v4983, 4
        %v4986 = vshll.u32 %v4892, 16
        %v4988 = vrot.slane %v4986, 5
        %v4989 = vor.u32 %v4985, %v4988
        %v4990 = vrot.slane %v4989, 4
        %v4992 = vshll.u32 %v4893, 16
        %v4994 = vrot.slane %v4992, 5
        %v4995 = vsel %vm287, %v4990, %v4994
        %v4996 = vshrl.u32 %v4893, 16
        %v4998 = vrot.slane %v4996, 4
        %v4999 = vor.u32 %v4998, %v4994
        %v5000 = vrot.slane %v4999, 4
        %v5002 = vshll.u32 %v4894, 16
        %v5004 = vrot.slane %v5002, 5
        %v5005 = vsel %vm287, %v5000, %v5004
        %v5007 = vshrl.u32 %v4895, 16
        %v5009 = vrot.slane %v5007, 4
        %v5010 = vshll.u32 %v4895, 16
        %v5012 = vrot.slane %v5010, 5
        %v5013 = vor.u32 %v5009, %v5012
        %v5014 = vrot.slane %v5013, 4
        %v5016 = vshll.u32 %v4896, 16
        %v5018 = vrot.slane %v5016, 5
        %v5019 = vsel %vm287, %v5014, %v5018
        %v5020 = vshrl.u32 %v4896, 16
        %v5022 = vrot.slane %v5020, 4
        %v5023 = vor.u32 %v5022, %v5018
        %v5024 = vrot.slane %v5023, 4
        %v5026 = vshll.u32 %v4897, 16
        %v5028 = vrot.slane %v5026, 5
        %v5029 = vsel %vm287, %v5024, %v5028
        %v5031 = vshrl.u32 %v4898, 16
        %v5033 = vrot.slane %v5031, 4
        %v5034 = vshll.u32 %v4898, 16
        %v5036 = vrot.slane %v5034, 5
        %v5037 = vor.u32 %v5033, %v5036
        %v5038 = vrot.slane %v5037, 4
        %v5040 = vshll.u32 %v4899, 16
        %v5042 = vrot.slane %v5040, 5
        %v5043 = vsel %vm287, %v5038, %v5042
        %v5044 = vshrl.u32 %v4899, 16
        %v5046 = vrot.slane %v5044, 4
        %v5047 = vor.u32 %v5046, %v5042
        %v5048 = vrot.slane %v5047, 4
        %v5050 = vshll.u32 %v4900, 16
        %v5052 = vrot.slane %v5050, 5
        %v5053 = vsel %vm287, %v5048, %v5052
        %v5055 = vshrl.u32 %v4901, 16
        %v5057 = vrot.slane %v5055, 4
        %v5058 = vshll.u32 %v4901, 16
        %v5060 = vrot.slane %v5058, 5
        %v5061 = vor.u32 %v5057, %v5060
        %v5062 = vrot.slane %v5061, 4
        %v5064 = vshll.u32 %v4902, 16
        %v5066 = vrot.slane %v5064, 5
        %v5067 = vsel %vm287, %v5062, %v5066
        %v5068 = vshrl.u32 %v4902, 16
        %v5070 = vrot.slane %v5068, 4
        %v5071 = vor.u32 %v5070, %v5066
        %v5072 = vrot.slane %v5071, 4
        %v5074 = vshll.u32 %v4903, 16
        %v5076 = vrot.slane %v5074, 5
        %v5077 = vsel %vm287, %v5072, %v5076
        %v5079 = vshrl.u32 %v4904, 16
        %v5081 = vrot.slane %v5079, 4
        %v5082 = vshll.u32 %v4904, 16
        %v5084 = vrot.slane %v5082, 5
        %v5085 = vor.u32 %v5081, %v5084
        %v5086 = vrot.slane %v5085, 4
        %v5088 = vshll.u32 %v4905, 16
        %v5090 = vrot.slane %v5088, 5
        %v5091 = vsel %vm287, %v5086, %v5090
        %v5092 = vshrl.u32 %v4905, 16
        %v5094 = vrot.slane %v5092, 4
        %v5095 = vor.u32 %v5094, %v5090
        %v5096 = vrot.slane %v5095, 4
        %v5098 = vshll.u32 %v4906, 16
        %v5100 = vrot.slane %v5098, 5
        %v5101 = vsel %vm287, %v5096, %v5100
        %v5103 = vshrl.u32 %v4907, 16
        %v5105 = vrot.slane %v5103, 4
        %v5106 = vshll.u32 %v4907, 16
        %v5108 = vrot.slane %v5106, 5
        %v5109 = vor.u32 %v5105, %v5108
        %v5110 = vrot.slane %v5109, 4
        %v5112 = vshll.u32 %v4908, 16
        %v5114 = vrot.slane %v5112, 5
        %v5115 = vsel %vm287, %v5110, %v5114
        %v5116 = vshrl.u32 %v4908, 16
        %v5118 = vrot.slane %v5116, 4
        %v5119 = vor.u32 %v5118, %v5114
        %v5120 = vrot.slane %v5119, 4
        %v5122 = vshll.u32 %v4909, 16
        %v5124 = vrot.slane %v5122, 5
        %v5125 = vsel %vm287, %v5120, %v5124
        %v5127 = vshrl.u32 %v4910, 16
        %v5129 = vrot.slane %v5127, 4
        %v5130 = vshll.u32 %v4910, 16
        %v5132 = vrot.slane %v5130, 5
        %v5133 = vor.u32 %v5129, %v5132
        %v5134 = vrot.slane %v5133, 4
        %v5136 = vshll.u32 %v4911, 16
        %v5138 = vrot.slane %v5136, 5
        %v5139 = vsel %vm287, %v5134, %v5138
        %v5140 = vshrl.u32 %v4911, 16
        %v5142 = vrot.slane %v5140, 4
        %v5143 = vor.u32 %v5142, %v5138
        %v5144 = vrot.slane %v5143, 4
        %v5146 = vshll.u32 %v4912, 16
        %v5148 = vrot.slane %v5146, 5
        %v5149 = vsel %vm287, %v5144, %v5148
        %v5151 = vshrl.u32 %v4913, 16
        %v5153 = vrot.slane %v5151, 4
        %v5154 = vshll.u32 %v4913, 16
        %v5156 = vrot.slane %v5154, 5
        %v5157 = vor.u32 %v5153, %v5156
        %v5158 = vrot.slane %v5157, 4
        %v5160 = vshll.u32 %v4914, 16
        %v5162 = vrot.slane %v5160, 5
        %v5163 = vsel %vm287, %v5158, %v5162
        %v5164 = vshrl.u32 %v4914, 16
        %v5166 = vrot.slane %v5164, 4
        %v5167 = vor.u32 %v5166, %v5162
        %v5168 = vrot.slane %v5167, 4
        %v5170 = vshll.u32 %v4915, 16
        %v5172 = vrot.slane %v5170, 5
        %v5173 = vsel %vm287, %v5168, %v5172
        %v5175 = vshrl.u32 %v4916, 16
        %v5177 = vrot.slane %v5175, 4
        %v5178 = vshll.u32 %v4916, 16
        %v5180 = vrot.slane %v5178, 5
        %v5181 = vor.u32 %v5177, %v5180
        %v5182 = vrot.slane %v5181, 4
        %v5184 = vshll.u32 %v4917, 16
        %v5186 = vrot.slane %v5184, 5
        %v5187 = vsel %vm287, %v5182, %v5186
        %v5188 = vshrl.u32 %v4917, 16
        %v5190 = vrot.slane %v5188, 4
        %v5191 = vor.u32 %v5190, %v5186
        %v5192 = vrot.slane %v5191, 4
        %v5194 = vshll.u32 %v4918, 16
        %v5196 = vrot.slane %v5194, 5
        %v5197 = vsel %vm287, %v5192, %v5196
        %v5199 = vshrl.u32 %v4919, 16
        %v5201 = vrot.slane %v5199, 4
        %v5202 = vshll.u32 %v4919, 16
        %v5204 = vrot.slane %v5202, 5
        %v5205 = vor.u32 %v5201, %v5204
        %v5206 = vrot.slane %v5205, 4
        %v5208 = vshll.u32 %v4920, 16
        %v5210 = vrot.slane %v5208, 5
        %v5211 = vsel %vm287, %v5206, %v5210
        %v5212 = vshrl.u32 %v4920, 16
        %v5214 = vrot.slane %v5212, 4
        %v5215 = vor.u32 %v5214, %v5210
        %v5216 = vrot.slane %v5215, 4
        %v5218 = vshll.u32 %v4921, 16
        %v5220 = vrot.slane %v5218, 5
        %v5221 = vsel %vm287, %v5216, %v5220
        %v5223 = vshrl.u32 %v4922, 16
        %v5225 = vrot.slane %v5223, 4
        %v5226 = vshll.u32 %v4922, 16
        %v5228 = vrot.slane %v5226, 5
        %v5229 = vor.u32 %v5225, %v5228
        %v5230 = vrot.slane %v5229, 4
        %v5232 = vshll.u32 %v4923, 16
        %v5234 = vrot.slane %v5232, 5
        %v5235 = vsel %vm287, %v5230, %v5234
        %v5236 = vshrl.u32 %v4923, 16
        %v5238 = vrot.slane %v5236, 4
        %v5239 = vor.u32 %v5238, %v5234
        %v5240 = vrot.slane %v5239, 4
        %v5242 = vshll.u32 %v4924, 16
        %v5244 = vrot.slane %v5242, 5
        %v5245 = vsel %vm287, %v5240, %v5244
        %v5247 = vshrl.u32 %v4925, 16
        %v5249 = vrot.slane %v5247, 4
        %v5250 = vshll.u32 %v4925, 16
        %v5252 = vrot.slane %v5250, 5
        %v5253 = vor.u32 %v5249, %v5252
        %v5254 = vrot.slane %v5253, 4
        %v5256 = vshll.u32 %v4926, 16
        %v5258 = vrot.slane %v5256, 5
        %v5259 = vsel %vm287, %v5254, %v5258
        %v5260 = vshrl.u32 %v4926, 16
        %v5262 = vrot.slane %v5260, 4
        %v5263 = vor.u32 %v5262, %v5258
        %v5264 = vrot.slane %v5263, 4
        %v5266 = vshll.u32 %v4927, 16
        %v5268 = vrot.slane %v5266, 5
        %v5269 = vsel %vm287, %v5264, %v5268
        %v5271 = vshrl.u32 %v4928, 16
        %v5273 = vrot.slane %v5271, 4
        %v5274 = vshll.u32 %v4928, 16
        %v5276 = vrot.slane %v5274, 5
        %v5277 = vor.u32 %v5273, %v5276
        %v5278 = vrot.slane %v5277, 4
        %v5280 = vshll.u32 %v4929, 16
        %v5282 = vrot.slane %v5280, 5
        %v5283 = vsel %vm287, %v5278, %v5282
        %v5284 = vshrl.u32 %v4929, 16
        %v5286 = vrot.slane %v5284, 4
        %v5287 = vor.u32 %v5286, %v5282
        %v5288 = vrot.slane %v5287, 4
        %v5290 = vshll.u32 %v4930, 16
        %v5292 = vrot.slane %v5290, 5
        %v5293 = vsel %vm287, %v5288, %v5292
        %v5295 = vshrl.u32 %v4931, 16
        %v5297 = vrot.slane %v5295, 4
        %v5298 = vshll.u32 %v4931, 16
        %v5300 = vrot.slane %v5298, 5
        %v5301 = vor.u32 %v5297, %v5300
        %v5302 = vrot.slane %v5301, 4
        %v5304 = vshll.u32 %v4932, 16
        %v5306 = vrot.slane %v5304, 5
        %v5307 = vsel %vm287, %v5302, %v5306
        %v5308 = vshrl.u32 %v4932, 16
        %v5310 = vrot.slane %v5308, 4
        %v5311 = vor.u32 %v5310, %v5306
        %v5312 = vrot.slane %v5311, 4
        %v5314 = vshll.u32 %v4933, 16
        %v5316 = vrot.slane %v5314, 5
        %v5317 = vsel %vm287, %v5312, %v5316
        %s5318 = scalar_lea.vmem %s1, 18
        %v5319 = vld [vmem:[%s5318] sm:$0x3]
        %v5320 = vunpack.c.l.b16 %v4947
        %v5321 = vunpack.c.l.b16 %v4957
        %v5322 = vunpack.c.l.b16 %v4971
        %v5323 = vunpack.c.l.b16 %v4981
        %v5324 = vunpack.c.l.b16 %v4995
        %v5325 = vunpack.c.l.b16 %v5005
        %v5326 = vunpack.c.l.b16 %v5019
        %v5327 = vunpack.c.l.b16 %v5029
        %v5328 = vunpack.c.l.b16 %v5043
        %v5329 = vunpack.c.l.b16 %v5053
        %v5330 = vunpack.c.l.b16 %v5067
        %v5331 = vunpack.c.l.b16 %v5077
        %v5332 = vunpack.c.l.b16 %v5091
        %v5333 = vunpack.c.l.b16 %v5101
        %v5334 = vunpack.c.l.b16 %v5115
        %v5335 = vunpack.c.l.b16 %v5125
        %v5336 = vunpack.c.l.b16 %v5139
        %v5337 = vunpack.c.l.b16 %v5149
        %v5338 = vunpack.c.l.b16 %v5163
        %v5339 = vunpack.c.l.b16 %v5173
        %v5340 = vunpack.c.l.b16 %v5187
        %v5341 = vunpack.c.l.b16 %v5197
        %v5342 = vunpack.c.l.b16 %v5211
        %v5343 = vunpack.c.l.b16 %v5221
        %v5344 = vunpack.c.l.b16 %v5235
        %v5345 = vunpack.c.l.b16 %v5245
        %v5346 = vunpack.c.l.b16 %v5259
        %v5347 = vunpack.c.l.b16 %v5269
        %v5348 = vunpack.c.l.b16 %v5283
        %v5349 = vunpack.c.l.b16 %v5293
        %v5350 = vunpack.c.l.b16 %v5307
        %v5351 = vunpack.c.l.b16 %v5317
        %v5352 = vpack.c.b16 %v5321, %v5320
        %v5353 = vpack.c.b16 %v5323, %v5322
        %v5354 = vpack.c.b16 %v5325, %v5324
        %v5355 = vpack.c.b16 %v5327, %v5326
        %v5356 = vpack.c.b16 %v5329, %v5328
        %v5357 = vpack.c.b16 %v5331, %v5330
        %v5358 = vpack.c.b16 %v5333, %v5332
        %v5359 = vpack.c.b16 %v5335, %v5334
        %v5360 = vpack.c.b16 %v5337, %v5336
        %v5361 = vpack.c.b16 %v5339, %v5338
        %v5362 = vpack.c.b16 %v5341, %v5340
        %v5363 = vpack.c.b16 %v5343, %v5342
        %v5364 = vpack.c.b16 %v5345, %v5344
        %v5365 = vpack.c.b16 %v5347, %v5346
        %v5366 = vpack.c.b16 %v5349, %v5348
        %v5367 = vpack.c.b16 %v5351, %v5350
        %v5369 = vsel %vm1158, %v5352, 0
        %v5372 = vsel %vm1158, %v5353, 0
        %v5375 = vsel %vm1158, %v5354, 0
        %v5378 = vsel %vm1158, %v5355, 0
        %v5381 = vsel %vm1158, %v5356, 0
        %v5384 = vsel %vm1158, %v5357, 0
        %v5387 = vsel %vm1158, %v5358, 0
        %v5390 = vsel %vm1158, %v5359, 0
        %v5393 = vsel %vm1158, %v5360, 0
        %v5396 = vsel %vm1158, %v5361, 0
        %v5399 = vsel %vm1158, %v5362, 0
        %v5402 = vsel %vm1158, %v5363, 0
        %v5405 = vsel %vm1158, %v5364, 0
        %v5408 = vsel %vm1158, %v5365, 0
        %v5411 = vsel %vm1158, %v5366, 0
        %v5414 = vsel %vm1158, %v5367, 0
        %v5417 = vsel %vm1207, %v5319, 0
        %5419 = vmatpush.bf16.msra.mxu0 0
        %5420 = vmatpush.bf16.msra.mxu0 0
        %5421 = vmatpush.bf16.msra.mxu0 0
        %5422 = vmatpush.bf16.msra.mxu0 0
        %5423 = vmatpush.bf16.msra.mxu0 0
        %5424 = vmatpush.bf16.msra.mxu0 0
        %5425 = vmatpush.bf16.msra.mxu0 0
        %5426 = vmatpush.bf16.msra.mxu0 %v5417
        %5427 = vmatmul.bf16.gmra.mxu0 %v5369
        %v5428 = vpop.f32.mrf.mxu0
        %v5429 = vadd.f32 0.0, %v5428
        %v5430 = vpop.f32.mrf.mxu0
        %v5431 = vadd.f32 0.0, %v5430
        %5432 = vmatmul.bf16.gmra.mxu0 %v5372
        %v5433 = vpop.f32.mrf.mxu0
        %v5434 = vadd.f32 0.0, %v5433
        %v5435 = vpop.f32.mrf.mxu0
        %v5436 = vadd.f32 0.0, %v5435
        %5437 = vmatmul.bf16.gmra.mxu0 %v5375
        %v5438 = vpop.f32.mrf.mxu0
        %v5439 = vadd.f32 0.0, %v5438
        %v5440 = vpop.f32.mrf.mxu0
        %v5441 = vadd.f32 0.0, %v5440
        %5442 = vmatmul.bf16.gmra.mxu0 %v5378
        %v5443 = vpop.f32.mrf.mxu0
        %v5444 = vadd.f32 0.0, %v5443
        %v5445 = vpop.f32.mrf.mxu0
        %v5446 = vadd.f32 0.0, %v5445
        %5447 = vmatmul.bf16.gmra.mxu0 %v5381
        %v5448 = vpop.f32.mrf.mxu0
        %v5449 = vadd.f32 0.0, %v5448
        %v5450 = vpop.f32.mrf.mxu0
        %v5451 = vadd.f32 0.0, %v5450
        %5452 = vmatmul.bf16.gmra.mxu0 %v5384
        %v5453 = vpop.f32.mrf.mxu0
        %v5454 = vadd.f32 0.0, %v5453
        %v5455 = vpop.f32.mrf.mxu0
        %v5456 = vadd.f32 0.0, %v5455
        %5457 = vmatmul.bf16.gmra.mxu0 %v5387
        %v5458 = vpop.f32.mrf.mxu0
        %v5459 = vadd.f32 0.0, %v5458
        %v5460 = vpop.f32.mrf.mxu0
        %v5461 = vadd.f32 0.0, %v5460
        %5462 = vmatmul.bf16.gmra.mxu0 %v5390
        %v5463 = vpop.f32.mrf.mxu0
        %v5464 = vadd.f32 0.0, %v5463
        %v5465 = vpop.f32.mrf.mxu0
        %v5466 = vadd.f32 0.0, %v5465
        %5467 = vmatmul.bf16.gmra.mxu0 %v5393
        %v5468 = vpop.f32.mrf.mxu0
        %v5469 = vadd.f32 0.0, %v5468
        %v5470 = vpop.f32.mrf.mxu0
        %v5471 = vadd.f32 0.0, %v5470
        %5472 = vmatmul.bf16.gmra.mxu0 %v5396
        %v5473 = vpop.f32.mrf.mxu0
        %v5474 = vadd.f32 0.0, %v5473
        %v5475 = vpop.f32.mrf.mxu0
        %v5476 = vadd.f32 0.0, %v5475
        %5477 = vmatmul.bf16.gmra.mxu0 %v5399
        %v5478 = vpop.f32.mrf.mxu0
        %v5479 = vadd.f32 0.0, %v5478
        %v5480 = vpop.f32.mrf.mxu0
        %v5481 = vadd.f32 0.0, %v5480
        %5482 = vmatmul.bf16.gmra.mxu0 %v5402
        %v5483 = vpop.f32.mrf.mxu0
        %v5484 = vadd.f32 0.0, %v5483
        %v5485 = vpop.f32.mrf.mxu0
        %v5486 = vadd.f32 0.0, %v5485
        %5487 = vmatmul.bf16.gmra.mxu0 %v5405
        %v5488 = vpop.f32.mrf.mxu0
        %v5489 = vadd.f32 0.0, %v5488
        %v5490 = vpop.f32.mrf.mxu0
        %v5491 = vadd.f32 0.0, %v5490
        %5492 = vmatmul.bf16.gmra.mxu0 %v5408
        %v5493 = vpop.f32.mrf.mxu0
        %v5494 = vadd.f32 0.0, %v5493
        %v5495 = vpop.f32.mrf.mxu0
        %v5496 = vadd.f32 0.0, %v5495
        %5497 = vmatmul.bf16.gmra.mxu0 %v5411
        %v5498 = vpop.f32.mrf.mxu0
        %v5499 = vadd.f32 0.0, %v5498
        %v5500 = vpop.f32.mrf.mxu0
        %v5501 = vadd.f32 0.0, %v5500
        %5502 = vmatmul.bf16.gmra.mxu0 %v5414
        %v5503 = vpop.f32.mrf.mxu0
        %v5504 = vadd.f32 0.0, %v5503
        %v5505 = vpop.f32.mrf.mxu0
        %v5506 = vadd.f32 0.0, %v5505
        %5507 = vdwg.mxu0
        %v5508 = vunpack.c.l.b16 %v4513
        %v5509 = vunpack.c.l.b16 %v4523
        %v5510 = vunpack.c.l.b16 %v4537
        %v5511 = vunpack.c.l.b16 %v4547
        %v5512 = vunpack.c.l.b16 %v4561
        %v5513 = vunpack.c.l.b16 %v4571
        %v5514 = vunpack.c.l.b16 %v4585
        %v5515 = vunpack.c.l.b16 %v4595
        %v5516 = vunpack.c.l.b16 %v4609
        %v5517 = vunpack.c.l.b16 %v4619
        %v5518 = vunpack.c.l.b16 %v4633
        %v5519 = vunpack.c.l.b16 %v4643
        %v5520 = vunpack.c.l.b16 %v4657
        %v5521 = vunpack.c.l.b16 %v4667
        %v5522 = vunpack.c.l.b16 %v4681
        %v5523 = vunpack.c.l.b16 %v4691
        %v5524 = vunpack.c.l.b16 %v4705
        %v5525 = vunpack.c.l.b16 %v4715
        %v5526 = vunpack.c.l.b16 %v4729
        %v5527 = vunpack.c.l.b16 %v4739
        %v5528 = vunpack.c.l.b16 %v4753
        %v5529 = vunpack.c.l.b16 %v4763
        %v5530 = vunpack.c.l.b16 %v4777
        %v5531 = vunpack.c.l.b16 %v4787
        %v5532 = vunpack.c.l.b16 %v4801
        %v5533 = vunpack.c.l.b16 %v4811
        %v5534 = vunpack.c.l.b16 %v4825
        %v5535 = vunpack.c.l.b16 %v4835
        %v5536 = vunpack.c.l.b16 %v4849
        %v5537 = vunpack.c.l.b16 %v4859
        %v5538 = vunpack.c.l.b16 %v4873
        %v5539 = vunpack.c.l.b16 %v4883
        %v5540 = vpack.c.b16 %v5509, %v5508
        %v5541 = vpack.c.b16 %v5511, %v5510
        %v5542 = vpack.c.b16 %v5513, %v5512
        %v5543 = vpack.c.b16 %v5515, %v5514
        %v5544 = vpack.c.b16 %v5517, %v5516
        %v5545 = vpack.c.b16 %v5519, %v5518
        %v5546 = vpack.c.b16 %v5521, %v5520
        %v5547 = vpack.c.b16 %v5523, %v5522
        %v5548 = vpack.c.b16 %v5525, %v5524
        %v5549 = vpack.c.b16 %v5527, %v5526
        %v5550 = vpack.c.b16 %v5529, %v5528
        %v5551 = vpack.c.b16 %v5531, %v5530
        %v5552 = vpack.c.b16 %v5533, %v5532
        %v5553 = vpack.c.b16 %v5535, %v5534
        %v5554 = vpack.c.b16 %v5537, %v5536
        %v5555 = vpack.c.b16 %v5539, %v5538
        %v5557 = vsel %vm1158, %v5540, 0
        %v5560 = vsel %vm1158, %v5541, 0
        %v5563 = vsel %vm1158, %v5542, 0
        %v5566 = vsel %vm1158, %v5543, 0
        %v5569 = vsel %vm1158, %v5544, 0
        %v5572 = vsel %vm1158, %v5545, 0
        %v5575 = vsel %vm1158, %v5546, 0
        %v5578 = vsel %vm1158, %v5547, 0
        %v5581 = vsel %vm1158, %v5548, 0
        %v5584 = vsel %vm1158, %v5549, 0
        %v5587 = vsel %vm1158, %v5550, 0
        %v5590 = vsel %vm1158, %v5551, 0
        %v5593 = vsel %vm1158, %v5552, 0
        %v5596 = vsel %vm1158, %v5553, 0
        %v5599 = vsel %vm1158, %v5554, 0
        %v5602 = vsel %vm1158, %v5555, 0
        %v5605 = vsel %vm1207, %v4885, 0
        %5607 = vmatpush.bf16.msra.mxu0 0
        %5608 = vmatpush.bf16.msra.mxu0 0
        %5609 = vmatpush.bf16.msra.mxu0 0
        %5610 = vmatpush.bf16.msra.mxu0 0
        %5611 = vmatpush.bf16.msra.mxu0 0
        %5612 = vmatpush.bf16.msra.mxu0 0
        %5613 = vmatpush.bf16.msra.mxu0 0
        %5614 = vmatpush.bf16.msra.mxu0 %v5605
        %5615 = vmatmul.bf16.gmra.mxu0 %v5557
        %v5616 = vpop.f32.mrf.mxu0
        %v5617 = vadd.f32 %v5429, %v5616
        %v5618 = vpop.f32.mrf.mxu0
        %v5619 = vadd.f32 %v5431, %v5618
        %5620 = vmatmul.bf16.gmra.mxu0 %v5560
        %v5621 = vpop.f32.mrf.mxu0
        %v5622 = vadd.f32 %v5434, %v5621
        %v5623 = vpop.f32.mrf.mxu0
        %v5624 = vadd.f32 %v5436, %v5623
        %5625 = vmatmul.bf16.gmra.mxu0 %v5563
        %v5626 = vpop.f32.mrf.mxu0
        %v5627 = vadd.f32 %v5439, %v5626
        %v5628 = vpop.f32.mrf.mxu0
        %v5629 = vadd.f32 %v5441, %v5628
        %5630 = vmatmul.bf16.gmra.mxu0 %v5566
        %v5631 = vpop.f32.mrf.mxu0
        %v5632 = vadd.f32 %v5444, %v5631
        %v5633 = vpop.f32.mrf.mxu0
        %v5634 = vadd.f32 %v5446, %v5633
        %5635 = vmatmul.bf16.gmra.mxu0 %v5569
        %v5636 = vpop.f32.mrf.mxu0
        %v5637 = vadd.f32 %v5449, %v5636
        %v5638 = vpop.f32.mrf.mxu0
        %v5639 = vadd.f32 %v5451, %v5638
        %5640 = vmatmul.bf16.gmra.mxu0 %v5572
        %v5641 = vpop.f32.mrf.mxu0
        %v5642 = vadd.f32 %v5454, %v5641
        %v5643 = vpop.f32.mrf.mxu0
        %v5644 = vadd.f32 %v5456, %v5643
        %5645 = vmatmul.bf16.gmra.mxu0 %v5575
        %v5646 = vpop.f32.mrf.mxu0
        %v5647 = vadd.f32 %v5459, %v5646
        %v5648 = vpop.f32.mrf.mxu0
        %v5649 = vadd.f32 %v5461, %v5648
        %5650 = vmatmul.bf16.gmra.mxu0 %v5578
        %v5651 = vpop.f32.mrf.mxu0
        %v5652 = vadd.f32 %v5464, %v5651
        %v5653 = vpop.f32.mrf.mxu0
        %v5654 = vadd.f32 %v5466, %v5653
        %5655 = vmatmul.bf16.gmra.mxu0 %v5581
        %v5656 = vpop.f32.mrf.mxu0
        %v5657 = vadd.f32 %v5469, %v5656
        %v5658 = vpop.f32.mrf.mxu0
        %v5659 = vadd.f32 %v5471, %v5658
        %5660 = vmatmul.bf16.gmra.mxu0 %v5584
        %v5661 = vpop.f32.mrf.mxu0
        %v5662 = vadd.f32 %v5474, %v5661
        %v5663 = vpop.f32.mrf.mxu0
        %v5664 = vadd.f32 %v5476, %v5663
        %5665 = vmatmul.bf16.gmra.mxu0 %v5587
        %v5666 = vpop.f32.mrf.mxu0
        %v5667 = vadd.f32 %v5479, %v5666
        %v5668 = vpop.f32.mrf.mxu0
        %v5669 = vadd.f32 %v5481, %v5668
        %5670 = vmatmul.bf16.gmra.mxu0 %v5590
        %v5671 = vpop.f32.mrf.mxu0
        %v5672 = vadd.f32 %v5484, %v5671
        %v5673 = vpop.f32.mrf.mxu0
        %v5674 = vadd.f32 %v5486, %v5673
        %5675 = vmatmul.bf16.gmra.mxu0 %v5593
        %v5676 = vpop.f32.mrf.mxu0
        %v5677 = vadd.f32 %v5489, %v5676
        %v5678 = vpop.f32.mrf.mxu0
        %v5679 = vadd.f32 %v5491, %v5678
        %5680 = vmatmul.bf16.gmra.mxu0 %v5596
        %v5681 = vpop.f32.mrf.mxu0
        %v5682 = vadd.f32 %v5494, %v5681
        %v5683 = vpop.f32.mrf.mxu0
        %v5684 = vadd.f32 %v5496, %v5683
        %5685 = vmatmul.bf16.gmra.mxu0 %v5599
        %v5686 = vpop.f32.mrf.mxu0
        %v5687 = vadd.f32 %v5499, %v5686
        %v5688 = vpop.f32.mrf.mxu0
        %v5689 = vadd.f32 %v5501, %v5688
        %5690 = vmatmul.bf16.gmra.mxu0 %v5602
        %v5691 = vpop.f32.mrf.mxu0
        %v5692 = vadd.f32 %v5504, %v5691
        %v5693 = vpop.f32.mrf.mxu0
        %v5694 = vadd.f32 %v5506, %v5693
        %5695 = vdwg.mxu0
        %v5696 = vld [vmem:[%s4451] sm:$0xf]
        %v5697 = vld [vmem:[%s4451 + $0x4] sm:$0xf]
        %v5698 = vld [vmem:[%s4451 + $0xc] sm:$0xf]
        %v5699 = vld [vmem:[%s4451 + $0x10] sm:$0xf]
        %v5700 = vld [vmem:[%s4451 + $0x18] sm:$0xf]
        %v5701 = vld [vmem:[%s4451 + $0x1c] sm:$0xf]
        %v5702 = vld [vmem:[%s4451 + $0x24] sm:$0xf]
        %v5703 = vld [vmem:[%s4451 + $0x28] sm:$0xf]
        %v5704 = vld [vmem:[%s4451 + $0x30] sm:$0xf]
        %v5705 = vld [vmem:[%s4451 + $0x34] sm:$0xf]
        %v5706 = vld [vmem:[%s4451 + $0x3c] sm:$0xf]
        %v5707 = vld [vmem:[%s4451 + $0x40] sm:$0xf]
        %v5708 = vld [vmem:[%s4451 + $0x48] sm:$0xf]
        %v5709 = vld [vmem:[%s4451 + $0x4c] sm:$0xf]
        %v5710 = vld [vmem:[%s4451 + $0x54] sm:$0xf]
        %v5711 = vld [vmem:[%s4451 + $0x58] sm:$0xf]
        %v5712 = vld [vmem:[%s4451 + $0x60] sm:$0xf]
        %v5713 = vld [vmem:[%s4451 + $0x64] sm:$0xf]
        %v5714 = vld [vmem:[%s4451 + $0x6c] sm:$0xf]
        %v5715 = vld [vmem:[%s4451 + $0x70] sm:$0xf]
        %v5716 = vld [vmem:[%s4451 + $0x78] sm:$0xf]
        %v5717 = vld [vmem:[%s4451 + $0x7c] sm:$0xf]
        %v5718 = vld [vmem:[%s4451 + $0x84] sm:$0xf]
        %v5719 = vld [vmem:[%s4451 + $0x88] sm:$0xf]
        %v5720 = vld [vmem:[%s4451 + $0x90] sm:$0xf]
        %v5721 = vld [vmem:[%s4451 + $0x94] sm:$0xf]
        %v5722 = vld [vmem:[%s4451 + $0x9c] sm:$0xf]
        %v5723 = vld [vmem:[%s4451 + $0xa0] sm:$0xf]
        %v5724 = vld [vmem:[%s4451 + $0xa8] sm:$0xf]
        %v5725 = vld [vmem:[%s4451 + $0xac] sm:$0xf]
        %v5726 = vld [vmem:[%s4451 + $0xb4] sm:$0xf]
        %v5727 = vld [vmem:[%s4451 + $0xb8] sm:$0xf]
        %s5728 = scalar_lea.vmem %s1, 20
        %v5729 = vld [vmem:[%s5728] sm:$0x3]
        %v5762 = vunpack.c.l.b16 %v5696
        %v5763 = vunpack.c.l.b16 %v5697
        %v5764 = vunpack.c.l.b16 %v5698
        %v5765 = vunpack.c.l.b16 %v5699
        %v5766 = vunpack.c.l.b16 %v5700
        %v5767 = vunpack.c.l.b16 %v5701
        %v5768 = vunpack.c.l.b16 %v5702
        %v5769 = vunpack.c.l.b16 %v5703
        %v5770 = vunpack.c.l.b16 %v5704
        %v5771 = vunpack.c.l.b16 %v5705
        %v5772 = vunpack.c.l.b16 %v5706
        %v5773 = vunpack.c.l.b16 %v5707
        %v5774 = vunpack.c.l.b16 %v5708
        %v5775 = vunpack.c.l.b16 %v5709
        %v5776 = vunpack.c.l.b16 %v5710
        %v5777 = vunpack.c.l.b16 %v5711
        %v5778 = vunpack.c.l.b16 %v5712
        %v5779 = vunpack.c.l.b16 %v5713
        %v5780 = vunpack.c.l.b16 %v5714
        %v5781 = vunpack.c.l.b16 %v5715
        %v5782 = vunpack.c.l.b16 %v5716
        %v5783 = vunpack.c.l.b16 %v5717
        %v5784 = vunpack.c.l.b16 %v5718
        %v5785 = vunpack.c.l.b16 %v5719
        %v5786 = vunpack.c.l.b16 %v5720
        %v5787 = vunpack.c.l.b16 %v5721
        %v5788 = vunpack.c.l.b16 %v5722
        %v5789 = vunpack.c.l.b16 %v5723
        %v5790 = vunpack.c.l.b16 %v5724
        %v5791 = vunpack.c.l.b16 %v5725
        %v5792 = vunpack.c.l.b16 %v5726
        %v5793 = vunpack.c.l.b16 %v5727
        %v5794 = vpack.c.b16 %v5763, %v5762
        %v5795 = vpack.c.b16 %v5765, %v5764
        %v5796 = vpack.c.b16 %v5767, %v5766
        %v5797 = vpack.c.b16 %v5769, %v5768
        %v5798 = vpack.c.b16 %v5771, %v5770
        %v5799 = vpack.c.b16 %v5773, %v5772
        %v5800 = vpack.c.b16 %v5775, %v5774
        %v5801 = vpack.c.b16 %v5777, %v5776
        %v5802 = vpack.c.b16 %v5779, %v5778
        %v5803 = vpack.c.b16 %v5781, %v5780
        %v5804 = vpack.c.b16 %v5783, %v5782
        %v5805 = vpack.c.b16 %v5785, %v5784
        %v5806 = vpack.c.b16 %v5787, %v5786
        %v5807 = vpack.c.b16 %v5789, %v5788
        %v5808 = vpack.c.b16 %v5791, %v5790
        %v5809 = vpack.c.b16 %v5793, %v5792
        %v5811 = vsel %vm1158, %v5794, 0
        %v5814 = vsel %vm1158, %v5795, 0
        %v5817 = vsel %vm1158, %v5796, 0
        %v5820 = vsel %vm1158, %v5797, 0
        %v5823 = vsel %vm1158, %v5798, 0
        %v5826 = vsel %vm1158, %v5799, 0
        %v5829 = vsel %vm1158, %v5800, 0
        %v5832 = vsel %vm1158, %v5801, 0
        %v5835 = vsel %vm1158, %v5802, 0
        %v5838 = vsel %vm1158, %v5803, 0
        %v5841 = vsel %vm1158, %v5804, 0
        %v5844 = vsel %vm1158, %v5805, 0
        %v5847 = vsel %vm1158, %v5806, 0
        %v5850 = vsel %vm1158, %v5807, 0
        %v5853 = vsel %vm1158, %v5808, 0
        %v5856 = vsel %vm1158, %v5809, 0
        %v5859 = vsel %vm1207, %v5729, 0
        %5861 = vmatpush.bf16.msra.mxu0 0
        %5862 = vmatpush.bf16.msra.mxu0 0
        %5863 = vmatpush.bf16.msra.mxu0 0
        %5864 = vmatpush.bf16.msra.mxu0 0
        %5865 = vmatpush.bf16.msra.mxu0 0
        %5866 = vmatpush.bf16.msra.mxu0 0
        %5867 = vmatpush.bf16.msra.mxu0 0
        %5868 = vmatpush.bf16.msra.mxu0 %v5859
        %5869 = vmatmul.bf16.gmra.mxu0 %v5811
        %v5870 = vpop.f32.mrf.mxu0
        %v5871 = vadd.f32 0.0, %v5870
        %v5872 = vpop.f32.mrf.mxu0
        %v5873 = vadd.f32 0.0, %v5872
        %5874 = vmatmul.bf16.gmra.mxu0 %v5814
        %v5875 = vpop.f32.mrf.mxu0
        %v5876 = vadd.f32 0.0, %v5875
        %v5877 = vpop.f32.mrf.mxu0
        %v5878 = vadd.f32 0.0, %v5877
        %5879 = vmatmul.bf16.gmra.mxu0 %v5817
        %v5880 = vpop.f32.mrf.mxu0
        %v5881 = vadd.f32 0.0, %v5880
        %v5882 = vpop.f32.mrf.mxu0
        %v5883 = vadd.f32 0.0, %v5882
        %5884 = vmatmul.bf16.gmra.mxu0 %v5820
        %v5885 = vpop.f32.mrf.mxu0
        %v5886 = vadd.f32 0.0, %v5885
        %v5887 = vpop.f32.mrf.mxu0
        %v5888 = vadd.f32 0.0, %v5887
        %5889 = vmatmul.bf16.gmra.mxu0 %v5823
        %v5890 = vpop.f32.mrf.mxu0
        %v5891 = vadd.f32 0.0, %v5890
        %v5892 = vpop.f32.mrf.mxu0
        %v5893 = vadd.f32 0.0, %v5892
        %5894 = vmatmul.bf16.gmra.mxu0 %v5826
        %v5895 = vpop.f32.mrf.mxu0
        %v5896 = vadd.f32 0.0, %v5895
        %v5897 = vpop.f32.mrf.mxu0
        %v5898 = vadd.f32 0.0, %v5897
        %5899 = vmatmul.bf16.gmra.mxu0 %v5829
        %v5900 = vpop.f32.mrf.mxu0
        %v5901 = vadd.f32 0.0, %v5900
        %v5902 = vpop.f32.mrf.mxu0
        %v5903 = vadd.f32 0.0, %v5902
        %5904 = vmatmul.bf16.gmra.mxu0 %v5832
        %v5905 = vpop.f32.mrf.mxu0
        %v5906 = vadd.f32 0.0, %v5905
        %v5907 = vpop.f32.mrf.mxu0
        %v5908 = vadd.f32 0.0, %v5907
        %5909 = vmatmul.bf16.gmra.mxu0 %v5835
        %v5910 = vpop.f32.mrf.mxu0
        %v5911 = vadd.f32 0.0, %v5910
        %v5912 = vpop.f32.mrf.mxu0
        %v5913 = vadd.f32 0.0, %v5912
        %5914 = vmatmul.bf16.gmra.mxu0 %v5838
        %v5915 = vpop.f32.mrf.mxu0
        %v5916 = vadd.f32 0.0, %v5915
        %v5917 = vpop.f32.mrf.mxu0
        %v5918 = vadd.f32 0.0, %v5917
        %5919 = vmatmul.bf16.gmra.mxu0 %v5841
        %v5920 = vpop.f32.mrf.mxu0
        %v5921 = vadd.f32 0.0, %v5920
        %v5922 = vpop.f32.mrf.mxu0
        %v5923 = vadd.f32 0.0, %v5922
        %5924 = vmatmul.bf16.gmra.mxu0 %v5844
        %v5925 = vpop.f32.mrf.mxu0
        %v5926 = vadd.f32 0.0, %v5925
        %v5927 = vpop.f32.mrf.mxu0
        %v5928 = vadd.f32 0.0, %v5927
        %5929 = vmatmul.bf16.gmra.mxu0 %v5847
        %v5930 = vpop.f32.mrf.mxu0
        %v5931 = vadd.f32 0.0, %v5930
        %v5932 = vpop.f32.mrf.mxu0
        %v5933 = vadd.f32 0.0, %v5932
        %5934 = vmatmul.bf16.gmra.mxu0 %v5850
        %v5935 = vpop.f32.mrf.mxu0
        %v5936 = vadd.f32 0.0, %v5935
        %v5937 = vpop.f32.mrf.mxu0
        %v5938 = vadd.f32 0.0, %v5937
        %5939 = vmatmul.bf16.gmra.mxu0 %v5853
        %v5940 = vpop.f32.mrf.mxu0
        %v5941 = vadd.f32 0.0, %v5940
        %v5942 = vpop.f32.mrf.mxu0
        %v5943 = vadd.f32 0.0, %v5942
        %5944 = vmatmul.bf16.gmra.mxu0 %v5856
        %v5945 = vpop.f32.mrf.mxu0
        %v5946 = vadd.f32 0.0, %v5945
        %v5947 = vpop.f32.mrf.mxu0
        %v5948 = vadd.f32 0.0, %v5947
        %5949 = vdwg.mxu0
        %v5950 = vadd.f32 %v5617, %v5871
        %v5951 = vadd.f32 %v5619, %v5873
        %v5952 = vadd.f32 %v5622, %v5876
        %v5953 = vadd.f32 %v5624, %v5878
        %v5954 = vadd.f32 %v5627, %v5881
        %v5955 = vadd.f32 %v5629, %v5883
        %v5956 = vadd.f32 %v5632, %v5886
        %v5957 = vadd.f32 %v5634, %v5888
        %v5958 = vadd.f32 %v5637, %v5891
        %v5959 = vadd.f32 %v5639, %v5893
        %v5960 = vadd.f32 %v5642, %v5896
        %v5961 = vadd.f32 %v5644, %v5898
        %v5962 = vadd.f32 %v5647, %v5901
        %v5963 = vadd.f32 %v5649, %v5903
        %v5964 = vadd.f32 %v5652, %v5906
        %v5965 = vadd.f32 %v5654, %v5908
        %v5966 = vadd.f32 %v5657, %v5911
        %v5967 = vadd.f32 %v5659, %v5913
        %v5968 = vadd.f32 %v5662, %v5916
        %v5969 = vadd.f32 %v5664, %v5918
        %v5970 = vadd.f32 %v5667, %v5921
        %v5971 = vadd.f32 %v5669, %v5923
        %v5972 = vadd.f32 %v5672, %v5926
        %v5973 = vadd.f32 %v5674, %v5928
        %v5974 = vadd.f32 %v5677, %v5931
        %v5975 = vadd.f32 %v5679, %v5933
        %v5976 = vadd.f32 %v5682, %v5936
        %v5977 = vadd.f32 %v5684, %v5938
        %v5978 = vadd.f32 %v5687, %v5941
        %v5979 = vadd.f32 %v5689, %v5943
        %v5980 = vadd.f32 %v5692, %v5946
        %v5981 = vadd.f32 %v5694, %v5948
        %v5982 = vld [vmem:[%s236] sm:$0xf]
        %v5983 = vld [vmem:[%s236 + $0x4] sm:$0xf]
        %v5984 = vld [vmem:[%s236 + $0xc] sm:$0xf]
        %v5985 = vld [vmem:[%s236 + $0x10] sm:$0xf]
        %v5986 = vld [vmem:[%s236 + $0x18] sm:$0xf]
        %v5987 = vld [vmem:[%s236 + $0x1c] sm:$0xf]
        %v5988 = vld [vmem:[%s236 + $0x24] sm:$0xf]
        %v5989 = vld [vmem:[%s236 + $0x28] sm:$0xf]
        %v5990 = vld [vmem:[%s236 + $0x30] sm:$0xf]
        %v5991 = vld [vmem:[%s236 + $0x34] sm:$0xf]
        %v5992 = vld [vmem:[%s236 + $0x3c] sm:$0xf]
        %v5993 = vld [vmem:[%s236 + $0x40] sm:$0xf]
        %v5994 = vld [vmem:[%s236 + $0x48] sm:$0xf]
        %v5995 = vld [vmem:[%s236 + $0x4c] sm:$0xf]
        %v5996 = vld [vmem:[%s236 + $0x54] sm:$0xf]
        %v5997 = vld [vmem:[%s236 + $0x58] sm:$0xf]
        %v5998 = vld [vmem:[%s236 + $0x60] sm:$0xf]
        %v5999 = vld [vmem:[%s236 + $0x64] sm:$0xf]
        %v6000 = vld [vmem:[%s236 + $0x6c] sm:$0xf]
        %v6001 = vld [vmem:[%s236 + $0x70] sm:$0xf]
        %v6002 = vld [vmem:[%s236 + $0x78] sm:$0xf]
        %v6003 = vld [vmem:[%s236 + $0x7c] sm:$0xf]
        %v6004 = vld [vmem:[%s236 + $0x84] sm:$0xf]
        %v6005 = vld [vmem:[%s236 + $0x88] sm:$0xf]
        %v6006 = vld [vmem:[%s236 + $0x90] sm:$0xf]
        %v6007 = vld [vmem:[%s236 + $0x94] sm:$0xf]
        %v6008 = vld [vmem:[%s236 + $0x9c] sm:$0xf]
        %v6009 = vld [vmem:[%s236 + $0xa0] sm:$0xf]
        %v6010 = vld [vmem:[%s236 + $0xa8] sm:$0xf]
        %v6011 = vld [vmem:[%s236 + $0xac] sm:$0xf]
        %v6012 = vld [vmem:[%s236 + $0xb4] sm:$0xf]
        %v6013 = vld [vmem:[%s236 + $0xb8] sm:$0xf]
        %s6014 = scalar_lea.vmem %s1, 22
        %v6015 = vld [vmem:[%s6014] sm:$0x3]
        %v6048 = vunpack.c.l.b16 %v5982
        %v6049 = vunpack.c.l.b16 %v5983
        %v6050 = vunpack.c.l.b16 %v5984
        %v6051 = vunpack.c.l.b16 %v5985
        %v6052 = vunpack.c.l.b16 %v5986
        %v6053 = vunpack.c.l.b16 %v5987
        %v6054 = vunpack.c.l.b16 %v5988
        %v6055 = vunpack.c.l.b16 %v5989
        %v6056 = vunpack.c.l.b16 %v5990
        %v6057 = vunpack.c.l.b16 %v5991
        %v6058 = vunpack.c.l.b16 %v5992
        %v6059 = vunpack.c.l.b16 %v5993
        %v6060 = vunpack.c.l.b16 %v5994
        %v6061 = vunpack.c.l.b16 %v5995
        %v6062 = vunpack.c.l.b16 %v5996
        %v6063 = vunpack.c.l.b16 %v5997
        %v6064 = vunpack.c.l.b16 %v5998
        %v6065 = vunpack.c.l.b16 %v5999
        %v6066 = vunpack.c.l.b16 %v6000
        %v6067 = vunpack.c.l.b16 %v6001
        %v6068 = vunpack.c.l.b16 %v6002
        %v6069 = vunpack.c.l.b16 %v6003
        %v6070 = vunpack.c.l.b16 %v6004
        %v6071 = vunpack.c.l.b16 %v6005
        %v6072 = vunpack.c.l.b16 %v6006
        %v6073 = vunpack.c.l.b16 %v6007
        %v6074 = vunpack.c.l.b16 %v6008
        %v6075 = vunpack.c.l.b16 %v6009
        %v6076 = vunpack.c.l.b16 %v6010
        %v6077 = vunpack.c.l.b16 %v6011
        %v6078 = vunpack.c.l.b16 %v6012
        %v6079 = vunpack.c.l.b16 %v6013
        %v6080 = vpack.c.b16 %v6049, %v6048
        %v6081 = vpack.c.b16 %v6051, %v6050
        %v6082 = vpack.c.b16 %v6053, %v6052
        %v6083 = vpack.c.b16 %v6055, %v6054
        %v6084 = vpack.c.b16 %v6057, %v6056
        %v6085 = vpack.c.b16 %v6059, %v6058
        %v6086 = vpack.c.b16 %v6061, %v6060
        %v6087 = vpack.c.b16 %v6063, %v6062
        %v6088 = vpack.c.b16 %v6065, %v6064
        %v6089 = vpack.c.b16 %v6067, %v6066
        %v6090 = vpack.c.b16 %v6069, %v6068
        %v6091 = vpack.c.b16 %v6071, %v6070
        %v6092 = vpack.c.b16 %v6073, %v6072
        %v6093 = vpack.c.b16 %v6075, %v6074
        %v6094 = vpack.c.b16 %v6077, %v6076
        %v6095 = vpack.c.b16 %v6079, %v6078
        %v6097 = vsel %vm1158, %v6080, 0
        %v6100 = vsel %vm1158, %v6081, 0
        %v6103 = vsel %vm1158, %v6082, 0
        %v6106 = vsel %vm1158, %v6083, 0
        %v6109 = vsel %vm1158, %v6084, 0
        %v6112 = vsel %vm1158, %v6085, 0
        %v6115 = vsel %vm1158, %v6086, 0
        %v6118 = vsel %vm1158, %v6087, 0
        %v6121 = vsel %vm1158, %v6088, 0
        %v6124 = vsel %vm1158, %v6089, 0
        %v6127 = vsel %vm1158, %v6090, 0
        %v6130 = vsel %vm1158, %v6091, 0
        %v6133 = vsel %vm1158, %v6092, 0
        %v6136 = vsel %vm1158, %v6093, 0
        %v6139 = vsel %vm1158, %v6094, 0
        %v6142 = vsel %vm1158, %v6095, 0
        %v6145 = vsel %vm1207, %v6015, 0
        %6147 = vmatpush.bf16.msra.mxu0 0
        %6148 = vmatpush.bf16.msra.mxu0 0
        %6149 = vmatpush.bf16.msra.mxu0 0
        %6150 = vmatpush.bf16.msra.mxu0 0
        %6151 = vmatpush.bf16.msra.mxu0 0
        %6152 = vmatpush.bf16.msra.mxu0 0
        %6153 = vmatpush.bf16.msra.mxu0 0
        %6154 = vmatpush.bf16.msra.mxu0 %v6145
        %6155 = vmatmul.bf16.gmra.mxu0 %v6097
        %v6156 = vpop.f32.mrf.mxu0
        %v6157 = vadd.f32 0.0, %v6156
        %v6158 = vpop.f32.mrf.mxu0
        %v6159 = vadd.f32 0.0, %v6158
        %6160 = vmatmul.bf16.gmra.mxu0 %v6100
        %v6161 = vpop.f32.mrf.mxu0
        %v6162 = vadd.f32 0.0, %v6161
        %v6163 = vpop.f32.mrf.mxu0
        %v6164 = vadd.f32 0.0, %v6163
        %6165 = vmatmul.bf16.gmra.mxu0 %v6103
        %v6166 = vpop.f32.mrf.mxu0
        %v6167 = vadd.f32 0.0, %v6166
        %v6168 = vpop.f32.mrf.mxu0
        %v6169 = vadd.f32 0.0, %v6168
        %6170 = vmatmul.bf16.gmra.mxu0 %v6106
        %v6171 = vpop.f32.mrf.mxu0
        %v6172 = vadd.f32 0.0, %v6171
        %v6173 = vpop.f32.mrf.mxu0
        %v6174 = vadd.f32 0.0, %v6173
        %6175 = vmatmul.bf16.gmra.mxu0 %v6109
        %v6176 = vpop.f32.mrf.mxu0
        %v6177 = vadd.f32 0.0, %v6176
        %v6178 = vpop.f32.mrf.mxu0
        %v6179 = vadd.f32 0.0, %v6178
        %6180 = vmatmul.bf16.gmra.mxu0 %v6112
        %v6181 = vpop.f32.mrf.mxu0
        %v6182 = vadd.f32 0.0, %v6181
        %v6183 = vpop.f32.mrf.mxu0
        %v6184 = vadd.f32 0.0, %v6183
        %6185 = vmatmul.bf16.gmra.mxu0 %v6115
        %v6186 = vpop.f32.mrf.mxu0
        %v6187 = vadd.f32 0.0, %v6186
        %v6188 = vpop.f32.mrf.mxu0
        %v6189 = vadd.f32 0.0, %v6188
        %6190 = vmatmul.bf16.gmra.mxu0 %v6118
        %v6191 = vpop.f32.mrf.mxu0
        %v6192 = vadd.f32 0.0, %v6191
        %v6193 = vpop.f32.mrf.mxu0
        %v6194 = vadd.f32 0.0, %v6193
        %6195 = vmatmul.bf16.gmra.mxu0 %v6121
        %v6196 = vpop.f32.mrf.mxu0
        %v6197 = vadd.f32 0.0, %v6196
        %v6198 = vpop.f32.mrf.mxu0
        %v6199 = vadd.f32 0.0, %v6198
        %6200 = vmatmul.bf16.gmra.mxu0 %v6124
        %v6201 = vpop.f32.mrf.mxu0
        %v6202 = vadd.f32 0.0, %v6201
        %v6203 = vpop.f32.mrf.mxu0
        %v6204 = vadd.f32 0.0, %v6203
        %6205 = vmatmul.bf16.gmra.mxu0 %v6127
        %v6206 = vpop.f32.mrf.mxu0
        %v6207 = vadd.f32 0.0, %v6206
        %v6208 = vpop.f32.mrf.mxu0
        %v6209 = vadd.f32 0.0, %v6208
        %6210 = vmatmul.bf16.gmra.mxu0 %v6130
        %v6211 = vpop.f32.mrf.mxu0
        %v6212 = vadd.f32 0.0, %v6211
        %v6213 = vpop.f32.mrf.mxu0
        %v6214 = vadd.f32 0.0, %v6213
        %6215 = vmatmul.bf16.gmra.mxu0 %v6133
        %v6216 = vpop.f32.mrf.mxu0
        %v6217 = vadd.f32 0.0, %v6216
        %v6218 = vpop.f32.mrf.mxu0
        %v6219 = vadd.f32 0.0, %v6218
        %6220 = vmatmul.bf16.gmra.mxu0 %v6136
        %v6221 = vpop.f32.mrf.mxu0
        %v6222 = vadd.f32 0.0, %v6221
        %v6223 = vpop.f32.mrf.mxu0
        %v6224 = vadd.f32 0.0, %v6223
        %6225 = vmatmul.bf16.gmra.mxu0 %v6139
        %v6226 = vpop.f32.mrf.mxu0
        %v6227 = vadd.f32 0.0, %v6226
        %v6228 = vpop.f32.mrf.mxu0
        %v6229 = vadd.f32 0.0, %v6228
        %6230 = vmatmul.bf16.gmra.mxu0 %v6142
        %v6231 = vpop.f32.mrf.mxu0
        %v6232 = vadd.f32 0.0, %v6231
        %v6233 = vpop.f32.mrf.mxu0
        %v6234 = vadd.f32 0.0, %v6233
        %6235 = vdwg.mxu0
        %v6236 = vadd.f32 %v5950, %v6157
        %v6237 = vadd.f32 %v5951, %v6159
        %v6238 = vadd.f32 %v5952, %v6162
        %v6239 = vadd.f32 %v5953, %v6164
        %v6240 = vadd.f32 %v5954, %v6167
        %v6241 = vadd.f32 %v5955, %v6169
        %v6242 = vadd.f32 %v5956, %v6172
        %v6243 = vadd.f32 %v5957, %v6174
        %v6244 = vadd.f32 %v5958, %v6177
        %v6245 = vadd.f32 %v5959, %v6179
        %v6246 = vadd.f32 %v5960, %v6182
        %v6247 = vadd.f32 %v5961, %v6184
        %v6248 = vadd.f32 %v5962, %v6187
        %v6249 = vadd.f32 %v5963, %v6189
        %v6250 = vadd.f32 %v5964, %v6192
        %v6251 = vadd.f32 %v5965, %v6194
        %v6252 = vadd.f32 %v5966, %v6197
        %v6253 = vadd.f32 %v5967, %v6199
        %v6254 = vadd.f32 %v5968, %v6202
        %v6255 = vadd.f32 %v5969, %v6204
        %v6256 = vadd.f32 %v5970, %v6207
        %v6257 = vadd.f32 %v5971, %v6209
        %v6258 = vadd.f32 %v5972, %v6212
        %v6259 = vadd.f32 %v5973, %v6214
        %v6260 = vadd.f32 %v5974, %v6217
        %v6261 = vadd.f32 %v5975, %v6219
        %v6262 = vadd.f32 %v5976, %v6222
        %v6263 = vadd.f32 %v5977, %v6224
        %v6264 = vadd.f32 %v5978, %v6227
        %v6265 = vadd.f32 %v5979, %v6229
        %v6266 = vadd.f32 %v5980, %v6232
        %v6267 = vadd.f32 %v5981, %v6234
        %v6268 = vpack.c.bf16 %v6236, %v6236
        %v6269 = vpack.c.bf16 %v6237, %v6237
        %v6270 = vpack.c.bf16 %v6238, %v6238
        %v6271 = vpack.c.bf16 %v6239, %v6239
        %v6272 = vpack.c.bf16 %v6240, %v6240
        %v6273 = vpack.c.bf16 %v6241, %v6241
        %v6274 = vpack.c.bf16 %v6242, %v6242
        %v6275 = vpack.c.bf16 %v6243, %v6243
        %v6276 = vpack.c.bf16 %v6244, %v6244
        %v6277 = vpack.c.bf16 %v6245, %v6245
        %v6278 = vpack.c.bf16 %v6246, %v6246
        %v6279 = vpack.c.bf16 %v6247, %v6247
        %v6280 = vpack.c.bf16 %v6248, %v6248
        %v6281 = vpack.c.bf16 %v6249, %v6249
        %v6282 = vpack.c.bf16 %v6250, %v6250
        %v6283 = vpack.c.bf16 %v6251, %v6251
        %v6284 = vpack.c.bf16 %v6252, %v6252
        %v6285 = vpack.c.bf16 %v6253, %v6253
        %v6286 = vpack.c.bf16 %v6254, %v6254
        %v6287 = vpack.c.bf16 %v6255, %v6255
        %v6288 = vpack.c.bf16 %v6256, %v6256
        %v6289 = vpack.c.bf16 %v6257, %v6257
        %v6290 = vpack.c.bf16 %v6258, %v6258
        %v6291 = vpack.c.bf16 %v6259, %v6259
        %v6292 = vpack.c.bf16 %v6260, %v6260
        %v6293 = vpack.c.bf16 %v6261, %v6261
        %v6294 = vpack.c.bf16 %v6262, %v6262
        %v6295 = vpack.c.bf16 %v6263, %v6263
        %v6296 = vpack.c.bf16 %v6264, %v6264
        %v6297 = vpack.c.bf16 %v6265, %v6265
        %v6298 = vpack.c.bf16 %v6266, %v6266
        %v6299 = vpack.c.bf16 %v6267, %v6267
        %s6300 = scalar_lea.vmem %s212, 256 [#allocation2]
        %6301 = vst [vmem:[%s6300] sm:$0xf] %v6268
        %6302 = vst [vmem:[%s6300 + $0x4] sm:$0xf] %v6269
        %6303 = vst [vmem:[%s6300 + $0x8] sm:$0xf] %v6270
        %6304 = vst [vmem:[%s6300 + $0xc] sm:$0xf] %v6271
        %6305 = vst [vmem:[%s6300 + $0x10] sm:$0xf] %v6272
        %6306 = vst [vmem:[%s6300 + $0x14] sm:$0xf] %v6273
        %6307 = vst [vmem:[%s6300 + $0x18] sm:$0xf] %v6274
        %6308 = vst [vmem:[%s6300 + $0x1c] sm:$0xf] %v6275
        %6309 = vst [vmem:[%s6300 + $0x20] sm:$0xf] %v6276
        %6310 = vst [vmem:[%s6300 + $0x24] sm:$0xf] %v6277
        %6311 = vst [vmem:[%s6300 + $0x28] sm:$0xf] %v6278
        %6312 = vst [vmem:[%s6300 + $0x2c] sm:$0xf] %v6279
        %6313 = vst [vmem:[%s6300 + $0x30] sm:$0xf] %v6280
        %6314 = vst [vmem:[%s6300 + $0x34] sm:$0xf] %v6281
        %6315 = vst [vmem:[%s6300 + $0x38] sm:$0xf] %v6282
        %6316 = vst [vmem:[%s6300 + $0x3c] sm:$0xf] %v6283
        %6317 = vst [vmem:[%s6300 + $0x40] sm:$0xf] %v6284
        %6318 = vst [vmem:[%s6300 + $0x44] sm:$0xf] %v6285
        %6319 = vst [vmem:[%s6300 + $0x48] sm:$0xf] %v6286
        %6320 = vst [vmem:[%s6300 + $0x4c] sm:$0xf] %v6287
        %6321 = vst [vmem:[%s6300 + $0x50] sm:$0xf] %v6288
        %6322 = vst [vmem:[%s6300 + $0x54] sm:$0xf] %v6289
        %6323 = vst [vmem:[%s6300 + $0x58] sm:$0xf] %v6290
        %6324 = vst [vmem:[%s6300 + $0x5c] sm:$0xf] %v6291
        %6325 = vst [vmem:[%s6300 + $0x60] sm:$0xf] %v6292
        %6326 = vst [vmem:[%s6300 + $0x64] sm:$0xf] %v6293
        %6327 = vst [vmem:[%s6300 + $0x68] sm:$0xf] %v6294
        %6328 = vst [vmem:[%s6300 + $0x6c] sm:$0xf] %v6295
        %6329 = vst [vmem:[%s6300 + $0x70] sm:$0xf] %v6296
        %6330 = vst [vmem:[%s6300 + $0x74] sm:$0xf] %v6297
        %6331 = vst [vmem:[%s6300 + $0x78] sm:$0xf] %v6298
        %6332 = vst [vmem:[%s6300 + $0x7c] sm:$0xf] %v6299
        %v6333 = vadd.f32 %v6236, %v6237
        %v6334 = vadd.f32 %v6333, %v6238
        %v6335 = vadd.f32 %v6334, %v6239
        %v6336 = vadd.f32 %v6335, %v6240
        %v6337 = vadd.f32 %v6336, %v6241
        %v6338 = vadd.f32 %v6337, %v6242
        %v6339 = vadd.f32 %v6338, %v6243
        %v6340 = vadd.f32 %v6339, %v6244
        %v6341 = vadd.f32 %v6340, %v6245
        %v6342 = vadd.f32 %v6341, %v6246
        %v6343 = vadd.f32 %v6342, %v6247
        %v6344 = vadd.f32 %v6343, %v6248
        %v6345 = vadd.f32 %v6344, %v6249
        %v6346 = vadd.f32 %v6345, %v6250
        %v6347 = vadd.f32 %v6346, %v6251
        %v6348 = vadd.f32 %v6347, %v6252
        %v6349 = vadd.f32 %v6348, %v6253
        %v6350 = vadd.f32 %v6349, %v6254
        %v6351 = vadd.f32 %v6350, %v6255
        %v6352 = vadd.f32 %v6351, %v6256
        %v6353 = vadd.f32 %v6352, %v6257
        %v6354 = vadd.f32 %v6353, %v6258
        %v6355 = vadd.f32 %v6354, %v6259
        %v6356 = vadd.f32 %v6355, %v6260
        %v6357 = vadd.f32 %v6356, %v6261
        %v6358 = vadd.f32 %v6357, %v6262
        %v6359 = vadd.f32 %v6358, %v6263
        %v6360 = vadd.f32 %v6359, %v6264
        %v6361 = vadd.f32 %v6360, %v6265
        %v6362 = vadd.f32 %v6361, %v6266
        %v6363 = vadd.f32 %v6362, %v6267
        %v6364 = vrot.slane %v6363, 4
        %v6365 = vadd.f32 %v6363, %v6364
        %v6366 = vrot.slane %v6365, 2
        %v6367 = vadd.f32 %v6365, %v6366
        %v6368 = vrot.slane %v6367, 1
        %v6369 = vadd.f32 %v6367, %v6368
        %v6370 = vadd.f32 %v4377, %v6369
        %v6371 = vmul.f32 %v6236, %v6236
        %v6372 = vmul.f32 %v6237, %v6237
        %v6373 = vmul.f32 %v6238, %v6238
        %v6374 = vmul.f32 %v6239, %v6239
        %v6375 = vmul.f32 %v6240, %v6240
        %v6376 = vmul.f32 %v6241, %v6241
        %v6377 = vmul.f32 %v6242, %v6242
        %v6378 = vmul.f32 %v6243, %v6243
        %v6379 = vmul.f32 %v6244, %v6244
        %v6380 = vmul.f32 %v6245, %v6245
        %v6381 = vmul.f32 %v6246, %v6246
        %v6382 = vmul.f32 %v6247, %v6247
        %v6383 = vmul.f32 %v6248, %v6248
        %v6384 = vmul.f32 %v6249, %v6249
        %v6385 = vmul.f32 %v6250, %v6250
        %v6386 = vmul.f32 %v6251, %v6251
        %v6387 = vmul.f32 %v6252, %v6252
        %v6388 = vmul.f32 %v6253, %v6253
        %v6389 = vmul.f32 %v6254, %v6254
        %v6390 = vmul.f32 %v6255, %v6255
        %v6391 = vmul.f32 %v6256, %v6256
        %v6392 = vmul.f32 %v6257, %v6257
        %v6393 = vmul.f32 %v6258, %v6258
        %v6394 = vmul.f32 %v6259, %v6259
        %v6395 = vmul.f32 %v6260, %v6260
        %v6396 = vmul.f32 %v6261, %v6261
        %v6397 = vmul.f32 %v6262, %v6262
        %v6398 = vmul.f32 %v6263, %v6263
        %v6399 = vmul.f32 %v6264, %v6264
        %v6400 = vmul.f32 %v6265, %v6265
        %v6401 = vmul.f32 %v6266, %v6266
        %v6402 = vmul.f32 %v6267, %v6267
        %v6403 = vadd.f32 %v6371, %v6372
        %v6404 = vadd.f32 %v6403, %v6373
        %v6405 = vadd.f32 %v6404, %v6374
        %v6406 = vadd.f32 %v6405, %v6375
        %v6407 = vadd.f32 %v6406, %v6376
        %v6408 = vadd.f32 %v6407, %v6377
        %v6409 = vadd.f32 %v6408, %v6378
        %v6410 = vadd.f32 %v6409, %v6379
        %v6411 = vadd.f32 %v6410, %v6380
        %v6412 = vadd.f32 %v6411, %v6381
        %v6413 = vadd.f32 %v6412, %v6382
        %v6414 = vadd.f32 %v6413, %v6383
        %v6415 = vadd.f32 %v6414, %v6384
        %v6416 = vadd.f32 %v6415, %v6385
        %v6417 = vadd.f32 %v6416, %v6386
        %v6418 = vadd.f32 %v6417, %v6387
        %v6419 = vadd.f32 %v6418, %v6388
        %v6420 = vadd.f32 %v6419, %v6389
        %v6421 = vadd.f32 %v6420, %v6390
        %v6422 = vadd.f32 %v6421, %v6391
        %v6423 = vadd.f32 %v6422, %v6392
        %v6424 = vadd.f32 %v6423, %v6393
        %v6425 = vadd.f32 %v6424, %v6394
        %v6426 = vadd.f32 %v6425, %v6395
        %v6427 = vadd.f32 %v6426, %v6396
        %v6428 = vadd.f32 %v6427, %v6397
        %v6429 = vadd.f32 %v6428, %v6398
        %v6430 = vadd.f32 %v6429, %v6399
        %v6431 = vadd.f32 %v6430, %v6400
        %v6432 = vadd.f32 %v6431, %v6401
        %v6433 = vadd.f32 %v6432, %v6402
        %v6434 = vrot.slane %v6433, 4
        %v6435 = vadd.f32 %v6433, %v6434
        %v6436 = vrot.slane %v6435, 2
        %v6437 = vadd.f32 %v6435, %v6436
        %v6438 = vrot.slane %v6437, 1
        %v6439 = vadd.f32 %v6437, %v6438
        %v6440 = vadd.f32 %v4447, %v6439
        %v6441 = vld [vmem:[%s4451] sm:$0xe]
        %v6442 = vld [vmem:[%s4451 + $0x4] sm:$0xf]
        %v6443 = vld [vmem:[%s4451 + $0x8] sm:$0x1]
        %v6444 = vld [vmem:[%s4451 + $0xc] sm:$0xe]
        %v6445 = vld [vmem:[%s4451 + $0x10] sm:$0xf]
        %v6446 = vld [vmem:[%s4451 + $0x14] sm:$0x1]
        %v6447 = vld [vmem:[%s4451 + $0x18] sm:$0xe]
        %v6448 = vld [vmem:[%s4451 + $0x1c] sm:$0xf]
        %v6449 = vld [vmem:[%s4451 + $0x20] sm:$0x1]
        %v6450 = vld [vmem:[%s4451 + $0x24] sm:$0xe]
        %v6451 = vld [vmem:[%s4451 + $0x28] sm:$0xf]
        %v6452 = vld [vmem:[%s4451 + $0x2c] sm:$0x1]
        %v6453 = vld [vmem:[%s4451 + $0x30] sm:$0xe]
        %v6454 = vld [vmem:[%s4451 + $0x34] sm:$0xf]
        %v6455 = vld [vmem:[%s4451 + $0x38] sm:$0x1]
        %v6456 = vld [vmem:[%s4451 + $0x3c] sm:$0xe]
        %v6457 = vld [vmem:[%s4451 + $0x40] sm:$0xf]
        %v6458 = vld [vmem:[%s4451 + $0x44] sm:$0x1]
        %v6459 = vld [vmem:[%s4451 + $0x48] sm:$0xe]
        %v6460 = vld [vmem:[%s4451 + $0x4c] sm:$0xf]
        %v6461 = vld [vmem:[%s4451 + $0x50] sm:$0x1]
        %v6462 = vld [vmem:[%s4451 + $0x54] sm:$0xe]
        %v6463 = vld [vmem:[%s4451 + $0x58] sm:$0xf]
        %v6464 = vld [vmem:[%s4451 + $0x5c] sm:$0x1]
        %v6465 = vld [vmem:[%s4451 + $0x60] sm:$0xe]
        %v6466 = vld [vmem:[%s4451 + $0x64] sm:$0xf]
        %v6467 = vld [vmem:[%s4451 + $0x68] sm:$0x1]
        %v6468 = vld [vmem:[%s4451 + $0x6c] sm:$0xe]
        %v6469 = vld [vmem:[%s4451 + $0x70] sm:$0xf]
        %v6470 = vld [vmem:[%s4451 + $0x74] sm:$0x1]
        %v6471 = vld [vmem:[%s4451 + $0x78] sm:$0xe]
        %v6472 = vld [vmem:[%s4451 + $0x7c] sm:$0xf]
        %v6473 = vld [vmem:[%s4451 + $0x80] sm:$0x1]
        %v6474 = vld [vmem:[%s4451 + $0x84] sm:$0xe]
        %v6475 = vld [vmem:[%s4451 + $0x88] sm:$0xf]
        %v6476 = vld [vmem:[%s4451 + $0x8c] sm:$0x1]
        %v6477 = vld [vmem:[%s4451 + $0x90] sm:$0xe]
        %v6478 = vld [vmem:[%s4451 + $0x94] sm:$0xf]
        %v6479 = vld [vmem:[%s4451 + $0x98] sm:$0x1]
        %v6480 = vld [vmem:[%s4451 + $0x9c] sm:$0xe]
        %v6481 = vld [vmem:[%s4451 + $0xa0] sm:$0xf]
        %v6482 = vld [vmem:[%s4451 + $0xa4] sm:$0x1]
        %v6483 = vld [vmem:[%s4451 + $0xa8] sm:$0xe]
        %v6484 = vld [vmem:[%s4451 + $0xac] sm:$0xf]
        %v6485 = vld [vmem:[%s4451 + $0xb0] sm:$0x1]
        %v6486 = vld [vmem:[%s4451 + $0xb4] sm:$0xe]
        %v6487 = vld [vmem:[%s4451 + $0xb8] sm:$0xf]
        %v6488 = vld [vmem:[%s4451 + $0xbc] sm:$0x1]
        %v6537 = vrot.slane %v6441, 5
        %v6538 = vrot.slane %v6537, 4
        %v6539 = vrot.slane %v6442, 5
        %v6540 = vsel %vm2330, %v6538, %v6539
        %v6541 = vrot.slane %v6539, 4
        %v6542 = vrot.slane %v6443, 5
        %v6543 = vsel %vm2330, %v6541, %v6542
        %v6544 = vrot.slane %v6444, 5
        %v6545 = vrot.slane %v6544, 4
        %v6546 = vrot.slane %v6445, 5
        %v6547 = vsel %vm2330, %v6545, %v6546
        %v6548 = vrot.slane %v6546, 4
        %v6549 = vrot.slane %v6446, 5
        %v6550 = vsel %vm2330, %v6548, %v6549
        %v6551 = vrot.slane %v6447, 5
        %v6552 = vrot.slane %v6551, 4
        %v6553 = vrot.slane %v6448, 5
        %v6554 = vsel %vm2330, %v6552, %v6553
        %v6555 = vrot.slane %v6553, 4
        %v6556 = vrot.slane %v6449, 5
        %v6557 = vsel %vm2330, %v6555, %v6556
        %v6558 = vrot.slane %v6450, 5
        %v6559 = vrot.slane %v6558, 4
        %v6560 = vrot.slane %v6451, 5
        %v6561 = vsel %vm2330, %v6559, %v6560
        %v6562 = vrot.slane %v6560, 4
        %v6563 = vrot.slane %v6452, 5
        %v6564 = vsel %vm2330, %v6562, %v6563
        %v6565 = vrot.slane %v6453, 5
        %v6566 = vrot.slane %v6565, 4
        %v6567 = vrot.slane %v6454, 5
        %v6568 = vsel %vm2330, %v6566, %v6567
        %v6569 = vrot.slane %v6567, 4
        %v6570 = vrot.slane %v6455, 5
        %v6571 = vsel %vm2330, %v6569, %v6570
        %v6572 = vrot.slane %v6456, 5
        %v6573 = vrot.slane %v6572, 4
        %v6574 = vrot.slane %v6457, 5
        %v6575 = vsel %vm2330, %v6573, %v6574
        %v6576 = vrot.slane %v6574, 4
        %v6577 = vrot.slane %v6458, 5
        %v6578 = vsel %vm2330, %v6576, %v6577
        %v6579 = vrot.slane %v6459, 5
        %v6580 = vrot.slane %v6579, 4
        %v6581 = vrot.slane %v6460, 5
        %v6582 = vsel %vm2330, %v6580, %v6581
        %v6583 = vrot.slane %v6581, 4
        %v6584 = vrot.slane %v6461, 5
        %v6585 = vsel %vm2330, %v6583, %v6584
        %v6586 = vrot.slane %v6462, 5
        %v6587 = vrot.slane %v6586, 4
        %v6588 = vrot.slane %v6463, 5
        %v6589 = vsel %vm2330, %v6587, %v6588
        %v6590 = vrot.slane %v6588, 4
        %v6591 = vrot.slane %v6464, 5
        %v6592 = vsel %vm2330, %v6590, %v6591
        %v6593 = vrot.slane %v6465, 5
        %v6594 = vrot.slane %v6593, 4
        %v6595 = vrot.slane %v6466, 5
        %v6596 = vsel %vm2330, %v6594, %v6595
        %v6597 = vrot.slane %v6595, 4
        %v6598 = vrot.slane %v6467, 5
        %v6599 = vsel %vm2330, %v6597, %v6598
        %v6600 = vrot.slane %v6468, 5
        %v6601 = vrot.slane %v6600, 4
        %v6602 = vrot.slane %v6469, 5
        %v6603 = vsel %vm2330, %v6601, %v6602
        %v6604 = vrot.slane %v6602, 4
        %v6605 = vrot.slane %v6470, 5
        %v6606 = vsel %vm2330, %v6604, %v6605
        %v6607 = vrot.slane %v6471, 5
        %v6608 = vrot.slane %v6607, 4
        %v6609 = vrot.slane %v6472, 5
        %v6610 = vsel %vm2330, %v6608, %v6609
        %v6611 = vrot.slane %v6609, 4
        %v6612 = vrot.slane %v6473, 5
        %v6613 = vsel %vm2330, %v6611, %v6612
        %v6614 = vrot.slane %v6474, 5
        %v6615 = vrot.slane %v6614, 4
        %v6616 = vrot.slane %v6475, 5
        %v6617 = vsel %vm2330, %v6615, %v6616
        %v6618 = vrot.slane %v6616, 4
        %v6619 = vrot.slane %v6476, 5
        %v6620 = vsel %vm2330, %v6618, %v6619
        %v6621 = vrot.slane %v6477, 5
        %v6622 = vrot.slane %v6621, 4
        %v6623 = vrot.slane %v6478, 5
        %v6624 = vsel %vm2330, %v6622, %v6623
        %v6625 = vrot.slane %v6623, 4
        %v6626 = vrot.slane %v6479, 5
        %v6627 = vsel %vm2330, %v6625, %v6626
        %v6628 = vrot.slane %v6480, 5
        %v6629 = vrot.slane %v6628, 4
        %v6630 = vrot.slane %v6481, 5
        %v6631 = vsel %vm2330, %v6629, %v6630
        %v6632 = vrot.slane %v6630, 4
        %v6633 = vrot.slane %v6482, 5
        %v6634 = vsel %vm2330, %v6632, %v6633
        %v6635 = vrot.slane %v6483, 5
        %v6636 = vrot.slane %v6635, 4
        %v6637 = vrot.slane %v6484, 5
        %v6638 = vsel %vm2330, %v6636, %v6637
        %v6639 = vrot.slane %v6637, 4
        %v6640 = vrot.slane %v6485, 5
        %v6641 = vsel %vm2330, %v6639, %v6640
        %v6642 = vrot.slane %v6486, 5
        %v6643 = vrot.slane %v6642, 4
        %v6644 = vrot.slane %v6487, 5
        %v6645 = vsel %vm2330, %v6643, %v6644
        %v6646 = vrot.slane %v6644, 4
        %v6647 = vrot.slane %v6488, 5
        %v6648 = vsel %vm2330, %v6646, %v6647
        %s6649 = scalar_lea.vmem %s1, 24
        %v6650 = vld [vmem:[%s6649] sm:$0x3]
        %v6651 = vld [vmem:[%s4451] sm:$0xf]
        %v6652 = vld [vmem:[%s4451 + $0xc] sm:$0xf]
        %v6653 = vld [vmem:[%s4451 + $0x18] sm:$0xf]
        %v6654 = vld [vmem:[%s4451 + $0x24] sm:$0xf]
        %v6655 = vld [vmem:[%s4451 + $0x30] sm:$0xf]
        %v6656 = vld [vmem:[%s4451 + $0x3c] sm:$0xf]
        %v6657 = vld [vmem:[%s4451 + $0x48] sm:$0xf]
        %v6658 = vld [vmem:[%s4451 + $0x54] sm:$0xf]
        %v6659 = vld [vmem:[%s4451 + $0x60] sm:$0xf]
        %v6660 = vld [vmem:[%s4451 + $0x6c] sm:$0xf]
        %v6661 = vld [vmem:[%s4451 + $0x78] sm:$0xf]
        %v6662 = vld [vmem:[%s4451 + $0x84] sm:$0xf]
        %v6663 = vld [vmem:[%s4451 + $0x90] sm:$0xf]
        %v6664 = vld [vmem:[%s4451 + $0x9c] sm:$0xf]
        %v6665 = vld [vmem:[%s4451 + $0xa8] sm:$0xf]
        %v6666 = vld [vmem:[%s4451 + $0xb4] sm:$0xf]
        %v6668 = vshrl.u32 %v6651, 16
        %v6670 = vrot.slane %v6668, 4
        %v6671 = vshll.u32 %v6651, 16
        %v6673 = vrot.slane %v6671, 5
        %v6674 = vor.u32 %v6670, %v6673
        %v6675 = vrot.slane %v6674, 4
        %v6677 = vshll.u32 %v6442, 16
        %v6679 = vrot.slane %v6677, 5
        %v6680 = vsel %vm287, %v6675, %v6679
        %v6681 = vshrl.u32 %v6442, 16
        %v6683 = vrot.slane %v6681, 4
        %v6684 = vor.u32 %v6683, %v6679
        %v6685 = vrot.slane %v6684, 4
        %v6687 = vshll.u32 %v6443, 16
        %v6689 = vrot.slane %v6687, 5
        %v6690 = vsel %vm287, %v6685, %v6689
        %v6692 = vshrl.u32 %v6652, 16
        %v6694 = vrot.slane %v6692, 4
        %v6695 = vshll.u32 %v6652, 16
        %v6697 = vrot.slane %v6695, 5
        %v6698 = vor.u32 %v6694, %v6697
        %v6699 = vrot.slane %v6698, 4
        %v6701 = vshll.u32 %v6445, 16
        %v6703 = vrot.slane %v6701, 5
        %v6704 = vsel %vm287, %v6699, %v6703
        %v6705 = vshrl.u32 %v6445, 16
        %v6707 = vrot.slane %v6705, 4
        %v6708 = vor.u32 %v6707, %v6703
        %v6709 = vrot.slane %v6708, 4
        %v6711 = vshll.u32 %v6446, 16
        %v6713 = vrot.slane %v6711, 5
        %v6714 = vsel %vm287, %v6709, %v6713
        %v6716 = vshrl.u32 %v6653, 16
        %v6718 = vrot.slane %v6716, 4
        %v6719 = vshll.u32 %v6653, 16
        %v6721 = vrot.slane %v6719, 5
        %v6722 = vor.u32 %v6718, %v6721
        %v6723 = vrot.slane %v6722, 4
        %v6725 = vshll.u32 %v6448, 16
        %v6727 = vrot.slane %v6725, 5
        %v6728 = vsel %vm287, %v6723, %v6727
        %v6729 = vshrl.u32 %v6448, 16
        %v6731 = vrot.slane %v6729, 4
        %v6732 = vor.u32 %v6731, %v6727
        %v6733 = vrot.slane %v6732, 4
        %v6735 = vshll.u32 %v6449, 16
        %v6737 = vrot.slane %v6735, 5
        %v6738 = vsel %vm287, %v6733, %v6737
        %v6740 = vshrl.u32 %v6654, 16
        %v6742 = vrot.slane %v6740, 4
        %v6743 = vshll.u32 %v6654, 16
        %v6745 = vrot.slane %v6743, 5
        %v6746 = vor.u32 %v6742, %v6745
        %v6747 = vrot.slane %v6746, 4
        %v6749 = vshll.u32 %v6451, 16
        %v6751 = vrot.slane %v6749, 5
        %v6752 = vsel %vm287, %v6747, %v6751
        %v6753 = vshrl.u32 %v6451, 16
        %v6755 = vrot.slane %v6753, 4
        %v6756 = vor.u32 %v6755, %v6751
        %v6757 = vrot.slane %v6756, 4
        %v6759 = vshll.u32 %v6452, 16
        %v6761 = vrot.slane %v6759, 5
        %v6762 = vsel %vm287, %v6757, %v6761
        %v6764 = vshrl.u32 %v6655, 16
        %v6766 = vrot.slane %v6764, 4
        %v6767 = vshll.u32 %v6655, 16
        %v6769 = vrot.slane %v6767, 5
        %v6770 = vor.u32 %v6766, %v6769
        %v6771 = vrot.slane %v6770, 4
        %v6773 = vshll.u32 %v6454, 16
        %v6775 = vrot.slane %v6773, 5
        %v6776 = vsel %vm287, %v6771, %v6775
        %v6777 = vshrl.u32 %v6454, 16
        %v6779 = vrot.slane %v6777, 4
        %v6780 = vor.u32 %v6779, %v6775
        %v6781 = vrot.slane %v6780, 4
        %v6783 = vshll.u32 %v6455, 16
        %v6785 = vrot.slane %v6783, 5
        %v6786 = vsel %vm287, %v6781, %v6785
        %v6788 = vshrl.u32 %v6656, 16
        %v6790 = vrot.slane %v6788, 4
        %v6791 = vshll.u32 %v6656, 16
        %v6793 = vrot.slane %v6791, 5
        %v6794 = vor.u32 %v6790, %v6793
        %v6795 = vrot.slane %v6794, 4
        %v6797 = vshll.u32 %v6457, 16
        %v6799 = vrot.slane %v6797, 5
        %v6800 = vsel %vm287, %v6795, %v6799
        %v6801 = vshrl.u32 %v6457, 16
        %v6803 = vrot.slane %v6801, 4
        %v6804 = vor.u32 %v6803, %v6799
        %v6805 = vrot.slane %v6804, 4
        %v6807 = vshll.u32 %v6458, 16
        %v6809 = vrot.slane %v6807, 5
        %v6810 = vsel %vm287, %v6805, %v6809
        %v6812 = vshrl.u32 %v6657, 16
        %v6814 = vrot.slane %v6812, 4
        %v6815 = vshll.u32 %v6657, 16
        %v6817 = vrot.slane %v6815, 5
        %v6818 = vor.u32 %v6814, %v6817
        %v6819 = vrot.slane %v6818, 4
        %v6821 = vshll.u32 %v6460, 16
        %v6823 = vrot.slane %v6821, 5
        %v6824 = vsel %vm287, %v6819, %v6823
        %v6825 = vshrl.u32 %v6460, 16
        %v6827 = vrot.slane %v6825, 4
        %v6828 = vor.u32 %v6827, %v6823
        %v6829 = vrot.slane %v6828, 4
        %v6831 = vshll.u32 %v6461, 16
        %v6833 = vrot.slane %v6831, 5
        %v6834 = vsel %vm287, %v6829, %v6833
        %v6836 = vshrl.u32 %v6658, 16
        %v6838 = vrot.slane %v6836, 4
        %v6839 = vshll.u32 %v6658, 16
        %v6841 = vrot.slane %v6839, 5
        %v6842 = vor.u32 %v6838, %v6841
        %v6843 = vrot.slane %v6842, 4
        %v6845 = vshll.u32 %v6463, 16
        %v6847 = vrot.slane %v6845, 5
        %v6848 = vsel %vm287, %v6843, %v6847
        %v6849 = vshrl.u32 %v6463, 16
        %v6851 = vrot.slane %v6849, 4
        %v6852 = vor.u32 %v6851, %v6847
        %v6853 = vrot.slane %v6852, 4
        %v6855 = vshll.u32 %v6464, 16
        %v6857 = vrot.slane %v6855, 5
        %v6858 = vsel %vm287, %v6853, %v6857
        %v6860 = vshrl.u32 %v6659, 16
        %v6862 = vrot.slane %v6860, 4
        %v6863 = vshll.u32 %v6659, 16
        %v6865 = vrot.slane %v6863, 5
        %v6866 = vor.u32 %v6862, %v6865
        %v6867 = vrot.slane %v6866, 4
        %v6869 = vshll.u32 %v6466, 16
        %v6871 = vrot.slane %v6869, 5
        %v6872 = vsel %vm287, %v6867, %v6871
        %v6873 = vshrl.u32 %v6466, 16
        %v6875 = vrot.slane %v6873, 4
        %v6876 = vor.u32 %v6875, %v6871
        %v6877 = vrot.slane %v6876, 4
        %v6879 = vshll.u32 %v6467, 16
        %v6881 = vrot.slane %v6879, 5
        %v6882 = vsel %vm287, %v6877, %v6881
        %v6884 = vshrl.u32 %v6660, 16
        %v6886 = vrot.slane %v6884, 4
        %v6887 = vshll.u32 %v6660, 16
        %v6889 = vrot.slane %v6887, 5
        %v6890 = vor.u32 %v6886, %v6889
        %v6891 = vrot.slane %v6890, 4
        %v6893 = vshll.u32 %v6469, 16
        %v6895 = vrot.slane %v6893, 5
        %v6896 = vsel %vm287, %v6891, %v6895
        %v6897 = vshrl.u32 %v6469, 16
        %v6899 = vrot.slane %v6897, 4
        %v6900 = vor.u32 %v6899, %v6895
        %v6901 = vrot.slane %v6900, 4
        %v6903 = vshll.u32 %v6470, 16
        %v6905 = vrot.slane %v6903, 5
        %v6906 = vsel %vm287, %v6901, %v6905
        %v6908 = vshrl.u32 %v6661, 16
        %v6910 = vrot.slane %v6908, 4
        %v6911 = vshll.u32 %v6661, 16
        %v6913 = vrot.slane %v6911, 5
        %v6914 = vor.u32 %v6910, %v6913
        %v6915 = vrot.slane %v6914, 4
        %v6917 = vshll.u32 %v6472, 16
        %v6919 = vrot.slane %v6917, 5
        %v6920 = vsel %vm287, %v6915, %v6919
        %v6921 = vshrl.u32 %v6472, 16
        %v6923 = vrot.slane %v6921, 4
        %v6924 = vor.u32 %v6923, %v6919
        %v6925 = vrot.slane %v6924, 4
        %v6927 = vshll.u32 %v6473, 16
        %v6929 = vrot.slane %v6927, 5
        %v6930 = vsel %vm287, %v6925, %v6929
        %v6932 = vshrl.u32 %v6662, 16
        %v6934 = vrot.slane %v6932, 4
        %v6935 = vshll.u32 %v6662, 16
        %v6937 = vrot.slane %v6935, 5
        %v6938 = vor.u32 %v6934, %v6937
        %v6939 = vrot.slane %v6938, 4
        %v6941 = vshll.u32 %v6475, 16
        %v6943 = vrot.slane %v6941, 5
        %v6944 = vsel %vm287, %v6939, %v6943
        %v6945 = vshrl.u32 %v6475, 16
        %v6947 = vrot.slane %v6945, 4
        %v6948 = vor.u32 %v6947, %v6943
        %v6949 = vrot.slane %v6948, 4
        %v6951 = vshll.u32 %v6476, 16
        %v6953 = vrot.slane %v6951, 5
        %v6954 = vsel %vm287, %v6949, %v6953
        %v6956 = vshrl.u32 %v6663, 16
        %v6958 = vrot.slane %v6956, 4
        %v6959 = vshll.u32 %v6663, 16
        %v6961 = vrot.slane %v6959, 5
        %v6962 = vor.u32 %v6958, %v6961
        %v6963 = vrot.slane %v6962, 4
        %v6965 = vshll.u32 %v6478, 16
        %v6967 = vrot.slane %v6965, 5
        %v6968 = vsel %vm287, %v6963, %v6967
        %v6969 = vshrl.u32 %v6478, 16
        %v6971 = vrot.slane %v6969, 4
        %v6972 = vor.u32 %v6971, %v6967
        %v6973 = vrot.slane %v6972, 4
        %v6975 = vshll.u32 %v6479, 16
        %v6977 = vrot.slane %v6975, 5
        %v6978 = vsel %vm287, %v6973, %v6977
        %v6980 = vshrl.u32 %v6664, 16
        %v6982 = vrot.slane %v6980, 4
        %v6983 = vshll.u32 %v6664, 16
        %v6985 = vrot.slane %v6983, 5
        %v6986 = vor.u32 %v6982, %v6985
        %v6987 = vrot.slane %v6986, 4
        %v6989 = vshll.u32 %v6481, 16
        %v6991 = vrot.slane %v6989, 5
        %v6992 = vsel %vm287, %v6987, %v6991
        %v6993 = vshrl.u32 %v6481, 16
        %v6995 = vrot.slane %v6993, 4
        %v6996 = vor.u32 %v6995, %v6991
        %v6997 = vrot.slane %v6996, 4
        %v6999 = vshll.u32 %v6482, 16
        %v7001 = vrot.slane %v6999, 5
        %v7002 = vsel %vm287, %v6997, %v7001
        %v7004 = vshrl.u32 %v6665, 16
        %v7006 = vrot.slane %v7004, 4
        %v7007 = vshll.u32 %v6665, 16
        %v7009 = vrot.slane %v7007, 5
        %v7010 = vor.u32 %v7006, %v7009
        %v7011 = vrot.slane %v7010, 4
        %v7013 = vshll.u32 %v6484, 16
        %v7015 = vrot.slane %v7013, 5
        %v7016 = vsel %vm287, %v7011, %v7015
        %v7017 = vshrl.u32 %v6484, 16
        %v7019 = vrot.slane %v7017, 4
        %v7020 = vor.u32 %v7019, %v7015
        %v7021 = vrot.slane %v7020, 4
        %v7023 = vshll.u32 %v6485, 16
        %v7025 = vrot.slane %v7023, 5
        %v7026 = vsel %vm287, %v7021, %v7025
        %v7028 = vshrl.u32 %v6666, 16
        %v7030 = vrot.slane %v7028, 4
        %v7031 = vshll.u32 %v6666, 16
        %v7033 = vrot.slane %v7031, 5
        %v7034 = vor.u32 %v7030, %v7033
        %v7035 = vrot.slane %v7034, 4
        %v7037 = vshll.u32 %v6487, 16
        %v7039 = vrot.slane %v7037, 5
        %v7040 = vsel %vm287, %v7035, %v7039
        %v7041 = vshrl.u32 %v6487, 16
        %v7043 = vrot.slane %v7041, 4
        %v7044 = vor.u32 %v7043, %v7039
        %v7045 = vrot.slane %v7044, 4
        %v7047 = vshll.u32 %v6488, 16
        %v7049 = vrot.slane %v7047, 5
        %v7050 = vsel %vm287, %v7045, %v7049
        %s7051 = scalar_lea.vmem %s1, 26
        %v7052 = vld [vmem:[%s7051] sm:$0x3]
        %v7053 = vunpack.c.l.b16 %v6680
        %v7054 = vunpack.c.l.b16 %v6690
        %v7055 = vunpack.c.l.b16 %v6704
        %v7056 = vunpack.c.l.b16 %v6714
        %v7057 = vunpack.c.l.b16 %v6728
        %v7058 = vunpack.c.l.b16 %v6738
        %v7059 = vunpack.c.l.b16 %v6752
        %v7060 = vunpack.c.l.b16 %v6762
        %v7061 = vunpack.c.l.b16 %v6776
        %v7062 = vunpack.c.l.b16 %v6786
        %v7063 = vunpack.c.l.b16 %v6800
        %v7064 = vunpack.c.l.b16 %v6810
        %v7065 = vunpack.c.l.b16 %v6824
        %v7066 = vunpack.c.l.b16 %v6834
        %v7067 = vunpack.c.l.b16 %v6848
        %v7068 = vunpack.c.l.b16 %v6858
        %v7069 = vunpack.c.l.b16 %v6872
        %v7070 = vunpack.c.l.b16 %v6882
        %v7071 = vunpack.c.l.b16 %v6896
        %v7072 = vunpack.c.l.b16 %v6906
        %v7073 = vunpack.c.l.b16 %v6920
        %v7074 = vunpack.c.l.b16 %v6930
        %v7075 = vunpack.c.l.b16 %v6944
        %v7076 = vunpack.c.l.b16 %v6954
        %v7077 = vunpack.c.l.b16 %v6968
        %v7078 = vunpack.c.l.b16 %v6978
        %v7079 = vunpack.c.l.b16 %v6992
        %v7080 = vunpack.c.l.b16 %v7002
        %v7081 = vunpack.c.l.b16 %v7016
        %v7082 = vunpack.c.l.b16 %v7026
        %v7083 = vunpack.c.l.b16 %v7040
        %v7084 = vunpack.c.l.b16 %v7050
        %v7085 = vpack.c.b16 %v7054, %v7053
        %v7086 = vpack.c.b16 %v7056, %v7055
        %v7087 = vpack.c.b16 %v7058, %v7057
        %v7088 = vpack.c.b16 %v7060, %v7059
        %v7089 = vpack.c.b16 %v7062, %v7061
        %v7090 = vpack.c.b16 %v7064, %v7063
        %v7091 = vpack.c.b16 %v7066, %v7065
        %v7092 = vpack.c.b16 %v7068, %v7067
        %v7093 = vpack.c.b16 %v7070, %v7069
        %v7094 = vpack.c.b16 %v7072, %v7071
        %v7095 = vpack.c.b16 %v7074, %v7073
        %v7096 = vpack.c.b16 %v7076, %v7075
        %v7097 = vpack.c.b16 %v7078, %v7077
        %v7098 = vpack.c.b16 %v7080, %v7079
        %v7099 = vpack.c.b16 %v7082, %v7081
        %v7100 = vpack.c.b16 %v7084, %v7083
        %v7102 = vsel %vm1158, %v7085, 0
        %v7105 = vsel %vm1158, %v7086, 0
        %v7108 = vsel %vm1158, %v7087, 0
        %v7111 = vsel %vm1158, %v7088, 0
        %v7114 = vsel %vm1158, %v7089, 0
        %v7117 = vsel %vm1158, %v7090, 0
        %v7120 = vsel %vm1158, %v7091, 0
        %v7123 = vsel %vm1158, %v7092, 0
        %v7126 = vsel %vm1158, %v7093, 0
        %v7129 = vsel %vm1158, %v7094, 0
        %v7132 = vsel %vm1158, %v7095, 0
        %v7135 = vsel %vm1158, %v7096, 0
        %v7138 = vsel %vm1158, %v7097, 0
        %v7141 = vsel %vm1158, %v7098, 0
        %v7144 = vsel %vm1158, %v7099, 0
        %v7147 = vsel %vm1158, %v7100, 0
        %v7150 = vsel %vm1207, %v7052, 0
        %7152 = vmatpush.bf16.msra.mxu0 0
        %7153 = vmatpush.bf16.msra.mxu0 0
        %7154 = vmatpush.bf16.msra.mxu0 0
        %7155 = vmatpush.bf16.msra.mxu0 0
        %7156 = vmatpush.bf16.msra.mxu0 0
        %7157 = vmatpush.bf16.msra.mxu0 0
        %7158 = vmatpush.bf16.msra.mxu0 0
        %7159 = vmatpush.bf16.msra.mxu0 %v7150
        %7160 = vmatmul.bf16.gmra.mxu0 %v7102
        %v7161 = vpop.f32.mrf.mxu0
        %v7162 = vadd.f32 0.0, %v7161
        %v7163 = vpop.f32.mrf.mxu0
        %v7164 = vadd.f32 0.0, %v7163
        %7165 = vmatmul.bf16.gmra.mxu0 %v7105
        %v7166 = vpop.f32.mrf.mxu0
        %v7167 = vadd.f32 0.0, %v7166
        %v7168 = vpop.f32.mrf.mxu0
        %v7169 = vadd.f32 0.0, %v7168
        %7170 = vmatmul.bf16.gmra.mxu0 %v7108
        %v7171 = vpop.f32.mrf.mxu0
        %v7172 = vadd.f32 0.0, %v7171
        %v7173 = vpop.f32.mrf.mxu0
        %v7174 = vadd.f32 0.0, %v7173
        %7175 = vmatmul.bf16.gmra.mxu0 %v7111
        %v7176 = vpop.f32.mrf.mxu0
        %v7177 = vadd.f32 0.0, %v7176
        %v7178 = vpop.f32.mrf.mxu0
        %v7179 = vadd.f32 0.0, %v7178
        %7180 = vmatmul.bf16.gmra.mxu0 %v7114
        %v7181 = vpop.f32.mrf.mxu0
        %v7182 = vadd.f32 0.0, %v7181
        %v7183 = vpop.f32.mrf.mxu0
        %v7184 = vadd.f32 0.0, %v7183
        %7185 = vmatmul.bf16.gmra.mxu0 %v7117
        %v7186 = vpop.f32.mrf.mxu0
        %v7187 = vadd.f32 0.0, %v7186
        %v7188 = vpop.f32.mrf.mxu0
        %v7189 = vadd.f32 0.0, %v7188
        %7190 = vmatmul.bf16.gmra.mxu0 %v7120
        %v7191 = vpop.f32.mrf.mxu0
        %v7192 = vadd.f32 0.0, %v7191
        %v7193 = vpop.f32.mrf.mxu0
        %v7194 = vadd.f32 0.0, %v7193
        %7195 = vmatmul.bf16.gmra.mxu0 %v7123
        %v7196 = vpop.f32.mrf.mxu0
        %v7197 = vadd.f32 0.0, %v7196
        %v7198 = vpop.f32.mrf.mxu0
        %v7199 = vadd.f32 0.0, %v7198
        %7200 = vmatmul.bf16.gmra.mxu0 %v7126
        %v7201 = vpop.f32.mrf.mxu0
        %v7202 = vadd.f32 0.0, %v7201
        %v7203 = vpop.f32.mrf.mxu0
        %v7204 = vadd.f32 0.0, %v7203
        %7205 = vmatmul.bf16.gmra.mxu0 %v7129
        %v7206 = vpop.f32.mrf.mxu0
        %v7207 = vadd.f32 0.0, %v7206
        %v7208 = vpop.f32.mrf.mxu0
        %v7209 = vadd.f32 0.0, %v7208
        %7210 = vmatmul.bf16.gmra.mxu0 %v7132
        %v7211 = vpop.f32.mrf.mxu0
        %v7212 = vadd.f32 0.0, %v7211
        %v7213 = vpop.f32.mrf.mxu0
        %v7214 = vadd.f32 0.0, %v7213
        %7215 = vmatmul.bf16.gmra.mxu0 %v7135
        %v7216 = vpop.f32.mrf.mxu0
        %v7217 = vadd.f32 0.0, %v7216
        %v7218 = vpop.f32.mrf.mxu0
        %v7219 = vadd.f32 0.0, %v7218
        %7220 = vmatmul.bf16.gmra.mxu0 %v7138
        %v7221 = vpop.f32.mrf.mxu0
        %v7222 = vadd.f32 0.0, %v7221
        %v7223 = vpop.f32.mrf.mxu0
        %v7224 = vadd.f32 0.0, %v7223
        %7225 = vmatmul.bf16.gmra.mxu0 %v7141
        %v7226 = vpop.f32.mrf.mxu0
        %v7227 = vadd.f32 0.0, %v7226
        %v7228 = vpop.f32.mrf.mxu0
        %v7229 = vadd.f32 0.0, %v7228
        %7230 = vmatmul.bf16.gmra.mxu0 %v7144
        %v7231 = vpop.f32.mrf.mxu0
        %v7232 = vadd.f32 0.0, %v7231
        %v7233 = vpop.f32.mrf.mxu0
        %v7234 = vadd.f32 0.0, %v7233
        %7235 = vmatmul.bf16.gmra.mxu0 %v7147
        %v7236 = vpop.f32.mrf.mxu0
        %v7237 = vadd.f32 0.0, %v7236
        %v7238 = vpop.f32.mrf.mxu0
        %v7239 = vadd.f32 0.0, %v7238
        %7240 = vdwg.mxu0
        %v7241 = vunpack.c.l.b16 %v6540
        %v7242 = vunpack.c.l.b16 %v6543
        %v7243 = vunpack.c.l.b16 %v6547
        %v7244 = vunpack.c.l.b16 %v6550
        %v7245 = vunpack.c.l.b16 %v6554
        %v7246 = vunpack.c.l.b16 %v6557
        %v7247 = vunpack.c.l.b16 %v6561
        %v7248 = vunpack.c.l.b16 %v6564
        %v7249 = vunpack.c.l.b16 %v6568
        %v7250 = vunpack.c.l.b16 %v6571
        %v7251 = vunpack.c.l.b16 %v6575
        %v7252 = vunpack.c.l.b16 %v6578
        %v7253 = vunpack.c.l.b16 %v6582
        %v7254 = vunpack.c.l.b16 %v6585
        %v7255 = vunpack.c.l.b16 %v6589
        %v7256 = vunpack.c.l.b16 %v6592
        %v7257 = vunpack.c.l.b16 %v6596
        %v7258 = vunpack.c.l.b16 %v6599
        %v7259 = vunpack.c.l.b16 %v6603
        %v7260 = vunpack.c.l.b16 %v6606
        %v7261 = vunpack.c.l.b16 %v6610
        %v7262 = vunpack.c.l.b16 %v6613
        %v7263 = vunpack.c.l.b16 %v6617
        %v7264 = vunpack.c.l.b16 %v6620
        %v7265 = vunpack.c.l.b16 %v6624
        %v7266 = vunpack.c.l.b16 %v6627
        %v7267 = vunpack.c.l.b16 %v6631
        %v7268 = vunpack.c.l.b16 %v6634
        %v7269 = vunpack.c.l.b16 %v6638
        %v7270 = vunpack.c.l.b16 %v6641
        %v7271 = vunpack.c.l.b16 %v6645
        %v7272 = vunpack.c.l.b16 %v6648
        %v7273 = vpack.c.b16 %v7242, %v7241
        %v7274 = vpack.c.b16 %v7244, %v7243
        %v7275 = vpack.c.b16 %v7246, %v7245
        %v7276 = vpack.c.b16 %v7248, %v7247
        %v7277 = vpack.c.b16 %v7250, %v7249
        %v7278 = vpack.c.b16 %v7252, %v7251
        %v7279 = vpack.c.b16 %v7254, %v7253
        %v7280 = vpack.c.b16 %v7256, %v7255
        %v7281 = vpack.c.b16 %v7258, %v7257
        %v7282 = vpack.c.b16 %v7260, %v7259
        %v7283 = vpack.c.b16 %v7262, %v7261
        %v7284 = vpack.c.b16 %v7264, %v7263
        %v7285 = vpack.c.b16 %v7266, %v7265
        %v7286 = vpack.c.b16 %v7268, %v7267
        %v7287 = vpack.c.b16 %v7270, %v7269
        %v7288 = vpack.c.b16 %v7272, %v7271
        %v7290 = vsel %vm1158, %v7273, 0
        %v7293 = vsel %vm1158, %v7274, 0
        %v7296 = vsel %vm1158, %v7275, 0
        %v7299 = vsel %vm1158, %v7276, 0
        %v7302 = vsel %vm1158, %v7277, 0
        %v7305 = vsel %vm1158, %v7278, 0
        %v7308 = vsel %vm1158, %v7279, 0
        %v7311 = vsel %vm1158, %v7280, 0
        %v7314 = vsel %vm1158, %v7281, 0
        %v7317 = vsel %vm1158, %v7282, 0
        %v7320 = vsel %vm1158, %v7283, 0
        %v7323 = vsel %vm1158, %v7284, 0
        %v7326 = vsel %vm1158, %v7285, 0
        %v7329 = vsel %vm1158, %v7286, 0
        %v7332 = vsel %vm1158, %v7287, 0
        %v7335 = vsel %vm1158, %v7288, 0
        %v7338 = vsel %vm1207, %v6650, 0
        %7340 = vmatpush.bf16.msra.mxu0 0
        %7341 = vmatpush.bf16.msra.mxu0 0
        %7342 = vmatpush.bf16.msra.mxu0 0
        %7343 = vmatpush.bf16.msra.mxu0 0
        %7344 = vmatpush.bf16.msra.mxu0 0
        %7345 = vmatpush.bf16.msra.mxu0 0
        %7346 = vmatpush.bf16.msra.mxu0 0
        %7347 = vmatpush.bf16.msra.mxu0 %v7338
        %7348 = vmatmul.bf16.gmra.mxu0 %v7290
        %v7349 = vpop.f32.mrf.mxu0
        %v7350 = vadd.f32 %v7162, %v7349
        %v7351 = vpop.f32.mrf.mxu0
        %v7352 = vadd.f32 %v7164, %v7351
        %7353 = vmatmul.bf16.gmra.mxu0 %v7293
        %v7354 = vpop.f32.mrf.mxu0
        %v7355 = vadd.f32 %v7167, %v7354
        %v7356 = vpop.f32.mrf.mxu0
        %v7357 = vadd.f32 %v7169, %v7356
        %7358 = vmatmul.bf16.gmra.mxu0 %v7296
        %v7359 = vpop.f32.mrf.mxu0
        %v7360 = vadd.f32 %v7172, %v7359
        %v7361 = vpop.f32.mrf.mxu0
        %v7362 = vadd.f32 %v7174, %v7361
        %7363 = vmatmul.bf16.gmra.mxu0 %v7299
        %v7364 = vpop.f32.mrf.mxu0
        %v7365 = vadd.f32 %v7177, %v7364
        %v7366 = vpop.f32.mrf.mxu0
        %v7367 = vadd.f32 %v7179, %v7366
        %7368 = vmatmul.bf16.gmra.mxu0 %v7302
        %v7369 = vpop.f32.mrf.mxu0
        %v7370 = vadd.f32 %v7182, %v7369
        %v7371 = vpop.f32.mrf.mxu0
        %v7372 = vadd.f32 %v7184, %v7371
        %7373 = vmatmul.bf16.gmra.mxu0 %v7305
        %v7374 = vpop.f32.mrf.mxu0
        %v7375 = vadd.f32 %v7187, %v7374
        %v7376 = vpop.f32.mrf.mxu0
        %v7377 = vadd.f32 %v7189, %v7376
        %7378 = vmatmul.bf16.gmra.mxu0 %v7308
        %v7379 = vpop.f32.mrf.mxu0
        %v7380 = vadd.f32 %v7192, %v7379
        %v7381 = vpop.f32.mrf.mxu0
        %v7382 = vadd.f32 %v7194, %v7381
        %7383 = vmatmul.bf16.gmra.mxu0 %v7311
        %v7384 = vpop.f32.mrf.mxu0
        %v7385 = vadd.f32 %v7197, %v7384
        %v7386 = vpop.f32.mrf.mxu0
        %v7387 = vadd.f32 %v7199, %v7386
        %7388 = vmatmul.bf16.gmra.mxu0 %v7314
        %v7389 = vpop.f32.mrf.mxu0
        %v7390 = vadd.f32 %v7202, %v7389
        %v7391 = vpop.f32.mrf.mxu0
        %v7392 = vadd.f32 %v7204, %v7391
        %7393 = vmatmul.bf16.gmra.mxu0 %v7317
        %v7394 = vpop.f32.mrf.mxu0
        %v7395 = vadd.f32 %v7207, %v7394
        %v7396 = vpop.f32.mrf.mxu0
        %v7397 = vadd.f32 %v7209, %v7396
        %7398 = vmatmul.bf16.gmra.mxu0 %v7320
        %v7399 = vpop.f32.mrf.mxu0
        %v7400 = vadd.f32 %v7212, %v7399
        %v7401 = vpop.f32.mrf.mxu0
        %v7402 = vadd.f32 %v7214, %v7401
        %7403 = vmatmul.bf16.gmra.mxu0 %v7323
        %v7404 = vpop.f32.mrf.mxu0
        %v7405 = vadd.f32 %v7217, %v7404
        %v7406 = vpop.f32.mrf.mxu0
        %v7407 = vadd.f32 %v7219, %v7406
        %7408 = vmatmul.bf16.gmra.mxu0 %v7326
        %v7409 = vpop.f32.mrf.mxu0
        %v7410 = vadd.f32 %v7222, %v7409
        %v7411 = vpop.f32.mrf.mxu0
        %v7412 = vadd.f32 %v7224, %v7411
        %7413 = vmatmul.bf16.gmra.mxu0 %v7329
        %v7414 = vpop.f32.mrf.mxu0
        %v7415 = vadd.f32 %v7227, %v7414
        %v7416 = vpop.f32.mrf.mxu0
        %v7417 = vadd.f32 %v7229, %v7416
        %7418 = vmatmul.bf16.gmra.mxu0 %v7332
        %v7419 = vpop.f32.mrf.mxu0
        %v7420 = vadd.f32 %v7232, %v7419
        %v7421 = vpop.f32.mrf.mxu0
        %v7422 = vadd.f32 %v7234, %v7421
        %7423 = vmatmul.bf16.gmra.mxu0 %v7335
        %v7424 = vpop.f32.mrf.mxu0
        %v7425 = vadd.f32 %v7237, %v7424
        %v7426 = vpop.f32.mrf.mxu0
        %v7427 = vadd.f32 %v7239, %v7426
        %7428 = vdwg.mxu0
        %v7429 = vld [vmem:[%s236] sm:$0xe]
        %v7430 = vld [vmem:[%s236 + $0x4] sm:$0xf]
        %v7431 = vld [vmem:[%s236 + $0x8] sm:$0x1]
        %v7432 = vld [vmem:[%s236 + $0xc] sm:$0xe]
        %v7433 = vld [vmem:[%s236 + $0x10] sm:$0xf]
        %v7434 = vld [vmem:[%s236 + $0x14] sm:$0x1]
        %v7435 = vld [vmem:[%s236 + $0x18] sm:$0xe]
        %v7436 = vld [vmem:[%s236 + $0x1c] sm:$0xf]
        %v7437 = vld [vmem:[%s236 + $0x20] sm:$0x1]
        %v7438 = vld [vmem:[%s236 + $0x24] sm:$0xe]
        %v7439 = vld [vmem:[%s236 + $0x28] sm:$0xf]
        %v7440 = vld [vmem:[%s236 + $0x2c] sm:$0x1]
        %v7441 = vld [vmem:[%s236 + $0x30] sm:$0xe]
        %v7442 = vld [vmem:[%s236 + $0x34] sm:$0xf]
        %v7443 = vld [vmem:[%s236 + $0x38] sm:$0x1]
        %v7444 = vld [vmem:[%s236 + $0x3c] sm:$0xe]
        %v7445 = vld [vmem:[%s236 + $0x40] sm:$0xf]
        %v7446 = vld [vmem:[%s236 + $0x44] sm:$0x1]
        %v7447 = vld [vmem:[%s236 + $0x48] sm:$0xe]
        %v7448 = vld [vmem:[%s236 + $0x4c] sm:$0xf]
        %v7449 = vld [vmem:[%s236 + $0x50] sm:$0x1]
        %v7450 = vld [vmem:[%s236 + $0x54] sm:$0xe]
        %v7451 = vld [vmem:[%s236 + $0x58] sm:$0xf]
        %v7452 = vld [vmem:[%s236 + $0x5c] sm:$0x1]
        %v7453 = vld [vmem:[%s236 + $0x60] sm:$0xe]
        %v7454 = vld [vmem:[%s236 + $0x64] sm:$0xf]
        %v7455 = vld [vmem:[%s236 + $0x68] sm:$0x1]
        %v7456 = vld [vmem:[%s236 + $0x6c] sm:$0xe]
        %v7457 = vld [vmem:[%s236 + $0x70] sm:$0xf]
        %v7458 = vld [vmem:[%s236 + $0x74] sm:$0x1]
        %v7459 = vld [vmem:[%s236 + $0x78] sm:$0xe]
        %v7460 = vld [vmem:[%s236 + $0x7c] sm:$0xf]
        %v7461 = vld [vmem:[%s236 + $0x80] sm:$0x1]
        %v7462 = vld [vmem:[%s236 + $0x84] sm:$0xe]
        %v7463 = vld [vmem:[%s236 + $0x88] sm:$0xf]
        %v7464 = vld [vmem:[%s236 + $0x8c] sm:$0x1]
        %v7465 = vld [vmem:[%s236 + $0x90] sm:$0xe]
        %v7466 = vld [vmem:[%s236 + $0x94] sm:$0xf]
        %v7467 = vld [vmem:[%s236 + $0x98] sm:$0x1]
        %v7468 = vld [vmem:[%s236 + $0x9c] sm:$0xe]
        %v7469 = vld [vmem:[%s236 + $0xa0] sm:$0xf]
        %v7470 = vld [vmem:[%s236 + $0xa4] sm:$0x1]
        %v7471 = vld [vmem:[%s236 + $0xa8] sm:$0xe]
        %v7472 = vld [vmem:[%s236 + $0xac] sm:$0xf]
        %v7473 = vld [vmem:[%s236 + $0xb0] sm:$0x1]
        %v7474 = vld [vmem:[%s236 + $0xb4] sm:$0xe]
        %v7475 = vld [vmem:[%s236 + $0xb8] sm:$0xf]
        %v7476 = vld [vmem:[%s236 + $0xbc] sm:$0x1]
        %v7525 = vrot.slane %v7429, 5
        %v7526 = vrot.slane %v7525, 4
        %v7527 = vrot.slane %v7430, 5
        %v7528 = vsel %vm2330, %v7526, %v7527
        %v7529 = vrot.slane %v7527, 4
        %v7530 = vrot.slane %v7431, 5
        %v7531 = vsel %vm2330, %v7529, %v7530
        %v7532 = vrot.slane %v7432, 5
        %v7533 = vrot.slane %v7532, 4
        %v7534 = vrot.slane %v7433, 5
        %v7535 = vsel %vm2330, %v7533, %v7534
        %v7536 = vrot.slane %v7534, 4
        %v7537 = vrot.slane %v7434, 5
        %v7538 = vsel %vm2330, %v7536, %v7537
        %v7539 = vrot.slane %v7435, 5
        %v7540 = vrot.slane %v7539, 4
        %v7541 = vrot.slane %v7436, 5
        %v7542 = vsel %vm2330, %v7540, %v7541
        %v7543 = vrot.slane %v7541, 4
        %v7544 = vrot.slane %v7437, 5
        %v7545 = vsel %vm2330, %v7543, %v7544
        %v7546 = vrot.slane %v7438, 5
        %v7547 = vrot.slane %v7546, 4
        %v7548 = vrot.slane %v7439, 5
        %v7549 = vsel %vm2330, %v7547, %v7548
        %v7550 = vrot.slane %v7548, 4
        %v7551 = vrot.slane %v7440, 5
        %v7552 = vsel %vm2330, %v7550, %v7551
        %v7553 = vrot.slane %v7441, 5
        %v7554 = vrot.slane %v7553, 4
        %v7555 = vrot.slane %v7442, 5
        %v7556 = vsel %vm2330, %v7554, %v7555
        %v7557 = vrot.slane %v7555, 4
        %v7558 = vrot.slane %v7443, 5
        %v7559 = vsel %vm2330, %v7557, %v7558
        %v7560 = vrot.slane %v7444, 5
        %v7561 = vrot.slane %v7560, 4
        %v7562 = vrot.slane %v7445, 5
        %v7563 = vsel %vm2330, %v7561, %v7562
        %v7564 = vrot.slane %v7562, 4
        %v7565 = vrot.slane %v7446, 5
        %v7566 = vsel %vm2330, %v7564, %v7565
        %v7567 = vrot.slane %v7447, 5
        %v7568 = vrot.slane %v7567, 4
        %v7569 = vrot.slane %v7448, 5
        %v7570 = vsel %vm2330, %v7568, %v7569
        %v7571 = vrot.slane %v7569, 4
        %v7572 = vrot.slane %v7449, 5
        %v7573 = vsel %vm2330, %v7571, %v7572
        %v7574 = vrot.slane %v7450, 5
        %v7575 = vrot.slane %v7574, 4
        %v7576 = vrot.slane %v7451, 5
        %v7577 = vsel %vm2330, %v7575, %v7576
        %v7578 = vrot.slane %v7576, 4
        %v7579 = vrot.slane %v7452, 5
        %v7580 = vsel %vm2330, %v7578, %v7579
        %v7581 = vrot.slane %v7453, 5
        %v7582 = vrot.slane %v7581, 4
        %v7583 = vrot.slane %v7454, 5
        %v7584 = vsel %vm2330, %v7582, %v7583
        %v7585 = vrot.slane %v7583, 4
        %v7586 = vrot.slane %v7455, 5
        %v7587 = vsel %vm2330, %v7585, %v7586
        %v7588 = vrot.slane %v7456, 5
        %v7589 = vrot.slane %v7588, 4
        %v7590 = vrot.slane %v7457, 5
        %v7591 = vsel %vm2330, %v7589, %v7590
        %v7592 = vrot.slane %v7590, 4
        %v7593 = vrot.slane %v7458, 5
        %v7594 = vsel %vm2330, %v7592, %v7593
        %v7595 = vrot.slane %v7459, 5
        %v7596 = vrot.slane %v7595, 4
        %v7597 = vrot.slane %v7460, 5
        %v7598 = vsel %vm2330, %v7596, %v7597
        %v7599 = vrot.slane %v7597, 4
        %v7600 = vrot.slane %v7461, 5
        %v7601 = vsel %vm2330, %v7599, %v7600
        %v7602 = vrot.slane %v7462, 5
        %v7603 = vrot.slane %v7602, 4
        %v7604 = vrot.slane %v7463, 5
        %v7605 = vsel %vm2330, %v7603, %v7604
        %v7606 = vrot.slane %v7604, 4
        %v7607 = vrot.slane %v7464, 5
        %v7608 = vsel %vm2330, %v7606, %v7607
        %v7609 = vrot.slane %v7465, 5
        %v7610 = vrot.slane %v7609, 4
        %v7611 = vrot.slane %v7466, 5
        %v7612 = vsel %vm2330, %v7610, %v7611
        %v7613 = vrot.slane %v7611, 4
        %v7614 = vrot.slane %v7467, 5
        %v7615 = vsel %vm2330, %v7613, %v7614
        %v7616 = vrot.slane %v7468, 5
        %v7617 = vrot.slane %v7616, 4
        %v7618 = vrot.slane %v7469, 5
        %v7619 = vsel %vm2330, %v7617, %v7618
        %v7620 = vrot.slane %v7618, 4
        %v7621 = vrot.slane %v7470, 5
        %v7622 = vsel %vm2330, %v7620, %v7621
        %v7623 = vrot.slane %v7471, 5
        %v7624 = vrot.slane %v7623, 4
        %v7625 = vrot.slane %v7472, 5
        %v7626 = vsel %vm2330, %v7624, %v7625
        %v7627 = vrot.slane %v7625, 4
        %v7628 = vrot.slane %v7473, 5
        %v7629 = vsel %vm2330, %v7627, %v7628
        %v7630 = vrot.slane %v7474, 5
        %v7631 = vrot.slane %v7630, 4
        %v7632 = vrot.slane %v7475, 5
        %v7633 = vsel %vm2330, %v7631, %v7632
        %v7634 = vrot.slane %v7632, 4
        %v7635 = vrot.slane %v7476, 5
        %v7636 = vsel %vm2330, %v7634, %v7635
        %s7637 = scalar_lea.vmem %s1, 28
        %v7638 = vld [vmem:[%s7637] sm:$0x3]
        %v7639 = vunpack.c.l.b16 %v7528
        %v7640 = vunpack.c.l.b16 %v7531
        %v7641 = vunpack.c.l.b16 %v7535
        %v7642 = vunpack.c.l.b16 %v7538
        %v7643 = vunpack.c.l.b16 %v7542
        %v7644 = vunpack.c.l.b16 %v7545
        %v7645 = vunpack.c.l.b16 %v7549
        %v7646 = vunpack.c.l.b16 %v7552
        %v7647 = vunpack.c.l.b16 %v7556
        %v7648 = vunpack.c.l.b16 %v7559
        %v7649 = vunpack.c.l.b16 %v7563
        %v7650 = vunpack.c.l.b16 %v7566
        %v7651 = vunpack.c.l.b16 %v7570
        %v7652 = vunpack.c.l.b16 %v7573
        %v7653 = vunpack.c.l.b16 %v7577
        %v7654 = vunpack.c.l.b16 %v7580
        %v7655 = vunpack.c.l.b16 %v7584
        %v7656 = vunpack.c.l.b16 %v7587
        %v7657 = vunpack.c.l.b16 %v7591
        %v7658 = vunpack.c.l.b16 %v7594
        %v7659 = vunpack.c.l.b16 %v7598
        %v7660 = vunpack.c.l.b16 %v7601
        %v7661 = vunpack.c.l.b16 %v7605
        %v7662 = vunpack.c.l.b16 %v7608
        %v7663 = vunpack.c.l.b16 %v7612
        %v7664 = vunpack.c.l.b16 %v7615
        %v7665 = vunpack.c.l.b16 %v7619
        %v7666 = vunpack.c.l.b16 %v7622
        %v7667 = vunpack.c.l.b16 %v7626
        %v7668 = vunpack.c.l.b16 %v7629
        %v7669 = vunpack.c.l.b16 %v7633
        %v7670 = vunpack.c.l.b16 %v7636
        %v7671 = vpack.c.b16 %v7640, %v7639
        %v7672 = vpack.c.b16 %v7642, %v7641
        %v7673 = vpack.c.b16 %v7644, %v7643
        %v7674 = vpack.c.b16 %v7646, %v7645
        %v7675 = vpack.c.b16 %v7648, %v7647
        %v7676 = vpack.c.b16 %v7650, %v7649
        %v7677 = vpack.c.b16 %v7652, %v7651
        %v7678 = vpack.c.b16 %v7654, %v7653
        %v7679 = vpack.c.b16 %v7656, %v7655
        %v7680 = vpack.c.b16 %v7658, %v7657
        %v7681 = vpack.c.b16 %v7660, %v7659
        %v7682 = vpack.c.b16 %v7662, %v7661
        %v7683 = vpack.c.b16 %v7664, %v7663
        %v7684 = vpack.c.b16 %v7666, %v7665
        %v7685 = vpack.c.b16 %v7668, %v7667
        %v7686 = vpack.c.b16 %v7670, %v7669
        %v7688 = vsel %vm1158, %v7671, 0
        %v7691 = vsel %vm1158, %v7672, 0
        %v7694 = vsel %vm1158, %v7673, 0
        %v7697 = vsel %vm1158, %v7674, 0
        %v7700 = vsel %vm1158, %v7675, 0
        %v7703 = vsel %vm1158, %v7676, 0
        %v7706 = vsel %vm1158, %v7677, 0
        %v7709 = vsel %vm1158, %v7678, 0
        %v7712 = vsel %vm1158, %v7679, 0
        %v7715 = vsel %vm1158, %v7680, 0
        %v7718 = vsel %vm1158, %v7681, 0
        %v7721 = vsel %vm1158, %v7682, 0
        %v7724 = vsel %vm1158, %v7683, 0
        %v7727 = vsel %vm1158, %v7684, 0
        %v7730 = vsel %vm1158, %v7685, 0
        %v7733 = vsel %vm1158, %v7686, 0
        %v7736 = vsel %vm1207, %v7638, 0
        %7738 = vmatpush.bf16.msra.mxu0 0
        %7739 = vmatpush.bf16.msra.mxu0 0
        %7740 = vmatpush.bf16.msra.mxu0 0
        %7741 = vmatpush.bf16.msra.mxu0 0
        %7742 = vmatpush.bf16.msra.mxu0 0
        %7743 = vmatpush.bf16.msra.mxu0 0
        %7744 = vmatpush.bf16.msra.mxu0 0
        %7745 = vmatpush.bf16.msra.mxu0 %v7736
        %7746 = vmatmul.bf16.gmra.mxu0 %v7688
        %v7747 = vpop.f32.mrf.mxu0
        %v7748 = vadd.f32 0.0, %v7747
        %v7749 = vpop.f32.mrf.mxu0
        %v7750 = vadd.f32 0.0, %v7749
        %7751 = vmatmul.bf16.gmra.mxu0 %v7691
        %v7752 = vpop.f32.mrf.mxu0
        %v7753 = vadd.f32 0.0, %v7752
        %v7754 = vpop.f32.mrf.mxu0
        %v7755 = vadd.f32 0.0, %v7754
        %7756 = vmatmul.bf16.gmra.mxu0 %v7694
        %v7757 = vpop.f32.mrf.mxu0
        %v7758 = vadd.f32 0.0, %v7757
        %v7759 = vpop.f32.mrf.mxu0
        %v7760 = vadd.f32 0.0, %v7759
        %7761 = vmatmul.bf16.gmra.mxu0 %v7697
        %v7762 = vpop.f32.mrf.mxu0
        %v7763 = vadd.f32 0.0, %v7762
        %v7764 = vpop.f32.mrf.mxu0
        %v7765 = vadd.f32 0.0, %v7764
        %7766 = vmatmul.bf16.gmra.mxu0 %v7700
        %v7767 = vpop.f32.mrf.mxu0
        %v7768 = vadd.f32 0.0, %v7767
        %v7769 = vpop.f32.mrf.mxu0
        %v7770 = vadd.f32 0.0, %v7769
        %7771 = vmatmul.bf16.gmra.mxu0 %v7703
        %v7772 = vpop.f32.mrf.mxu0
        %v7773 = vadd.f32 0.0, %v7772
        %v7774 = vpop.f32.mrf.mxu0
        %v7775 = vadd.f32 0.0, %v7774
        %7776 = vmatmul.bf16.gmra.mxu0 %v7706
        %v7777 = vpop.f32.mrf.mxu0
        %v7778 = vadd.f32 0.0, %v7777
        %v7779 = vpop.f32.mrf.mxu0
        %v7780 = vadd.f32 0.0, %v7779
        %7781 = vmatmul.bf16.gmra.mxu0 %v7709
        %v7782 = vpop.f32.mrf.mxu0
        %v7783 = vadd.f32 0.0, %v7782
        %v7784 = vpop.f32.mrf.mxu0
        %v7785 = vadd.f32 0.0, %v7784
        %7786 = vmatmul.bf16.gmra.mxu0 %v7712
        %v7787 = vpop.f32.mrf.mxu0
        %v7788 = vadd.f32 0.0, %v7787
        %v7789 = vpop.f32.mrf.mxu0
        %v7790 = vadd.f32 0.0, %v7789
        %7791 = vmatmul.bf16.gmra.mxu0 %v7715
        %v7792 = vpop.f32.mrf.mxu0
        %v7793 = vadd.f32 0.0, %v7792
        %v7794 = vpop.f32.mrf.mxu0
        %v7795 = vadd.f32 0.0, %v7794
        %7796 = vmatmul.bf16.gmra.mxu0 %v7718
        %v7797 = vpop.f32.mrf.mxu0
        %v7798 = vadd.f32 0.0, %v7797
        %v7799 = vpop.f32.mrf.mxu0
        %v7800 = vadd.f32 0.0, %v7799
        %7801 = vmatmul.bf16.gmra.mxu0 %v7721
        %v7802 = vpop.f32.mrf.mxu0
        %v7803 = vadd.f32 0.0, %v7802
        %v7804 = vpop.f32.mrf.mxu0
        %v7805 = vadd.f32 0.0, %v7804
        %7806 = vmatmul.bf16.gmra.mxu0 %v7724
        %v7807 = vpop.f32.mrf.mxu0
        %v7808 = vadd.f32 0.0, %v7807
        %v7809 = vpop.f32.mrf.mxu0
        %v7810 = vadd.f32 0.0, %v7809
        %7811 = vmatmul.bf16.gmra.mxu0 %v7727
        %v7812 = vpop.f32.mrf.mxu0
        %v7813 = vadd.f32 0.0, %v7812
        %v7814 = vpop.f32.mrf.mxu0
        %v7815 = vadd.f32 0.0, %v7814
        %7816 = vmatmul.bf16.gmra.mxu0 %v7730
        %v7817 = vpop.f32.mrf.mxu0
        %v7818 = vadd.f32 0.0, %v7817
        %v7819 = vpop.f32.mrf.mxu0
        %v7820 = vadd.f32 0.0, %v7819
        %7821 = vmatmul.bf16.gmra.mxu0 %v7733
        %v7822 = vpop.f32.mrf.mxu0
        %v7823 = vadd.f32 0.0, %v7822
        %v7824 = vpop.f32.mrf.mxu0
        %v7825 = vadd.f32 0.0, %v7824
        %7826 = vdwg.mxu0
        %v7827 = vadd.f32 %v7350, %v7748
        %v7828 = vadd.f32 %v7352, %v7750
        %v7829 = vadd.f32 %v7355, %v7753
        %v7830 = vadd.f32 %v7357, %v7755
        %v7831 = vadd.f32 %v7360, %v7758
        %v7832 = vadd.f32 %v7362, %v7760
        %v7833 = vadd.f32 %v7365, %v7763
        %v7834 = vadd.f32 %v7367, %v7765
        %v7835 = vadd.f32 %v7370, %v7768
        %v7836 = vadd.f32 %v7372, %v7770
        %v7837 = vadd.f32 %v7375, %v7773
        %v7838 = vadd.f32 %v7377, %v7775
        %v7839 = vadd.f32 %v7380, %v7778
        %v7840 = vadd.f32 %v7382, %v7780
        %v7841 = vadd.f32 %v7385, %v7783
        %v7842 = vadd.f32 %v7387, %v7785
        %v7843 = vadd.f32 %v7390, %v7788
        %v7844 = vadd.f32 %v7392, %v7790
        %v7845 = vadd.f32 %v7395, %v7793
        %v7846 = vadd.f32 %v7397, %v7795
        %v7847 = vadd.f32 %v7400, %v7798
        %v7848 = vadd.f32 %v7402, %v7800
        %v7849 = vadd.f32 %v7405, %v7803
        %v7850 = vadd.f32 %v7407, %v7805
        %v7851 = vadd.f32 %v7410, %v7808
        %v7852 = vadd.f32 %v7412, %v7810
        %v7853 = vadd.f32 %v7415, %v7813
        %v7854 = vadd.f32 %v7417, %v7815
        %v7855 = vadd.f32 %v7420, %v7818
        %v7856 = vadd.f32 %v7422, %v7820
        %v7857 = vadd.f32 %v7425, %v7823
        %v7858 = vadd.f32 %v7427, %v7825
        %v7859 = vld [vmem:[%s236] sm:$0xf]
        %v7860 = vld [vmem:[%s236 + $0xc] sm:$0xf]
        %v7861 = vld [vmem:[%s236 + $0x18] sm:$0xf]
        %v7862 = vld [vmem:[%s236 + $0x24] sm:$0xf]
        %v7863 = vld [vmem:[%s236 + $0x30] sm:$0xf]
        %v7864 = vld [vmem:[%s236 + $0x3c] sm:$0xf]
        %v7865 = vld [vmem:[%s236 + $0x48] sm:$0xf]
        %v7866 = vld [vmem:[%s236 + $0x54] sm:$0xf]
        %v7867 = vld [vmem:[%s236 + $0x60] sm:$0xf]
        %v7868 = vld [vmem:[%s236 + $0x6c] sm:$0xf]
        %v7869 = vld [vmem:[%s236 + $0x78] sm:$0xf]
        %v7870 = vld [vmem:[%s236 + $0x84] sm:$0xf]
        %v7871 = vld [vmem:[%s236 + $0x90] sm:$0xf]
        %v7872 = vld [vmem:[%s236 + $0x9c] sm:$0xf]
        %v7873 = vld [vmem:[%s236 + $0xa8] sm:$0xf]
        %v7874 = vld [vmem:[%s236 + $0xb4] sm:$0xf]
        %v7876 = vshrl.u32 %v7859, 16
        %v7878 = vrot.slane %v7876, 4
        %v7879 = vshll.u32 %v7859, 16
        %v7881 = vrot.slane %v7879, 5
        %v7882 = vor.u32 %v7878, %v7881
        %v7883 = vrot.slane %v7882, 4
        %v7885 = vshll.u32 %v7430, 16
        %v7887 = vrot.slane %v7885, 5
        %v7888 = vsel %vm287, %v7883, %v7887
        %v7889 = vshrl.u32 %v7430, 16
        %v7891 = vrot.slane %v7889, 4
        %v7892 = vor.u32 %v7891, %v7887
        %v7893 = vrot.slane %v7892, 4
        %v7895 = vshll.u32 %v7431, 16
        %v7897 = vrot.slane %v7895, 5
        %v7898 = vsel %vm287, %v7893, %v7897
        %v7900 = vshrl.u32 %v7860, 16
        %v7902 = vrot.slane %v7900, 4
        %v7903 = vshll.u32 %v7860, 16
        %v7905 = vrot.slane %v7903, 5
        %v7906 = vor.u32 %v7902, %v7905
        %v7907 = vrot.slane %v7906, 4
        %v7909 = vshll.u32 %v7433, 16
        %v7911 = vrot.slane %v7909, 5
        %v7912 = vsel %vm287, %v7907, %v7911
        %v7913 = vshrl.u32 %v7433, 16
        %v7915 = vrot.slane %v7913, 4
        %v7916 = vor.u32 %v7915, %v7911
        %v7917 = vrot.slane %v7916, 4
        %v7919 = vshll.u32 %v7434, 16
        %v7921 = vrot.slane %v7919, 5
        %v7922 = vsel %vm287, %v7917, %v7921
        %v7924 = vshrl.u32 %v7861, 16
        %v7926 = vrot.slane %v7924, 4
        %v7927 = vshll.u32 %v7861, 16
        %v7929 = vrot.slane %v7927, 5
        %v7930 = vor.u32 %v7926, %v7929
        %v7931 = vrot.slane %v7930, 4
        %v7933 = vshll.u32 %v7436, 16
        %v7935 = vrot.slane %v7933, 5
        %v7936 = vsel %vm287, %v7931, %v7935
        %v7937 = vshrl.u32 %v7436, 16
        %v7939 = vrot.slane %v7937, 4
        %v7940 = vor.u32 %v7939, %v7935
        %v7941 = vrot.slane %v7940, 4
        %v7943 = vshll.u32 %v7437, 16
        %v7945 = vrot.slane %v7943, 5
        %v7946 = vsel %vm287, %v7941, %v7945
        %v7948 = vshrl.u32 %v7862, 16
        %v7950 = vrot.slane %v7948, 4
        %v7951 = vshll.u32 %v7862, 16
        %v7953 = vrot.slane %v7951, 5
        %v7954 = vor.u32 %v7950, %v7953
        %v7955 = vrot.slane %v7954, 4
        %v7957 = vshll.u32 %v7439, 16
        %v7959 = vrot.slane %v7957, 5
        %v7960 = vsel %vm287, %v7955, %v7959
        %v7961 = vshrl.u32 %v7439, 16
        %v7963 = vrot.slane %v7961, 4
        %v7964 = vor.u32 %v7963, %v7959
        %v7965 = vrot.slane %v7964, 4
        %v7967 = vshll.u32 %v7440, 16
        %v7969 = vrot.slane %v7967, 5
        %v7970 = vsel %vm287, %v7965, %v7969
        %v7972 = vshrl.u32 %v7863, 16
        %v7974 = vrot.slane %v7972, 4
        %v7975 = vshll.u32 %v7863, 16
        %v7977 = vrot.slane %v7975, 5
        %v7978 = vor.u32 %v7974, %v7977
        %v7979 = vrot.slane %v7978, 4
        %v7981 = vshll.u32 %v7442, 16
        %v7983 = vrot.slane %v7981, 5
        %v7984 = vsel %vm287, %v7979, %v7983
        %v7985 = vshrl.u32 %v7442, 16
        %v7987 = vrot.slane %v7985, 4
        %v7988 = vor.u32 %v7987, %v7983
        %v7989 = vrot.slane %v7988, 4
        %v7991 = vshll.u32 %v7443, 16
        %v7993 = vrot.slane %v7991, 5
        %v7994 = vsel %vm287, %v7989, %v7993
        %v7996 = vshrl.u32 %v7864, 16
        %v7998 = vrot.slane %v7996, 4
        %v7999 = vshll.u32 %v7864, 16
        %v8001 = vrot.slane %v7999, 5
        %v8002 = vor.u32 %v7998, %v8001
        %v8003 = vrot.slane %v8002, 4
        %v8005 = vshll.u32 %v7445, 16
        %v8007 = vrot.slane %v8005, 5
        %v8008 = vsel %vm287, %v8003, %v8007
        %v8009 = vshrl.u32 %v7445, 16
        %v8011 = vrot.slane %v8009, 4
        %v8012 = vor.u32 %v8011, %v8007
        %v8013 = vrot.slane %v8012, 4
        %v8015 = vshll.u32 %v7446, 16
        %v8017 = vrot.slane %v8015, 5
        %v8018 = vsel %vm287, %v8013, %v8017
        %v8020 = vshrl.u32 %v7865, 16
        %v8022 = vrot.slane %v8020, 4
        %v8023 = vshll.u32 %v7865, 16
        %v8025 = vrot.slane %v8023, 5
        %v8026 = vor.u32 %v8022, %v8025
        %v8027 = vrot.slane %v8026, 4
        %v8029 = vshll.u32 %v7448, 16
        %v8031 = vrot.slane %v8029, 5
        %v8032 = vsel %vm287, %v8027, %v8031
        %v8033 = vshrl.u32 %v7448, 16
        %v8035 = vrot.slane %v8033, 4
        %v8036 = vor.u32 %v8035, %v8031
        %v8037 = vrot.slane %v8036, 4
        %v8039 = vshll.u32 %v7449, 16
        %v8041 = vrot.slane %v8039, 5
        %v8042 = vsel %vm287, %v8037, %v8041
        %v8044 = vshrl.u32 %v7866, 16
        %v8046 = vrot.slane %v8044, 4
        %v8047 = vshll.u32 %v7866, 16
        %v8049 = vrot.slane %v8047, 5
        %v8050 = vor.u32 %v8046, %v8049
        %v8051 = vrot.slane %v8050, 4
        %v8053 = vshll.u32 %v7451, 16
        %v8055 = vrot.slane %v8053, 5
        %v8056 = vsel %vm287, %v8051, %v8055
        %v8057 = vshrl.u32 %v7451, 16
        %v8059 = vrot.slane %v8057, 4
        %v8060 = vor.u32 %v8059, %v8055
        %v8061 = vrot.slane %v8060, 4
        %v8063 = vshll.u32 %v7452, 16
        %v8065 = vrot.slane %v8063, 5
        %v8066 = vsel %vm287, %v8061, %v8065
        %v8068 = vshrl.u32 %v7867, 16
        %v8070 = vrot.slane %v8068, 4
        %v8071 = vshll.u32 %v7867, 16
        %v8073 = vrot.slane %v8071, 5
        %v8074 = vor.u32 %v8070, %v8073
        %v8075 = vrot.slane %v8074, 4
        %v8077 = vshll.u32 %v7454, 16
        %v8079 = vrot.slane %v8077, 5
        %v8080 = vsel %vm287, %v8075, %v8079
        %v8081 = vshrl.u32 %v7454, 16
        %v8083 = vrot.slane %v8081, 4
        %v8084 = vor.u32 %v8083, %v8079
        %v8085 = vrot.slane %v8084, 4
        %v8087 = vshll.u32 %v7455, 16
        %v8089 = vrot.slane %v8087, 5
        %v8090 = vsel %vm287, %v8085, %v8089
        %v8092 = vshrl.u32 %v7868, 16
        %v8094 = vrot.slane %v8092, 4
        %v8095 = vshll.u32 %v7868, 16
        %v8097 = vrot.slane %v8095, 5
        %v8098 = vor.u32 %v8094, %v8097
        %v8099 = vrot.slane %v8098, 4
        %v8101 = vshll.u32 %v7457, 16
        %v8103 = vrot.slane %v8101, 5
        %v8104 = vsel %vm287, %v8099, %v8103
        %v8105 = vshrl.u32 %v7457, 16
        %v8107 = vrot.slane %v8105, 4
        %v8108 = vor.u32 %v8107, %v8103
        %v8109 = vrot.slane %v8108, 4
        %v8111 = vshll.u32 %v7458, 16
        %v8113 = vrot.slane %v8111, 5
        %v8114 = vsel %vm287, %v8109, %v8113
        %v8116 = vshrl.u32 %v7869, 16
        %v8118 = vrot.slane %v8116, 4
        %v8119 = vshll.u32 %v7869, 16
        %v8121 = vrot.slane %v8119, 5
        %v8122 = vor.u32 %v8118, %v8121
        %v8123 = vrot.slane %v8122, 4
        %v8125 = vshll.u32 %v7460, 16
        %v8127 = vrot.slane %v8125, 5
        %v8128 = vsel %vm287, %v8123, %v8127
        %v8129 = vshrl.u32 %v7460, 16
        %v8131 = vrot.slane %v8129, 4
        %v8132 = vor.u32 %v8131, %v8127
        %v8133 = vrot.slane %v8132, 4
        %v8135 = vshll.u32 %v7461, 16
        %v8137 = vrot.slane %v8135, 5
        %v8138 = vsel %vm287, %v8133, %v8137
        %v8140 = vshrl.u32 %v7870, 16
        %v8142 = vrot.slane %v8140, 4
        %v8143 = vshll.u32 %v7870, 16
        %v8145 = vrot.slane %v8143, 5
        %v8146 = vor.u32 %v8142, %v8145
        %v8147 = vrot.slane %v8146, 4
        %v8149 = vshll.u32 %v7463, 16
        %v8151 = vrot.slane %v8149, 5
        %v8152 = vsel %vm287, %v8147, %v8151
        %v8153 = vshrl.u32 %v7463, 16
        %v8155 = vrot.slane %v8153, 4
        %v8156 = vor.u32 %v8155, %v8151
        %v8157 = vrot.slane %v8156, 4
        %v8159 = vshll.u32 %v7464, 16
        %v8161 = vrot.slane %v8159, 5
        %v8162 = vsel %vm287, %v8157, %v8161
        %v8164 = vshrl.u32 %v7871, 16
        %v8166 = vrot.slane %v8164, 4
        %v8167 = vshll.u32 %v7871, 16
        %v8169 = vrot.slane %v8167, 5
        %v8170 = vor.u32 %v8166, %v8169
        %v8171 = vrot.slane %v8170, 4
        %v8173 = vshll.u32 %v7466, 16
        %v8175 = vrot.slane %v8173, 5
        %v8176 = vsel %vm287, %v8171, %v8175
        %v8177 = vshrl.u32 %v7466, 16
        %v8179 = vrot.slane %v8177, 4
        %v8180 = vor.u32 %v8179, %v8175
        %v8181 = vrot.slane %v8180, 4
        %v8183 = vshll.u32 %v7467, 16
        %v8185 = vrot.slane %v8183, 5
        %v8186 = vsel %vm287, %v8181, %v8185
        %v8188 = vshrl.u32 %v7872, 16
        %v8190 = vrot.slane %v8188, 4
        %v8191 = vshll.u32 %v7872, 16
        %v8193 = vrot.slane %v8191, 5
        %v8194 = vor.u32 %v8190, %v8193
        %v8195 = vrot.slane %v8194, 4
        %v8197 = vshll.u32 %v7469, 16
        %v8199 = vrot.slane %v8197, 5
        %v8200 = vsel %vm287, %v8195, %v8199
        %v8201 = vshrl.u32 %v7469, 16
        %v8203 = vrot.slane %v8201, 4
        %v8204 = vor.u32 %v8203, %v8199
        %v8205 = vrot.slane %v8204, 4
        %v8207 = vshll.u32 %v7470, 16
        %v8209 = vrot.slane %v8207, 5
        %v8210 = vsel %vm287, %v8205, %v8209
        %v8212 = vshrl.u32 %v7873, 16
        %v8214 = vrot.slane %v8212, 4
        %v8215 = vshll.u32 %v7873, 16
        %v8217 = vrot.slane %v8215, 5
        %v8218 = vor.u32 %v8214, %v8217
        %v8219 = vrot.slane %v8218, 4
        %v8221 = vshll.u32 %v7472, 16
        %v8223 = vrot.slane %v8221, 5
        %v8224 = vsel %vm287, %v8219, %v8223
        %v8225 = vshrl.u32 %v7472, 16
        %v8227 = vrot.slane %v8225, 4
        %v8228 = vor.u32 %v8227, %v8223
        %v8229 = vrot.slane %v8228, 4
        %v8231 = vshll.u32 %v7473, 16
        %v8233 = vrot.slane %v8231, 5
        %v8234 = vsel %vm287, %v8229, %v8233
        %v8236 = vshrl.u32 %v7874, 16
        %v8238 = vrot.slane %v8236, 4
        %v8239 = vshll.u32 %v7874, 16
        %v8241 = vrot.slane %v8239, 5
        %v8242 = vor.u32 %v8238, %v8241
        %v8243 = vrot.slane %v8242, 4
        %v8245 = vshll.u32 %v7475, 16
        %v8247 = vrot.slane %v8245, 5
        %v8248 = vsel %vm287, %v8243, %v8247
        %v8249 = vshrl.u32 %v7475, 16
        %v8251 = vrot.slane %v8249, 4
        %v8252 = vor.u32 %v8251, %v8247
        %v8253 = vrot.slane %v8252, 4
        %v8255 = vshll.u32 %v7476, 16
        %v8257 = vrot.slane %v8255, 5
        %v8258 = vsel %vm287, %v8253, %v8257
        %s8259 = scalar_lea.vmem %s1, 30
        %v8260 = vld [vmem:[%s8259] sm:$0x3]
        %v8261 = vunpack.c.l.b16 %v7888
        %v8262 = vunpack.c.l.b16 %v7898
        %v8263 = vunpack.c.l.b16 %v7912
        %v8264 = vunpack.c.l.b16 %v7922
        %v8265 = vunpack.c.l.b16 %v7936
        %v8266 = vunpack.c.l.b16 %v7946
        %v8267 = vunpack.c.l.b16 %v7960
        %v8268 = vunpack.c.l.b16 %v7970
        %v8269 = vunpack.c.l.b16 %v7984
        %v8270 = vunpack.c.l.b16 %v7994
        %v8271 = vunpack.c.l.b16 %v8008
        %v8272 = vunpack.c.l.b16 %v8018
        %v8273 = vunpack.c.l.b16 %v8032
        %v8274 = vunpack.c.l.b16 %v8042
        %v8275 = vunpack.c.l.b16 %v8056
        %v8276 = vunpack.c.l.b16 %v8066
        %v8277 = vunpack.c.l.b16 %v8080
        %v8278 = vunpack.c.l.b16 %v8090
        %v8279 = vunpack.c.l.b16 %v8104
        %v8280 = vunpack.c.l.b16 %v8114
        %v8281 = vunpack.c.l.b16 %v8128
        %v8282 = vunpack.c.l.b16 %v8138
        %v8283 = vunpack.c.l.b16 %v8152
        %v8284 = vunpack.c.l.b16 %v8162
        %v8285 = vunpack.c.l.b16 %v8176
        %v8286 = vunpack.c.l.b16 %v8186
        %v8287 = vunpack.c.l.b16 %v8200
        %v8288 = vunpack.c.l.b16 %v8210
        %v8289 = vunpack.c.l.b16 %v8224
        %v8290 = vunpack.c.l.b16 %v8234
        %v8291 = vunpack.c.l.b16 %v8248
        %v8292 = vunpack.c.l.b16 %v8258
        %v8293 = vpack.c.b16 %v8262, %v8261
        %v8294 = vpack.c.b16 %v8264, %v8263
        %v8295 = vpack.c.b16 %v8266, %v8265
        %v8296 = vpack.c.b16 %v8268, %v8267
        %v8297 = vpack.c.b16 %v8270, %v8269
        %v8298 = vpack.c.b16 %v8272, %v8271
        %v8299 = vpack.c.b16 %v8274, %v8273
        %v8300 = vpack.c.b16 %v8276, %v8275
        %v8301 = vpack.c.b16 %v8278, %v8277
        %v8302 = vpack.c.b16 %v8280, %v8279
        %v8303 = vpack.c.b16 %v8282, %v8281
        %v8304 = vpack.c.b16 %v8284, %v8283
        %v8305 = vpack.c.b16 %v8286, %v8285
        %v8306 = vpack.c.b16 %v8288, %v8287
        %v8307 = vpack.c.b16 %v8290, %v8289
        %v8308 = vpack.c.b16 %v8292, %v8291
        %v8310 = vsel %vm1158, %v8293, 0
        %v8313 = vsel %vm1158, %v8294, 0
        %v8316 = vsel %vm1158, %v8295, 0
        %v8319 = vsel %vm1158, %v8296, 0
        %v8322 = vsel %vm1158, %v8297, 0
        %v8325 = vsel %vm1158, %v8298, 0
        %v8328 = vsel %vm1158, %v8299, 0
        %v8331 = vsel %vm1158, %v8300, 0
        %v8334 = vsel %vm1158, %v8301, 0
        %v8337 = vsel %vm1158, %v8302, 0
        %v8340 = vsel %vm1158, %v8303, 0
        %v8343 = vsel %vm1158, %v8304, 0
        %v8346 = vsel %vm1158, %v8305, 0
        %v8349 = vsel %vm1158, %v8306, 0
        %v8352 = vsel %vm1158, %v8307, 0
        %v8355 = vsel %vm1158, %v8308, 0
        %v8358 = vsel %vm1207, %v8260, 0
        %8360 = vmatpush.bf16.msra.mxu0 0
        %8361 = vmatpush.bf16.msra.mxu0 0
        %8362 = vmatpush.bf16.msra.mxu0 0
        %8363 = vmatpush.bf16.msra.mxu0 0
        %8364 = vmatpush.bf16.msra.mxu0 0
        %8365 = vmatpush.bf16.msra.mxu0 0
        %8366 = vmatpush.bf16.msra.mxu0 0
        %8367 = vmatpush.bf16.msra.mxu0 %v8358
        %8368 = vmatmul.bf16.gmra.mxu0 %v8310
        %v8369 = vpop.f32.mrf.mxu0
        %v8370 = vadd.f32 0.0, %v8369
        %v8371 = vpop.f32.mrf.mxu0
        %v8372 = vadd.f32 0.0, %v8371
        %8373 = vmatmul.bf16.gmra.mxu0 %v8313
        %v8374 = vpop.f32.mrf.mxu0
        %v8375 = vadd.f32 0.0, %v8374
        %v8376 = vpop.f32.mrf.mxu0
        %v8377 = vadd.f32 0.0, %v8376
        %8378 = vmatmul.bf16.gmra.mxu0 %v8316
        %v8379 = vpop.f32.mrf.mxu0
        %v8380 = vadd.f32 0.0, %v8379
        %v8381 = vpop.f32.mrf.mxu0
        %v8382 = vadd.f32 0.0, %v8381
        %8383 = vmatmul.bf16.gmra.mxu0 %v8319
        %v8384 = vpop.f32.mrf.mxu0
        %v8385 = vadd.f32 0.0, %v8384
        %v8386 = vpop.f32.mrf.mxu0
        %v8387 = vadd.f32 0.0, %v8386
        %8388 = vmatmul.bf16.gmra.mxu0 %v8322
        %v8389 = vpop.f32.mrf.mxu0
        %v8390 = vadd.f32 0.0, %v8389
        %v8391 = vpop.f32.mrf.mxu0
        %v8392 = vadd.f32 0.0, %v8391
        %8393 = vmatmul.bf16.gmra.mxu0 %v8325
        %v8394 = vpop.f32.mrf.mxu0
        %v8395 = vadd.f32 0.0, %v8394
        %v8396 = vpop.f32.mrf.mxu0
        %v8397 = vadd.f32 0.0, %v8396
        %8398 = vmatmul.bf16.gmra.mxu0 %v8328
        %v8399 = vpop.f32.mrf.mxu0
        %v8400 = vadd.f32 0.0, %v8399
        %v8401 = vpop.f32.mrf.mxu0
        %v8402 = vadd.f32 0.0, %v8401
        %8403 = vmatmul.bf16.gmra.mxu0 %v8331
        %v8404 = vpop.f32.mrf.mxu0
        %v8405 = vadd.f32 0.0, %v8404
        %v8406 = vpop.f32.mrf.mxu0
        %v8407 = vadd.f32 0.0, %v8406
        %8408 = vmatmul.bf16.gmra.mxu0 %v8334
        %v8409 = vpop.f32.mrf.mxu0
        %v8410 = vadd.f32 0.0, %v8409
        %v8411 = vpop.f32.mrf.mxu0
        %v8412 = vadd.f32 0.0, %v8411
        %8413 = vmatmul.bf16.gmra.mxu0 %v8337
        %v8414 = vpop.f32.mrf.mxu0
        %v8415 = vadd.f32 0.0, %v8414
        %v8416 = vpop.f32.mrf.mxu0
        %v8417 = vadd.f32 0.0, %v8416
        %8418 = vmatmul.bf16.gmra.mxu0 %v8340
        %v8419 = vpop.f32.mrf.mxu0
        %v8420 = vadd.f32 0.0, %v8419
        %v8421 = vpop.f32.mrf.mxu0
        %v8422 = vadd.f32 0.0, %v8421
        %8423 = vmatmul.bf16.gmra.mxu0 %v8343
        %v8424 = vpop.f32.mrf.mxu0
        %v8425 = vadd.f32 0.0, %v8424
        %v8426 = vpop.f32.mrf.mxu0
        %v8427 = vadd.f32 0.0, %v8426
        %8428 = vmatmul.bf16.gmra.mxu0 %v8346
        %v8429 = vpop.f32.mrf.mxu0
        %v8430 = vadd.f32 0.0, %v8429
        %v8431 = vpop.f32.mrf.mxu0
        %v8432 = vadd.f32 0.0, %v8431
        %8433 = vmatmul.bf16.gmra.mxu0 %v8349
        %v8434 = vpop.f32.mrf.mxu0
        %v8435 = vadd.f32 0.0, %v8434
        %v8436 = vpop.f32.mrf.mxu0
        %v8437 = vadd.f32 0.0, %v8436
        %8438 = vmatmul.bf16.gmra.mxu0 %v8352
        %v8439 = vpop.f32.mrf.mxu0
        %v8440 = vadd.f32 0.0, %v8439
        %v8441 = vpop.f32.mrf.mxu0
        %v8442 = vadd.f32 0.0, %v8441
        %8443 = vmatmul.bf16.gmra.mxu0 %v8355
        %v8444 = vpop.f32.mrf.mxu0
        %v8445 = vadd.f32 0.0, %v8444
        %v8446 = vpop.f32.mrf.mxu0
        %v8447 = vadd.f32 0.0, %v8446
        %8448 = vdwg.mxu0
        %v8449 = vadd.f32 %v7827, %v8370
        %v8450 = vadd.f32 %v7828, %v8372
        %v8451 = vadd.f32 %v7829, %v8375
        %v8452 = vadd.f32 %v7830, %v8377
        %v8453 = vadd.f32 %v7831, %v8380
        %v8454 = vadd.f32 %v7832, %v8382
        %v8455 = vadd.f32 %v7833, %v8385
        %v8456 = vadd.f32 %v7834, %v8387
        %v8457 = vadd.f32 %v7835, %v8390
        %v8458 = vadd.f32 %v7836, %v8392
        %v8459 = vadd.f32 %v7837, %v8395
        %v8460 = vadd.f32 %v7838, %v8397
        %v8461 = vadd.f32 %v7839, %v8400
        %v8462 = vadd.f32 %v7840, %v8402
        %v8463 = vadd.f32 %v7841, %v8405
        %v8464 = vadd.f32 %v7842, %v8407
        %v8465 = vadd.f32 %v7843, %v8410
        %v8466 = vadd.f32 %v7844, %v8412
        %v8467 = vadd.f32 %v7845, %v8415
        %v8468 = vadd.f32 %v7846, %v8417
        %v8469 = vadd.f32 %v7847, %v8420
        %v8470 = vadd.f32 %v7848, %v8422
        %v8471 = vadd.f32 %v7849, %v8425
        %v8472 = vadd.f32 %v7850, %v8427
        %v8473 = vadd.f32 %v7851, %v8430
        %v8474 = vadd.f32 %v7852, %v8432
        %v8475 = vadd.f32 %v7853, %v8435
        %v8476 = vadd.f32 %v7854, %v8437
        %v8477 = vadd.f32 %v7855, %v8440
        %v8478 = vadd.f32 %v7856, %v8442
        %v8479 = vadd.f32 %v7857, %v8445
        %v8480 = vadd.f32 %v7858, %v8447
        %v8481 = vpack.c.bf16 %v8449, %v8449
        %v8482 = vpack.c.bf16 %v8450, %v8450
        %v8483 = vpack.c.bf16 %v8451, %v8451
        %v8484 = vpack.c.bf16 %v8452, %v8452
        %v8485 = vpack.c.bf16 %v8453, %v8453
        %v8486 = vpack.c.bf16 %v8454, %v8454
        %v8487 = vpack.c.bf16 %v8455, %v8455
        %v8488 = vpack.c.bf16 %v8456, %v8456
        %v8489 = vpack.c.bf16 %v8457, %v8457
        %v8490 = vpack.c.bf16 %v8458, %v8458
        %v8491 = vpack.c.bf16 %v8459, %v8459
        %v8492 = vpack.c.bf16 %v8460, %v8460
        %v8493 = vpack.c.bf16 %v8461, %v8461
        %v8494 = vpack.c.bf16 %v8462, %v8462
        %v8495 = vpack.c.bf16 %v8463, %v8463
        %v8496 = vpack.c.bf16 %v8464, %v8464
        %v8497 = vpack.c.bf16 %v8465, %v8465
        %v8498 = vpack.c.bf16 %v8466, %v8466
        %v8499 = vpack.c.bf16 %v8467, %v8467
        %v8500 = vpack.c.bf16 %v8468, %v8468
        %v8501 = vpack.c.bf16 %v8469, %v8469
        %v8502 = vpack.c.bf16 %v8470, %v8470
        %v8503 = vpack.c.bf16 %v8471, %v8471
        %v8504 = vpack.c.bf16 %v8472, %v8472
        %v8505 = vpack.c.bf16 %v8473, %v8473
        %v8506 = vpack.c.bf16 %v8474, %v8474
        %v8507 = vpack.c.bf16 %v8475, %v8475
        %v8508 = vpack.c.bf16 %v8476, %v8476
        %v8509 = vpack.c.bf16 %v8477, %v8477
        %v8510 = vpack.c.bf16 %v8478, %v8478
        %v8511 = vpack.c.bf16 %v8479, %v8479
        %v8512 = vpack.c.bf16 %v8480, %v8480
        %s8513 = scalar_lea.vmem %s212, 384 [#allocation2]
        %8514 = vst [vmem:[%s8513] sm:$0xf] %v8481
        %8515 = vst [vmem:[%s8513 + $0x4] sm:$0xf] %v8482
        %8516 = vst [vmem:[%s8513 + $0x8] sm:$0xf] %v8483
        %8517 = vst [vmem:[%s8513 + $0xc] sm:$0xf] %v8484
        %8518 = vst [vmem:[%s8513 + $0x10] sm:$0xf] %v8485
        %8519 = vst [vmem:[%s8513 + $0x14] sm:$0xf] %v8486
        %8520 = vst [vmem:[%s8513 + $0x18] sm:$0xf] %v8487
        %8521 = vst [vmem:[%s8513 + $0x1c] sm:$0xf] %v8488
        %8522 = vst [vmem:[%s8513 + $0x20] sm:$0xf] %v8489
        %8523 = vst [vmem:[%s8513 + $0x24] sm:$0xf] %v8490
        %8524 = vst [vmem:[%s8513 + $0x28] sm:$0xf] %v8491
        %8525 = vst [vmem:[%s8513 + $0x2c] sm:$0xf] %v8492
        %8526 = vst [vmem:[%s8513 + $0x30] sm:$0xf] %v8493
        %8527 = vst [vmem:[%s8513 + $0x34] sm:$0xf] %v8494
        %8528 = vst [vmem:[%s8513 + $0x38] sm:$0xf] %v8495
        %8529 = vst [vmem:[%s8513 + $0x3c] sm:$0xf] %v8496
        %8530 = vst [vmem:[%s8513 + $0x40] sm:$0xf] %v8497
        %8531 = vst [vmem:[%s8513 + $0x44] sm:$0xf] %v8498
        %8532 = vst [vmem:[%s8513 + $0x48] sm:$0xf] %v8499
        %8533 = vst [vmem:[%s8513 + $0x4c] sm:$0xf] %v8500
        %8534 = vst [vmem:[%s8513 + $0x50] sm:$0xf] %v8501
        %8535 = vst [vmem:[%s8513 + $0x54] sm:$0xf] %v8502
        %8536 = vst [vmem:[%s8513 + $0x58] sm:$0xf] %v8503
        %8537 = vst [vmem:[%s8513 + $0x5c] sm:$0xf] %v8504
        %8538 = vst [vmem:[%s8513 + $0x60] sm:$0xf] %v8505
        %8539 = vst [vmem:[%s8513 + $0x64] sm:$0xf] %v8506
        %8540 = vst [vmem:[%s8513 + $0x68] sm:$0xf] %v8507
        %8541 = vst [vmem:[%s8513 + $0x6c] sm:$0xf] %v8508
        %8542 = vst [vmem:[%s8513 + $0x70] sm:$0xf] %v8509
        %8543 = vst [vmem:[%s8513 + $0x74] sm:$0xf] %v8510
        %8544 = vst [vmem:[%s8513 + $0x78] sm:$0xf] %v8511
        %8545 = vst [vmem:[%s8513 + $0x7c] sm:$0xf] %v8512
        %v8546 = vadd.f32 %v8449, %v8450
        %v8547 = vadd.f32 %v8546, %v8451
        %v8548 = vadd.f32 %v8547, %v8452
        %v8549 = vadd.f32 %v8548, %v8453
        %v8550 = vadd.f32 %v8549, %v8454
        %v8551 = vadd.f32 %v8550, %v8455
        %v8552 = vadd.f32 %v8551, %v8456
        %v8553 = vadd.f32 %v8552, %v8457
        %v8554 = vadd.f32 %v8553, %v8458
        %v8555 = vadd.f32 %v8554, %v8459
        %v8556 = vadd.f32 %v8555, %v8460
        %v8557 = vadd.f32 %v8556, %v8461
        %v8558 = vadd.f32 %v8557, %v8462
        %v8559 = vadd.f32 %v8558, %v8463
        %v8560 = vadd.f32 %v8559, %v8464
        %v8561 = vadd.f32 %v8560, %v8465
        %v8562 = vadd.f32 %v8561, %v8466
        %v8563 = vadd.f32 %v8562, %v8467
        %v8564 = vadd.f32 %v8563, %v8468
        %v8565 = vadd.f32 %v8564, %v8469
        %v8566 = vadd.f32 %v8565, %v8470
        %v8567 = vadd.f32 %v8566, %v8471
        %v8568 = vadd.f32 %v8567, %v8472
        %v8569 = vadd.f32 %v8568, %v8473
        %v8570 = vadd.f32 %v8569, %v8474
        %v8571 = vadd.f32 %v8570, %v8475
        %v8572 = vadd.f32 %v8571, %v8476
        %v8573 = vadd.f32 %v8572, %v8477
        %v8574 = vadd.f32 %v8573, %v8478
        %v8575 = vadd.f32 %v8574, %v8479
        %v8576 = vadd.f32 %v8575, %v8480
        %v8577 = vrot.slane %v8576, 4
        %v8578 = vadd.f32 %v8576, %v8577
        %v8579 = vrot.slane %v8578, 2
        %v8580 = vadd.f32 %v8578, %v8579
        %v8581 = vrot.slane %v8580, 1
        %v8582 = vadd.f32 %v8580, %v8581
        %v8583 = vadd.f32 %v6370, %v8582
        %v8584 = vmul.f32 %v8449, %v8449
        %v8585 = vmul.f32 %v8450, %v8450
        %v8586 = vmul.f32 %v8451, %v8451
        %v8587 = vmul.f32 %v8452, %v8452
        %v8588 = vmul.f32 %v8453, %v8453
        %v8589 = vmul.f32 %v8454, %v8454
        %v8590 = vmul.f32 %v8455, %v8455
        %v8591 = vmul.f32 %v8456, %v8456
        %v8592 = vmul.f32 %v8457, %v8457
        %v8593 = vmul.f32 %v8458, %v8458
        %v8594 = vmul.f32 %v8459, %v8459
        %v8595 = vmul.f32 %v8460, %v8460
        %v8596 = vmul.f32 %v8461, %v8461
        %v8597 = vmul.f32 %v8462, %v8462
        %v8598 = vmul.f32 %v8463, %v8463
        %v8599 = vmul.f32 %v8464, %v8464
        %v8600 = vmul.f32 %v8465, %v8465
        %v8601 = vmul.f32 %v8466, %v8466
        %v8602 = vmul.f32 %v8467, %v8467
        %v8603 = vmul.f32 %v8468, %v8468
        %v8604 = vmul.f32 %v8469, %v8469
        %v8605 = vmul.f32 %v8470, %v8470
        %v8606 = vmul.f32 %v8471, %v8471
        %v8607 = vmul.f32 %v8472, %v8472
        %v8608 = vmul.f32 %v8473, %v8473
        %v8609 = vmul.f32 %v8474, %v8474
        %v8610 = vmul.f32 %v8475, %v8475
        %v8611 = vmul.f32 %v8476, %v8476
        %v8612 = vmul.f32 %v8477, %v8477
        %v8613 = vmul.f32 %v8478, %v8478
        %v8614 = vmul.f32 %v8479, %v8479
        %v8615 = vmul.f32 %v8480, %v8480
        %v8616 = vadd.f32 %v8584, %v8585
        %v8617 = vadd.f32 %v8616, %v8586
        %v8618 = vadd.f32 %v8617, %v8587
        %v8619 = vadd.f32 %v8618, %v8588
        %v8620 = vadd.f32 %v8619, %v8589
        %v8621 = vadd.f32 %v8620, %v8590
        %v8622 = vadd.f32 %v8621, %v8591
        %v8623 = vadd.f32 %v8622, %v8592
        %v8624 = vadd.f32 %v8623, %v8593
        %v8625 = vadd.f32 %v8624, %v8594
        %v8626 = vadd.f32 %v8625, %v8595
        %v8627 = vadd.f32 %v8626, %v8596
        %v8628 = vadd.f32 %v8627, %v8597
        %v8629 = vadd.f32 %v8628, %v8598
        %v8630 = vadd.f32 %v8629, %v8599
        %v8631 = vadd.f32 %v8630, %v8600
        %v8632 = vadd.f32 %v8631, %v8601
        %v8633 = vadd.f32 %v8632, %v8602
        %v8634 = vadd.f32 %v8633, %v8603
        %v8635 = vadd.f32 %v8634, %v8604
        %v8636 = vadd.f32 %v8635, %v8605
        %v8637 = vadd.f32 %v8636, %v8606
        %v8638 = vadd.f32 %v8637, %v8607
        %v8639 = vadd.f32 %v8638, %v8608
        %v8640 = vadd.f32 %v8639, %v8609
        %v8641 = vadd.f32 %v8640, %v8610
        %v8642 = vadd.f32 %v8641, %v8611
        %v8643 = vadd.f32 %v8642, %v8612
        %v8644 = vadd.f32 %v8643, %v8613
        %v8645 = vadd.f32 %v8644, %v8614
        %v8646 = vadd.f32 %v8645, %v8615
        %v8647 = vrot.slane %v8646, 4
        %v8648 = vadd.f32 %v8646, %v8647
        %v8649 = vrot.slane %v8648, 2
        %v8650 = vadd.f32 %v8648, %v8649
        %v8651 = vrot.slane %v8650, 1
        %v8652 = vadd.f32 %v8650, %v8651
        %v8653 = vadd.f32 %v6440, %v8652
        %8654 = vst [vmem:[%s218] sm:$0x1] %v8583
        %8655 = vst [vmem:[%s224] sm:$0x1] %v8653
        %s8656 = sand.u32 %s91, 1
        %s8657 = scalar_lea.sflag [#allocation3], %s8656
        %s8658 = sand.u32 %s91, 1
        %s8659 = smul.addr %s8658, 512
        %s8660 = scalar_lea.vmem [#allocation2], %s8659
        %s8661 = sand.u32 %s22, 1
        %s8662 = scalar_lea.sflag [#allocation5], %s8661
        %s8663 = sand.u32 %s119, 1
        %s8664 = scalar_lea.vmem [#allocation4], %s8663
        %s8665 = sand.u32 %s22, 1
        %s8666 = scalar_lea.sflag [#allocation5], %s8665
        %s8667 = sand.u32 %s147, 1
        %s8668 = scalar_lea.vmem [#allocation6], %s8667
        // Predicated region
        $region29: #{tpu_custom_call.1} parent=27 // pred_check
          %p8669 = pneg %p101
        $region30: #{tpu_custom_call.1} parent=27 // pred_check_branch
          %8671 = sbr.rel (%p8669) target = $region32
        $region31: #{tpu_custom_call.1} parent=27 // pred_region
          #allocation8 [shape = 'u32[6]{0}', space=smem, size = 0x18, scoped, tag = 'DMA stride descriptor']
          %s8672 = smul.u32 32, %s27
          %8674 = vsyncadd %s8657, 0
          %s8675 = smul.addr %s26, 32
          %s8676 = sadd.s32 %s8672, %s8675
          %s8677 = smul.addr %s8676, 4
          %s8678 = scalar_lea.hbm %s2, %s8677
          %s8680 = sshll.u32 1, 14
          %s8681 = sxor.u32 4294967295, %s8680
          %s8684 = sshll.u32 7, 18
          %s8685 = sxor.u32 4294967295, %s8684
          %s8686 = sand.u32 0, %s8685
          %s8688 = sor.u32 %s8686, 0
          %s8689 = sshll.u32 %s8660, 4
          %s8690 = int_to_ptr.vmem [resolvable:$true] %s8689
          %s8691 = sshll.u32 %s8678, 4
          %s8692 = int_to_ptr.hbm [resolvable:$true] %s8691
          %8698 = sst [smem:[#allocation8]] 2048
          %s8699 = scalar_lea.smem [#allocation8], 1
          %8700 = sst [smem:[%s8699]] 4096
          %s8701 = scalar_lea.smem [#allocation8], 2
          %8702 = sst [smem:[%s8701]] 32
          %s8703 = scalar_lea.smem [#allocation8], 3
          %8704 = sst [smem:[%s8703]] 64
          %s8705 = scalar_lea.smem [#allocation8], 4
          %8706 = sst [smem:[%s8705]] 64
          %s8707 = scalar_lea.smem [#allocation8], 5
          %8708 = sst [smem:[%s8707]] 4
          %8710 = dma.general %s8690, 8192, %s8692, %s8657, [#allocation7], [#allocation8], %s8688, 0
        $region32: #{tpu_custom_call.1} parent=27 // pred_fallthru
          _
        // Predicated region
        $region33: #{tpu_custom_call.1} parent=27 // pred_check
          %p8711 = pneg %p129
        $region34: #{tpu_custom_call.1} parent=27 // pred_check_branch
          %8713 = sbr.rel (%p8711) target = $region36
        $region35: #{tpu_custom_call.1} parent=27 // pred_region
          %8715 = vsyncadd %s8662, 0
          %s8716 = sadd.s32 %s27, %s26
          %s8717 = scalar_lea.hbm %s3, %s8716
          %s8719 = sshll.u32 %s8664, 4
          %s8720 = int_to_ptr.vmem [resolvable:$true] %s8719
          %s8721 = sshll.u32 %s8717, 4
          %s8722 = int_to_ptr.hbm [resolvable:$true] %s8721
          %8724 = dma.vmem_to_hbm [thread:$0]  %s8720, 16, %s8722, %s8662
        $region36: #{tpu_custom_call.1} parent=27 // pred_fallthru
          _
        // Predicated region
        $region37: #{tpu_custom_call.1} parent=27 // pred_check
          %p8725 = pneg %p157
        $region38: #{tpu_custom_call.1} parent=27 // pred_check_branch
          %8727 = sbr.rel (%p8725) target = $region40
        $region39: #{tpu_custom_call.1} parent=27 // pred_region
          %8729 = vsyncadd %s8666, 0
          %s8730 = sadd.s32 %s27, %s26
          %s8731 = scalar_lea.hbm %s4, %s8730
          %s8733 = sshll.u32 %s8668, 4
          %s8734 = int_to_ptr.vmem [resolvable:$true] %s8733
          %s8735 = sshll.u32 %s8731, 4
          %s8736 = int_to_ptr.hbm [resolvable:$true] %s8735
          %8738 = dma.vmem_to_hbm [thread:$0]  %s8734, 16, %s8736, %s8666
        $region40: #{tpu_custom_call.1} parent=27 // pred_fallthru
          _
      $region28: #{tpu_custom_call.1} parent=5 // pred_fallthru
        _
      %p8739 = scmp.le.s32.totalorder 2, %s17
      // Predicated region
      $region41: #{tpu_custom_call.1} parent=5 // pred_check
        %p8740 = pneg %p8739
      $region42: #{tpu_custom_call.1} parent=5 // pred_check_branch
        %8742 = sbr.rel (%p8740) target = $region44
      $region43: #{tpu_custom_call.1} parent=5 // pred_region
        %s8743 = ssub.s32 %s17, 2
        // Predicated region
        $region45: #{tpu_custom_call.1} parent=43 // pred_check
          %p8744 = pneg %p107
        $region46: #{tpu_custom_call.1} parent=43 // pred_check_branch
          %8746 = sbr.rel (%p8744) target = $region48
        $region47: #{tpu_custom_call.1} parent=43 // pred_region
          %s8747 = sand.u32 %s92, 1
          %s8748 = scalar_lea.sflag [#allocation3], %s8747
          %s8749 = sand.u32 %s92, 1
          %s8750 = smul.addr %s8749, 512
          %s8751 = scalar_lea.vmem [#allocation2], %s8750
          %8753 = dma.done %s8748, 8192
        $region48: #{tpu_custom_call.1} parent=43 // pred_fallthru
          _
        // Predicated region
        $region49: #{tpu_custom_call.1} parent=43 // pred_check
          %p8754 = pneg %p135
        $region50: #{tpu_custom_call.1} parent=43 // pred_check_branch
          %8756 = sbr.rel (%p8754) target = $region52
        $region51: #{tpu_custom_call.1} parent=43 // pred_region
          %s8757 = sand.u32 %s23, 1
          %s8758 = scalar_lea.sflag [#allocation5], %s8757
          %s8759 = sand.u32 %s120, 1
          %s8760 = scalar_lea.vmem [#allocation4], %s8759
          %8762 = dma.done %s8758, 16
        $region52: #{tpu_custom_call.1} parent=43 // pred_fallthru
          _
        // Predicated region
        $region53: #{tpu_custom_call.1} parent=43 // pred_check
          %p8763 = pneg %p163
        $region54: #{tpu_custom_call.1} parent=43 // pred_check_branch
          %8765 = sbr.rel (%p8763) target = $region56
        $region55: #{tpu_custom_call.1} parent=43 // pred_region
          %s8766 = sand.u32 %s23, 1
          %s8767 = scalar_lea.sflag [#allocation5], %s8766
          %s8768 = sand.u32 %s148, 1
          %s8769 = scalar_lea.vmem [#allocation6], %s8768
          %8771 = dma.done %s8767, 16
        $region56: #{tpu_custom_call.1} parent=43 // pred_fallthru
          _
      $region44: #{tpu_custom_call.1} parent=5 // pred_fallthru
        _
    $region6: #{tpu_custom_call.1} parent=1 // loop_footer
      %s21 = sadd.s32 1, %s17
    $region7: #{tpu_custom_call.1} parent=1 // loop_footer_branch
      %16 = sbr.rel target = $region3
    $region8: #{tpu_custom_call.1} parent=1 // loop_exit
      _
    %8772 = vsyncpa [#allocation3], 1
    %s8773 = scalar_lea.sflag [#allocation3], 1
    %8774 = vsyncpa %s8773, 1
    %8775 = vsyncpa [#allocation5], 1
    %s8776 = scalar_lea.sflag [#allocation5], 1
    %8777 = vsyncpa %s8776, 1

</llo_original>
